<compile_context>
chip_gen: v7x
topology: tpu7x:2x2x1
jax: 0.10.0
libtpu: 0.0.40
codegen_flags: <defaults>
</compile_context>

<pallas_src>
import functools
import math

import jax
import jax.numpy as jnp
from jax.experimental import pallas as pl
from jax.experimental.pallas import tpu as pltpu

_MXU_DTYPE = jnp.bfloat16    # MXU operand dtype (accumulation stays f32)
_APPROX_RECIP = True         # EUP approx reciprocal in softmax

_CP = getattr(pltpu, "CompilerParams", None) or getattr(pltpu, "TPUCompilerParams", None)


# ----------------------------------------------------------------------------
# In-kernel building blocks (operate on VMEM values / ref-dicts)
# ----------------------------------------------------------------------------
def _recip(x):
    if _APPROX_RECIP and hasattr(pl, "reciprocal"):
        return pl.reciprocal(x, approx=True)   # EUP slot; frees the VALU
    return 1.0 / x


def _mxu(x):
    # cast only MXU operands; all elementwise math stays f32 (v5e-safe)
    return x.astype(_MXU_DTYPE)


def _linear2d(x2, w_ref, b_ref, relu=False):
    y = jnp.dot(_mxu(x2), _mxu(w_ref[...]),
                preferred_element_type=jnp.float32) + b_ref[...]
    if relu:
        y = jnp.maximum(y, 0.0)
    return y


def _feature_head(x3, head, pe2):
    # x3: (B, L, F) -> Linear + ReLU + positional encoding -> (B, L, D)
    B, L, F = x3.shape
    D = head["w"].shape[1]
    y = _linear2d(x3.reshape(B * L, F), head["w"], head["b"], relu=True)
    return y.reshape(B, L, D) + pe2            # pe2: (L, D) broadcasts over batch


def _layernorm(x3, norm):
    # LayerNorm over last dim, eps=1e-5 (PyTorch default); residual already added.
    mu = jnp.mean(x3, axis=-1, keepdims=True)
    var = jnp.mean(jnp.square(x3 - mu), axis=-1, keepdims=True)
    y = (x3 - mu) * jax.lax.rsqrt(var + 1e-5)
    return y * norm["g"][...] + norm["b"][...]


def _mha(x_q, x_kv, attn, num_heads, causal, is_self):
    # torch MHA semantics (dropout=0, scale = 1/sqrt(head_dim)).
    B, Lq, D = x_q.shape
    Lk = x_kv.shape[1]
    dh = D // num_heads
    scale = 1.0 / math.sqrt(dh)

    if is_self:
        # self-attention: one fused QKV matmul (lane-dense N = 3D)
        x2 = x_q.reshape(B * Lq, D)
        qkv = jnp.dot(_mxu(x2), _mxu(attn["wqkv"][...]),
                      preferred_element_type=jnp.float32) + attn["bqkv"][...]
        q2, k2, v2 = qkv[:, :D], qkv[:, D:2 * D], qkv[:, 2 * D:]
    else:
        # cross-attention: pre-split Wq / Wkv (no in-kernel weight lane slice)
        q2 = jnp.dot(_mxu(x_q.reshape(B * Lq, D)), _mxu(attn["wq"][...]),
                     preferred_element_type=jnp.float32) + attn["bq"][...]
        kv = jnp.dot(_mxu(x_kv.reshape(B * Lk, D)), _mxu(attn["wkv"][...]),
                     preferred_element_type=jnp.float32) + attn["bkv"][...]
        k2, v2 = kv[:, :D], kv[:, D:]

    if causal:
        # mask built in-kernel from iota — nothing materialized or DMA'd
        r = jax.lax.broadcasted_iota(jnp.int32, (Lq, Lk), 0)
        c = jax.lax.broadcasted_iota(jnp.int32, (Lq, Lk), 1)
        neg = jnp.where(r >= c, 0.0, -1e30).astype(jnp.float32)

    # TODO(synk): at d_model >= 128 replace the per-head lane slices below with a
    # 128-lane-aligned head-batched layout ((B*H, L, dh) einsums).
    head_outs = []
    for h in range(num_heads):                 # static unroll; no per-head grid
        sl = slice(h * dh, (h + 1) * dh)
        qh = _mxu(q2[:, sl].reshape(B, Lq, dh))
        kh = _mxu(k2[:, sl].reshape(B, Lk, dh))
        vh = _mxu(v2[:, sl].reshape(B, Lk, dh))
        # contract over dh directly (no k.T / XLU transpose)
        s = jnp.einsum("bqd,bkd->bqk", qh, kh,
                       preferred_element_type=jnp.float32) * scale
        if causal:
            s = s + neg
        m = jnp.max(s, axis=-1, keepdims=True)
        e = jnp.exp(s - m)                     # f32 EUP
        p = e * _recip(jnp.sum(e, axis=-1, keepdims=True))
        oh = jnp.einsum("bqk,bkd->bqd", _mxu(p), vh,
                        preferred_element_type=jnp.float32)
        head_outs.append(oh.reshape(B * Lq, dh))

    # single Wo matmul with contraction K = D (not H matmuls with K = dh)
    o_cat = jnp.concatenate(head_outs, axis=-1)          # (B*Lq, D)
    out = jnp.dot(_mxu(o_cat), _mxu(attn["wo"][...]),
                  preferred_element_type=jnp.float32) + attn["bo"][...]
    return out.reshape(B, Lq, D)


def _ffn(x3, lp):
    B, L, D = x3.shape
    h = _linear2d(x3.reshape(B * L, D), lp["w1"], lp["b1"], relu=True)
    return _linear2d(h, lp["w2"], lp["b2"]).reshape(B, L, D)


def _decoder_layer(tgt, memory, lp, num_heads, causal):
    t2 = _mha(tgt, tgt, lp["self_attn"], num_heads, causal, is_self=True)
    tgt = _layernorm(tgt + t2, lp["norm1"])
    t2 = _mha(tgt, memory, lp["cross_attn"], num_heads, False, is_self=False)
    tgt = _layernorm(tgt + t2, lp["norm2"])
    t2 = _ffn(tgt, lp)
    return _layernorm(tgt + t2, lp["norm3"])


def _encoder_layer(src, lp, num_heads):
    s2 = _mha(src, src, lp["self_attn"], num_heads, False, is_self=True)
    src = _layernorm(src + s2, lp["norm1"])
    s2 = _ffn(src, lp)
    return _layernorm(src + s2, lp["norm2"])


def _decoder_stack(tgt, memory, stack, num_heads, causal):
    out = tgt
    for lp in stack["layers"]:
        out = _decoder_layer(out, memory, lp, num_heads, causal)
    if stack["norm"] is not None:
        out = _layernorm(out, stack["norm"])
    return out


def _encoder_stack(src, stack, num_heads):
    out = src
    for lp in stack["layers"]:
        out = _encoder_layer(out, lp, num_heads)
    if stack["norm"] is not None:
        out = _layernorm(out, stack["norm"])
    return out


# ----------------------------------------------------------------------------
# The fused forward kernel (one grid step = one batch element)
# ----------------------------------------------------------------------------
def _vac_forward_kernel(*refs, treedef, n_leaves, num_heads, has_queries):
    x_long_ref, x_work_ref, pe_long_ref, pe_work_ref = refs[:4]
    leaf_refs = refs[4:4 + n_leaves]
    o_ref = refs[4 + n_leaves]
    p = jax.tree_util.tree_unflatten(treedef, leaf_refs)   # dict of VMEM refs

    # ---- long-memory branch: feature head + PE + enc modules ---------------
    lm = _feature_head(x_long_ref[...], p["head_long"], pe_long_ref[...])
    B, _, D = lm.shape

    mem = lm
    for has_q, q_ref, stack in zip(has_queries, p["enc_queries"], p["enc_modules"]):
        if has_q:
            nq = q_ref.shape[0]
            tgt = jnp.broadcast_to(q_ref[...][None, :, :], (B, nq, D))
            mem = _decoder_stack(tgt, mem, stack, num_heads, causal=False)
        else:
            mem = _encoder_stack(mem, stack, num_heads)

    # ---- work-memory branch: feature head + PE + causal decoder ------------
    wm = _feature_head(x_work_ref[...], p["head_work"], pe_work_ref[...])
    out = _decoder_stack(wm, mem, p["dec_modules"], num_heads, causal=True)

    # lane-dense store: flatten (1, Lw, D) -> (1, 1, Lw*D) so last dim >= 128
    Bb, Lw, Dd = out.shape
    o_ref[...] = out.reshape(Bb, 1, Lw * Dd).astype(o_ref.dtype)


# ----------------------------------------------------------------------------
# Parameter init (deterministic, synthetic; biases/LN params stored 2-D)
# ----------------------------------------------------------------------------
def _init_linear(key, din, dout):
    s = 1.0 / math.sqrt(din)
    w = jax.random.normal(key, (din, dout), jnp.float32) * s
    b = jnp.zeros((1, dout), jnp.float32)
    return w, b


def _init_norm(d):
    return dict(g=jnp.ones((1, d), jnp.float32), b=jnp.zeros((1, d), jnp.float32))


def _init_mha(key, d, cross):
    k1, k2 = jax.random.split(key)
    s = 1.0 / math.sqrt(d)
    w_in = jax.random.normal(k1, (d, 3 * d), jnp.float32) * s   # [Wq|Wk|Wv]
    wo = jax.random.normal(k2, (d, d), jnp.float32) * s
    bo = jnp.zeros((1, d), jnp.float32)
    if cross:
        # pre-split at init time -> no lane slicing of the packed weight in-kernel
        return dict(wq=w_in[:, :d], bq=jnp.zeros((1, d), jnp.float32),
                    wkv=w_in[:, d:], bkv=jnp.zeros((1, 2 * d), jnp.float32),
                    wo=wo, bo=bo)
    return dict(wqkv=w_in, bqkv=jnp.zeros((1, 3 * d), jnp.float32), wo=wo, bo=bo)


def _init_dec_layer(key, d, ff):
    ks = jax.random.split(key, 4)
    w1, b1 = _init_linear(ks[2], d, ff)
    w2, b2 = _init_linear(ks[3], ff, d)
    return dict(self_attn=_init_mha(ks[0], d, cross=False),
                cross_attn=_init_mha(ks[1], d, cross=True),
                w1=w1, b1=b1, w2=w2, b2=b2,
                norm1=_init_norm(d), norm2=_init_norm(d), norm3=_init_norm(d))


def _init_enc_layer(key, d, ff):
    ks = jax.random.split(key, 3)
    w1, b1 = _init_linear(ks[1], d, ff)
    w2, b2 = _init_linear(ks[2], ff, d)
    return dict(self_attn=_init_mha(ks[0], d, cross=False),
                w1=w1, b1=b1, w2=w2, b2=b2,
                norm1=_init_norm(d), norm2=_init_norm(d))


def _init_stack(key, n_layers, d, ff, use_norm, decoder):
    ks = jax.random.split(key, n_layers)
    init = _init_dec_layer if decoder else _init_enc_layer
    return dict(layers=[init(k, d, ff) for k in ks],
                norm=_init_norm(d) if use_norm else None)


def positional_encoding_table(max_len, d_model):
    position = jnp.arange(max_len, dtype=jnp.float32)[:, None]
    div_term = jnp.exp(jnp.arange(0, d_model, 2, dtype=jnp.float32)
                       * (-math.log(10000.0) / d_model))
    pe = jnp.zeros((max_len, d_model), jnp.float32)
    pe = pe.at[:, 0::2].set(jnp.sin(position * div_term))
    pe = pe.at[:, 1::2].set(jnp.cos(position * div_term))
    return pe


def init_vac_encoder(key, cfg):
    d, ff, f_in = cfg["d_model"], cfg["dim_feedforward"], cfg["len_feature"]
    ks = jax.random.split(key, 4)
    w_l, b_l = _init_linear(ks[0], f_in, d)
    w_w, b_w = _init_linear(ks[1], f_in, d)
    params = dict(
        head_long=dict(w=w_l, b=b_l),
        head_work=dict(w=w_w, b=b_w),
        pe=positional_encoding_table(cfg["long_memory_num_samples"]
                                     + cfg["work_memory_length"] + 8, d),
        enc_queries=[],
        enc_modules=[],
    )
    enc_keys = jax.random.split(ks[2], len(cfg["enc_module"]))
    for ek, spec in zip(enc_keys, cfg["enc_module"]):
        nq, n_layers, use_norm = spec
        if nq != -1:
            params["enc_queries"].append(
                jax.random.normal(jax.random.fold_in(ek, 7), (nq, d), jnp.float32))
            params["enc_modules"].append(
                _init_stack(ek, n_layers, d, ff, use_norm, decoder=True))
        else:
            params["enc_queries"].append(None)
            params["enc_modules"].append(
                _init_stack(ek, n_layers, d, ff, use_norm, decoder=False))
    _, n_dec, dec_norm = cfg["dec_module"]
    params["dec_modules"] = _init_stack(ks[3], n_dec, d, ff, dec_norm, decoder=True)
    return params


# ----------------------------------------------------------------------------
# Cost estimate (advisory scheduler hint) + VMEM limit
# ----------------------------------------------------------------------------
def _flops_estimate(cfg, B, Lw):
    D, F, ff, H = (cfg["d_model"], cfg["len_feature"],
                   cfg["dim_feedforward"], cfg["num_heads"])
    Ln = cfg["long_memory_num_samples"]
    dh = D // H
    flops = 2 * B * (Ln + Lw) * F * D
    trans = 0

    def mha(Lq, Lk):
        f = 2 * B * Lq * D * 3 * D + 4 * B * H * Lq * Lk * dh + 2 * B * Lq * D * D
        return f, B * H * Lq * Lk

    seq = Ln
    for (nq, n_layers, _) in cfg["enc_module"]:
        for _ in range(n_layers):
            if nq != -1:
                f1, t1 = mha(nq, nq)
                f2, t2 = mha(nq, seq)
                flops += f1 + f2 + 4 * B * nq * D * ff
                trans += t1 + t2
            else:
                f1, t1 = mha(seq, seq)
                flops += f1 + 4 * B * seq * D * ff
                trans += t1
        if nq != -1:
            seq = nq
    for _ in range(cfg["dec_module"][1]):
        f1, t1 = mha(Lw, Lw)
        f2, t2 = mha(Lw, seq)
        flops += f1 + f2 + 4 * B * Lw * D * ff
        trans += t1 + t2
    return flops, trans


def _vmem_limit_bytes(leaves, per_step_io_bytes):
    weight_bytes = sum(int(l.size) * l.dtype.itemsize for l in leaves)
    # double-buffered operands + per-step I/O + activation headroom
    est = 2 * weight_bytes + 2 * per_step_io_bytes + (16 << 20)
    return int(min(64 << 20, max(32 << 20, est)))   # 64 MiB cap fits v7x physical VMEM


# ----------------------------------------------------------------------------
# VAC_encoder.forward — one fused pallas_call, grid over batch
# ----------------------------------------------------------------------------
def vac_encoder_forward(params, input_features, cfg):
    # input_features: (B, T, len_feature), T = long_memory_num_samples + work_len
    B, T, F_in = input_features.shape
    D = cfg["d_model"]
    long_n = cfg["long_memory_num_samples"]
    Lw = T - long_n

    x_long = input_features[:, :long_n]
    x_work = input_features[:, long_n:]
    pe = params["pe"]
    pe_long = pe[:long_n]                      # pos_encoding, padding = 0
    pe_work = pe[long_n:long_n + Lw]           # pos_encoding, padding = long_n

    net = {k: v for k, v in params.items() if k != "pe"}
    leaves, treedef = jax.tree_util.tree_flatten(net)

    kernel = functools.partial(
        _vac_forward_kernel,
        treedef=treedef,
        n_leaves=len(leaves),
        num_heads=cfg["num_heads"],
        has_queries=tuple(spec[0] != -1 for spec in cfg["enc_module"]),
    )

    def _const_spec(arr):
        n = arr.ndim
        return pl.BlockSpec(arr.shape, lambda b, n=n: (0,) * n)

    in_specs = [
        pl.BlockSpec((1, long_n, F_in), lambda b: (b, 0, 0)),
        pl.BlockSpec((1, Lw, F_in), lambda b: (b, 0, 0)),
        _const_spec(pe_long),
        _const_spec(pe_work),
    ] + [_const_spec(l) for l in leaves]
    out_spec = pl.BlockSpec((1, 1, Lw * D), lambda b: (b, 0, 0))

    call_kwargs = {}
    if _CP is not None:
        per_step_io = 4 * (long_n * F_in + Lw * F_in + pe_long.size + pe_work.size + Lw * D)
        call_kwargs["compiler_params"] = _CP(
            dimension_semantics=("parallel",),          # v7x: batch split across 2 TCs
            vmem_limit_bytes=_vmem_limit_bytes(leaves, per_step_io),
        )
    if hasattr(pl, "CostEstimate"):
        flops, trans = _flops_estimate(cfg, B, Lw)
        bytes_acc = 4 * (x_long.size + x_work.size + pe_long.size + pe_work.size
                         + sum(int(l.size) for l in leaves) + B * Lw * D)
        call_kwargs["cost_estimate"] = pl.CostEstimate(
            flops=int(flops), transcendentals=int(trans),
            bytes_accessed=int(bytes_acc))

    out = pl.pallas_call(
        kernel,
        grid=(B,),
        in_specs=in_specs,
        out_specs=out_spec,
        out_shape=jax.ShapeDtypeStruct((B, 1, Lw * D), jnp.float32),
        **call_kwargs,
    )(x_long, x_work, pe_long, pe_work, *leaves)

    # un-flatten the lane-dense store and match the PyTorch seq-first layout
    return jnp.transpose(out.reshape(B, Lw, D), (1, 0, 2))


# ----------------------------------------------------------------------------
if __name__ == "__main__":
    cfg = dict(
        len_feature=64,
        d_model=32,
        num_heads=4,
        dim_feedforward=64,
        long_memory_length=16,
        long_memory_sampling_rate=2,
        work_memory_length=8,
        enc_module=[[8, 1, True], [-1, 1, True]],   # [num_queries, num_layers, norm]
        dec_module=[-1, 1, True],
    )
    cfg["long_memory_num_samples"] = (cfg["long_memory_length"]
                                      // cfg["long_memory_sampling_rate"])

    key = jax.random.PRNGKey(0)
    k_params, k_x = jax.random.split(key)
    params = init_vac_encoder(k_params, cfg)

    B = 2
    T = cfg["long_memory_num_samples"] + cfg["work_memory_length"]   # 8 + 8 = 16
    x = jax.random.normal(k_x, (B, T, cfg["len_feature"]), jnp.float32)

    fwd = jax.jit(functools.partial(vac_encoder_forward, cfg=cfg))
    out = jax.block_until_ready(fwd(params, x))

    assert out.shape == (cfg["work_memory_length"], B, cfg["d_model"]), out.shape
    assert bool(jnp.all(jnp.isfinite(out)))
    print("KERNEL_OK")
</pallas_src>

<mosaic_0001>
module attributes {stable_mosaic.version = 11 : i64} {
  func.func @_vac_forward_kernel(%arg0: i32, %arg1: memref<1x8x64xf32, #tpu.memory_space<vmem>>, %arg2: memref<1x8x64xf32, #tpu.memory_space<vmem>>, %arg3: memref<8x32xf32, #tpu.memory_space<vmem>>, %arg4: memref<8x32xf32, #tpu.memory_space<vmem>>, %arg5: memref<1x64xf32, #tpu.memory_space<vmem>>, %arg6: memref<1x32xf32, #tpu.memory_space<vmem>>, %arg7: memref<1x64xf32, #tpu.memory_space<vmem>>, %arg8: memref<1x32xf32, #tpu.memory_space<vmem>>, %arg9: memref<1x32xf32, #tpu.memory_space<vmem>>, %arg10: memref<32x64xf32, #tpu.memory_space<vmem>>, %arg11: memref<32x32xf32, #tpu.memory_space<vmem>>, %arg12: memref<32x32xf32, #tpu.memory_space<vmem>>, %arg13: memref<1x32xf32, #tpu.memory_space<vmem>>, %arg14: memref<1x32xf32, #tpu.memory_space<vmem>>, %arg15: memref<1x32xf32, #tpu.memory_space<vmem>>, %arg16: memref<1x32xf32, #tpu.memory_space<vmem>>, %arg17: memref<1x32xf32, #tpu.memory_space<vmem>>, %arg18: memref<1x32xf32, #tpu.memory_space<vmem>>, %arg19: memref<1x32xf32, #tpu.memory_space<vmem>>, %arg20: memref<1x96xf32, #tpu.memory_space<vmem>>, %arg21: memref<32x32xf32, #tpu.memory_space<vmem>>, %arg22: memref<32x96xf32, #tpu.memory_space<vmem>>, %arg23: memref<32x64xf32, #tpu.memory_space<vmem>>, %arg24: memref<64x32xf32, #tpu.memory_space<vmem>>, %arg25: memref<1x32xf32, #tpu.memory_space<vmem>>, %arg26: memref<1x32xf32, #tpu.memory_space<vmem>>, %arg27: memref<1x64xf32, #tpu.memory_space<vmem>>, %arg28: memref<1x32xf32, #tpu.memory_space<vmem>>, %arg29: memref<1x64xf32, #tpu.memory_space<vmem>>, %arg30: memref<1x32xf32, #tpu.memory_space<vmem>>, %arg31: memref<1x32xf32, #tpu.memory_space<vmem>>, %arg32: memref<32x64xf32, #tpu.memory_space<vmem>>, %arg33: memref<32x32xf32, #tpu.memory_space<vmem>>, %arg34: memref<32x32xf32, #tpu.memory_space<vmem>>, %arg35: memref<1x32xf32, #tpu.memory_space<vmem>>, %arg36: memref<1x32xf32, #tpu.memory_space<vmem>>, %arg37: memref<1x32xf32, #tpu.memory_space<vmem>>, %arg38: memref<1x32xf32, #tpu.memory_space<vmem>>, %arg39: memref<1x32xf32, #tpu.memory_space<vmem>>, %arg40: memref<1x32xf32, #tpu.memory_space<vmem>>, %arg41: memref<1x32xf32, #tpu.memory_space<vmem>>, %arg42: memref<1x96xf32, #tpu.memory_space<vmem>>, %arg43: memref<32x32xf32, #tpu.memory_space<vmem>>, %arg44: memref<32x96xf32, #tpu.memory_space<vmem>>, %arg45: memref<32x64xf32, #tpu.memory_space<vmem>>, %arg46: memref<64x32xf32, #tpu.memory_space<vmem>>, %arg47: memref<1x32xf32, #tpu.memory_space<vmem>>, %arg48: memref<1x32xf32, #tpu.memory_space<vmem>>, %arg49: memref<1x64xf32, #tpu.memory_space<vmem>>, %arg50: memref<1x32xf32, #tpu.memory_space<vmem>>, %arg51: memref<1x32xf32, #tpu.memory_space<vmem>>, %arg52: memref<1x32xf32, #tpu.memory_space<vmem>>, %arg53: memref<1x32xf32, #tpu.memory_space<vmem>>, %arg54: memref<1x32xf32, #tpu.memory_space<vmem>>, %arg55: memref<1x32xf32, #tpu.memory_space<vmem>>, %arg56: memref<1x96xf32, #tpu.memory_space<vmem>>, %arg57: memref<32x32xf32, #tpu.memory_space<vmem>>, %arg58: memref<32x96xf32, #tpu.memory_space<vmem>>, %arg59: memref<32x64xf32, #tpu.memory_space<vmem>>, %arg60: memref<64x32xf32, #tpu.memory_space<vmem>>, %arg61: memref<1x32xf32, #tpu.memory_space<vmem>>, %arg62: memref<1x32xf32, #tpu.memory_space<vmem>>, %arg63: memref<8x32xf32, #tpu.memory_space<vmem>>, %arg64: memref<1x32xf32, #tpu.memory_space<vmem>>, %arg65: memref<64x32xf32, #tpu.memory_space<vmem>>, %arg66: memref<1x32xf32, #tpu.memory_space<vmem>>, %arg67: memref<64x32xf32, #tpu.memory_space<vmem>>, %arg68: memref<1x1x256xf32, #tpu.memory_space<vmem>>) attributes {dimension_semantics = [#tpu.dimension_semantics<parallel>], iteration_bounds = array<i64: 2>, scalar_prefetch = 0 : i64, scratch_operands = 0 : i64, tpu.core_type = #tpu.core_type<tc>, window_params = [{transform_indices = @transform_0, window_bounds = array<i64: 1, 8, 64>}, {transform_indices = @transform_1, window_bounds = array<i64: 1, 8, 64>}, {pipeline_mode = #tpu.pipeline_mode<synchronous>, transform_indices = @transform_2, window_bounds = array<i64: 8, 32>}, {pipeline_mode = #tpu.pipeline_mode<synchronous>, transform_indices = @transform_3, window_bounds = array<i64: 8, 32>}, {pipeline_mode = #tpu.pipeline_mode<synchronous>, transform_indices = @transform_4, window_bounds = array<i64: 1, 64>}, {pipeline_mode = #tpu.pipeline_mode<synchronous>, transform_indices = @transform_5, window_bounds = array<i64: 1, 32>}, {pipeline_mode = #tpu.pipeline_mode<synchronous>, transform_indices = @transform_6, window_bounds = array<i64: 1, 64>}, {pipeline_mode = #tpu.pipeline_mode<synchronous>, transform_indices = @transform_7, window_bounds = array<i64: 1, 32>}, {pipeline_mode = #tpu.pipeline_mode<synchronous>, transform_indices = @transform_8, window_bounds = array<i64: 1, 32>}, {pipeline_mode = #tpu.pipeline_mode<synchronous>, transform_indices = @transform_9, window_bounds = array<i64: 32, 64>}, {pipeline_mode = #tpu.pipeline_mode<synchronous>, transform_indices = @transform_10, window_bounds = array<i64: 32, 32>}, {pipeline_mode = #tpu.pipeline_mode<synchronous>, transform_indices = @transform_11, window_bounds = array<i64: 32, 32>}, {pipeline_mode = #tpu.pipeline_mode<synchronous>, transform_indices = @transform_12, window_bounds = array<i64: 1, 32>}, {pipeline_mode = #tpu.pipeline_mode<synchronous>, transform_indices = @transform_13, window_bounds = array<i64: 1, 32>}, {pipeline_mode = #tpu.pipeline_mode<synchronous>, transform_indices = @transform_14, window_bounds = array<i64: 1, 32>}, {pipeline_mode = #tpu.pipeline_mode<synchronous>, transform_indices = @transform_15, window_bounds = array<i64: 1, 32>}, {pipeline_mode = #tpu.pipeline_mode<synchronous>, transform_indices = @transform_16, window_bounds = array<i64: 1, 32>}, {pipeline_mode = #tpu.pipeline_mode<synchronous>, transform_indices = @transform_17, window_bounds = array<i64: 1, 32>}, {pipeline_mode = #tpu.pipeline_mode<synchronous>, transform_indices = @transform_18, window_bounds = array<i64: 1, 32>}, {pipeline_mode = #tpu.pipeline_mode<synchronous>, transform_indices = @transform_19, window_bounds = array<i64: 1, 96>}, {pipeline_mode = #tpu.pipeline_mode<synchronous>, transform_indices = @transform_20, window_bounds = array<i64: 32, 32>}, {pipeline_mode = #tpu.pipeline_mode<synchronous>, transform_indices = @transform_21, window_bounds = array<i64: 32, 96>}, {pipeline_mode = #tpu.pipeline_mode<synchronous>, transform_indices = @transform_22, window_bounds = array<i64: 32, 64>}, {pipeline_mode = #tpu.pipeline_mode<synchronous>, transform_indices = @transform_23, window_bounds = array<i64: 64, 32>}, {pipeline_mode = #tpu.pipeline_mode<synchronous>, transform_indices = @transform_24, window_bounds = array<i64: 1, 32>}, {pipeline_mode = #tpu.pipeline_mode<synchronous>, transform_indices = @transform_25, window_bounds = array<i64: 1, 32>}, {pipeline_mode = #tpu.pipeline_mode<synchronous>, transform_indices = @transform_26, window_bounds = array<i64: 1, 64>}, {pipeline_mode = #tpu.pipeline_mode<synchronous>, transform_indices = @transform_27, window_bounds = array<i64: 1, 32>}, {pipeline_mode = #tpu.pipeline_mode<synchronous>, transform_indices = @transform_28, window_bounds = array<i64: 1, 64>}, {pipeline_mode = #tpu.pipeline_mode<synchronous>, transform_indices = @transform_29, window_bounds = array<i64: 1, 32>}, {pipeline_mode = #tpu.pipeline_mode<synchronous>, transform_indices = @transform_30, window_bounds = array<i64: 1, 32>}, {pipeline_mode = #tpu.pipeline_mode<synchronous>, transform_indices = @transform_31, window_bounds = array<i64: 32, 64>}, {pipeline_mode = #tpu.pipeline_mode<synchronous>, transform_indices = @transform_32, window_bounds = array<i64: 32, 32>}, {pipeline_mode = #tpu.pipeline_mode<synchronous>, transform_indices = @transform_33, window_bounds = array<i64: 32, 32>}, {pipeline_mode = #tpu.pipeline_mode<synchronous>, transform_indices = @transform_34, window_bounds = array<i64: 1, 32>}, {pipeline_mode = #tpu.pipeline_mode<synchronous>, transform_indices = @transform_35, window_bounds = array<i64: 1, 32>}, {pipeline_mode = #tpu.pipeline_mode<synchronous>, transform_indices = @transform_36, window_bounds = array<i64: 1, 32>}, {pipeline_mode = #tpu.pipeline_mode<synchronous>, transform_indices = @transform_37, window_bounds = array<i64: 1, 32>}, {pipeline_mode = #tpu.pipeline_mode<synchronous>, transform_indices = @transform_38, window_bounds = array<i64: 1, 32>}, {pipeline_mode = #tpu.pipeline_mode<synchronous>, transform_indices = @transform_39, window_bounds = array<i64: 1, 32>}, {pipeline_mode = #tpu.pipeline_mode<synchronous>, transform_indices = @transform_40, window_bounds = array<i64: 1, 32>}, {pipeline_mode = #tpu.pipeline_mode<synchronous>, transform_indices = @transform_41, window_bounds = array<i64: 1, 96>}, {pipeline_mode = #tpu.pipeline_mode<synchronous>, transform_indices = @transform_42, window_bounds = array<i64: 32, 32>}, {pipeline_mode = #tpu.pipeline_mode<synchronous>, transform_indices = @transform_43, window_bounds = array<i64: 32, 96>}, {pipeline_mode = #tpu.pipeline_mode<synchronous>, transform_indices = @transform_44, window_bounds = array<i64: 32, 64>}, {pipeline_mode = #tpu.pipeline_mode<synchronous>, transform_indices = @transform_45, window_bounds = array<i64: 64, 32>}, {pipeline_mode = #tpu.pipeline_mode<synchronous>, transform_indices = @transform_46, window_bounds = array<i64: 1, 32>}, {pipeline_mode = #tpu.pipeline_mode<synchronous>, transform_indices = @transform_47, window_bounds = array<i64: 1, 32>}, {pipeline_mode = #tpu.pipeline_mode<synchronous>, transform_indices = @transform_48, window_bounds = array<i64: 1, 64>}, {pipeline_mode = #tpu.pipeline_mode<synchronous>, transform_indices = @transform_49, window_bounds = array<i64: 1, 32>}, {pipeline_mode = #tpu.pipeline_mode<synchronous>, transform_indices = @transform_50, window_bounds = array<i64: 1, 32>}, {pipeline_mode = #tpu.pipeline_mode<synchronous>, transform_indices = @transform_51, window_bounds = array<i64: 1, 32>}, {pipeline_mode = #tpu.pipeline_mode<synchronous>, transform_indices = @transform_52, window_bounds = array<i64: 1, 32>}, {pipeline_mode = #tpu.pipeline_mode<synchronous>, transform_indices = @transform_53, window_bounds = array<i64: 1, 32>}, {pipeline_mode = #tpu.pipeline_mode<synchronous>, transform_indices = @transform_54, window_bounds = array<i64: 1, 32>}, {pipeline_mode = #tpu.pipeline_mode<synchronous>, transform_indices = @transform_55, window_bounds = array<i64: 1, 96>}, {pipeline_mode = #tpu.pipeline_mode<synchronous>, transform_indices = @transform_56, window_bounds = array<i64: 32, 32>}, {pipeline_mode = #tpu.pipeline_mode<synchronous>, transform_indices = @transform_57, window_bounds = array<i64: 32, 96>}, {pipeline_mode = #tpu.pipeline_mode<synchronous>, transform_indices = @transform_58, window_bounds = array<i64: 32, 64>}, {pipeline_mode = #tpu.pipeline_mode<synchronous>, transform_indices = @transform_59, window_bounds = array<i64: 64, 32>}, {pipeline_mode = #tpu.pipeline_mode<synchronous>, transform_indices = @transform_60, window_bounds = array<i64: 1, 32>}, {pipeline_mode = #tpu.pipeline_mode<synchronous>, transform_indices = @transform_61, window_bounds = array<i64: 1, 32>}, {pipeline_mode = #tpu.pipeline_mode<synchronous>, transform_indices = @transform_62, window_bounds = array<i64: 8, 32>}, {pipeline_mode = #tpu.pipeline_mode<synchronous>, transform_indices = @transform_63, window_bounds = array<i64: 1, 32>}, {pipeline_mode = #tpu.pipeline_mode<synchronous>, transform_indices = @transform_64, window_bounds = array<i64: 64, 32>}, {pipeline_mode = #tpu.pipeline_mode<synchronous>, transform_indices = @transform_65, window_bounds = array<i64: 1, 32>}, {pipeline_mode = #tpu.pipeline_mode<synchronous>, transform_indices = @transform_66, window_bounds = array<i64: 64, 32>}, {transform_indices = @transform_67, window_bounds = array<i64: 1, 1, 256>}]} {
    %c0 = arith.constant 0 : index
    %c0_0 = arith.constant 0 : index
    %c0_1 = arith.constant 0 : index
    %0 = vector.load %arg1[%c0, %c0_0, %c0_1] : memref<1x8x64xf32, #tpu.memory_space<vmem>>, vector<1x8x64xf32>
    %c0_2 = arith.constant 0 : index
    %c0_3 = arith.constant 0 : index
    %1 = vector.load %arg3[%c0_2, %c0_3] : memref<8x32xf32, #tpu.memory_space<vmem>>, vector<8x32xf32>
    %2 = vector.shape_cast %0 : vector<1x8x64xf32> to vector<8x64xf32>
    %3 = arith.truncf %2 : vector<8x64xf32> to vector<8x64xbf16>
    %c0_4 = arith.constant 0 : index
    %c0_5 = arith.constant 0 : index
    %4 = vector.load %arg65[%c0_4, %c0_5] : memref<64x32xf32, #tpu.memory_space<vmem>>, vector<64x32xf32>
    %5 = arith.truncf %4 : vector<64x32xf32> to vector<64x32xbf16>
    %cst = arith.constant dense<0.000000e+00> : vector<8x32xf32>
    %6 = tpu.matmul %3, %5, %cst {dimension_numbers = #tpu.dot_dimension_numbers<[1], [0], [0], [1], [0, 0, 1, 1], [], []>} : vector<8x64xbf16>, vector<64x32xbf16>, vector<8x32xf32> -> vector<8x32xf32>
    %c0_6 = arith.constant 0 : index
    %c0_7 = arith.constant 0 : index
    %7 = vector.load %arg64[%c0_6, %c0_7] : memref<1x32xf32, #tpu.memory_space<vmem>>, vector<1x32xf32>
    %8 = vector.broadcast %7 : vector<1x32xf32> to vector<8x32xf32>
    %9 = arith.addf %6, %8 : vector<8x32xf32>
    %cst_8 = arith.constant 0.000000e+00 : f32
    %10 = vector.broadcast %cst_8 : f32 to vector<8x32xf32>
    %11 = arith.maximumf %9, %10 : vector<8x32xf32>
    %12 = vector.shape_cast %11 : vector<8x32xf32> to vector<1x8x32xf32>
    %13 = vector.shape_cast %1 : vector<8x32xf32> to vector<1x8x32xf32>
    %14 = arith.addf %12, %13 : vector<1x8x32xf32>
    %c0_9 = arith.constant 0 : index
    %c0_10 = arith.constant 0 : index
    %15 = vector.load %arg63[%c0_9, %c0_10] : memref<8x32xf32, #tpu.memory_space<vmem>>, vector<8x32xf32>
    %16 = vector.shape_cast %15 : vector<8x32xf32> to vector<1x8x32xf32>
    %17 = vector.shape_cast %16 : vector<1x8x32xf32> to vector<8x32xf32>
    %18 = arith.truncf %17 : vector<8x32xf32> to vector<8x32xbf16>
    %c0_11 = arith.constant 0 : index
    %c0_12 = arith.constant 0 : index
    %19 = vector.load %arg44[%c0_11, %c0_12] : memref<32x96xf32, #tpu.memory_space<vmem>>, vector<32x96xf32>
    %20 = arith.truncf %19 : vector<32x96xf32> to vector<32x96xbf16>
    %cst_13 = arith.constant dense<0.000000e+00> : vector<8x96xf32>
    %21 = tpu.matmul %18, %20, %cst_13 {dimension_numbers = #tpu.dot_dimension_numbers<[1], [0], [0], [1], [0, 0, 1, 1], [], []>} : vector<8x32xbf16>, vector<32x96xbf16>, vector<8x96xf32> -> vector<8x96xf32>
    %c0_14 = arith.constant 0 : index
    %c0_15 = arith.constant 0 : index
    %22 = vector.load %arg42[%c0_14, %c0_15] : memref<1x96xf32, #tpu.memory_space<vmem>>, vector<1x96xf32>
    %23 = vector.broadcast %22 : vector<1x96xf32> to vector<8x96xf32>
    %24 = arith.addf %21, %23 : vector<8x96xf32>
    %25 = vector.extract_strided_slice %24 {offsets = [0, 0], sizes = [8, 32], strides = [1, 1]} : vector<8x96xf32> to vector<8x32xf32>
    %26 = vector.extract_strided_slice %24 {offsets = [0, 32], sizes = [8, 32], strides = [1, 1]} : vector<8x96xf32> to vector<8x32xf32>
    %27 = vector.extract_strided_slice %24 {offsets = [0, 64], sizes = [8, 32], strides = [1, 1]} : vector<8x96xf32> to vector<8x32xf32>
    %28 = vector.extract_strided_slice %25 {offsets = [0, 0], sizes = [8, 8], strides = [1, 1]} : vector<8x32xf32> to vector<8x8xf32>
    %29 = vector.shape_cast %28 : vector<8x8xf32> to vector<1x8x8xf32>
    %30 = arith.truncf %29 : vector<1x8x8xf32> to vector<1x8x8xbf16>
    %31 = vector.extract_strided_slice %26 {offsets = [0, 0], sizes = [8, 8], strides = [1, 1]} : vector<8x32xf32> to vector<8x8xf32>
    %32 = vector.shape_cast %31 : vector<8x8xf32> to vector<1x8x8xf32>
    %33 = arith.truncf %32 : vector<1x8x8xf32> to vector<1x8x8xbf16>
    %34 = vector.extract_strided_slice %27 {offsets = [0, 0], sizes = [8, 8], strides = [1, 1]} : vector<8x32xf32> to vector<8x8xf32>
    %35 = vector.shape_cast %34 : vector<8x8xf32> to vector<1x8x8xf32>
    %36 = arith.truncf %35 : vector<1x8x8xf32> to vector<1x8x8xbf16>
    "tpu.trace_start"() <{level = 10 : i32, message = "bqd,bkd->bqk"}> : () -> ()
    %cst_16 = arith.constant dense<0.000000e+00> : vector<1x8x8xf32>
    %37 = tpu.matmul %30, %33, %cst_16 {dimension_numbers = #tpu.dot_dimension_numbers<[2], [2], [1], [1], [0, 0, 0, 1, 1, 1], [0], [0]>} : vector<1x8x8xbf16>, vector<1x8x8xbf16>, vector<1x8x8xf32> -> vector<1x8x8xf32>
    "tpu.trace_stop"() : () -> ()
    %cst_17 = arith.constant 0.353553385 : f32
    %38 = vector.broadcast %cst_17 : f32 to vector<1x8x8xf32>
    %39 = arith.mulf %37, %38 : vector<1x8x8xf32>
    %cst_18 = arith.constant dense<0xFF800000> : vector<1x8xf32>
    %40 = vector.multi_reduction <maximumf>, %39, %cst_18 [2] : vector<1x8x8xf32> to vector<1x8xf32>
    %41 = vector.shape_cast %40 : vector<1x8xf32> to vector<1x8x1xf32>
    %42 = vector.broadcast %41 : vector<1x8x1xf32> to vector<1x8x8xf32>
    %43 = arith.subf %39, %42 : vector<1x8x8xf32>
    %44 = math.exp %43 : vector<1x8x8xf32>
    %cst_19 = arith.constant dense<0.000000e+00> : vector<1x8xf32>
    %45 = vector.multi_reduction <add>, %44, %cst_19 [2] : vector<1x8x8xf32> to vector<1x8xf32>
    %46 = vector.shape_cast %45 : vector<1x8xf32> to vector<1x8x1xf32>
    %47 = tpu.reciprocal %46 {approx = true} : vector<1x8x1xf32> -> vector<1x8x1xf32>
    %48 = vector.broadcast %47 : vector<1x8x1xf32> to vector<1x8x8xf32>
    %49 = arith.mulf %44, %48 : vector<1x8x8xf32>
    %50 = arith.truncf %49 : vector<1x8x8xf32> to vector<1x8x8xbf16>
    "tpu.trace_start"() <{level = 10 : i32, message = "bqk,bkd->bqd"}> : () -> ()
    %cst_20 = arith.constant dense<0.000000e+00> : vector<1x8x8xf32>
    %51 = tpu.matmul %50, %36, %cst_20 {dimension_numbers = #tpu.dot_dimension_numbers<[2], [1], [1], [2], [0, 0, 0, 1, 1, 2], [0], [0]>} : vector<1x8x8xbf16>, vector<1x8x8xbf16>, vector<1x8x8xf32> -> vector<1x8x8xf32>
    "tpu.trace_stop"() : () -> ()
    %52 = vector.shape_cast %51 : vector<1x8x8xf32> to vector<8x8xf32>
    %53 = vector.extract_strided_slice %25 {offsets = [0, 8], sizes = [8, 8], strides = [1, 1]} : vector<8x32xf32> to vector<8x8xf32>
    %54 = vector.shape_cast %53 : vector<8x8xf32> to vector<1x8x8xf32>
    %55 = arith.truncf %54 : vector<1x8x8xf32> to vector<1x8x8xbf16>
    %56 = vector.extract_strided_slice %26 {offsets = [0, 8], sizes = [8, 8], strides = [1, 1]} : vector<8x32xf32> to vector<8x8xf32>
    %57 = vector.shape_cast %56 : vector<8x8xf32> to vector<1x8x8xf32>
    %58 = arith.truncf %57 : vector<1x8x8xf32> to vector<1x8x8xbf16>
    %59 = vector.extract_strided_slice %27 {offsets = [0, 8], sizes = [8, 8], strides = [1, 1]} : vector<8x32xf32> to vector<8x8xf32>
    %60 = vector.shape_cast %59 : vector<8x8xf32> to vector<1x8x8xf32>
    %61 = arith.truncf %60 : vector<1x8x8xf32> to vector<1x8x8xbf16>
    "tpu.trace_start"() <{level = 10 : i32, message = "bqd,bkd->bqk"}> : () -> ()
    %cst_21 = arith.constant dense<0.000000e+00> : vector<1x8x8xf32>
    %62 = tpu.matmul %55, %58, %cst_21 {dimension_numbers = #tpu.dot_dimension_numbers<[2], [2], [1], [1], [0, 0, 0, 1, 1, 1], [0], [0]>} : vector<1x8x8xbf16>, vector<1x8x8xbf16>, vector<1x8x8xf32> -> vector<1x8x8xf32>
    "tpu.trace_stop"() : () -> ()
    %cst_22 = arith.constant 0.353553385 : f32
    %63 = vector.broadcast %cst_22 : f32 to vector<1x8x8xf32>
    %64 = arith.mulf %62, %63 : vector<1x8x8xf32>
    %cst_23 = arith.constant dense<0xFF800000> : vector<1x8xf32>
    %65 = vector.multi_reduction <maximumf>, %64, %cst_23 [2] : vector<1x8x8xf32> to vector<1x8xf32>
    %66 = vector.shape_cast %65 : vector<1x8xf32> to vector<1x8x1xf32>
    %67 = vector.broadcast %66 : vector<1x8x1xf32> to vector<1x8x8xf32>
    %68 = arith.subf %64, %67 : vector<1x8x8xf32>
    %69 = math.exp %68 : vector<1x8x8xf32>
    %cst_24 = arith.constant dense<0.000000e+00> : vector<1x8xf32>
    %70 = vector.multi_reduction <add>, %69, %cst_24 [2] : vector<1x8x8xf32> to vector<1x8xf32>
    %71 = vector.shape_cast %70 : vector<1x8xf32> to vector<1x8x1xf32>
    %72 = tpu.reciprocal %71 {approx = true} : vector<1x8x1xf32> -> vector<1x8x1xf32>
    %73 = vector.broadcast %72 : vector<1x8x1xf32> to vector<1x8x8xf32>
    %74 = arith.mulf %69, %73 : vector<1x8x8xf32>
    %75 = arith.truncf %74 : vector<1x8x8xf32> to vector<1x8x8xbf16>
    "tpu.trace_start"() <{level = 10 : i32, message = "bqk,bkd->bqd"}> : () -> ()
    %cst_25 = arith.constant dense<0.000000e+00> : vector<1x8x8xf32>
    %76 = tpu.matmul %75, %61, %cst_25 {dimension_numbers = #tpu.dot_dimension_numbers<[2], [1], [1], [2], [0, 0, 0, 1, 1, 2], [0], [0]>} : vector<1x8x8xbf16>, vector<1x8x8xbf16>, vector<1x8x8xf32> -> vector<1x8x8xf32>
    "tpu.trace_stop"() : () -> ()
    %77 = vector.shape_cast %76 : vector<1x8x8xf32> to vector<8x8xf32>
    %78 = vector.extract_strided_slice %25 {offsets = [0, 16], sizes = [8, 8], strides = [1, 1]} : vector<8x32xf32> to vector<8x8xf32>
    %79 = vector.shape_cast %78 : vector<8x8xf32> to vector<1x8x8xf32>
    %80 = arith.truncf %79 : vector<1x8x8xf32> to vector<1x8x8xbf16>
    %81 = vector.extract_strided_slice %26 {offsets = [0, 16], sizes = [8, 8], strides = [1, 1]} : vector<8x32xf32> to vector<8x8xf32>
    %82 = vector.shape_cast %81 : vector<8x8xf32> to vector<1x8x8xf32>
    %83 = arith.truncf %82 : vector<1x8x8xf32> to vector<1x8x8xbf16>
    %84 = vector.extract_strided_slice %27 {offsets = [0, 16], sizes = [8, 8], strides = [1, 1]} : vector<8x32xf32> to vector<8x8xf32>
    %85 = vector.shape_cast %84 : vector<8x8xf32> to vector<1x8x8xf32>
    %86 = arith.truncf %85 : vector<1x8x8xf32> to vector<1x8x8xbf16>
    "tpu.trace_start"() <{level = 10 : i32, message = "bqd,bkd->bqk"}> : () -> ()
    %cst_26 = arith.constant dense<0.000000e+00> : vector<1x8x8xf32>
    %87 = tpu.matmul %80, %83, %cst_26 {dimension_numbers = #tpu.dot_dimension_numbers<[2], [2], [1], [1], [0, 0, 0, 1, 1, 1], [0], [0]>} : vector<1x8x8xbf16>, vector<1x8x8xbf16>, vector<1x8x8xf32> -> vector<1x8x8xf32>
    "tpu.trace_stop"() : () -> ()
    %cst_27 = arith.constant 0.353553385 : f32
    %88 = vector.broadcast %cst_27 : f32 to vector<1x8x8xf32>
    %89 = arith.mulf %87, %88 : vector<1x8x8xf32>
    %cst_28 = arith.constant dense<0xFF800000> : vector<1x8xf32>
    %90 = vector.multi_reduction <maximumf>, %89, %cst_28 [2] : vector<1x8x8xf32> to vector<1x8xf32>
    %91 = vector.shape_cast %90 : vector<1x8xf32> to vector<1x8x1xf32>
    %92 = vector.broadcast %91 : vector<1x8x1xf32> to vector<1x8x8xf32>
    %93 = arith.subf %89, %92 : vector<1x8x8xf32>
    %94 = math.exp %93 : vector<1x8x8xf32>
    %cst_29 = arith.constant dense<0.000000e+00> : vector<1x8xf32>
    %95 = vector.multi_reduction <add>, %94, %cst_29 [2] : vector<1x8x8xf32> to vector<1x8xf32>
    %96 = vector.shape_cast %95 : vector<1x8xf32> to vector<1x8x1xf32>
    %97 = tpu.reciprocal %96 {approx = true} : vector<1x8x1xf32> -> vector<1x8x1xf32>
    %98 = vector.broadcast %97 : vector<1x8x1xf32> to vector<1x8x8xf32>
    %99 = arith.mulf %94, %98 : vector<1x8x8xf32>
    %100 = arith.truncf %99 : vector<1x8x8xf32> to vector<1x8x8xbf16>
    "tpu.trace_start"() <{level = 10 : i32, message = "bqk,bkd->bqd"}> : () -> ()
    %cst_30 = arith.constant dense<0.000000e+00> : vector<1x8x8xf32>
    %101 = tpu.matmul %100, %86, %cst_30 {dimension_numbers = #tpu.dot_dimension_numbers<[2], [1], [1], [2], [0, 0, 0, 1, 1, 2], [0], [0]>} : vector<1x8x8xbf16>, vector<1x8x8xbf16>, vector<1x8x8xf32> -> vector<1x8x8xf32>
    "tpu.trace_stop"() : () -> ()
    %102 = vector.shape_cast %101 : vector<1x8x8xf32> to vector<8x8xf32>
    %103 = vector.extract_strided_slice %25 {offsets = [0, 24], sizes = [8, 8], strides = [1, 1]} : vector<8x32xf32> to vector<8x8xf32>
    %104 = vector.shape_cast %103 : vector<8x8xf32> to vector<1x8x8xf32>
    %105 = arith.truncf %104 : vector<1x8x8xf32> to vector<1x8x8xbf16>
    %106 = vector.extract_strided_slice %26 {offsets = [0, 24], sizes = [8, 8], strides = [1, 1]} : vector<8x32xf32> to vector<8x8xf32>
    %107 = vector.shape_cast %106 : vector<8x8xf32> to vector<1x8x8xf32>
    %108 = arith.truncf %107 : vector<1x8x8xf32> to vector<1x8x8xbf16>
    %109 = vector.extract_strided_slice %27 {offsets = [0, 24], sizes = [8, 8], strides = [1, 1]} : vector<8x32xf32> to vector<8x8xf32>
    %110 = vector.shape_cast %109 : vector<8x8xf32> to vector<1x8x8xf32>
    %111 = arith.truncf %110 : vector<1x8x8xf32> to vector<1x8x8xbf16>
    "tpu.trace_start"() <{level = 10 : i32, message = "bqd,bkd->bqk"}> : () -> ()
    %cst_31 = arith.constant dense<0.000000e+00> : vector<1x8x8xf32>
    %112 = tpu.matmul %105, %108, %cst_31 {dimension_numbers = #tpu.dot_dimension_numbers<[2], [2], [1], [1], [0, 0, 0, 1, 1, 1], [0], [0]>} : vector<1x8x8xbf16>, vector<1x8x8xbf16>, vector<1x8x8xf32> -> vector<1x8x8xf32>
    "tpu.trace_stop"() : () -> ()
    %cst_32 = arith.constant 0.353553385 : f32
    %113 = vector.broadcast %cst_32 : f32 to vector<1x8x8xf32>
    %114 = arith.mulf %112, %113 : vector<1x8x8xf32>
    %cst_33 = arith.constant dense<0xFF800000> : vector<1x8xf32>
    %115 = vector.multi_reduction <maximumf>, %114, %cst_33 [2] : vector<1x8x8xf32> to vector<1x8xf32>
    %116 = vector.shape_cast %115 : vector<1x8xf32> to vector<1x8x1xf32>
    %117 = vector.broadcast %116 : vector<1x8x1xf32> to vector<1x8x8xf32>
    %118 = arith.subf %114, %117 : vector<1x8x8xf32>
    %119 = math.exp %118 : vector<1x8x8xf32>
    %cst_34 = arith.constant dense<0.000000e+00> : vector<1x8xf32>
    %120 = vector.multi_reduction <add>, %119, %cst_34 [2] : vector<1x8x8xf32> to vector<1x8xf32>
    %121 = vector.shape_cast %120 : vector<1x8xf32> to vector<1x8x1xf32>
    %122 = tpu.reciprocal %121 {approx = true} : vector<1x8x1xf32> -> vector<1x8x1xf32>
    %123 = vector.broadcast %122 : vector<1x8x1xf32> to vector<1x8x8xf32>
    %124 = arith.mulf %119, %123 : vector<1x8x8xf32>
    %125 = arith.truncf %124 : vector<1x8x8xf32> to vector<1x8x8xbf16>
    "tpu.trace_start"() <{level = 10 : i32, message = "bqk,bkd->bqd"}> : () -> ()
    %cst_35 = arith.constant dense<0.000000e+00> : vector<1x8x8xf32>
    %126 = tpu.matmul %125, %111, %cst_35 {dimension_numbers = #tpu.dot_dimension_numbers<[2], [1], [1], [2], [0, 0, 0, 1, 1, 2], [0], [0]>} : vector<1x8x8xbf16>, vector<1x8x8xbf16>, vector<1x8x8xf32> -> vector<1x8x8xf32>
    "tpu.trace_stop"() : () -> ()
    %127 = vector.shape_cast %126 : vector<1x8x8xf32> to vector<8x8xf32>
    %128 = tpu.concatenate %52, %77, %102, %127 in 1 : vector<8x8xf32>, vector<8x8xf32>, vector<8x8xf32>, vector<8x8xf32> -> vector<8x32xf32>
    %129 = arith.truncf %128 : vector<8x32xf32> to vector<8x32xbf16>
    %c0_36 = arith.constant 0 : index
    %c0_37 = arith.constant 0 : index
    %130 = vector.load %arg43[%c0_36, %c0_37] : memref<32x32xf32, #tpu.memory_space<vmem>>, vector<32x32xf32>
    %131 = arith.truncf %130 : vector<32x32xf32> to vector<32x32xbf16>
    %cst_38 = arith.constant dense<0.000000e+00> : vector<8x32xf32>
    %132 = tpu.matmul %129, %131, %cst_38 {dimension_numbers = #tpu.dot_dimension_numbers<[1], [0], [0], [1], [0, 0, 1, 1], [], []>} : vector<8x32xbf16>, vector<32x32xbf16>, vector<8x32xf32> -> vector<8x32xf32>
    %c0_39 = arith.constant 0 : index
    %c0_40 = arith.constant 0 : index
    %133 = vector.load %arg41[%c0_39, %c0_40] : memref<1x32xf32, #tpu.memory_space<vmem>>, vector<1x32xf32>
    %134 = vector.broadcast %133 : vector<1x32xf32> to vector<8x32xf32>
    %135 = arith.addf %132, %134 : vector<8x32xf32>
    %136 = vector.shape_cast %135 : vector<8x32xf32> to vector<1x8x32xf32>
    %137 = arith.addf %16, %136 : vector<1x8x32xf32>
    %cst_41 = arith.constant dense<0.000000e+00> : vector<1x8xf32>
    %138 = vector.multi_reduction <add>, %137, %cst_41 [2] : vector<1x8x32xf32> to vector<1x8xf32>
    %139 = vector.shape_cast %138 : vector<1x8xf32> to vector<1x8x1xf32>
    %cst_42 = arith.constant 3.200000e+01 : f32
    %140 = vector.broadcast %cst_42 : f32 to vector<1x8x1xf32>
    %141 = arith.divf %139, %140 : vector<1x8x1xf32>
    %142 = vector.broadcast %141 : vector<1x8x1xf32> to vector<1x8x32xf32>
    %143 = arith.subf %137, %142 : vector<1x8x32xf32>
    %144 = arith.mulf %143, %143 : vector<1x8x32xf32>
    %cst_43 = arith.constant dense<0.000000e+00> : vector<1x8xf32>
    %145 = vector.multi_reduction <add>, %144, %cst_43 [2] : vector<1x8x32xf32> to vector<1x8xf32>
    %146 = vector.shape_cast %145 : vector<1x8xf32> to vector<1x8x1xf32>
    %cst_44 = arith.constant 3.200000e+01 : f32
    %147 = vector.broadcast %cst_44 : f32 to vector<1x8x1xf32>
    %148 = arith.divf %146, %147 : vector<1x8x1xf32>
    %149 = vector.broadcast %141 : vector<1x8x1xf32> to vector<1x8x32xf32>
    %150 = arith.subf %137, %149 : vector<1x8x32xf32>
    %cst_45 = arith.constant 9.99999974E-6 : f32
    %151 = vector.broadcast %cst_45 : f32 to vector<1x8x1xf32>
    %152 = arith.addf %148, %151 : vector<1x8x1xf32>
    %153 = math.rsqrt %152 : vector<1x8x1xf32>
    %154 = vector.broadcast %153 : vector<1x8x1xf32> to vector<1x8x32xf32>
    %155 = arith.mulf %150, %154 : vector<1x8x32xf32>
    %c0_46 = arith.constant 0 : index
    %c0_47 = arith.constant 0 : index
    %156 = vector.load %arg36[%c0_46, %c0_47] : memref<1x32xf32, #tpu.memory_space<vmem>>, vector<1x32xf32>
    %157 = vector.shape_cast %156 : vector<1x32xf32> to vector<1x1x32xf32>
    %158 = vector.broadcast %157 : vector<1x1x32xf32> to vector<1x8x32xf32>
    %159 = arith.mulf %155, %158 : vector<1x8x32xf32>
    %c0_48 = arith.constant 0 : index
    %c0_49 = arith.constant 0 : index
    %160 = vector.load %arg35[%c0_48, %c0_49] : memref<1x32xf32, #tpu.memory_space<vmem>>, vector<1x32xf32>
    %161 = vector.shape_cast %160 : vector<1x32xf32> to vector<1x1x32xf32>
    %162 = vector.broadcast %161 : vector<1x1x32xf32> to vector<1x8x32xf32>
    %163 = arith.addf %159, %162 : vector<1x8x32xf32>
    %164 = vector.shape_cast %163 : vector<1x8x32xf32> to vector<8x32xf32>
    %165 = arith.truncf %164 : vector<8x32xf32> to vector<8x32xbf16>
    %c0_50 = arith.constant 0 : index
    %c0_51 = arith.constant 0 : index
    %166 = vector.load %arg34[%c0_50, %c0_51] : memref<32x32xf32, #tpu.memory_space<vmem>>, vector<32x32xf32>
    %167 = arith.truncf %166 : vector<32x32xf32> to vector<32x32xbf16>
    %cst_52 = arith.constant dense<0.000000e+00> : vector<8x32xf32>
    %168 = tpu.matmul %165, %167, %cst_52 {dimension_numbers = #tpu.dot_dimension_numbers<[1], [0], [0], [1], [0, 0, 1, 1], [], []>} : vector<8x32xbf16>, vector<32x32xbf16>, vector<8x32xf32> -> vector<8x32xf32>
    %c0_53 = arith.constant 0 : index
    %c0_54 = arith.constant 0 : index
    %169 = vector.load %arg31[%c0_53, %c0_54] : memref<1x32xf32, #tpu.memory_space<vmem>>, vector<1x32xf32>
    %170 = vector.broadcast %169 : vector<1x32xf32> to vector<8x32xf32>
    %171 = arith.addf %168, %170 : vector<8x32xf32>
    %172 = vector.shape_cast %14 : vector<1x8x32xf32> to vector<8x32xf32>
    %173 = arith.truncf %172 : vector<8x32xf32> to vector<8x32xbf16>
    %c0_55 = arith.constant 0 : index
    %c0_56 = arith.constant 0 : index
    %174 = vector.load %arg32[%c0_55, %c0_56] : memref<32x64xf32, #tpu.memory_space<vmem>>, vector<32x64xf32>
    %175 = arith.truncf %174 : vector<32x64xf32> to vector<32x64xbf16>
    %cst_57 = arith.constant dense<0.000000e+00> : vector<8x64xf32>
    %176 = tpu.matmul %173, %175, %cst_57 {dimension_numbers = #tpu.dot_dimension_numbers<[1], [0], [0], [1], [0, 0, 1, 1], [], []>} : vector<8x32xbf16>, vector<32x64xbf16>, vector<8x64xf32> -> vector<8x64xf32>
    %c0_58 = arith.constant 0 : index
    %c0_59 = arith.constant 0 : index
    %177 = vector.load %arg29[%c0_58, %c0_59] : memref<1x64xf32, #tpu.memory_space<vmem>>, vector<1x64xf32>
    %178 = vector.broadcast %177 : vector<1x64xf32> to vector<8x64xf32>
    %179 = arith.addf %176, %178 : vector<8x64xf32>
    %180 = vector.extract_strided_slice %179 {offsets = [0, 0], sizes = [8, 32], strides = [1, 1]} : vector<8x64xf32> to vector<8x32xf32>
    %181 = vector.extract_strided_slice %179 {offsets = [0, 32], sizes = [8, 32], strides = [1, 1]} : vector<8x64xf32> to vector<8x32xf32>
    %182 = vector.extract_strided_slice %171 {offsets = [0, 0], sizes = [8, 8], strides = [1, 1]} : vector<8x32xf32> to vector<8x8xf32>
    %183 = vector.shape_cast %182 : vector<8x8xf32> to vector<1x8x8xf32>
    %184 = arith.truncf %183 : vector<1x8x8xf32> to vector<1x8x8xbf16>
    %185 = vector.extract_strided_slice %180 {offsets = [0, 0], sizes = [8, 8], strides = [1, 1]} : vector<8x32xf32> to vector<8x8xf32>
    %186 = vector.shape_cast %185 : vector<8x8xf32> to vector<1x8x8xf32>
    %187 = arith.truncf %186 : vector<1x8x8xf32> to vector<1x8x8xbf16>
    %188 = vector.extract_strided_slice %181 {offsets = [0, 0], sizes = [8, 8], strides = [1, 1]} : vector<8x32xf32> to vector<8x8xf32>
    %189 = vector.shape_cast %188 : vector<8x8xf32> to vector<1x8x8xf32>
    %190 = arith.truncf %189 : vector<1x8x8xf32> to vector<1x8x8xbf16>
    "tpu.trace_start"() <{level = 10 : i32, message = "bqd,bkd->bqk"}> : () -> ()
    %cst_60 = arith.constant dense<0.000000e+00> : vector<1x8x8xf32>
    %191 = tpu.matmul %184, %187, %cst_60 {dimension_numbers = #tpu.dot_dimension_numbers<[2], [2], [1], [1], [0, 0, 0, 1, 1, 1], [0], [0]>} : vector<1x8x8xbf16>, vector<1x8x8xbf16>, vector<1x8x8xf32> -> vector<1x8x8xf32>
    "tpu.trace_stop"() : () -> ()
    %cst_61 = arith.constant 0.353553385 : f32
    %192 = vector.broadcast %cst_61 : f32 to vector<1x8x8xf32>
    %193 = arith.mulf %191, %192 : vector<1x8x8xf32>
    %cst_62 = arith.constant dense<0xFF800000> : vector<1x8xf32>
    %194 = vector.multi_reduction <maximumf>, %193, %cst_62 [2] : vector<1x8x8xf32> to vector<1x8xf32>
    %195 = vector.shape_cast %194 : vector<1x8xf32> to vector<1x8x1xf32>
    %196 = vector.broadcast %195 : vector<1x8x1xf32> to vector<1x8x8xf32>
    %197 = arith.subf %193, %196 : vector<1x8x8xf32>
    %198 = math.exp %197 : vector<1x8x8xf32>
    %cst_63 = arith.constant dense<0.000000e+00> : vector<1x8xf32>
    %199 = vector.multi_reduction <add>, %198, %cst_63 [2] : vector<1x8x8xf32> to vector<1x8xf32>
    %200 = vector.shape_cast %199 : vector<1x8xf32> to vector<1x8x1xf32>
    %201 = tpu.reciprocal %200 {approx = true} : vector<1x8x1xf32> -> vector<1x8x1xf32>
    %202 = vector.broadcast %201 : vector<1x8x1xf32> to vector<1x8x8xf32>
    %203 = arith.mulf %198, %202 : vector<1x8x8xf32>
    %204 = arith.truncf %203 : vector<1x8x8xf32> to vector<1x8x8xbf16>
    "tpu.trace_start"() <{level = 10 : i32, message = "bqk,bkd->bqd"}> : () -> ()
    %cst_64 = arith.constant dense<0.000000e+00> : vector<1x8x8xf32>
    %205 = tpu.matmul %204, %190, %cst_64 {dimension_numbers = #tpu.dot_dimension_numbers<[2], [1], [1], [2], [0, 0, 0, 1, 1, 2], [0], [0]>} : vector<1x8x8xbf16>, vector<1x8x8xbf16>, vector<1x8x8xf32> -> vector<1x8x8xf32>
    "tpu.trace_stop"() : () -> ()
    %206 = vector.shape_cast %205 : vector<1x8x8xf32> to vector<8x8xf32>
    %207 = vector.extract_strided_slice %171 {offsets = [0, 8], sizes = [8, 8], strides = [1, 1]} : vector<8x32xf32> to vector<8x8xf32>
    %208 = vector.shape_cast %207 : vector<8x8xf32> to vector<1x8x8xf32>
    %209 = arith.truncf %208 : vector<1x8x8xf32> to vector<1x8x8xbf16>
    %210 = vector.extract_strided_slice %180 {offsets = [0, 8], sizes = [8, 8], strides = [1, 1]} : vector<8x32xf32> to vector<8x8xf32>
    %211 = vector.shape_cast %210 : vector<8x8xf32> to vector<1x8x8xf32>
    %212 = arith.truncf %211 : vector<1x8x8xf32> to vector<1x8x8xbf16>
    %213 = vector.extract_strided_slice %181 {offsets = [0, 8], sizes = [8, 8], strides = [1, 1]} : vector<8x32xf32> to vector<8x8xf32>
    %214 = vector.shape_cast %213 : vector<8x8xf32> to vector<1x8x8xf32>
    %215 = arith.truncf %214 : vector<1x8x8xf32> to vector<1x8x8xbf16>
    "tpu.trace_start"() <{level = 10 : i32, message = "bqd,bkd->bqk"}> : () -> ()
    %cst_65 = arith.constant dense<0.000000e+00> : vector<1x8x8xf32>
    %216 = tpu.matmul %209, %212, %cst_65 {dimension_numbers = #tpu.dot_dimension_numbers<[2], [2], [1], [1], [0, 0, 0, 1, 1, 1], [0], [0]>} : vector<1x8x8xbf16>, vector<1x8x8xbf16>, vector<1x8x8xf32> -> vector<1x8x8xf32>
    "tpu.trace_stop"() : () -> ()
    %cst_66 = arith.constant 0.353553385 : f32
    %217 = vector.broadcast %cst_66 : f32 to vector<1x8x8xf32>
    %218 = arith.mulf %216, %217 : vector<1x8x8xf32>
    %cst_67 = arith.constant dense<0xFF800000> : vector<1x8xf32>
    %219 = vector.multi_reduction <maximumf>, %218, %cst_67 [2] : vector<1x8x8xf32> to vector<1x8xf32>
    %220 = vector.shape_cast %219 : vector<1x8xf32> to vector<1x8x1xf32>
    %221 = vector.broadcast %220 : vector<1x8x1xf32> to vector<1x8x8xf32>
    %222 = arith.subf %218, %221 : vector<1x8x8xf32>
    %223 = math.exp %222 : vector<1x8x8xf32>
    %cst_68 = arith.constant dense<0.000000e+00> : vector<1x8xf32>
    %224 = vector.multi_reduction <add>, %223, %cst_68 [2] : vector<1x8x8xf32> to vector<1x8xf32>
    %225 = vector.shape_cast %224 : vector<1x8xf32> to vector<1x8x1xf32>
    %226 = tpu.reciprocal %225 {approx = true} : vector<1x8x1xf32> -> vector<1x8x1xf32>
    %227 = vector.broadcast %226 : vector<1x8x1xf32> to vector<1x8x8xf32>
    %228 = arith.mulf %223, %227 : vector<1x8x8xf32>
    %229 = arith.truncf %228 : vector<1x8x8xf32> to vector<1x8x8xbf16>
    "tpu.trace_start"() <{level = 10 : i32, message = "bqk,bkd->bqd"}> : () -> ()
    %cst_69 = arith.constant dense<0.000000e+00> : vector<1x8x8xf32>
    %230 = tpu.matmul %229, %215, %cst_69 {dimension_numbers = #tpu.dot_dimension_numbers<[2], [1], [1], [2], [0, 0, 0, 1, 1, 2], [0], [0]>} : vector<1x8x8xbf16>, vector<1x8x8xbf16>, vector<1x8x8xf32> -> vector<1x8x8xf32>
    "tpu.trace_stop"() : () -> ()
    %231 = vector.shape_cast %230 : vector<1x8x8xf32> to vector<8x8xf32>
    %232 = vector.extract_strided_slice %171 {offsets = [0, 16], sizes = [8, 8], strides = [1, 1]} : vector<8x32xf32> to vector<8x8xf32>
    %233 = vector.shape_cast %232 : vector<8x8xf32> to vector<1x8x8xf32>
    %234 = arith.truncf %233 : vector<1x8x8xf32> to vector<1x8x8xbf16>
    %235 = vector.extract_strided_slice %180 {offsets = [0, 16], sizes = [8, 8], strides = [1, 1]} : vector<8x32xf32> to vector<8x8xf32>
    %236 = vector.shape_cast %235 : vector<8x8xf32> to vector<1x8x8xf32>
    %237 = arith.truncf %236 : vector<1x8x8xf32> to vector<1x8x8xbf16>
    %238 = vector.extract_strided_slice %181 {offsets = [0, 16], sizes = [8, 8], strides = [1, 1]} : vector<8x32xf32> to vector<8x8xf32>
    %239 = vector.shape_cast %238 : vector<8x8xf32> to vector<1x8x8xf32>
    %240 = arith.truncf %239 : vector<1x8x8xf32> to vector<1x8x8xbf16>
    "tpu.trace_start"() <{level = 10 : i32, message = "bqd,bkd->bqk"}> : () -> ()
    %cst_70 = arith.constant dense<0.000000e+00> : vector<1x8x8xf32>
    %241 = tpu.matmul %234, %237, %cst_70 {dimension_numbers = #tpu.dot_dimension_numbers<[2], [2], [1], [1], [0, 0, 0, 1, 1, 1], [0], [0]>} : vector<1x8x8xbf16>, vector<1x8x8xbf16>, vector<1x8x8xf32> -> vector<1x8x8xf32>
    "tpu.trace_stop"() : () -> ()
    %cst_71 = arith.constant 0.353553385 : f32
    %242 = vector.broadcast %cst_71 : f32 to vector<1x8x8xf32>
    %243 = arith.mulf %241, %242 : vector<1x8x8xf32>
    %cst_72 = arith.constant dense<0xFF800000> : vector<1x8xf32>
    %244 = vector.multi_reduction <maximumf>, %243, %cst_72 [2] : vector<1x8x8xf32> to vector<1x8xf32>
    %245 = vector.shape_cast %244 : vector<1x8xf32> to vector<1x8x1xf32>
    %246 = vector.broadcast %245 : vector<1x8x1xf32> to vector<1x8x8xf32>
    %247 = arith.subf %243, %246 : vector<1x8x8xf32>
    %248 = math.exp %247 : vector<1x8x8xf32>
    %cst_73 = arith.constant dense<0.000000e+00> : vector<1x8xf32>
    %249 = vector.multi_reduction <add>, %248, %cst_73 [2] : vector<1x8x8xf32> to vector<1x8xf32>
    %250 = vector.shape_cast %249 : vector<1x8xf32> to vector<1x8x1xf32>
    %251 = tpu.reciprocal %250 {approx = true} : vector<1x8x1xf32> -> vector<1x8x1xf32>
    %252 = vector.broadcast %251 : vector<1x8x1xf32> to vector<1x8x8xf32>
    %253 = arith.mulf %248, %252 : vector<1x8x8xf32>
    %254 = arith.truncf %253 : vector<1x8x8xf32> to vector<1x8x8xbf16>
    "tpu.trace_start"() <{level = 10 : i32, message = "bqk,bkd->bqd"}> : () -> ()
    %cst_74 = arith.constant dense<0.000000e+00> : vector<1x8x8xf32>
    %255 = tpu.matmul %254, %240, %cst_74 {dimension_numbers = #tpu.dot_dimension_numbers<[2], [1], [1], [2], [0, 0, 0, 1, 1, 2], [0], [0]>} : vector<1x8x8xbf16>, vector<1x8x8xbf16>, vector<1x8x8xf32> -> vector<1x8x8xf32>
    "tpu.trace_stop"() : () -> ()
    %256 = vector.shape_cast %255 : vector<1x8x8xf32> to vector<8x8xf32>
    %257 = vector.extract_strided_slice %171 {offsets = [0, 24], sizes = [8, 8], strides = [1, 1]} : vector<8x32xf32> to vector<8x8xf32>
    %258 = vector.shape_cast %257 : vector<8x8xf32> to vector<1x8x8xf32>
    %259 = arith.truncf %258 : vector<1x8x8xf32> to vector<1x8x8xbf16>
    %260 = vector.extract_strided_slice %180 {offsets = [0, 24], sizes = [8, 8], strides = [1, 1]} : vector<8x32xf32> to vector<8x8xf32>
    %261 = vector.shape_cast %260 : vector<8x8xf32> to vector<1x8x8xf32>
    %262 = arith.truncf %261 : vector<1x8x8xf32> to vector<1x8x8xbf16>
    %263 = vector.extract_strided_slice %181 {offsets = [0, 24], sizes = [8, 8], strides = [1, 1]} : vector<8x32xf32> to vector<8x8xf32>
    %264 = vector.shape_cast %263 : vector<8x8xf32> to vector<1x8x8xf32>
    %265 = arith.truncf %264 : vector<1x8x8xf32> to vector<1x8x8xbf16>
    "tpu.trace_start"() <{level = 10 : i32, message = "bqd,bkd->bqk"}> : () -> ()
    %cst_75 = arith.constant dense<0.000000e+00> : vector<1x8x8xf32>
    %266 = tpu.matmul %259, %262, %cst_75 {dimension_numbers = #tpu.dot_dimension_numbers<[2], [2], [1], [1], [0, 0, 0, 1, 1, 1], [0], [0]>} : vector<1x8x8xbf16>, vector<1x8x8xbf16>, vector<1x8x8xf32> -> vector<1x8x8xf32>
    "tpu.trace_stop"() : () -> ()
    %cst_76 = arith.constant 0.353553385 : f32
    %267 = vector.broadcast %cst_76 : f32 to vector<1x8x8xf32>
    %268 = arith.mulf %266, %267 : vector<1x8x8xf32>
    %cst_77 = arith.constant dense<0xFF800000> : vector<1x8xf32>
    %269 = vector.multi_reduction <maximumf>, %268, %cst_77 [2] : vector<1x8x8xf32> to vector<1x8xf32>
    %270 = vector.shape_cast %269 : vector<1x8xf32> to vector<1x8x1xf32>
    %271 = vector.broadcast %270 : vector<1x8x1xf32> to vector<1x8x8xf32>
    %272 = arith.subf %268, %271 : vector<1x8x8xf32>
    %273 = math.exp %272 : vector<1x8x8xf32>
    %cst_78 = arith.constant dense<0.000000e+00> : vector<1x8xf32>
    %274 = vector.multi_reduction <add>, %273, %cst_78 [2] : vector<1x8x8xf32> to vector<1x8xf32>
    %275 = vector.shape_cast %274 : vector<1x8xf32> to vector<1x8x1xf32>
    %276 = tpu.reciprocal %275 {approx = true} : vector<1x8x1xf32> -> vector<1x8x1xf32>
    %277 = vector.broadcast %276 : vector<1x8x1xf32> to vector<1x8x8xf32>
    %278 = arith.mulf %273, %277 : vector<1x8x8xf32>
    %279 = arith.truncf %278 : vector<1x8x8xf32> to vector<1x8x8xbf16>
    "tpu.trace_start"() <{level = 10 : i32, message = "bqk,bkd->bqd"}> : () -> ()
    %cst_79 = arith.constant dense<0.000000e+00> : vector<1x8x8xf32>
    %280 = tpu.matmul %279, %265, %cst_79 {dimension_numbers = #tpu.dot_dimension_numbers<[2], [1], [1], [2], [0, 0, 0, 1, 1, 2], [0], [0]>} : vector<1x8x8xbf16>, vector<1x8x8xbf16>, vector<1x8x8xf32> -> vector<1x8x8xf32>
    "tpu.trace_stop"() : () -> ()
    %281 = vector.shape_cast %280 : vector<1x8x8xf32> to vector<8x8xf32>
    %282 = tpu.concatenate %206, %231, %256, %281 in 1 : vector<8x8xf32>, vector<8x8xf32>, vector<8x8xf32>, vector<8x8xf32> -> vector<8x32xf32>
    %283 = arith.truncf %282 : vector<8x32xf32> to vector<8x32xbf16>
    %c0_80 = arith.constant 0 : index
    %c0_81 = arith.constant 0 : index
    %284 = vector.load %arg33[%c0_80, %c0_81] : memref<32x32xf32, #tpu.memory_space<vmem>>, vector<32x32xf32>
    %285 = arith.truncf %284 : vector<32x32xf32> to vector<32x32xbf16>
    %cst_82 = arith.constant dense<0.000000e+00> : vector<8x32xf32>
    %286 = tpu.matmul %283, %285, %cst_82 {dimension_numbers = #tpu.dot_dimension_numbers<[1], [0], [0], [1], [0, 0, 1, 1], [], []>} : vector<8x32xbf16>, vector<32x32xbf16>, vector<8x32xf32> -> vector<8x32xf32>
    %c0_83 = arith.constant 0 : index
    %c0_84 = arith.constant 0 : index
    %287 = vector.load %arg30[%c0_83, %c0_84] : memref<1x32xf32, #tpu.memory_space<vmem>>, vector<1x32xf32>
    %288 = vector.broadcast %287 : vector<1x32xf32> to vector<8x32xf32>
    %289 = arith.addf %286, %288 : vector<8x32xf32>
    %290 = vector.shape_cast %289 : vector<8x32xf32> to vector<1x8x32xf32>
    %291 = arith.addf %163, %290 : vector<1x8x32xf32>
    %cst_85 = arith.constant dense<0.000000e+00> : vector<1x8xf32>
    %292 = vector.multi_reduction <add>, %291, %cst_85 [2] : vector<1x8x32xf32> to vector<1x8xf32>
    %293 = vector.shape_cast %292 : vector<1x8xf32> to vector<1x8x1xf32>
    %cst_86 = arith.constant 3.200000e+01 : f32
    %294 = vector.broadcast %cst_86 : f32 to vector<1x8x1xf32>
    %295 = arith.divf %293, %294 : vector<1x8x1xf32>
    %296 = vector.broadcast %295 : vector<1x8x1xf32> to vector<1x8x32xf32>
    %297 = arith.subf %291, %296 : vector<1x8x32xf32>
    %298 = arith.mulf %297, %297 : vector<1x8x32xf32>
    %cst_87 = arith.constant dense<0.000000e+00> : vector<1x8xf32>
    %299 = vector.multi_reduction <add>, %298, %cst_87 [2] : vector<1x8x32xf32> to vector<1x8xf32>
    %300 = vector.shape_cast %299 : vector<1x8xf32> to vector<1x8x1xf32>
    %cst_88 = arith.constant 3.200000e+01 : f32
    %301 = vector.broadcast %cst_88 : f32 to vector<1x8x1xf32>
    %302 = arith.divf %300, %301 : vector<1x8x1xf32>
    %303 = vector.broadcast %295 : vector<1x8x1xf32> to vector<1x8x32xf32>
    %304 = arith.subf %291, %303 : vector<1x8x32xf32>
    %cst_89 = arith.constant 9.99999974E-6 : f32
    %305 = vector.broadcast %cst_89 : f32 to vector<1x8x1xf32>
    %306 = arith.addf %302, %305 : vector<1x8x1xf32>
    %307 = math.rsqrt %306 : vector<1x8x1xf32>
    %308 = vector.broadcast %307 : vector<1x8x1xf32> to vector<1x8x32xf32>
    %309 = arith.mulf %304, %308 : vector<1x8x32xf32>
    %c0_90 = arith.constant 0 : index
    %c0_91 = arith.constant 0 : index
    %310 = vector.load %arg38[%c0_90, %c0_91] : memref<1x32xf32, #tpu.memory_space<vmem>>, vector<1x32xf32>
    %311 = vector.shape_cast %310 : vector<1x32xf32> to vector<1x1x32xf32>
    %312 = vector.broadcast %311 : vector<1x1x32xf32> to vector<1x8x32xf32>
    %313 = arith.mulf %309, %312 : vector<1x8x32xf32>
    %c0_92 = arith.constant 0 : index
    %c0_93 = arith.constant 0 : index
    %314 = vector.load %arg37[%c0_92, %c0_93] : memref<1x32xf32, #tpu.memory_space<vmem>>, vector<1x32xf32>
    %315 = vector.shape_cast %314 : vector<1x32xf32> to vector<1x1x32xf32>
    %316 = vector.broadcast %315 : vector<1x1x32xf32> to vector<1x8x32xf32>
    %317 = arith.addf %313, %316 : vector<1x8x32xf32>
    %318 = vector.shape_cast %317 : vector<1x8x32xf32> to vector<8x32xf32>
    %319 = arith.truncf %318 : vector<8x32xf32> to vector<8x32xbf16>
    %c0_94 = arith.constant 0 : index
    %c0_95 = arith.constant 0 : index
    %320 = vector.load %arg45[%c0_94, %c0_95] : memref<32x64xf32, #tpu.memory_space<vmem>>, vector<32x64xf32>
    %321 = arith.truncf %320 : vector<32x64xf32> to vector<32x64xbf16>
    %cst_96 = arith.constant dense<0.000000e+00> : vector<8x64xf32>
    %322 = tpu.matmul %319, %321, %cst_96 {dimension_numbers = #tpu.dot_dimension_numbers<[1], [0], [0], [1], [0, 0, 1, 1], [], []>} : vector<8x32xbf16>, vector<32x64xbf16>, vector<8x64xf32> -> vector<8x64xf32>
    %c0_97 = arith.constant 0 : index
    %c0_98 = arith.constant 0 : index
    %323 = vector.load %arg27[%c0_97, %c0_98] : memref<1x64xf32, #tpu.memory_space<vmem>>, vector<1x64xf32>
    %324 = vector.broadcast %323 : vector<1x64xf32> to vector<8x64xf32>
    %325 = arith.addf %322, %324 : vector<8x64xf32>
    %cst_99 = arith.constant 0.000000e+00 : f32
    %326 = vector.broadcast %cst_99 : f32 to vector<8x64xf32>
    %327 = arith.maximumf %325, %326 : vector<8x64xf32>
    %328 = arith.truncf %327 : vector<8x64xf32> to vector<8x64xbf16>
    %c0_100 = arith.constant 0 : index
    %c0_101 = arith.constant 0 : index
    %329 = vector.load %arg46[%c0_100, %c0_101] : memref<64x32xf32, #tpu.memory_space<vmem>>, vector<64x32xf32>
    %330 = arith.truncf %329 : vector<64x32xf32> to vector<64x32xbf16>
    %cst_102 = arith.constant dense<0.000000e+00> : vector<8x32xf32>
    %331 = tpu.matmul %328, %330, %cst_102 {dimension_numbers = #tpu.dot_dimension_numbers<[1], [0], [0], [1], [0, 0, 1, 1], [], []>} : vector<8x64xbf16>, vector<64x32xbf16>, vector<8x32xf32> -> vector<8x32xf32>
    %c0_103 = arith.constant 0 : index
    %c0_104 = arith.constant 0 : index
    %332 = vector.load %arg28[%c0_103, %c0_104] : memref<1x32xf32, #tpu.memory_space<vmem>>, vector<1x32xf32>
    %333 = vector.broadcast %332 : vector<1x32xf32> to vector<8x32xf32>
    %334 = arith.addf %331, %333 : vector<8x32xf32>
    %335 = vector.shape_cast %334 : vector<8x32xf32> to vector<1x8x32xf32>
    %336 = arith.addf %317, %335 : vector<1x8x32xf32>
    %cst_105 = arith.constant dense<0.000000e+00> : vector<1x8xf32>
    %337 = vector.multi_reduction <add>, %336, %cst_105 [2] : vector<1x8x32xf32> to vector<1x8xf32>
    %338 = vector.shape_cast %337 : vector<1x8xf32> to vector<1x8x1xf32>
    %cst_106 = arith.constant 3.200000e+01 : f32
    %339 = vector.broadcast %cst_106 : f32 to vector<1x8x1xf32>
    %340 = arith.divf %338, %339 : vector<1x8x1xf32>
    %341 = vector.broadcast %340 : vector<1x8x1xf32> to vector<1x8x32xf32>
    %342 = arith.subf %336, %341 : vector<1x8x32xf32>
    %343 = arith.mulf %342, %342 : vector<1x8x32xf32>
    %cst_107 = arith.constant dense<0.000000e+00> : vector<1x8xf32>
    %344 = vector.multi_reduction <add>, %343, %cst_107 [2] : vector<1x8x32xf32> to vector<1x8xf32>
    %345 = vector.shape_cast %344 : vector<1x8xf32> to vector<1x8x1xf32>
    %cst_108 = arith.constant 3.200000e+01 : f32
    %346 = vector.broadcast %cst_108 : f32 to vector<1x8x1xf32>
    %347 = arith.divf %345, %346 : vector<1x8x1xf32>
    %348 = vector.broadcast %340 : vector<1x8x1xf32> to vector<1x8x32xf32>
    %349 = arith.subf %336, %348 : vector<1x8x32xf32>
    %cst_109 = arith.constant 9.99999974E-6 : f32
    %350 = vector.broadcast %cst_109 : f32 to vector<1x8x1xf32>
    %351 = arith.addf %347, %350 : vector<1x8x1xf32>
    %352 = math.rsqrt %351 : vector<1x8x1xf32>
    %353 = vector.broadcast %352 : vector<1x8x1xf32> to vector<1x8x32xf32>
    %354 = arith.mulf %349, %353 : vector<1x8x32xf32>
    %c0_110 = arith.constant 0 : index
    %c0_111 = arith.constant 0 : index
    %355 = vector.load %arg40[%c0_110, %c0_111] : memref<1x32xf32, #tpu.memory_space<vmem>>, vector<1x32xf32>
    %356 = vector.shape_cast %355 : vector<1x32xf32> to vector<1x1x32xf32>
    %357 = vector.broadcast %356 : vector<1x1x32xf32> to vector<1x8x32xf32>
    %358 = arith.mulf %354, %357 : vector<1x8x32xf32>
    %c0_112 = arith.constant 0 : index
    %c0_113 = arith.constant 0 : index
    %359 = vector.load %arg39[%c0_112, %c0_113] : memref<1x32xf32, #tpu.memory_space<vmem>>, vector<1x32xf32>
    %360 = vector.shape_cast %359 : vector<1x32xf32> to vector<1x1x32xf32>
    %361 = vector.broadcast %360 : vector<1x1x32xf32> to vector<1x8x32xf32>
    %362 = arith.addf %358, %361 : vector<1x8x32xf32>
    %cst_114 = arith.constant dense<0.000000e+00> : vector<1x8xf32>
    %363 = vector.multi_reduction <add>, %362, %cst_114 [2] : vector<1x8x32xf32> to vector<1x8xf32>
    %364 = vector.shape_cast %363 : vector<1x8xf32> to vector<1x8x1xf32>
    %cst_115 = arith.constant 3.200000e+01 : f32
    %365 = vector.broadcast %cst_115 : f32 to vector<1x8x1xf32>
    %366 = arith.divf %364, %365 : vector<1x8x1xf32>
    %367 = vector.broadcast %366 : vector<1x8x1xf32> to vector<1x8x32xf32>
    %368 = arith.subf %362, %367 : vector<1x8x32xf32>
    %369 = arith.mulf %368, %368 : vector<1x8x32xf32>
    %cst_116 = arith.constant dense<0.000000e+00> : vector<1x8xf32>
    %370 = vector.multi_reduction <add>, %369, %cst_116 [2] : vector<1x8x32xf32> to vector<1x8xf32>
    %371 = vector.shape_cast %370 : vector<1x8xf32> to vector<1x8x1xf32>
    %cst_117 = arith.constant 3.200000e+01 : f32
    %372 = vector.broadcast %cst_117 : f32 to vector<1x8x1xf32>
    %373 = arith.divf %371, %372 : vector<1x8x1xf32>
    %374 = vector.broadcast %366 : vector<1x8x1xf32> to vector<1x8x32xf32>
    %375 = arith.subf %362, %374 : vector<1x8x32xf32>
    %cst_118 = arith.constant 9.99999974E-6 : f32
    %376 = vector.broadcast %cst_118 : f32 to vector<1x8x1xf32>
    %377 = arith.addf %373, %376 : vector<1x8x1xf32>
    %378 = math.rsqrt %377 : vector<1x8x1xf32>
    %379 = vector.broadcast %378 : vector<1x8x1xf32> to vector<1x8x32xf32>
    %380 = arith.mulf %375, %379 : vector<1x8x32xf32>
    %c0_119 = arith.constant 0 : index
    %c0_120 = arith.constant 0 : index
    %381 = vector.load %arg48[%c0_119, %c0_120] : memref<1x32xf32, #tpu.memory_space<vmem>>, vector<1x32xf32>
    %382 = vector.shape_cast %381 : vector<1x32xf32> to vector<1x1x32xf32>
    %383 = vector.broadcast %382 : vector<1x1x32xf32> to vector<1x8x32xf32>
    %384 = arith.mulf %380, %383 : vector<1x8x32xf32>
    %c0_121 = arith.constant 0 : index
    %c0_122 = arith.constant 0 : index
    %385 = vector.load %arg47[%c0_121, %c0_122] : memref<1x32xf32, #tpu.memory_space<vmem>>, vector<1x32xf32>
    %386 = vector.shape_cast %385 : vector<1x32xf32> to vector<1x1x32xf32>
    %387 = vector.broadcast %386 : vector<1x1x32xf32> to vector<1x8x32xf32>
    %388 = arith.addf %384, %387 : vector<1x8x32xf32>
    %389 = vector.shape_cast %388 : vector<1x8x32xf32> to vector<8x32xf32>
    %390 = arith.truncf %389 : vector<8x32xf32> to vector<8x32xbf16>
    %c0_123 = arith.constant 0 : index
    %c0_124 = arith.constant 0 : index
    %391 = vector.load %arg58[%c0_123, %c0_124] : memref<32x96xf32, #tpu.memory_space<vmem>>, vector<32x96xf32>
    %392 = arith.truncf %391 : vector<32x96xf32> to vector<32x96xbf16>
    %cst_125 = arith.constant dense<0.000000e+00> : vector<8x96xf32>
    %393 = tpu.matmul %390, %392, %cst_125 {dimension_numbers = #tpu.dot_dimension_numbers<[1], [0], [0], [1], [0, 0, 1, 1], [], []>} : vector<8x32xbf16>, vector<32x96xbf16>, vector<8x96xf32> -> vector<8x96xf32>
    %c0_126 = arith.constant 0 : index
    %c0_127 = arith.constant 0 : index
    %394 = vector.load %arg56[%c0_126, %c0_127] : memref<1x96xf32, #tpu.memory_space<vmem>>, vector<1x96xf32>
    %395 = vector.broadcast %394 : vector<1x96xf32> to vector<8x96xf32>
    %396 = arith.addf %393, %395 : vector<8x96xf32>
    %397 = vector.extract_strided_slice %396 {offsets = [0, 0], sizes = [8, 32], strides = [1, 1]} : vector<8x96xf32> to vector<8x32xf32>
    %398 = vector.extract_strided_slice %396 {offsets = [0, 32], sizes = [8, 32], strides = [1, 1]} : vector<8x96xf32> to vector<8x32xf32>
    %399 = vector.extract_strided_slice %396 {offsets = [0, 64], sizes = [8, 32], strides = [1, 1]} : vector<8x96xf32> to vector<8x32xf32>
    %400 = vector.extract_strided_slice %397 {offsets = [0, 0], sizes = [8, 8], strides = [1, 1]} : vector<8x32xf32> to vector<8x8xf32>
    %401 = vector.shape_cast %400 : vector<8x8xf32> to vector<1x8x8xf32>
    %402 = arith.truncf %401 : vector<1x8x8xf32> to vector<1x8x8xbf16>
    %403 = vector.extract_strided_slice %398 {offsets = [0, 0], sizes = [8, 8], strides = [1, 1]} : vector<8x32xf32> to vector<8x8xf32>
    %404 = vector.shape_cast %403 : vector<8x8xf32> to vector<1x8x8xf32>
    %405 = arith.truncf %404 : vector<1x8x8xf32> to vector<1x8x8xbf16>
    %406 = vector.extract_strided_slice %399 {offsets = [0, 0], sizes = [8, 8], strides = [1, 1]} : vector<8x32xf32> to vector<8x8xf32>
    %407 = vector.shape_cast %406 : vector<8x8xf32> to vector<1x8x8xf32>
    %408 = arith.truncf %407 : vector<1x8x8xf32> to vector<1x8x8xbf16>
    "tpu.trace_start"() <{level = 10 : i32, message = "bqd,bkd->bqk"}> : () -> ()
    %cst_128 = arith.constant dense<0.000000e+00> : vector<1x8x8xf32>
    %409 = tpu.matmul %402, %405, %cst_128 {dimension_numbers = #tpu.dot_dimension_numbers<[2], [2], [1], [1], [0, 0, 0, 1, 1, 1], [0], [0]>} : vector<1x8x8xbf16>, vector<1x8x8xbf16>, vector<1x8x8xf32> -> vector<1x8x8xf32>
    "tpu.trace_stop"() : () -> ()
    %cst_129 = arith.constant 0.353553385 : f32
    %410 = vector.broadcast %cst_129 : f32 to vector<1x8x8xf32>
    %411 = arith.mulf %409, %410 : vector<1x8x8xf32>
    %cst_130 = arith.constant dense<0xFF800000> : vector<1x8xf32>
    %412 = vector.multi_reduction <maximumf>, %411, %cst_130 [2] : vector<1x8x8xf32> to vector<1x8xf32>
    %413 = vector.shape_cast %412 : vector<1x8xf32> to vector<1x8x1xf32>
    %414 = vector.broadcast %413 : vector<1x8x1xf32> to vector<1x8x8xf32>
    %415 = arith.subf %411, %414 : vector<1x8x8xf32>
    %416 = math.exp %415 : vector<1x8x8xf32>
    %cst_131 = arith.constant dense<0.000000e+00> : vector<1x8xf32>
    %417 = vector.multi_reduction <add>, %416, %cst_131 [2] : vector<1x8x8xf32> to vector<1x8xf32>
    %418 = vector.shape_cast %417 : vector<1x8xf32> to vector<1x8x1xf32>
    %419 = tpu.reciprocal %418 {approx = true} : vector<1x8x1xf32> -> vector<1x8x1xf32>
    %420 = vector.broadcast %419 : vector<1x8x1xf32> to vector<1x8x8xf32>
    %421 = arith.mulf %416, %420 : vector<1x8x8xf32>
    %422 = arith.truncf %421 : vector<1x8x8xf32> to vector<1x8x8xbf16>
    "tpu.trace_start"() <{level = 10 : i32, message = "bqk,bkd->bqd"}> : () -> ()
    %cst_132 = arith.constant dense<0.000000e+00> : vector<1x8x8xf32>
    %423 = tpu.matmul %422, %408, %cst_132 {dimension_numbers = #tpu.dot_dimension_numbers<[2], [1], [1], [2], [0, 0, 0, 1, 1, 2], [0], [0]>} : vector<1x8x8xbf16>, vector<1x8x8xbf16>, vector<1x8x8xf32> -> vector<1x8x8xf32>
    "tpu.trace_stop"() : () -> ()
    %424 = vector.shape_cast %423 : vector<1x8x8xf32> to vector<8x8xf32>
    %425 = vector.extract_strided_slice %397 {offsets = [0, 8], sizes = [8, 8], strides = [1, 1]} : vector<8x32xf32> to vector<8x8xf32>
    %426 = vector.shape_cast %425 : vector<8x8xf32> to vector<1x8x8xf32>
    %427 = arith.truncf %426 : vector<1x8x8xf32> to vector<1x8x8xbf16>
    %428 = vector.extract_strided_slice %398 {offsets = [0, 8], sizes = [8, 8], strides = [1, 1]} : vector<8x32xf32> to vector<8x8xf32>
    %429 = vector.shape_cast %428 : vector<8x8xf32> to vector<1x8x8xf32>
    %430 = arith.truncf %429 : vector<1x8x8xf32> to vector<1x8x8xbf16>
    %431 = vector.extract_strided_slice %399 {offsets = [0, 8], sizes = [8, 8], strides = [1, 1]} : vector<8x32xf32> to vector<8x8xf32>
    %432 = vector.shape_cast %431 : vector<8x8xf32> to vector<1x8x8xf32>
    %433 = arith.truncf %432 : vector<1x8x8xf32> to vector<1x8x8xbf16>
    "tpu.trace_start"() <{level = 10 : i32, message = "bqd,bkd->bqk"}> : () -> ()
    %cst_133 = arith.constant dense<0.000000e+00> : vector<1x8x8xf32>
    %434 = tpu.matmul %427, %430, %cst_133 {dimension_numbers = #tpu.dot_dimension_numbers<[2], [2], [1], [1], [0, 0, 0, 1, 1, 1], [0], [0]>} : vector<1x8x8xbf16>, vector<1x8x8xbf16>, vector<1x8x8xf32> -> vector<1x8x8xf32>
    "tpu.trace_stop"() : () -> ()
    %cst_134 = arith.constant 0.353553385 : f32
    %435 = vector.broadcast %cst_134 : f32 to vector<1x8x8xf32>
    %436 = arith.mulf %434, %435 : vector<1x8x8xf32>
    %cst_135 = arith.constant dense<0xFF800000> : vector<1x8xf32>
    %437 = vector.multi_reduction <maximumf>, %436, %cst_135 [2] : vector<1x8x8xf32> to vector<1x8xf32>
    %438 = vector.shape_cast %437 : vector<1x8xf32> to vector<1x8x1xf32>
    %439 = vector.broadcast %438 : vector<1x8x1xf32> to vector<1x8x8xf32>
    %440 = arith.subf %436, %439 : vector<1x8x8xf32>
    %441 = math.exp %440 : vector<1x8x8xf32>
    %cst_136 = arith.constant dense<0.000000e+00> : vector<1x8xf32>
    %442 = vector.multi_reduction <add>, %441, %cst_136 [2] : vector<1x8x8xf32> to vector<1x8xf32>
    %443 = vector.shape_cast %442 : vector<1x8xf32> to vector<1x8x1xf32>
    %444 = tpu.reciprocal %443 {approx = true} : vector<1x8x1xf32> -> vector<1x8x1xf32>
    %445 = vector.broadcast %444 : vector<1x8x1xf32> to vector<1x8x8xf32>
    %446 = arith.mulf %441, %445 : vector<1x8x8xf32>
    %447 = arith.truncf %446 : vector<1x8x8xf32> to vector<1x8x8xbf16>
    "tpu.trace_start"() <{level = 10 : i32, message = "bqk,bkd->bqd"}> : () -> ()
    %cst_137 = arith.constant dense<0.000000e+00> : vector<1x8x8xf32>
    %448 = tpu.matmul %447, %433, %cst_137 {dimension_numbers = #tpu.dot_dimension_numbers<[2], [1], [1], [2], [0, 0, 0, 1, 1, 2], [0], [0]>} : vector<1x8x8xbf16>, vector<1x8x8xbf16>, vector<1x8x8xf32> -> vector<1x8x8xf32>
    "tpu.trace_stop"() : () -> ()
    %449 = vector.shape_cast %448 : vector<1x8x8xf32> to vector<8x8xf32>
    %450 = vector.extract_strided_slice %397 {offsets = [0, 16], sizes = [8, 8], strides = [1, 1]} : vector<8x32xf32> to vector<8x8xf32>
    %451 = vector.shape_cast %450 : vector<8x8xf32> to vector<1x8x8xf32>
    %452 = arith.truncf %451 : vector<1x8x8xf32> to vector<1x8x8xbf16>
    %453 = vector.extract_strided_slice %398 {offsets = [0, 16], sizes = [8, 8], strides = [1, 1]} : vector<8x32xf32> to vector<8x8xf32>
    %454 = vector.shape_cast %453 : vector<8x8xf32> to vector<1x8x8xf32>
    %455 = arith.truncf %454 : vector<1x8x8xf32> to vector<1x8x8xbf16>
    %456 = vector.extract_strided_slice %399 {offsets = [0, 16], sizes = [8, 8], strides = [1, 1]} : vector<8x32xf32> to vector<8x8xf32>
    %457 = vector.shape_cast %456 : vector<8x8xf32> to vector<1x8x8xf32>
    %458 = arith.truncf %457 : vector<1x8x8xf32> to vector<1x8x8xbf16>
    "tpu.trace_start"() <{level = 10 : i32, message = "bqd,bkd->bqk"}> : () -> ()
    %cst_138 = arith.constant dense<0.000000e+00> : vector<1x8x8xf32>
    %459 = tpu.matmul %452, %455, %cst_138 {dimension_numbers = #tpu.dot_dimension_numbers<[2], [2], [1], [1], [0, 0, 0, 1, 1, 1], [0], [0]>} : vector<1x8x8xbf16>, vector<1x8x8xbf16>, vector<1x8x8xf32> -> vector<1x8x8xf32>
    "tpu.trace_stop"() : () -> ()
    %cst_139 = arith.constant 0.353553385 : f32
    %460 = vector.broadcast %cst_139 : f32 to vector<1x8x8xf32>
    %461 = arith.mulf %459, %460 : vector<1x8x8xf32>
    %cst_140 = arith.constant dense<0xFF800000> : vector<1x8xf32>
    %462 = vector.multi_reduction <maximumf>, %461, %cst_140 [2] : vector<1x8x8xf32> to vector<1x8xf32>
    %463 = vector.shape_cast %462 : vector<1x8xf32> to vector<1x8x1xf32>
    %464 = vector.broadcast %463 : vector<1x8x1xf32> to vector<1x8x8xf32>
    %465 = arith.subf %461, %464 : vector<1x8x8xf32>
    %466 = math.exp %465 : vector<1x8x8xf32>
    %cst_141 = arith.constant dense<0.000000e+00> : vector<1x8xf32>
    %467 = vector.multi_reduction <add>, %466, %cst_141 [2] : vector<1x8x8xf32> to vector<1x8xf32>
    %468 = vector.shape_cast %467 : vector<1x8xf32> to vector<1x8x1xf32>
    %469 = tpu.reciprocal %468 {approx = true} : vector<1x8x1xf32> -> vector<1x8x1xf32>
    %470 = vector.broadcast %469 : vector<1x8x1xf32> to vector<1x8x8xf32>
    %471 = arith.mulf %466, %470 : vector<1x8x8xf32>
    %472 = arith.truncf %471 : vector<1x8x8xf32> to vector<1x8x8xbf16>
    "tpu.trace_start"() <{level = 10 : i32, message = "bqk,bkd->bqd"}> : () -> ()
    %cst_142 = arith.constant dense<0.000000e+00> : vector<1x8x8xf32>
    %473 = tpu.matmul %472, %458, %cst_142 {dimension_numbers = #tpu.dot_dimension_numbers<[2], [1], [1], [2], [0, 0, 0, 1, 1, 2], [0], [0]>} : vector<1x8x8xbf16>, vector<1x8x8xbf16>, vector<1x8x8xf32> -> vector<1x8x8xf32>
    "tpu.trace_stop"() : () -> ()
    %474 = vector.shape_cast %473 : vector<1x8x8xf32> to vector<8x8xf32>
    %475 = vector.extract_strided_slice %397 {offsets = [0, 24], sizes = [8, 8], strides = [1, 1]} : vector<8x32xf32> to vector<8x8xf32>
    %476 = vector.shape_cast %475 : vector<8x8xf32> to vector<1x8x8xf32>
    %477 = arith.truncf %476 : vector<1x8x8xf32> to vector<1x8x8xbf16>
    %478 = vector.extract_strided_slice %398 {offsets = [0, 24], sizes = [8, 8], strides = [1, 1]} : vector<8x32xf32> to vector<8x8xf32>
    %479 = vector.shape_cast %478 : vector<8x8xf32> to vector<1x8x8xf32>
    %480 = arith.truncf %479 : vector<1x8x8xf32> to vector<1x8x8xbf16>
    %481 = vector.extract_strided_slice %399 {offsets = [0, 24], sizes = [8, 8], strides = [1, 1]} : vector<8x32xf32> to vector<8x8xf32>
    %482 = vector.shape_cast %481 : vector<8x8xf32> to vector<1x8x8xf32>
    %483 = arith.truncf %482 : vector<1x8x8xf32> to vector<1x8x8xbf16>
    "tpu.trace_start"() <{level = 10 : i32, message = "bqd,bkd->bqk"}> : () -> ()
    %cst_143 = arith.constant dense<0.000000e+00> : vector<1x8x8xf32>
    %484 = tpu.matmul %477, %480, %cst_143 {dimension_numbers = #tpu.dot_dimension_numbers<[2], [2], [1], [1], [0, 0, 0, 1, 1, 1], [0], [0]>} : vector<1x8x8xbf16>, vector<1x8x8xbf16>, vector<1x8x8xf32> -> vector<1x8x8xf32>
    "tpu.trace_stop"() : () -> ()
    %cst_144 = arith.constant 0.353553385 : f32
    %485 = vector.broadcast %cst_144 : f32 to vector<1x8x8xf32>
    %486 = arith.mulf %484, %485 : vector<1x8x8xf32>
    %cst_145 = arith.constant dense<0xFF800000> : vector<1x8xf32>
    %487 = vector.multi_reduction <maximumf>, %486, %cst_145 [2] : vector<1x8x8xf32> to vector<1x8xf32>
    %488 = vector.shape_cast %487 : vector<1x8xf32> to vector<1x8x1xf32>
    %489 = vector.broadcast %488 : vector<1x8x1xf32> to vector<1x8x8xf32>
    %490 = arith.subf %486, %489 : vector<1x8x8xf32>
    %491 = math.exp %490 : vector<1x8x8xf32>
    %cst_146 = arith.constant dense<0.000000e+00> : vector<1x8xf32>
    %492 = vector.multi_reduction <add>, %491, %cst_146 [2] : vector<1x8x8xf32> to vector<1x8xf32>
    %493 = vector.shape_cast %492 : vector<1x8xf32> to vector<1x8x1xf32>
    %494 = tpu.reciprocal %493 {approx = true} : vector<1x8x1xf32> -> vector<1x8x1xf32>
    %495 = vector.broadcast %494 : vector<1x8x1xf32> to vector<1x8x8xf32>
    %496 = arith.mulf %491, %495 : vector<1x8x8xf32>
    %497 = arith.truncf %496 : vector<1x8x8xf32> to vector<1x8x8xbf16>
    "tpu.trace_start"() <{level = 10 : i32, message = "bqk,bkd->bqd"}> : () -> ()
    %cst_147 = arith.constant dense<0.000000e+00> : vector<1x8x8xf32>
    %498 = tpu.matmul %497, %483, %cst_147 {dimension_numbers = #tpu.dot_dimension_numbers<[2], [1], [1], [2], [0, 0, 0, 1, 1, 2], [0], [0]>} : vector<1x8x8xbf16>, vector<1x8x8xbf16>, vector<1x8x8xf32> -> vector<1x8x8xf32>
    "tpu.trace_stop"() : () -> ()
    %499 = vector.shape_cast %498 : vector<1x8x8xf32> to vector<8x8xf32>
    %500 = tpu.concatenate %424, %449, %474, %499 in 1 : vector<8x8xf32>, vector<8x8xf32>, vector<8x8xf32>, vector<8x8xf32> -> vector<8x32xf32>
    %501 = arith.truncf %500 : vector<8x32xf32> to vector<8x32xbf16>
    %c0_148 = arith.constant 0 : index
    %c0_149 = arith.constant 0 : index
    %502 = vector.load %arg57[%c0_148, %c0_149] : memref<32x32xf32, #tpu.memory_space<vmem>>, vector<32x32xf32>
    %503 = arith.truncf %502 : vector<32x32xf32> to vector<32x32xbf16>
    %cst_150 = arith.constant dense<0.000000e+00> : vector<8x32xf32>
    %504 = tpu.matmul %501, %503, %cst_150 {dimension_numbers = #tpu.dot_dimension_numbers<[1], [0], [0], [1], [0, 0, 1, 1], [], []>} : vector<8x32xbf16>, vector<32x32xbf16>, vector<8x32xf32> -> vector<8x32xf32>
    %c0_151 = arith.constant 0 : index
    %c0_152 = arith.constant 0 : index
    %505 = vector.load %arg55[%c0_151, %c0_152] : memref<1x32xf32, #tpu.memory_space<vmem>>, vector<1x32xf32>
    %506 = vector.broadcast %505 : vector<1x32xf32> to vector<8x32xf32>
    %507 = arith.addf %504, %506 : vector<8x32xf32>
    %508 = vector.shape_cast %507 : vector<8x32xf32> to vector<1x8x32xf32>
    %509 = arith.addf %388, %508 : vector<1x8x32xf32>
    %cst_153 = arith.constant dense<0.000000e+00> : vector<1x8xf32>
    %510 = vector.multi_reduction <add>, %509, %cst_153 [2] : vector<1x8x32xf32> to vector<1x8xf32>
    %511 = vector.shape_cast %510 : vector<1x8xf32> to vector<1x8x1xf32>
    %cst_154 = arith.constant 3.200000e+01 : f32
    %512 = vector.broadcast %cst_154 : f32 to vector<1x8x1xf32>
    %513 = arith.divf %511, %512 : vector<1x8x1xf32>
    %514 = vector.broadcast %513 : vector<1x8x1xf32> to vector<1x8x32xf32>
    %515 = arith.subf %509, %514 : vector<1x8x32xf32>
    %516 = arith.mulf %515, %515 : vector<1x8x32xf32>
    %cst_155 = arith.constant dense<0.000000e+00> : vector<1x8xf32>
    %517 = vector.multi_reduction <add>, %516, %cst_155 [2] : vector<1x8x32xf32> to vector<1x8xf32>
    %518 = vector.shape_cast %517 : vector<1x8xf32> to vector<1x8x1xf32>
    %cst_156 = arith.constant 3.200000e+01 : f32
    %519 = vector.broadcast %cst_156 : f32 to vector<1x8x1xf32>
    %520 = arith.divf %518, %519 : vector<1x8x1xf32>
    %521 = vector.broadcast %513 : vector<1x8x1xf32> to vector<1x8x32xf32>
    %522 = arith.subf %509, %521 : vector<1x8x32xf32>
    %cst_157 = arith.constant 9.99999974E-6 : f32
    %523 = vector.broadcast %cst_157 : f32 to vector<1x8x1xf32>
    %524 = arith.addf %520, %523 : vector<1x8x1xf32>
    %525 = math.rsqrt %524 : vector<1x8x1xf32>
    %526 = vector.broadcast %525 : vector<1x8x1xf32> to vector<1x8x32xf32>
    %527 = arith.mulf %522, %526 : vector<1x8x32xf32>
    %c0_158 = arith.constant 0 : index
    %c0_159 = arith.constant 0 : index
    %528 = vector.load %arg52[%c0_158, %c0_159] : memref<1x32xf32, #tpu.memory_space<vmem>>, vector<1x32xf32>
    %529 = vector.shape_cast %528 : vector<1x32xf32> to vector<1x1x32xf32>
    %530 = vector.broadcast %529 : vector<1x1x32xf32> to vector<1x8x32xf32>
    %531 = arith.mulf %527, %530 : vector<1x8x32xf32>
    %c0_160 = arith.constant 0 : index
    %c0_161 = arith.constant 0 : index
    %532 = vector.load %arg51[%c0_160, %c0_161] : memref<1x32xf32, #tpu.memory_space<vmem>>, vector<1x32xf32>
    %533 = vector.shape_cast %532 : vector<1x32xf32> to vector<1x1x32xf32>
    %534 = vector.broadcast %533 : vector<1x1x32xf32> to vector<1x8x32xf32>
    %535 = arith.addf %531, %534 : vector<1x8x32xf32>
    %536 = vector.shape_cast %535 : vector<1x8x32xf32> to vector<8x32xf32>
    %537 = arith.truncf %536 : vector<8x32xf32> to vector<8x32xbf16>
    %c0_162 = arith.constant 0 : index
    %c0_163 = arith.constant 0 : index
    %538 = vector.load %arg59[%c0_162, %c0_163] : memref<32x64xf32, #tpu.memory_space<vmem>>, vector<32x64xf32>
    %539 = arith.truncf %538 : vector<32x64xf32> to vector<32x64xbf16>
    %cst_164 = arith.constant dense<0.000000e+00> : vector<8x64xf32>
    %540 = tpu.matmul %537, %539, %cst_164 {dimension_numbers = #tpu.dot_dimension_numbers<[1], [0], [0], [1], [0, 0, 1, 1], [], []>} : vector<8x32xbf16>, vector<32x64xbf16>, vector<8x64xf32> -> vector<8x64xf32>
    %c0_165 = arith.constant 0 : index
    %c0_166 = arith.constant 0 : index
    %541 = vector.load %arg49[%c0_165, %c0_166] : memref<1x64xf32, #tpu.memory_space<vmem>>, vector<1x64xf32>
    %542 = vector.broadcast %541 : vector<1x64xf32> to vector<8x64xf32>
    %543 = arith.addf %540, %542 : vector<8x64xf32>
    %cst_167 = arith.constant 0.000000e+00 : f32
    %544 = vector.broadcast %cst_167 : f32 to vector<8x64xf32>
    %545 = arith.maximumf %543, %544 : vector<8x64xf32>
    %546 = arith.truncf %545 : vector<8x64xf32> to vector<8x64xbf16>
    %c0_168 = arith.constant 0 : index
    %c0_169 = arith.constant 0 : index
    %547 = vector.load %arg60[%c0_168, %c0_169] : memref<64x32xf32, #tpu.memory_space<vmem>>, vector<64x32xf32>
    %548 = arith.truncf %547 : vector<64x32xf32> to vector<64x32xbf16>
    %cst_170 = arith.constant dense<0.000000e+00> : vector<8x32xf32>
    %549 = tpu.matmul %546, %548, %cst_170 {dimension_numbers = #tpu.dot_dimension_numbers<[1], [0], [0], [1], [0, 0, 1, 1], [], []>} : vector<8x64xbf16>, vector<64x32xbf16>, vector<8x32xf32> -> vector<8x32xf32>
    %c0_171 = arith.constant 0 : index
    %c0_172 = arith.constant 0 : index
    %550 = vector.load %arg50[%c0_171, %c0_172] : memref<1x32xf32, #tpu.memory_space<vmem>>, vector<1x32xf32>
    %551 = vector.broadcast %550 : vector<1x32xf32> to vector<8x32xf32>
    %552 = arith.addf %549, %551 : vector<8x32xf32>
    %553 = vector.shape_cast %552 : vector<8x32xf32> to vector<1x8x32xf32>
    %554 = arith.addf %535, %553 : vector<1x8x32xf32>
    %cst_173 = arith.constant dense<0.000000e+00> : vector<1x8xf32>
    %555 = vector.multi_reduction <add>, %554, %cst_173 [2] : vector<1x8x32xf32> to vector<1x8xf32>
    %556 = vector.shape_cast %555 : vector<1x8xf32> to vector<1x8x1xf32>
    %cst_174 = arith.constant 3.200000e+01 : f32
    %557 = vector.broadcast %cst_174 : f32 to vector<1x8x1xf32>
    %558 = arith.divf %556, %557 : vector<1x8x1xf32>
    %559 = vector.broadcast %558 : vector<1x8x1xf32> to vector<1x8x32xf32>
    %560 = arith.subf %554, %559 : vector<1x8x32xf32>
    %561 = arith.mulf %560, %560 : vector<1x8x32xf32>
    %cst_175 = arith.constant dense<0.000000e+00> : vector<1x8xf32>
    %562 = vector.multi_reduction <add>, %561, %cst_175 [2] : vector<1x8x32xf32> to vector<1x8xf32>
    %563 = vector.shape_cast %562 : vector<1x8xf32> to vector<1x8x1xf32>
    %cst_176 = arith.constant 3.200000e+01 : f32
    %564 = vector.broadcast %cst_176 : f32 to vector<1x8x1xf32>
    %565 = arith.divf %563, %564 : vector<1x8x1xf32>
    %566 = vector.broadcast %558 : vector<1x8x1xf32> to vector<1x8x32xf32>
    %567 = arith.subf %554, %566 : vector<1x8x32xf32>
    %cst_177 = arith.constant 9.99999974E-6 : f32
    %568 = vector.broadcast %cst_177 : f32 to vector<1x8x1xf32>
    %569 = arith.addf %565, %568 : vector<1x8x1xf32>
    %570 = math.rsqrt %569 : vector<1x8x1xf32>
    %571 = vector.broadcast %570 : vector<1x8x1xf32> to vector<1x8x32xf32>
    %572 = arith.mulf %567, %571 : vector<1x8x32xf32>
    %c0_178 = arith.constant 0 : index
    %c0_179 = arith.constant 0 : index
    %573 = vector.load %arg54[%c0_178, %c0_179] : memref<1x32xf32, #tpu.memory_space<vmem>>, vector<1x32xf32>
    %574 = vector.shape_cast %573 : vector<1x32xf32> to vector<1x1x32xf32>
    %575 = vector.broadcast %574 : vector<1x1x32xf32> to vector<1x8x32xf32>
    %576 = arith.mulf %572, %575 : vector<1x8x32xf32>
    %c0_180 = arith.constant 0 : index
    %c0_181 = arith.constant 0 : index
    %577 = vector.load %arg53[%c0_180, %c0_181] : memref<1x32xf32, #tpu.memory_space<vmem>>, vector<1x32xf32>
    %578 = vector.shape_cast %577 : vector<1x32xf32> to vector<1x1x32xf32>
    %579 = vector.broadcast %578 : vector<1x1x32xf32> to vector<1x8x32xf32>
    %580 = arith.addf %576, %579 : vector<1x8x32xf32>
    %cst_182 = arith.constant dense<0.000000e+00> : vector<1x8xf32>
    %581 = vector.multi_reduction <add>, %580, %cst_182 [2] : vector<1x8x32xf32> to vector<1x8xf32>
    %582 = vector.shape_cast %581 : vector<1x8xf32> to vector<1x8x1xf32>
    %cst_183 = arith.constant 3.200000e+01 : f32
    %583 = vector.broadcast %cst_183 : f32 to vector<1x8x1xf32>
    %584 = arith.divf %582, %583 : vector<1x8x1xf32>
    %585 = vector.broadcast %584 : vector<1x8x1xf32> to vector<1x8x32xf32>
    %586 = arith.subf %580, %585 : vector<1x8x32xf32>
    %587 = arith.mulf %586, %586 : vector<1x8x32xf32>
    %cst_184 = arith.constant dense<0.000000e+00> : vector<1x8xf32>
    %588 = vector.multi_reduction <add>, %587, %cst_184 [2] : vector<1x8x32xf32> to vector<1x8xf32>
    %589 = vector.shape_cast %588 : vector<1x8xf32> to vector<1x8x1xf32>
    %cst_185 = arith.constant 3.200000e+01 : f32
    %590 = vector.broadcast %cst_185 : f32 to vector<1x8x1xf32>
    %591 = arith.divf %589, %590 : vector<1x8x1xf32>
    %592 = vector.broadcast %584 : vector<1x8x1xf32> to vector<1x8x32xf32>
    %593 = arith.subf %580, %592 : vector<1x8x32xf32>
    %cst_186 = arith.constant 9.99999974E-6 : f32
    %594 = vector.broadcast %cst_186 : f32 to vector<1x8x1xf32>
    %595 = arith.addf %591, %594 : vector<1x8x1xf32>
    %596 = math.rsqrt %595 : vector<1x8x1xf32>
    %597 = vector.broadcast %596 : vector<1x8x1xf32> to vector<1x8x32xf32>
    %598 = arith.mulf %593, %597 : vector<1x8x32xf32>
    %c0_187 = arith.constant 0 : index
    %c0_188 = arith.constant 0 : index
    %599 = vector.load %arg62[%c0_187, %c0_188] : memref<1x32xf32, #tpu.memory_space<vmem>>, vector<1x32xf32>
    %600 = vector.shape_cast %599 : vector<1x32xf32> to vector<1x1x32xf32>
    %601 = vector.broadcast %600 : vector<1x1x32xf32> to vector<1x8x32xf32>
    %602 = arith.mulf %598, %601 : vector<1x8x32xf32>
    %c0_189 = arith.constant 0 : index
    %c0_190 = arith.constant 0 : index
    %603 = vector.load %arg61[%c0_189, %c0_190] : memref<1x32xf32, #tpu.memory_space<vmem>>, vector<1x32xf32>
    %604 = vector.shape_cast %603 : vector<1x32xf32> to vector<1x1x32xf32>
    %605 = vector.broadcast %604 : vector<1x1x32xf32> to vector<1x8x32xf32>
    %606 = arith.addf %602, %605 : vector<1x8x32xf32>
    %c0_191 = arith.constant 0 : index
    %c0_192 = arith.constant 0 : index
    %c0_193 = arith.constant 0 : index
    %607 = vector.load %arg2[%c0_191, %c0_192, %c0_193] : memref<1x8x64xf32, #tpu.memory_space<vmem>>, vector<1x8x64xf32>
    %c0_194 = arith.constant 0 : index
    %c0_195 = arith.constant 0 : index
    %608 = vector.load %arg4[%c0_194, %c0_195] : memref<8x32xf32, #tpu.memory_space<vmem>>, vector<8x32xf32>
    %609 = vector.shape_cast %607 : vector<1x8x64xf32> to vector<8x64xf32>
    %610 = arith.truncf %609 : vector<8x64xf32> to vector<8x64xbf16>
    %c0_196 = arith.constant 0 : index
    %c0_197 = arith.constant 0 : index
    %611 = vector.load %arg67[%c0_196, %c0_197] : memref<64x32xf32, #tpu.memory_space<vmem>>, vector<64x32xf32>
    %612 = arith.truncf %611 : vector<64x32xf32> to vector<64x32xbf16>
    %cst_198 = arith.constant dense<0.000000e+00> : vector<8x32xf32>
    %613 = tpu.matmul %610, %612, %cst_198 {dimension_numbers = #tpu.dot_dimension_numbers<[1], [0], [0], [1], [0, 0, 1, 1], [], []>} : vector<8x64xbf16>, vector<64x32xbf16>, vector<8x32xf32> -> vector<8x32xf32>
    %c0_199 = arith.constant 0 : index
    %c0_200 = arith.constant 0 : index
    %614 = vector.load %arg66[%c0_199, %c0_200] : memref<1x32xf32, #tpu.memory_space<vmem>>, vector<1x32xf32>
    %615 = vector.broadcast %614 : vector<1x32xf32> to vector<8x32xf32>
    %616 = arith.addf %613, %615 : vector<8x32xf32>
    %cst_201 = arith.constant 0.000000e+00 : f32
    %617 = vector.broadcast %cst_201 : f32 to vector<8x32xf32>
    %618 = arith.maximumf %616, %617 : vector<8x32xf32>
    %619 = vector.shape_cast %618 : vector<8x32xf32> to vector<1x8x32xf32>
    %620 = vector.shape_cast %608 : vector<8x32xf32> to vector<1x8x32xf32>
    %621 = arith.addf %619, %620 : vector<1x8x32xf32>
    %622 = vector.shape_cast %621 : vector<1x8x32xf32> to vector<8x32xf32>
    %623 = arith.truncf %622 : vector<8x32xf32> to vector<8x32xbf16>
    %c0_202 = arith.constant 0 : index
    %c0_203 = arith.constant 0 : index
    %624 = vector.load %arg22[%c0_202, %c0_203] : memref<32x96xf32, #tpu.memory_space<vmem>>, vector<32x96xf32>
    %625 = arith.truncf %624 : vector<32x96xf32> to vector<32x96xbf16>
    %cst_204 = arith.constant dense<0.000000e+00> : vector<8x96xf32>
    %626 = tpu.matmul %623, %625, %cst_204 {dimension_numbers = #tpu.dot_dimension_numbers<[1], [0], [0], [1], [0, 0, 1, 1], [], []>} : vector<8x32xbf16>, vector<32x96xbf16>, vector<8x96xf32> -> vector<8x96xf32>
    %c0_205 = arith.constant 0 : index
    %c0_206 = arith.constant 0 : index
    %627 = vector.load %arg20[%c0_205, %c0_206] : memref<1x96xf32, #tpu.memory_space<vmem>>, vector<1x96xf32>
    %628 = vector.broadcast %627 : vector<1x96xf32> to vector<8x96xf32>
    %629 = arith.addf %626, %628 : vector<8x96xf32>
    %630 = vector.extract_strided_slice %629 {offsets = [0, 0], sizes = [8, 32], strides = [1, 1]} : vector<8x96xf32> to vector<8x32xf32>
    %631 = vector.extract_strided_slice %629 {offsets = [0, 32], sizes = [8, 32], strides = [1, 1]} : vector<8x96xf32> to vector<8x32xf32>
    %632 = vector.extract_strided_slice %629 {offsets = [0, 64], sizes = [8, 32], strides = [1, 1]} : vector<8x96xf32> to vector<8x32xf32>
    %633 = tpu.iota {dimensions = array<i32: 0>} : vector<8x8xi32>
    %634 = tpu.iota {dimensions = array<i32: 1>} : vector<8x8xi32>
    %635 = arith.cmpi sge, %633, %634 : vector<8x8xi32>
    %cst_207 = arith.constant 0.000000e+00 : f32
    %cst_208 = arith.constant -1.000000e+30 : f32
    %636 = vector.broadcast %cst_207 : f32 to vector<8x8xf32>
    %637 = vector.broadcast %cst_208 : f32 to vector<8x8xf32>
    %638 = arith.select %635, %636, %637 : vector<8x8xi1>, vector<8x8xf32>
    %639 = vector.extract_strided_slice %630 {offsets = [0, 0], sizes = [8, 8], strides = [1, 1]} : vector<8x32xf32> to vector<8x8xf32>
    %640 = vector.shape_cast %639 : vector<8x8xf32> to vector<1x8x8xf32>
    %641 = arith.truncf %640 : vector<1x8x8xf32> to vector<1x8x8xbf16>
    %642 = vector.extract_strided_slice %631 {offsets = [0, 0], sizes = [8, 8], strides = [1, 1]} : vector<8x32xf32> to vector<8x8xf32>
    %643 = vector.shape_cast %642 : vector<8x8xf32> to vector<1x8x8xf32>
    %644 = arith.truncf %643 : vector<1x8x8xf32> to vector<1x8x8xbf16>
    %645 = vector.extract_strided_slice %632 {offsets = [0, 0], sizes = [8, 8], strides = [1, 1]} : vector<8x32xf32> to vector<8x8xf32>
    %646 = vector.shape_cast %645 : vector<8x8xf32> to vector<1x8x8xf32>
    %647 = arith.truncf %646 : vector<1x8x8xf32> to vector<1x8x8xbf16>
    "tpu.trace_start"() <{level = 10 : i32, message = "bqd,bkd->bqk"}> : () -> ()
    %cst_209 = arith.constant dense<0.000000e+00> : vector<1x8x8xf32>
    %648 = tpu.matmul %641, %644, %cst_209 {dimension_numbers = #tpu.dot_dimension_numbers<[2], [2], [1], [1], [0, 0, 0, 1, 1, 1], [0], [0]>} : vector<1x8x8xbf16>, vector<1x8x8xbf16>, vector<1x8x8xf32> -> vector<1x8x8xf32>
    "tpu.trace_stop"() : () -> ()
    %cst_210 = arith.constant 0.353553385 : f32
    %649 = vector.broadcast %cst_210 : f32 to vector<1x8x8xf32>
    %650 = arith.mulf %648, %649 : vector<1x8x8xf32>
    %651 = vector.shape_cast %638 : vector<8x8xf32> to vector<1x8x8xf32>
    %652 = arith.addf %650, %651 : vector<1x8x8xf32>
    %cst_211 = arith.constant dense<0xFF800000> : vector<1x8xf32>
    %653 = vector.multi_reduction <maximumf>, %652, %cst_211 [2] : vector<1x8x8xf32> to vector<1x8xf32>
    %654 = vector.shape_cast %653 : vector<1x8xf32> to vector<1x8x1xf32>
    %655 = vector.broadcast %654 : vector<1x8x1xf32> to vector<1x8x8xf32>
    %656 = arith.subf %652, %655 : vector<1x8x8xf32>
    %657 = math.exp %656 : vector<1x8x8xf32>
    %cst_212 = arith.constant dense<0.000000e+00> : vector<1x8xf32>
    %658 = vector.multi_reduction <add>, %657, %cst_212 [2] : vector<1x8x8xf32> to vector<1x8xf32>
    %659 = vector.shape_cast %658 : vector<1x8xf32> to vector<1x8x1xf32>
    %660 = tpu.reciprocal %659 {approx = true} : vector<1x8x1xf32> -> vector<1x8x1xf32>
    %661 = vector.broadcast %660 : vector<1x8x1xf32> to vector<1x8x8xf32>
    %662 = arith.mulf %657, %661 : vector<1x8x8xf32>
    %663 = arith.truncf %662 : vector<1x8x8xf32> to vector<1x8x8xbf16>
    "tpu.trace_start"() <{level = 10 : i32, message = "bqk,bkd->bqd"}> : () -> ()
    %cst_213 = arith.constant dense<0.000000e+00> : vector<1x8x8xf32>
    %664 = tpu.matmul %663, %647, %cst_213 {dimension_numbers = #tpu.dot_dimension_numbers<[2], [1], [1], [2], [0, 0, 0, 1, 1, 2], [0], [0]>} : vector<1x8x8xbf16>, vector<1x8x8xbf16>, vector<1x8x8xf32> -> vector<1x8x8xf32>
    "tpu.trace_stop"() : () -> ()
    %665 = vector.shape_cast %664 : vector<1x8x8xf32> to vector<8x8xf32>
    %666 = vector.extract_strided_slice %630 {offsets = [0, 8], sizes = [8, 8], strides = [1, 1]} : vector<8x32xf32> to vector<8x8xf32>
    %667 = vector.shape_cast %666 : vector<8x8xf32> to vector<1x8x8xf32>
    %668 = arith.truncf %667 : vector<1x8x8xf32> to vector<1x8x8xbf16>
    %669 = vector.extract_strided_slice %631 {offsets = [0, 8], sizes = [8, 8], strides = [1, 1]} : vector<8x32xf32> to vector<8x8xf32>
    %670 = vector.shape_cast %669 : vector<8x8xf32> to vector<1x8x8xf32>
    %671 = arith.truncf %670 : vector<1x8x8xf32> to vector<1x8x8xbf16>
    %672 = vector.extract_strided_slice %632 {offsets = [0, 8], sizes = [8, 8], strides = [1, 1]} : vector<8x32xf32> to vector<8x8xf32>
    %673 = vector.shape_cast %672 : vector<8x8xf32> to vector<1x8x8xf32>
    %674 = arith.truncf %673 : vector<1x8x8xf32> to vector<1x8x8xbf16>
    "tpu.trace_start"() <{level = 10 : i32, message = "bqd,bkd->bqk"}> : () -> ()
    %cst_214 = arith.constant dense<0.000000e+00> : vector<1x8x8xf32>
    %675 = tpu.matmul %668, %671, %cst_214 {dimension_numbers = #tpu.dot_dimension_numbers<[2], [2], [1], [1], [0, 0, 0, 1, 1, 1], [0], [0]>} : vector<1x8x8xbf16>, vector<1x8x8xbf16>, vector<1x8x8xf32> -> vector<1x8x8xf32>
    "tpu.trace_stop"() : () -> ()
    %cst_215 = arith.constant 0.353553385 : f32
    %676 = vector.broadcast %cst_215 : f32 to vector<1x8x8xf32>
    %677 = arith.mulf %675, %676 : vector<1x8x8xf32>
    %678 = vector.shape_cast %638 : vector<8x8xf32> to vector<1x8x8xf32>
    %679 = arith.addf %677, %678 : vector<1x8x8xf32>
    %cst_216 = arith.constant dense<0xFF800000> : vector<1x8xf32>
    %680 = vector.multi_reduction <maximumf>, %679, %cst_216 [2] : vector<1x8x8xf32> to vector<1x8xf32>
    %681 = vector.shape_cast %680 : vector<1x8xf32> to vector<1x8x1xf32>
    %682 = vector.broadcast %681 : vector<1x8x1xf32> to vector<1x8x8xf32>
    %683 = arith.subf %679, %682 : vector<1x8x8xf32>
    %684 = math.exp %683 : vector<1x8x8xf32>
    %cst_217 = arith.constant dense<0.000000e+00> : vector<1x8xf32>
    %685 = vector.multi_reduction <add>, %684, %cst_217 [2] : vector<1x8x8xf32> to vector<1x8xf32>
    %686 = vector.shape_cast %685 : vector<1x8xf32> to vector<1x8x1xf32>
    %687 = tpu.reciprocal %686 {approx = true} : vector<1x8x1xf32> -> vector<1x8x1xf32>
    %688 = vector.broadcast %687 : vector<1x8x1xf32> to vector<1x8x8xf32>
    %689 = arith.mulf %684, %688 : vector<1x8x8xf32>
    %690 = arith.truncf %689 : vector<1x8x8xf32> to vector<1x8x8xbf16>
    "tpu.trace_start"() <{level = 10 : i32, message = "bqk,bkd->bqd"}> : () -> ()
    %cst_218 = arith.constant dense<0.000000e+00> : vector<1x8x8xf32>
    %691 = tpu.matmul %690, %674, %cst_218 {dimension_numbers = #tpu.dot_dimension_numbers<[2], [1], [1], [2], [0, 0, 0, 1, 1, 2], [0], [0]>} : vector<1x8x8xbf16>, vector<1x8x8xbf16>, vector<1x8x8xf32> -> vector<1x8x8xf32>
    "tpu.trace_stop"() : () -> ()
    %692 = vector.shape_cast %691 : vector<1x8x8xf32> to vector<8x8xf32>
    %693 = vector.extract_strided_slice %630 {offsets = [0, 16], sizes = [8, 8], strides = [1, 1]} : vector<8x32xf32> to vector<8x8xf32>
    %694 = vector.shape_cast %693 : vector<8x8xf32> to vector<1x8x8xf32>
    %695 = arith.truncf %694 : vector<1x8x8xf32> to vector<1x8x8xbf16>
    %696 = vector.extract_strided_slice %631 {offsets = [0, 16], sizes = [8, 8], strides = [1, 1]} : vector<8x32xf32> to vector<8x8xf32>
    %697 = vector.shape_cast %696 : vector<8x8xf32> to vector<1x8x8xf32>
    %698 = arith.truncf %697 : vector<1x8x8xf32> to vector<1x8x8xbf16>
    %699 = vector.extract_strided_slice %632 {offsets = [0, 16], sizes = [8, 8], strides = [1, 1]} : vector<8x32xf32> to vector<8x8xf32>
    %700 = vector.shape_cast %699 : vector<8x8xf32> to vector<1x8x8xf32>
    %701 = arith.truncf %700 : vector<1x8x8xf32> to vector<1x8x8xbf16>
    "tpu.trace_start"() <{level = 10 : i32, message = "bqd,bkd->bqk"}> : () -> ()
    %cst_219 = arith.constant dense<0.000000e+00> : vector<1x8x8xf32>
    %702 = tpu.matmul %695, %698, %cst_219 {dimension_numbers = #tpu.dot_dimension_numbers<[2], [2], [1], [1], [0, 0, 0, 1, 1, 1], [0], [0]>} : vector<1x8x8xbf16>, vector<1x8x8xbf16>, vector<1x8x8xf32> -> vector<1x8x8xf32>
    "tpu.trace_stop"() : () -> ()
    %cst_220 = arith.constant 0.353553385 : f32
    %703 = vector.broadcast %cst_220 : f32 to vector<1x8x8xf32>
    %704 = arith.mulf %702, %703 : vector<1x8x8xf32>
    %705 = vector.shape_cast %638 : vector<8x8xf32> to vector<1x8x8xf32>
    %706 = arith.addf %704, %705 : vector<1x8x8xf32>
    %cst_221 = arith.constant dense<0xFF800000> : vector<1x8xf32>
    %707 = vector.multi_reduction <maximumf>, %706, %cst_221 [2] : vector<1x8x8xf32> to vector<1x8xf32>
    %708 = vector.shape_cast %707 : vector<1x8xf32> to vector<1x8x1xf32>
    %709 = vector.broadcast %708 : vector<1x8x1xf32> to vector<1x8x8xf32>
    %710 = arith.subf %706, %709 : vector<1x8x8xf32>
    %711 = math.exp %710 : vector<1x8x8xf32>
    %cst_222 = arith.constant dense<0.000000e+00> : vector<1x8xf32>
    %712 = vector.multi_reduction <add>, %711, %cst_222 [2] : vector<1x8x8xf32> to vector<1x8xf32>
    %713 = vector.shape_cast %712 : vector<1x8xf32> to vector<1x8x1xf32>
    %714 = tpu.reciprocal %713 {approx = true} : vector<1x8x1xf32> -> vector<1x8x1xf32>
    %715 = vector.broadcast %714 : vector<1x8x1xf32> to vector<1x8x8xf32>
    %716 = arith.mulf %711, %715 : vector<1x8x8xf32>
    %717 = arith.truncf %716 : vector<1x8x8xf32> to vector<1x8x8xbf16>
    "tpu.trace_start"() <{level = 10 : i32, message = "bqk,bkd->bqd"}> : () -> ()
    %cst_223 = arith.constant dense<0.000000e+00> : vector<1x8x8xf32>
    %718 = tpu.matmul %717, %701, %cst_223 {dimension_numbers = #tpu.dot_dimension_numbers<[2], [1], [1], [2], [0, 0, 0, 1, 1, 2], [0], [0]>} : vector<1x8x8xbf16>, vector<1x8x8xbf16>, vector<1x8x8xf32> -> vector<1x8x8xf32>
    "tpu.trace_stop"() : () -> ()
    %719 = vector.shape_cast %718 : vector<1x8x8xf32> to vector<8x8xf32>
    %720 = vector.extract_strided_slice %630 {offsets = [0, 24], sizes = [8, 8], strides = [1, 1]} : vector<8x32xf32> to vector<8x8xf32>
    %721 = vector.shape_cast %720 : vector<8x8xf32> to vector<1x8x8xf32>
    %722 = arith.truncf %721 : vector<1x8x8xf32> to vector<1x8x8xbf16>
    %723 = vector.extract_strided_slice %631 {offsets = [0, 24], sizes = [8, 8], strides = [1, 1]} : vector<8x32xf32> to vector<8x8xf32>
    %724 = vector.shape_cast %723 : vector<8x8xf32> to vector<1x8x8xf32>
    %725 = arith.truncf %724 : vector<1x8x8xf32> to vector<1x8x8xbf16>
    %726 = vector.extract_strided_slice %632 {offsets = [0, 24], sizes = [8, 8], strides = [1, 1]} : vector<8x32xf32> to vector<8x8xf32>
    %727 = vector.shape_cast %726 : vector<8x8xf32> to vector<1x8x8xf32>
    %728 = arith.truncf %727 : vector<1x8x8xf32> to vector<1x8x8xbf16>
    "tpu.trace_start"() <{level = 10 : i32, message = "bqd,bkd->bqk"}> : () -> ()
    %cst_224 = arith.constant dense<0.000000e+00> : vector<1x8x8xf32>
    %729 = tpu.matmul %722, %725, %cst_224 {dimension_numbers = #tpu.dot_dimension_numbers<[2], [2], [1], [1], [0, 0, 0, 1, 1, 1], [0], [0]>} : vector<1x8x8xbf16>, vector<1x8x8xbf16>, vector<1x8x8xf32> -> vector<1x8x8xf32>
    "tpu.trace_stop"() : () -> ()
    %cst_225 = arith.constant 0.353553385 : f32
    %730 = vector.broadcast %cst_225 : f32 to vector<1x8x8xf32>
    %731 = arith.mulf %729, %730 : vector<1x8x8xf32>
    %732 = vector.shape_cast %638 : vector<8x8xf32> to vector<1x8x8xf32>
    %733 = arith.addf %731, %732 : vector<1x8x8xf32>
    %cst_226 = arith.constant dense<0xFF800000> : vector<1x8xf32>
    %734 = vector.multi_reduction <maximumf>, %733, %cst_226 [2] : vector<1x8x8xf32> to vector<1x8xf32>
    %735 = vector.shape_cast %734 : vector<1x8xf32> to vector<1x8x1xf32>
    %736 = vector.broadcast %735 : vector<1x8x1xf32> to vector<1x8x8xf32>
    %737 = arith.subf %733, %736 : vector<1x8x8xf32>
    %738 = math.exp %737 : vector<1x8x8xf32>
    %cst_227 = arith.constant dense<0.000000e+00> : vector<1x8xf32>
    %739 = vector.multi_reduction <add>, %738, %cst_227 [2] : vector<1x8x8xf32> to vector<1x8xf32>
    %740 = vector.shape_cast %739 : vector<1x8xf32> to vector<1x8x1xf32>
    %741 = tpu.reciprocal %740 {approx = true} : vector<1x8x1xf32> -> vector<1x8x1xf32>
    %742 = vector.broadcast %741 : vector<1x8x1xf32> to vector<1x8x8xf32>
    %743 = arith.mulf %738, %742 : vector<1x8x8xf32>
    %744 = arith.truncf %743 : vector<1x8x8xf32> to vector<1x8x8xbf16>
    "tpu.trace_start"() <{level = 10 : i32, message = "bqk,bkd->bqd"}> : () -> ()
    %cst_228 = arith.constant dense<0.000000e+00> : vector<1x8x8xf32>
    %745 = tpu.matmul %744, %728, %cst_228 {dimension_numbers = #tpu.dot_dimension_numbers<[2], [1], [1], [2], [0, 0, 0, 1, 1, 2], [0], [0]>} : vector<1x8x8xbf16>, vector<1x8x8xbf16>, vector<1x8x8xf32> -> vector<1x8x8xf32>
    "tpu.trace_stop"() : () -> ()
    %746 = vector.shape_cast %745 : vector<1x8x8xf32> to vector<8x8xf32>
    %747 = tpu.concatenate %665, %692, %719, %746 in 1 : vector<8x8xf32>, vector<8x8xf32>, vector<8x8xf32>, vector<8x8xf32> -> vector<8x32xf32>
    %748 = arith.truncf %747 : vector<8x32xf32> to vector<8x32xbf16>
    %c0_229 = arith.constant 0 : index
    %c0_230 = arith.constant 0 : index
    %749 = vector.load %arg21[%c0_229, %c0_230] : memref<32x32xf32, #tpu.memory_space<vmem>>, vector<32x32xf32>
    %750 = arith.truncf %749 : vector<32x32xf32> to vector<32x32xbf16>
    %cst_231 = arith.constant dense<0.000000e+00> : vector<8x32xf32>
    %751 = tpu.matmul %748, %750, %cst_231 {dimension_numbers = #tpu.dot_dimension_numbers<[1], [0], [0], [1], [0, 0, 1, 1], [], []>} : vector<8x32xbf16>, vector<32x32xbf16>, vector<8x32xf32> -> vector<8x32xf32>
    %c0_232 = arith.constant 0 : index
    %c0_233 = arith.constant 0 : index
    %752 = vector.load %arg19[%c0_232, %c0_233] : memref<1x32xf32, #tpu.memory_space<vmem>>, vector<1x32xf32>
    %753 = vector.broadcast %752 : vector<1x32xf32> to vector<8x32xf32>
    %754 = arith.addf %751, %753 : vector<8x32xf32>
    %755 = vector.shape_cast %754 : vector<8x32xf32> to vector<1x8x32xf32>
    %756 = arith.addf %621, %755 : vector<1x8x32xf32>
    %cst_234 = arith.constant dense<0.000000e+00> : vector<1x8xf32>
    %757 = vector.multi_reduction <add>, %756, %cst_234 [2] : vector<1x8x32xf32> to vector<1x8xf32>
    %758 = vector.shape_cast %757 : vector<1x8xf32> to vector<1x8x1xf32>
    %cst_235 = arith.constant 3.200000e+01 : f32
    %759 = vector.broadcast %cst_235 : f32 to vector<1x8x1xf32>
    %760 = arith.divf %758, %759 : vector<1x8x1xf32>
    %761 = vector.broadcast %760 : vector<1x8x1xf32> to vector<1x8x32xf32>
    %762 = arith.subf %756, %761 : vector<1x8x32xf32>
    %763 = arith.mulf %762, %762 : vector<1x8x32xf32>
    %cst_236 = arith.constant dense<0.000000e+00> : vector<1x8xf32>
    %764 = vector.multi_reduction <add>, %763, %cst_236 [2] : vector<1x8x32xf32> to vector<1x8xf32>
    %765 = vector.shape_cast %764 : vector<1x8xf32> to vector<1x8x1xf32>
    %cst_237 = arith.constant 3.200000e+01 : f32
    %766 = vector.broadcast %cst_237 : f32 to vector<1x8x1xf32>
    %767 = arith.divf %765, %766 : vector<1x8x1xf32>
    %768 = vector.broadcast %760 : vector<1x8x1xf32> to vector<1x8x32xf32>
    %769 = arith.subf %756, %768 : vector<1x8x32xf32>
    %cst_238 = arith.constant 9.99999974E-6 : f32
    %770 = vector.broadcast %cst_238 : f32 to vector<1x8x1xf32>
    %771 = arith.addf %767, %770 : vector<1x8x1xf32>
    %772 = math.rsqrt %771 : vector<1x8x1xf32>
    %773 = vector.broadcast %772 : vector<1x8x1xf32> to vector<1x8x32xf32>
    %774 = arith.mulf %769, %773 : vector<1x8x32xf32>
    %c0_239 = arith.constant 0 : index
    %c0_240 = arith.constant 0 : index
    %775 = vector.load %arg14[%c0_239, %c0_240] : memref<1x32xf32, #tpu.memory_space<vmem>>, vector<1x32xf32>
    %776 = vector.shape_cast %775 : vector<1x32xf32> to vector<1x1x32xf32>
    %777 = vector.broadcast %776 : vector<1x1x32xf32> to vector<1x8x32xf32>
    %778 = arith.mulf %774, %777 : vector<1x8x32xf32>
    %c0_241 = arith.constant 0 : index
    %c0_242 = arith.constant 0 : index
    %779 = vector.load %arg13[%c0_241, %c0_242] : memref<1x32xf32, #tpu.memory_space<vmem>>, vector<1x32xf32>
    %780 = vector.shape_cast %779 : vector<1x32xf32> to vector<1x1x32xf32>
    %781 = vector.broadcast %780 : vector<1x1x32xf32> to vector<1x8x32xf32>
    %782 = arith.addf %778, %781 : vector<1x8x32xf32>
    %783 = vector.shape_cast %782 : vector<1x8x32xf32> to vector<8x32xf32>
    %784 = arith.truncf %783 : vector<8x32xf32> to vector<8x32xbf16>
    %c0_243 = arith.constant 0 : index
    %c0_244 = arith.constant 0 : index
    %785 = vector.load %arg12[%c0_243, %c0_244] : memref<32x32xf32, #tpu.memory_space<vmem>>, vector<32x32xf32>
    %786 = arith.truncf %785 : vector<32x32xf32> to vector<32x32xbf16>
    %cst_245 = arith.constant dense<0.000000e+00> : vector<8x32xf32>
    %787 = tpu.matmul %784, %786, %cst_245 {dimension_numbers = #tpu.dot_dimension_numbers<[1], [0], [0], [1], [0, 0, 1, 1], [], []>} : vector<8x32xbf16>, vector<32x32xbf16>, vector<8x32xf32> -> vector<8x32xf32>
    %c0_246 = arith.constant 0 : index
    %c0_247 = arith.constant 0 : index
    %788 = vector.load %arg9[%c0_246, %c0_247] : memref<1x32xf32, #tpu.memory_space<vmem>>, vector<1x32xf32>
    %789 = vector.broadcast %788 : vector<1x32xf32> to vector<8x32xf32>
    %790 = arith.addf %787, %789 : vector<8x32xf32>
    %791 = vector.shape_cast %606 : vector<1x8x32xf32> to vector<8x32xf32>
    %792 = arith.truncf %791 : vector<8x32xf32> to vector<8x32xbf16>
    %c0_248 = arith.constant 0 : index
    %c0_249 = arith.constant 0 : index
    %793 = vector.load %arg10[%c0_248, %c0_249] : memref<32x64xf32, #tpu.memory_space<vmem>>, vector<32x64xf32>
    %794 = arith.truncf %793 : vector<32x64xf32> to vector<32x64xbf16>
    %cst_250 = arith.constant dense<0.000000e+00> : vector<8x64xf32>
    %795 = tpu.matmul %792, %794, %cst_250 {dimension_numbers = #tpu.dot_dimension_numbers<[1], [0], [0], [1], [0, 0, 1, 1], [], []>} : vector<8x32xbf16>, vector<32x64xbf16>, vector<8x64xf32> -> vector<8x64xf32>
    %c0_251 = arith.constant 0 : index
    %c0_252 = arith.constant 0 : index
    %796 = vector.load %arg7[%c0_251, %c0_252] : memref<1x64xf32, #tpu.memory_space<vmem>>, vector<1x64xf32>
    %797 = vector.broadcast %796 : vector<1x64xf32> to vector<8x64xf32>
    %798 = arith.addf %795, %797 : vector<8x64xf32>
    %799 = vector.extract_strided_slice %798 {offsets = [0, 0], sizes = [8, 32], strides = [1, 1]} : vector<8x64xf32> to vector<8x32xf32>
    %800 = vector.extract_strided_slice %798 {offsets = [0, 32], sizes = [8, 32], strides = [1, 1]} : vector<8x64xf32> to vector<8x32xf32>
    %801 = vector.extract_strided_slice %790 {offsets = [0, 0], sizes = [8, 8], strides = [1, 1]} : vector<8x32xf32> to vector<8x8xf32>
    %802 = vector.shape_cast %801 : vector<8x8xf32> to vector<1x8x8xf32>
    %803 = arith.truncf %802 : vector<1x8x8xf32> to vector<1x8x8xbf16>
    %804 = vector.extract_strided_slice %799 {offsets = [0, 0], sizes = [8, 8], strides = [1, 1]} : vector<8x32xf32> to vector<8x8xf32>
    %805 = vector.shape_cast %804 : vector<8x8xf32> to vector<1x8x8xf32>
    %806 = arith.truncf %805 : vector<1x8x8xf32> to vector<1x8x8xbf16>
    %807 = vector.extract_strided_slice %800 {offsets = [0, 0], sizes = [8, 8], strides = [1, 1]} : vector<8x32xf32> to vector<8x8xf32>
    %808 = vector.shape_cast %807 : vector<8x8xf32> to vector<1x8x8xf32>
    %809 = arith.truncf %808 : vector<1x8x8xf32> to vector<1x8x8xbf16>
    "tpu.trace_start"() <{level = 10 : i32, message = "bqd,bkd->bqk"}> : () -> ()
    %cst_253 = arith.constant dense<0.000000e+00> : vector<1x8x8xf32>
    %810 = tpu.matmul %803, %806, %cst_253 {dimension_numbers = #tpu.dot_dimension_numbers<[2], [2], [1], [1], [0, 0, 0, 1, 1, 1], [0], [0]>} : vector<1x8x8xbf16>, vector<1x8x8xbf16>, vector<1x8x8xf32> -> vector<1x8x8xf32>
    "tpu.trace_stop"() : () -> ()
    %cst_254 = arith.constant 0.353553385 : f32
    %811 = vector.broadcast %cst_254 : f32 to vector<1x8x8xf32>
    %812 = arith.mulf %810, %811 : vector<1x8x8xf32>
    %cst_255 = arith.constant dense<0xFF800000> : vector<1x8xf32>
    %813 = vector.multi_reduction <maximumf>, %812, %cst_255 [2] : vector<1x8x8xf32> to vector<1x8xf32>
    %814 = vector.shape_cast %813 : vector<1x8xf32> to vector<1x8x1xf32>
    %815 = vector.broadcast %814 : vector<1x8x1xf32> to vector<1x8x8xf32>
    %816 = arith.subf %812, %815 : vector<1x8x8xf32>
    %817 = math.exp %816 : vector<1x8x8xf32>
    %cst_256 = arith.constant dense<0.000000e+00> : vector<1x8xf32>
    %818 = vector.multi_reduction <add>, %817, %cst_256 [2] : vector<1x8x8xf32> to vector<1x8xf32>
    %819 = vector.shape_cast %818 : vector<1x8xf32> to vector<1x8x1xf32>
    %820 = tpu.reciprocal %819 {approx = true} : vector<1x8x1xf32> -> vector<1x8x1xf32>
    %821 = vector.broadcast %820 : vector<1x8x1xf32> to vector<1x8x8xf32>
    %822 = arith.mulf %817, %821 : vector<1x8x8xf32>
    %823 = arith.truncf %822 : vector<1x8x8xf32> to vector<1x8x8xbf16>
    "tpu.trace_start"() <{level = 10 : i32, message = "bqk,bkd->bqd"}> : () -> ()
    %cst_257 = arith.constant dense<0.000000e+00> : vector<1x8x8xf32>
    %824 = tpu.matmul %823, %809, %cst_257 {dimension_numbers = #tpu.dot_dimension_numbers<[2], [1], [1], [2], [0, 0, 0, 1, 1, 2], [0], [0]>} : vector<1x8x8xbf16>, vector<1x8x8xbf16>, vector<1x8x8xf32> -> vector<1x8x8xf32>
    "tpu.trace_stop"() : () -> ()
    %825 = vector.shape_cast %824 : vector<1x8x8xf32> to vector<8x8xf32>
    %826 = vector.extract_strided_slice %790 {offsets = [0, 8], sizes = [8, 8], strides = [1, 1]} : vector<8x32xf32> to vector<8x8xf32>
    %827 = vector.shape_cast %826 : vector<8x8xf32> to vector<1x8x8xf32>
    %828 = arith.truncf %827 : vector<1x8x8xf32> to vector<1x8x8xbf16>
    %829 = vector.extract_strided_slice %799 {offsets = [0, 8], sizes = [8, 8], strides = [1, 1]} : vector<8x32xf32> to vector<8x8xf32>
    %830 = vector.shape_cast %829 : vector<8x8xf32> to vector<1x8x8xf32>
    %831 = arith.truncf %830 : vector<1x8x8xf32> to vector<1x8x8xbf16>
    %832 = vector.extract_strided_slice %800 {offsets = [0, 8], sizes = [8, 8], strides = [1, 1]} : vector<8x32xf32> to vector<8x8xf32>
    %833 = vector.shape_cast %832 : vector<8x8xf32> to vector<1x8x8xf32>
    %834 = arith.truncf %833 : vector<1x8x8xf32> to vector<1x8x8xbf16>
    "tpu.trace_start"() <{level = 10 : i32, message = "bqd,bkd->bqk"}> : () -> ()
    %cst_258 = arith.constant dense<0.000000e+00> : vector<1x8x8xf32>
    %835 = tpu.matmul %828, %831, %cst_258 {dimension_numbers = #tpu.dot_dimension_numbers<[2], [2], [1], [1], [0, 0, 0, 1, 1, 1], [0], [0]>} : vector<1x8x8xbf16>, vector<1x8x8xbf16>, vector<1x8x8xf32> -> vector<1x8x8xf32>
    "tpu.trace_stop"() : () -> ()
    %cst_259 = arith.constant 0.353553385 : f32
    %836 = vector.broadcast %cst_259 : f32 to vector<1x8x8xf32>
    %837 = arith.mulf %835, %836 : vector<1x8x8xf32>
    %cst_260 = arith.constant dense<0xFF800000> : vector<1x8xf32>
    %838 = vector.multi_reduction <maximumf>, %837, %cst_260 [2] : vector<1x8x8xf32> to vector<1x8xf32>
    %839 = vector.shape_cast %838 : vector<1x8xf32> to vector<1x8x1xf32>
    %840 = vector.broadcast %839 : vector<1x8x1xf32> to vector<1x8x8xf32>
    %841 = arith.subf %837, %840 : vector<1x8x8xf32>
    %842 = math.exp %841 : vector<1x8x8xf32>
    %cst_261 = arith.constant dense<0.000000e+00> : vector<1x8xf32>
    %843 = vector.multi_reduction <add>, %842, %cst_261 [2] : vector<1x8x8xf32> to vector<1x8xf32>
    %844 = vector.shape_cast %843 : vector<1x8xf32> to vector<1x8x1xf32>
    %845 = tpu.reciprocal %844 {approx = true} : vector<1x8x1xf32> -> vector<1x8x1xf32>
    %846 = vector.broadcast %845 : vector<1x8x1xf32> to vector<1x8x8xf32>
    %847 = arith.mulf %842, %846 : vector<1x8x8xf32>
    %848 = arith.truncf %847 : vector<1x8x8xf32> to vector<1x8x8xbf16>
    "tpu.trace_start"() <{level = 10 : i32, message = "bqk,bkd->bqd"}> : () -> ()
    %cst_262 = arith.constant dense<0.000000e+00> : vector<1x8x8xf32>
    %849 = tpu.matmul %848, %834, %cst_262 {dimension_numbers = #tpu.dot_dimension_numbers<[2], [1], [1], [2], [0, 0, 0, 1, 1, 2], [0], [0]>} : vector<1x8x8xbf16>, vector<1x8x8xbf16>, vector<1x8x8xf32> -> vector<1x8x8xf32>
    "tpu.trace_stop"() : () -> ()
    %850 = vector.shape_cast %849 : vector<1x8x8xf32> to vector<8x8xf32>
    %851 = vector.extract_strided_slice %790 {offsets = [0, 16], sizes = [8, 8], strides = [1, 1]} : vector<8x32xf32> to vector<8x8xf32>
    %852 = vector.shape_cast %851 : vector<8x8xf32> to vector<1x8x8xf32>
    %853 = arith.truncf %852 : vector<1x8x8xf32> to vector<1x8x8xbf16>
    %854 = vector.extract_strided_slice %799 {offsets = [0, 16], sizes = [8, 8], strides = [1, 1]} : vector<8x32xf32> to vector<8x8xf32>
    %855 = vector.shape_cast %854 : vector<8x8xf32> to vector<1x8x8xf32>
    %856 = arith.truncf %855 : vector<1x8x8xf32> to vector<1x8x8xbf16>
    %857 = vector.extract_strided_slice %800 {offsets = [0, 16], sizes = [8, 8], strides = [1, 1]} : vector<8x32xf32> to vector<8x8xf32>
    %858 = vector.shape_cast %857 : vector<8x8xf32> to vector<1x8x8xf32>
    %859 = arith.truncf %858 : vector<1x8x8xf32> to vector<1x8x8xbf16>
    "tpu.trace_start"() <{level = 10 : i32, message = "bqd,bkd->bqk"}> : () -> ()
    %cst_263 = arith.constant dense<0.000000e+00> : vector<1x8x8xf32>
    %860 = tpu.matmul %853, %856, %cst_263 {dimension_numbers = #tpu.dot_dimension_numbers<[2], [2], [1], [1], [0, 0, 0, 1, 1, 1], [0], [0]>} : vector<1x8x8xbf16>, vector<1x8x8xbf16>, vector<1x8x8xf32> -> vector<1x8x8xf32>
    "tpu.trace_stop"() : () -> ()
    %cst_264 = arith.constant 0.353553385 : f32
    %861 = vector.broadcast %cst_264 : f32 to vector<1x8x8xf32>
    %862 = arith.mulf %860, %861 : vector<1x8x8xf32>
    %cst_265 = arith.constant dense<0xFF800000> : vector<1x8xf32>
    %863 = vector.multi_reduction <maximumf>, %862, %cst_265 [2] : vector<1x8x8xf32> to vector<1x8xf32>
    %864 = vector.shape_cast %863 : vector<1x8xf32> to vector<1x8x1xf32>
    %865 = vector.broadcast %864 : vector<1x8x1xf32> to vector<1x8x8xf32>
    %866 = arith.subf %862, %865 : vector<1x8x8xf32>
    %867 = math.exp %866 : vector<1x8x8xf32>
    %cst_266 = arith.constant dense<0.000000e+00> : vector<1x8xf32>
    %868 = vector.multi_reduction <add>, %867, %cst_266 [2] : vector<1x8x8xf32> to vector<1x8xf32>
    %869 = vector.shape_cast %868 : vector<1x8xf32> to vector<1x8x1xf32>
    %870 = tpu.reciprocal %869 {approx = true} : vector<1x8x1xf32> -> vector<1x8x1xf32>
    %871 = vector.broadcast %870 : vector<1x8x1xf32> to vector<1x8x8xf32>
    %872 = arith.mulf %867, %871 : vector<1x8x8xf32>
    %873 = arith.truncf %872 : vector<1x8x8xf32> to vector<1x8x8xbf16>
    "tpu.trace_start"() <{level = 10 : i32, message = "bqk,bkd->bqd"}> : () -> ()
    %cst_267 = arith.constant dense<0.000000e+00> : vector<1x8x8xf32>
    %874 = tpu.matmul %873, %859, %cst_267 {dimension_numbers = #tpu.dot_dimension_numbers<[2], [1], [1], [2], [0, 0, 0, 1, 1, 2], [0], [0]>} : vector<1x8x8xbf16>, vector<1x8x8xbf16>, vector<1x8x8xf32> -> vector<1x8x8xf32>
    "tpu.trace_stop"() : () -> ()
    %875 = vector.shape_cast %874 : vector<1x8x8xf32> to vector<8x8xf32>
    %876 = vector.extract_strided_slice %790 {offsets = [0, 24], sizes = [8, 8], strides = [1, 1]} : vector<8x32xf32> to vector<8x8xf32>
    %877 = vector.shape_cast %876 : vector<8x8xf32> to vector<1x8x8xf32>
    %878 = arith.truncf %877 : vector<1x8x8xf32> to vector<1x8x8xbf16>
    %879 = vector.extract_strided_slice %799 {offsets = [0, 24], sizes = [8, 8], strides = [1, 1]} : vector<8x32xf32> to vector<8x8xf32>
    %880 = vector.shape_cast %879 : vector<8x8xf32> to vector<1x8x8xf32>
    %881 = arith.truncf %880 : vector<1x8x8xf32> to vector<1x8x8xbf16>
    %882 = vector.extract_strided_slice %800 {offsets = [0, 24], sizes = [8, 8], strides = [1, 1]} : vector<8x32xf32> to vector<8x8xf32>
    %883 = vector.shape_cast %882 : vector<8x8xf32> to vector<1x8x8xf32>
    %884 = arith.truncf %883 : vector<1x8x8xf32> to vector<1x8x8xbf16>
    "tpu.trace_start"() <{level = 10 : i32, message = "bqd,bkd->bqk"}> : () -> ()
    %cst_268 = arith.constant dense<0.000000e+00> : vector<1x8x8xf32>
    %885 = tpu.matmul %878, %881, %cst_268 {dimension_numbers = #tpu.dot_dimension_numbers<[2], [2], [1], [1], [0, 0, 0, 1, 1, 1], [0], [0]>} : vector<1x8x8xbf16>, vector<1x8x8xbf16>, vector<1x8x8xf32> -> vector<1x8x8xf32>
    "tpu.trace_stop"() : () -> ()
    %cst_269 = arith.constant 0.353553385 : f32
    %886 = vector.broadcast %cst_269 : f32 to vector<1x8x8xf32>
    %887 = arith.mulf %885, %886 : vector<1x8x8xf32>
    %cst_270 = arith.constant dense<0xFF800000> : vector<1x8xf32>
    %888 = vector.multi_reduction <maximumf>, %887, %cst_270 [2] : vector<1x8x8xf32> to vector<1x8xf32>
    %889 = vector.shape_cast %888 : vector<1x8xf32> to vector<1x8x1xf32>
    %890 = vector.broadcast %889 : vector<1x8x1xf32> to vector<1x8x8xf32>
    %891 = arith.subf %887, %890 : vector<1x8x8xf32>
    %892 = math.exp %891 : vector<1x8x8xf32>
    %cst_271 = arith.constant dense<0.000000e+00> : vector<1x8xf32>
    %893 = vector.multi_reduction <add>, %892, %cst_271 [2] : vector<1x8x8xf32> to vector<1x8xf32>
    %894 = vector.shape_cast %893 : vector<1x8xf32> to vector<1x8x1xf32>
    %895 = tpu.reciprocal %894 {approx = true} : vector<1x8x1xf32> -> vector<1x8x1xf32>
    %896 = vector.broadcast %895 : vector<1x8x1xf32> to vector<1x8x8xf32>
    %897 = arith.mulf %892, %896 : vector<1x8x8xf32>
    %898 = arith.truncf %897 : vector<1x8x8xf32> to vector<1x8x8xbf16>
    "tpu.trace_start"() <{level = 10 : i32, message = "bqk,bkd->bqd"}> : () -> ()
    %cst_272 = arith.constant dense<0.000000e+00> : vector<1x8x8xf32>
    %899 = tpu.matmul %898, %884, %cst_272 {dimension_numbers = #tpu.dot_dimension_numbers<[2], [1], [1], [2], [0, 0, 0, 1, 1, 2], [0], [0]>} : vector<1x8x8xbf16>, vector<1x8x8xbf16>, vector<1x8x8xf32> -> vector<1x8x8xf32>
    "tpu.trace_stop"() : () -> ()
    %900 = vector.shape_cast %899 : vector<1x8x8xf32> to vector<8x8xf32>
    %901 = tpu.concatenate %825, %850, %875, %900 in 1 : vector<8x8xf32>, vector<8x8xf32>, vector<8x8xf32>, vector<8x8xf32> -> vector<8x32xf32>
    %902 = arith.truncf %901 : vector<8x32xf32> to vector<8x32xbf16>
    %c0_273 = arith.constant 0 : index
    %c0_274 = arith.constant 0 : index
    %903 = vector.load %arg11[%c0_273, %c0_274] : memref<32x32xf32, #tpu.memory_space<vmem>>, vector<32x32xf32>
    %904 = arith.truncf %903 : vector<32x32xf32> to vector<32x32xbf16>
    %cst_275 = arith.constant dense<0.000000e+00> : vector<8x32xf32>
    %905 = tpu.matmul %902, %904, %cst_275 {dimension_numbers = #tpu.dot_dimension_numbers<[1], [0], [0], [1], [0, 0, 1, 1], [], []>} : vector<8x32xbf16>, vector<32x32xbf16>, vector<8x32xf32> -> vector<8x32xf32>
    %c0_276 = arith.constant 0 : index
    %c0_277 = arith.constant 0 : index
    %906 = vector.load %arg8[%c0_276, %c0_277] : memref<1x32xf32, #tpu.memory_space<vmem>>, vector<1x32xf32>
    %907 = vector.broadcast %906 : vector<1x32xf32> to vector<8x32xf32>
    %908 = arith.addf %905, %907 : vector<8x32xf32>
    %909 = vector.shape_cast %908 : vector<8x32xf32> to vector<1x8x32xf32>
    %910 = arith.addf %782, %909 : vector<1x8x32xf32>
    %cst_278 = arith.constant dense<0.000000e+00> : vector<1x8xf32>
    %911 = vector.multi_reduction <add>, %910, %cst_278 [2] : vector<1x8x32xf32> to vector<1x8xf32>
    %912 = vector.shape_cast %911 : vector<1x8xf32> to vector<1x8x1xf32>
    %cst_279 = arith.constant 3.200000e+01 : f32
    %913 = vector.broadcast %cst_279 : f32 to vector<1x8x1xf32>
    %914 = arith.divf %912, %913 : vector<1x8x1xf32>
    %915 = vector.broadcast %914 : vector<1x8x1xf32> to vector<1x8x32xf32>
    %916 = arith.subf %910, %915 : vector<1x8x32xf32>
    %917 = arith.mulf %916, %916 : vector<1x8x32xf32>
    %cst_280 = arith.constant dense<0.000000e+00> : vector<1x8xf32>
    %918 = vector.multi_reduction <add>, %917, %cst_280 [2] : vector<1x8x32xf32> to vector<1x8xf32>
    %919 = vector.shape_cast %918 : vector<1x8xf32> to vector<1x8x1xf32>
    %cst_281 = arith.constant 3.200000e+01 : f32
    %920 = vector.broadcast %cst_281 : f32 to vector<1x8x1xf32>
    %921 = arith.divf %919, %920 : vector<1x8x1xf32>
    %922 = vector.broadcast %914 : vector<1x8x1xf32> to vector<1x8x32xf32>
    %923 = arith.subf %910, %922 : vector<1x8x32xf32>
    %cst_282 = arith.constant 9.99999974E-6 : f32
    %924 = vector.broadcast %cst_282 : f32 to vector<1x8x1xf32>
    %925 = arith.addf %921, %924 : vector<1x8x1xf32>
    %926 = math.rsqrt %925 : vector<1x8x1xf32>
    %927 = vector.broadcast %926 : vector<1x8x1xf32> to vector<1x8x32xf32>
    %928 = arith.mulf %923, %927 : vector<1x8x32xf32>
    %c0_283 = arith.constant 0 : index
    %c0_284 = arith.constant 0 : index
    %929 = vector.load %arg16[%c0_283, %c0_284] : memref<1x32xf32, #tpu.memory_space<vmem>>, vector<1x32xf32>
    %930 = vector.shape_cast %929 : vector<1x32xf32> to vector<1x1x32xf32>
    %931 = vector.broadcast %930 : vector<1x1x32xf32> to vector<1x8x32xf32>
    %932 = arith.mulf %928, %931 : vector<1x8x32xf32>
    %c0_285 = arith.constant 0 : index
    %c0_286 = arith.constant 0 : index
    %933 = vector.load %arg15[%c0_285, %c0_286] : memref<1x32xf32, #tpu.memory_space<vmem>>, vector<1x32xf32>
    %934 = vector.shape_cast %933 : vector<1x32xf32> to vector<1x1x32xf32>
    %935 = vector.broadcast %934 : vector<1x1x32xf32> to vector<1x8x32xf32>
    %936 = arith.addf %932, %935 : vector<1x8x32xf32>
    %937 = vector.shape_cast %936 : vector<1x8x32xf32> to vector<8x32xf32>
    %938 = arith.truncf %937 : vector<8x32xf32> to vector<8x32xbf16>
    %c0_287 = arith.constant 0 : index
    %c0_288 = arith.constant 0 : index
    %939 = vector.load %arg23[%c0_287, %c0_288] : memref<32x64xf32, #tpu.memory_space<vmem>>, vector<32x64xf32>
    %940 = arith.truncf %939 : vector<32x64xf32> to vector<32x64xbf16>
    %cst_289 = arith.constant dense<0.000000e+00> : vector<8x64xf32>
    %941 = tpu.matmul %938, %940, %cst_289 {dimension_numbers = #tpu.dot_dimension_numbers<[1], [0], [0], [1], [0, 0, 1, 1], [], []>} : vector<8x32xbf16>, vector<32x64xbf16>, vector<8x64xf32> -> vector<8x64xf32>
    %c0_290 = arith.constant 0 : index
    %c0_291 = arith.constant 0 : index
    %942 = vector.load %arg5[%c0_290, %c0_291] : memref<1x64xf32, #tpu.memory_space<vmem>>, vector<1x64xf32>
    %943 = vector.broadcast %942 : vector<1x64xf32> to vector<8x64xf32>
    %944 = arith.addf %941, %943 : vector<8x64xf32>
    %cst_292 = arith.constant 0.000000e+00 : f32
    %945 = vector.broadcast %cst_292 : f32 to vector<8x64xf32>
    %946 = arith.maximumf %944, %945 : vector<8x64xf32>
    %947 = arith.truncf %946 : vector<8x64xf32> to vector<8x64xbf16>
    %c0_293 = arith.constant 0 : index
    %c0_294 = arith.constant 0 : index
    %948 = vector.load %arg24[%c0_293, %c0_294] : memref<64x32xf32, #tpu.memory_space<vmem>>, vector<64x32xf32>
    %949 = arith.truncf %948 : vector<64x32xf32> to vector<64x32xbf16>
    %cst_295 = arith.constant dense<0.000000e+00> : vector<8x32xf32>
    %950 = tpu.matmul %947, %949, %cst_295 {dimension_numbers = #tpu.dot_dimension_numbers<[1], [0], [0], [1], [0, 0, 1, 1], [], []>} : vector<8x64xbf16>, vector<64x32xbf16>, vector<8x32xf32> -> vector<8x32xf32>
    %c0_296 = arith.constant 0 : index
    %c0_297 = arith.constant 0 : index
    %951 = vector.load %arg6[%c0_296, %c0_297] : memref<1x32xf32, #tpu.memory_space<vmem>>, vector<1x32xf32>
    %952 = vector.broadcast %951 : vector<1x32xf32> to vector<8x32xf32>
    %953 = arith.addf %950, %952 : vector<8x32xf32>
    %954 = vector.shape_cast %953 : vector<8x32xf32> to vector<1x8x32xf32>
    %955 = arith.addf %936, %954 : vector<1x8x32xf32>
    %cst_298 = arith.constant dense<0.000000e+00> : vector<1x8xf32>
    %956 = vector.multi_reduction <add>, %955, %cst_298 [2] : vector<1x8x32xf32> to vector<1x8xf32>
    %957 = vector.shape_cast %956 : vector<1x8xf32> to vector<1x8x1xf32>
    %cst_299 = arith.constant 3.200000e+01 : f32
    %958 = vector.broadcast %cst_299 : f32 to vector<1x8x1xf32>
    %959 = arith.divf %957, %958 : vector<1x8x1xf32>
    %960 = vector.broadcast %959 : vector<1x8x1xf32> to vector<1x8x32xf32>
    %961 = arith.subf %955, %960 : vector<1x8x32xf32>
    %962 = arith.mulf %961, %961 : vector<1x8x32xf32>
    %cst_300 = arith.constant dense<0.000000e+00> : vector<1x8xf32>
    %963 = vector.multi_reduction <add>, %962, %cst_300 [2] : vector<1x8x32xf32> to vector<1x8xf32>
    %964 = vector.shape_cast %963 : vector<1x8xf32> to vector<1x8x1xf32>
    %cst_301 = arith.constant 3.200000e+01 : f32
    %965 = vector.broadcast %cst_301 : f32 to vector<1x8x1xf32>
    %966 = arith.divf %964, %965 : vector<1x8x1xf32>
    %967 = vector.broadcast %959 : vector<1x8x1xf32> to vector<1x8x32xf32>
    %968 = arith.subf %955, %967 : vector<1x8x32xf32>
    %cst_302 = arith.constant 9.99999974E-6 : f32
    %969 = vector.broadcast %cst_302 : f32 to vector<1x8x1xf32>
    %970 = arith.addf %966, %969 : vector<1x8x1xf32>
    %971 = math.rsqrt %970 : vector<1x8x1xf32>
    %972 = vector.broadcast %971 : vector<1x8x1xf32> to vector<1x8x32xf32>
    %973 = arith.mulf %968, %972 : vector<1x8x32xf32>
    %c0_303 = arith.constant 0 : index
    %c0_304 = arith.constant 0 : index
    %974 = vector.load %arg18[%c0_303, %c0_304] : memref<1x32xf32, #tpu.memory_space<vmem>>, vector<1x32xf32>
    %975 = vector.shape_cast %974 : vector<1x32xf32> to vector<1x1x32xf32>
    %976 = vector.broadcast %975 : vector<1x1x32xf32> to vector<1x8x32xf32>
    %977 = arith.mulf %973, %976 : vector<1x8x32xf32>
    %c0_305 = arith.constant 0 : index
    %c0_306 = arith.constant 0 : index
    %978 = vector.load %arg17[%c0_305, %c0_306] : memref<1x32xf32, #tpu.memory_space<vmem>>, vector<1x32xf32>
    %979 = vector.shape_cast %978 : vector<1x32xf32> to vector<1x1x32xf32>
    %980 = vector.broadcast %979 : vector<1x1x32xf32> to vector<1x8x32xf32>
    %981 = arith.addf %977, %980 : vector<1x8x32xf32>
    %cst_307 = arith.constant dense<0.000000e+00> : vector<1x8xf32>
    %982 = vector.multi_reduction <add>, %981, %cst_307 [2] : vector<1x8x32xf32> to vector<1x8xf32>
    %983 = vector.shape_cast %982 : vector<1x8xf32> to vector<1x8x1xf32>
    %cst_308 = arith.constant 3.200000e+01 : f32
    %984 = vector.broadcast %cst_308 : f32 to vector<1x8x1xf32>
    %985 = arith.divf %983, %984 : vector<1x8x1xf32>
    %986 = vector.broadcast %985 : vector<1x8x1xf32> to vector<1x8x32xf32>
    %987 = arith.subf %981, %986 : vector<1x8x32xf32>
    %988 = arith.mulf %987, %987 : vector<1x8x32xf32>
    %cst_309 = arith.constant dense<0.000000e+00> : vector<1x8xf32>
    %989 = vector.multi_reduction <add>, %988, %cst_309 [2] : vector<1x8x32xf32> to vector<1x8xf32>
    %990 = vector.shape_cast %989 : vector<1x8xf32> to vector<1x8x1xf32>
    %cst_310 = arith.constant 3.200000e+01 : f32
    %991 = vector.broadcast %cst_310 : f32 to vector<1x8x1xf32>
    %992 = arith.divf %990, %991 : vector<1x8x1xf32>
    %993 = vector.broadcast %985 : vector<1x8x1xf32> to vector<1x8x32xf32>
    %994 = arith.subf %981, %993 : vector<1x8x32xf32>
    %cst_311 = arith.constant 9.99999974E-6 : f32
    %995 = vector.broadcast %cst_311 : f32 to vector<1x8x1xf32>
    %996 = arith.addf %992, %995 : vector<1x8x1xf32>
    %997 = math.rsqrt %996 : vector<1x8x1xf32>
    %998 = vector.broadcast %997 : vector<1x8x1xf32> to vector<1x8x32xf32>
    %999 = arith.mulf %994, %998 : vector<1x8x32xf32>
    %c0_312 = arith.constant 0 : index
    %c0_313 = arith.constant 0 : index
    %1000 = vector.load %arg26[%c0_312, %c0_313] : memref<1x32xf32, #tpu.memory_space<vmem>>, vector<1x32xf32>
    %1001 = vector.shape_cast %1000 : vector<1x32xf32> to vector<1x1x32xf32>
    %1002 = vector.broadcast %1001 : vector<1x1x32xf32> to vector<1x8x32xf32>
    %1003 = arith.mulf %999, %1002 : vector<1x8x32xf32>
    %c0_314 = arith.constant 0 : index
    %c0_315 = arith.constant 0 : index
    %1004 = vector.load %arg25[%c0_314, %c0_315] : memref<1x32xf32, #tpu.memory_space<vmem>>, vector<1x32xf32>
    %1005 = vector.shape_cast %1004 : vector<1x32xf32> to vector<1x1x32xf32>
    %1006 = vector.broadcast %1005 : vector<1x1x32xf32> to vector<1x8x32xf32>
    %1007 = arith.addf %1003, %1006 : vector<1x8x32xf32>
    %1008 = vector.shape_cast %1007 : vector<1x8x32xf32> to vector<1x1x256xf32>
    %c0_316 = arith.constant 0 : index
    %c0_317 = arith.constant 0 : index
    %c0_318 = arith.constant 0 : index
    %1009 = vector.load %arg68[%c0_316, %c0_317, %c0_318] : memref<1x1x256xf32, #tpu.memory_space<vmem>>, vector<1x1x256xf32>
    tpu.vector_store %arg68[%c0_316, %c0_317, %c0_318], %1008 {strides = array<i32>} : memref<1x1x256xf32, #tpu.memory_space<vmem>>, vector<1x1x256xf32>,
    return
  }
  func.func @transform_0(%arg0: i32) -> (i32, i32, i32) {
    %c0_i32 = arith.constant 0 : i32
    %c0_i32_0 = arith.constant 0 : i32
    %c0_i32_1 = arith.constant 0 : i32
    return %arg0, %c0_i32, %c0_i32_0 : i32, i32, i32
  }
  func.func @transform_1(%arg0: i32) -> (i32, i32, i32) {
    %c0_i32 = arith.constant 0 : i32
    %c0_i32_0 = arith.constant 0 : i32
    %c0_i32_1 = arith.constant 0 : i32
    return %arg0, %c0_i32, %c0_i32_0 : i32, i32, i32
  }
  func.func @transform_2(%arg0: i32) -> (i32, i32) {
    %c0_i32 = arith.constant 0 : i32
    %c0_i32_0 = arith.constant 0 : i32
    %c0_i32_1 = arith.constant 0 : i32
    return %c0_i32, %c0_i32_0 : i32, i32
  }
  func.func @transform_3(%arg0: i32) -> (i32, i32) {
    %c0_i32 = arith.constant 0 : i32
    %c0_i32_0 = arith.constant 0 : i32
    %c0_i32_1 = arith.constant 0 : i32
    return %c0_i32, %c0_i32_0 : i32, i32
  }
  func.func @transform_4(%arg0: i32) -> (i32, i32) {
    %c0_i32 = arith.constant 0 : i32
    %c0_i32_0 = arith.constant 0 : i32
    %c0_i32_1 = arith.constant 0 : i32
    return %c0_i32, %c0_i32_0 : i32, i32
  }
  func.func @transform_5(%arg0: i32) -> (i32, i32) {
    %c0_i32 = arith.constant 0 : i32
    %c0_i32_0 = arith.constant 0 : i32
    %c0_i32_1 = arith.constant 0 : i32
    return %c0_i32, %c0_i32_0 : i32, i32
  }
  func.func @transform_6(%arg0: i32) -> (i32, i32) {
    %c0_i32 = arith.constant 0 : i32
    %c0_i32_0 = arith.constant 0 : i32
    %c0_i32_1 = arith.constant 0 : i32
    return %c0_i32, %c0_i32_0 : i32, i32
  }
  func.func @transform_7(%arg0: i32) -> (i32, i32) {
    %c0_i32 = arith.constant 0 : i32
    %c0_i32_0 = arith.constant 0 : i32
    %c0_i32_1 = arith.constant 0 : i32
    return %c0_i32, %c0_i32_0 : i32, i32
  }
  func.func @transform_8(%arg0: i32) -> (i32, i32) {
    %c0_i32 = arith.constant 0 : i32
    %c0_i32_0 = arith.constant 0 : i32
    %c0_i32_1 = arith.constant 0 : i32
    return %c0_i32, %c0_i32_0 : i32, i32
  }
  func.func @transform_9(%arg0: i32) -> (i32, i32) {
    %c0_i32 = arith.constant 0 : i32
    %c0_i32_0 = arith.constant 0 : i32
    %c0_i32_1 = arith.constant 0 : i32
    return %c0_i32, %c0_i32_0 : i32, i32
  }
  func.func @transform_10(%arg0: i32) -> (i32, i32) {
    %c0_i32 = arith.constant 0 : i32
    %c0_i32_0 = arith.constant 0 : i32
    %c0_i32_1 = arith.constant 0 : i32
    return %c0_i32, %c0_i32_0 : i32, i32
  }
  func.func @transform_11(%arg0: i32) -> (i32, i32) {
    %c0_i32 = arith.constant 0 : i32
    %c0_i32_0 = arith.constant 0 : i32
    %c0_i32_1 = arith.constant 0 : i32
    return %c0_i32, %c0_i32_0 : i32, i32
  }
  func.func @transform_12(%arg0: i32) -> (i32, i32) {
    %c0_i32 = arith.constant 0 : i32
    %c0_i32_0 = arith.constant 0 : i32
    %c0_i32_1 = arith.constant 0 : i32
    return %c0_i32, %c0_i32_0 : i32, i32
  }
  func.func @transform_13(%arg0: i32) -> (i32, i32) {
    %c0_i32 = arith.constant 0 : i32
    %c0_i32_0 = arith.constant 0 : i32
    %c0_i32_1 = arith.constant 0 : i32
    return %c0_i32, %c0_i32_0 : i32, i32
  }
  func.func @transform_14(%arg0: i32) -> (i32, i32) {
    %c0_i32 = arith.constant 0 : i32
    %c0_i32_0 = arith.constant 0 : i32
    %c0_i32_1 = arith.constant 0 : i32
    return %c0_i32, %c0_i32_0 : i32, i32
  }
  func.func @transform_15(%arg0: i32) -> (i32, i32) {
    %c0_i32 = arith.constant 0 : i32
    %c0_i32_0 = arith.constant 0 : i32
    %c0_i32_1 = arith.constant 0 : i32
    return %c0_i32, %c0_i32_0 : i32, i32
  }
  func.func @transform_16(%arg0: i32) -> (i32, i32) {
    %c0_i32 = arith.constant 0 : i32
    %c0_i32_0 = arith.constant 0 : i32
    %c0_i32_1 = arith.constant 0 : i32
    return %c0_i32, %c0_i32_0 : i32, i32
  }
  func.func @transform_17(%arg0: i32) -> (i32, i32) {
    %c0_i32 = arith.constant 0 : i32
    %c0_i32_0 = arith.constant 0 : i32
    %c0_i32_1 = arith.constant 0 : i32
    return %c0_i32, %c0_i32_0 : i32, i32
  }
  func.func @transform_18(%arg0: i32) -> (i32, i32) {
    %c0_i32 = arith.constant 0 : i32
    %c0_i32_0 = arith.constant 0 : i32
    %c0_i32_1 = arith.constant 0 : i32
    return %c0_i32, %c0_i32_0 : i32, i32
  }
  func.func @transform_19(%arg0: i32) -> (i32, i32) {
    %c0_i32 = arith.constant 0 : i32
    %c0_i32_0 = arith.constant 0 : i32
    %c0_i32_1 = arith.constant 0 : i32
    return %c0_i32, %c0_i32_0 : i32, i32
  }
  func.func @transform_20(%arg0: i32) -> (i32, i32) {
    %c0_i32 = arith.constant 0 : i32
    %c0_i32_0 = arith.constant 0 : i32
    %c0_i32_1 = arith.constant 0 : i32
    return %c0_i32, %c0_i32_0 : i32, i32
  }
  func.func @transform_21(%arg0: i32) -> (i32, i32) {
    %c0_i32 = arith.constant 0 : i32
    %c0_i32_0 = arith.constant 0 : i32
    %c0_i32_1 = arith.constant 0 : i32
    return %c0_i32, %c0_i32_0 : i32, i32
  }
  func.func @transform_22(%arg0: i32) -> (i32, i32) {
    %c0_i32 = arith.constant 0 : i32
    %c0_i32_0 = arith.constant 0 : i32
    %c0_i32_1 = arith.constant 0 : i32
    return %c0_i32, %c0_i32_0 : i32, i32
  }
  func.func @transform_23(%arg0: i32) -> (i32, i32) {
    %c0_i32 = arith.constant 0 : i32
    %c0_i32_0 = arith.constant 0 : i32
    %c0_i32_1 = arith.constant 0 : i32
    return %c0_i32, %c0_i32_0 : i32, i32
  }
  func.func @transform_24(%arg0: i32) -> (i32, i32) {
    %c0_i32 = arith.constant 0 : i32
    %c0_i32_0 = arith.constant 0 : i32
    %c0_i32_1 = arith.constant 0 : i32
    return %c0_i32, %c0_i32_0 : i32, i32
  }
  func.func @transform_25(%arg0: i32) -> (i32, i32) {
    %c0_i32 = arith.constant 0 : i32
    %c0_i32_0 = arith.constant 0 : i32
    %c0_i32_1 = arith.constant 0 : i32
    return %c0_i32, %c0_i32_0 : i32, i32
  }
  func.func @transform_26(%arg0: i32) -> (i32, i32) {
    %c0_i32 = arith.constant 0 : i32
    %c0_i32_0 = arith.constant 0 : i32
    %c0_i32_1 = arith.constant 0 : i32
    return %c0_i32, %c0_i32_0 : i32, i32
  }
  func.func @transform_27(%arg0: i32) -> (i32, i32) {
    %c0_i32 = arith.constant 0 : i32
    %c0_i32_0 = arith.constant 0 : i32
    %c0_i32_1 = arith.constant 0 : i32
    return %c0_i32, %c0_i32_0 : i32, i32
  }
  func.func @transform_28(%arg0: i32) -> (i32, i32) {
    %c0_i32 = arith.constant 0 : i32
    %c0_i32_0 = arith.constant 0 : i32
    %c0_i32_1 = arith.constant 0 : i32
    return %c0_i32, %c0_i32_0 : i32, i32
  }
  func.func @transform_29(%arg0: i32) -> (i32, i32) {
    %c0_i32 = arith.constant 0 : i32
    %c0_i32_0 = arith.constant 0 : i32
    %c0_i32_1 = arith.constant 0 : i32
    return %c0_i32, %c0_i32_0 : i32, i32
  }
  func.func @transform_30(%arg0: i32) -> (i32, i32) {
    %c0_i32 = arith.constant 0 : i32
    %c0_i32_0 = arith.constant 0 : i32
    %c0_i32_1 = arith.constant 0 : i32
    return %c0_i32, %c0_i32_0 : i32, i32
  }
  func.func @transform_31(%arg0: i32) -> (i32, i32) {
    %c0_i32 = arith.constant 0 : i32
    %c0_i32_0 = arith.constant 0 : i32
    %c0_i32_1 = arith.constant 0 : i32
    return %c0_i32, %c0_i32_0 : i32, i32
  }
  func.func @transform_32(%arg0: i32) -> (i32, i32) {
    %c0_i32 = arith.constant 0 : i32
    %c0_i32_0 = arith.constant 0 : i32
    %c0_i32_1 = arith.constant 0 : i32
    return %c0_i32, %c0_i32_0 : i32, i32
  }
  func.func @transform_33(%arg0: i32) -> (i32, i32) {
    %c0_i32 = arith.constant 0 : i32
    %c0_i32_0 = arith.constant 0 : i32
    %c0_i32_1 = arith.constant 0 : i32
    return %c0_i32, %c0_i32_0 : i32, i32
  }
  func.func @transform_34(%arg0: i32) -> (i32, i32) {
    %c0_i32 = arith.constant 0 : i32
    %c0_i32_0 = arith.constant 0 : i32
    %c0_i32_1 = arith.constant 0 : i32
    return %c0_i32, %c0_i32_0 : i32, i32
  }
  func.func @transform_35(%arg0: i32) -> (i32, i32) {
    %c0_i32 = arith.constant 0 : i32
    %c0_i32_0 = arith.constant 0 : i32
    %c0_i32_1 = arith.constant 0 : i32
    return %c0_i32, %c0_i32_0 : i32, i32
  }
  func.func @transform_36(%arg0: i32) -> (i32, i32) {
    %c0_i32 = arith.constant 0 : i32
    %c0_i32_0 = arith.constant 0 : i32
    %c0_i32_1 = arith.constant 0 : i32
    return %c0_i32, %c0_i32_0 : i32, i32
  }
  func.func @transform_37(%arg0: i32) -> (i32, i32) {
    %c0_i32 = arith.constant 0 : i32
    %c0_i32_0 = arith.constant 0 : i32
    %c0_i32_1 = arith.constant 0 : i32
    return %c0_i32, %c0_i32_0 : i32, i32
  }
  func.func @transform_38(%arg0: i32) -> (i32, i32) {
    %c0_i32 = arith.constant 0 : i32
    %c0_i32_0 = arith.constant 0 : i32
    %c0_i32_1 = arith.constant 0 : i32
    return %c0_i32, %c0_i32_0 : i32, i32
  }
  func.func @transform_39(%arg0: i32) -> (i32, i32) {
    %c0_i32 = arith.constant 0 : i32
    %c0_i32_0 = arith.constant 0 : i32
    %c0_i32_1 = arith.constant 0 : i32
    return %c0_i32, %c0_i32_0 : i32, i32
  }
  func.func @transform_40(%arg0: i32) -> (i32, i32) {
    %c0_i32 = arith.constant 0 : i32
    %c0_i32_0 = arith.constant 0 : i32
    %c0_i32_1 = arith.constant 0 : i32
    return %c0_i32, %c0_i32_0 : i32, i32
  }
  func.func @transform_41(%arg0: i32) -> (i32, i32) {
    %c0_i32 = arith.constant 0 : i32
    %c0_i32_0 = arith.constant 0 : i32
    %c0_i32_1 = arith.constant 0 : i32
    return %c0_i32, %c0_i32_0 : i32, i32
  }
  func.func @transform_42(%arg0: i32) -> (i32, i32) {
    %c0_i32 = arith.constant 0 : i32
    %c0_i32_0 = arith.constant 0 : i32
    %c0_i32_1 = arith.constant 0 : i32
    return %c0_i32, %c0_i32_0 : i32, i32
  }
  func.func @transform_43(%arg0: i32) -> (i32, i32) {
    %c0_i32 = arith.constant 0 : i32
    %c0_i32_0 = arith.constant 0 : i32
    %c0_i32_1 = arith.constant 0 : i32
    return %c0_i32, %c0_i32_0 : i32, i32
  }
  func.func @transform_44(%arg0: i32) -> (i32, i32) {
    %c0_i32 = arith.constant 0 : i32
    %c0_i32_0 = arith.constant 0 : i32
    %c0_i32_1 = arith.constant 0 : i32
    return %c0_i32, %c0_i32_0 : i32, i32
  }
  func.func @transform_45(%arg0: i32) -> (i32, i32) {
    %c0_i32 = arith.constant 0 : i32
    %c0_i32_0 = arith.constant 0 : i32
    %c0_i32_1 = arith.constant 0 : i32
    return %c0_i32, %c0_i32_0 : i32, i32
  }
  func.func @transform_46(%arg0: i32) -> (i32, i32) {
    %c0_i32 = arith.constant 0 : i32
    %c0_i32_0 = arith.constant 0 : i32
    %c0_i32_1 = arith.constant 0 : i32
    return %c0_i32, %c0_i32_0 : i32, i32
  }
  func.func @transform_47(%arg0: i32) -> (i32, i32) {
    %c0_i32 = arith.constant 0 : i32
    %c0_i32_0 = arith.constant 0 : i32
    %c0_i32_1 = arith.constant 0 : i32
    return %c0_i32, %c0_i32_0 : i32, i32
  }
  func.func @transform_48(%arg0: i32) -> (i32, i32) {
    %c0_i32 = arith.constant 0 : i32
    %c0_i32_0 = arith.constant 0 : i32
    %c0_i32_1 = arith.constant 0 : i32
    return %c0_i32, %c0_i32_0 : i32, i32
  }
  func.func @transform_49(%arg0: i32) -> (i32, i32) {
    %c0_i32 = arith.constant 0 : i32
    %c0_i32_0 = arith.constant 0 : i32
    %c0_i32_1 = arith.constant 0 : i32
    return %c0_i32, %c0_i32_0 : i32, i32
  }
  func.func @transform_50(%arg0: i32) -> (i32, i32) {
    %c0_i32 = arith.constant 0 : i32
    %c0_i32_0 = arith.constant 0 : i32
    %c0_i32_1 = arith.constant 0 : i32
    return %c0_i32, %c0_i32_0 : i32, i32
  }
  func.func @transform_51(%arg0: i32) -> (i32, i32) {
    %c0_i32 = arith.constant 0 : i32
    %c0_i32_0 = arith.constant 0 : i32
    %c0_i32_1 = arith.constant 0 : i32
    return %c0_i32, %c0_i32_0 : i32, i32
  }
  func.func @transform_52(%arg0: i32) -> (i32, i32) {
    %c0_i32 = arith.constant 0 : i32
    %c0_i32_0 = arith.constant 0 : i32
    %c0_i32_1 = arith.constant 0 : i32
    return %c0_i32, %c0_i32_0 : i32, i32
  }
  func.func @transform_53(%arg0: i32) -> (i32, i32) {
    %c0_i32 = arith.constant 0 : i32
    %c0_i32_0 = arith.constant 0 : i32
    %c0_i32_1 = arith.constant 0 : i32
    return %c0_i32, %c0_i32_0 : i32, i32
  }
  func.func @transform_54(%arg0: i32) -> (i32, i32) {
    %c0_i32 = arith.constant 0 : i32
    %c0_i32_0 = arith.constant 0 : i32
    %c0_i32_1 = arith.constant 0 : i32
    return %c0_i32, %c0_i32_0 : i32, i32
  }
  func.func @transform_55(%arg0: i32) -> (i32, i32) {
    %c0_i32 = arith.constant 0 : i32
    %c0_i32_0 = arith.constant 0 : i32
    %c0_i32_1 = arith.constant 0 : i32
    return %c0_i32, %c0_i32_0 : i32, i32
  }
  func.func @transform_56(%arg0: i32) -> (i32, i32) {
    %c0_i32 = arith.constant 0 : i32
    %c0_i32_0 = arith.constant 0 : i32
    %c0_i32_1 = arith.constant 0 : i32
    return %c0_i32, %c0_i32_0 : i32, i32
  }
  func.func @transform_57(%arg0: i32) -> (i32, i32) {
    %c0_i32 = arith.constant 0 : i32
    %c0_i32_0 = arith.constant 0 : i32
    %c0_i32_1 = arith.constant 0 : i32
    return %c0_i32, %c0_i32_0 : i32, i32
  }
  func.func @transform_58(%arg0: i32) -> (i32, i32) {
    %c0_i32 = arith.constant 0 : i32
    %c0_i32_0 = arith.constant 0 : i32
    %c0_i32_1 = arith.constant 0 : i32
    return %c0_i32, %c0_i32_0 : i32, i32
  }
  func.func @transform_59(%arg0: i32) -> (i32, i32) {
    %c0_i32 = arith.constant 0 : i32
    %c0_i32_0 = arith.constant 0 : i32
    %c0_i32_1 = arith.constant 0 : i32
    return %c0_i32, %c0_i32_0 : i32, i32
  }
  func.func @transform_60(%arg0: i32) -> (i32, i32) {
    %c0_i32 = arith.constant 0 : i32
    %c0_i32_0 = arith.constant 0 : i32
    %c0_i32_1 = arith.constant 0 : i32
    return %c0_i32, %c0_i32_0 : i32, i32
  }
  func.func @transform_61(%arg0: i32) -> (i32, i32) {
    %c0_i32 = arith.constant 0 : i32
    %c0_i32_0 = arith.constant 0 : i32
    %c0_i32_1 = arith.constant 0 : i32
    return %c0_i32, %c0_i32_0 : i32, i32
  }
  func.func @transform_62(%arg0: i32) -> (i32, i32) {
    %c0_i32 = arith.constant 0 : i32
    %c0_i32_0 = arith.constant 0 : i32
    %c0_i32_1 = arith.constant 0 : i32
    return %c0_i32, %c0_i32_0 : i32, i32
  }
  func.func @transform_63(%arg0: i32) -> (i32, i32) {
    %c0_i32 = arith.constant 0 : i32
    %c0_i32_0 = arith.constant 0 : i32
    %c0_i32_1 = arith.constant 0 : i32
    return %c0_i32, %c0_i32_0 : i32, i32
  }
  func.func @transform_64(%arg0: i32) -> (i32, i32) {
    %c0_i32 = arith.constant 0 : i32
    %c0_i32_0 = arith.constant 0 : i32
    %c0_i32_1 = arith.constant 0 : i32
    return %c0_i32, %c0_i32_0 : i32, i32
  }
  func.func @transform_65(%arg0: i32) -> (i32, i32) {
    %c0_i32 = arith.constant 0 : i32
    %c0_i32_0 = arith.constant 0 : i32
    %c0_i32_1 = arith.constant 0 : i32
    return %c0_i32, %c0_i32_0 : i32, i32
  }
  func.func @transform_66(%arg0: i32) -> (i32, i32) {
    %c0_i32 = arith.constant 0 : i32
    %c0_i32_0 = arith.constant 0 : i32
    %c0_i32_1 = arith.constant 0 : i32
    return %c0_i32, %c0_i32_0 : i32, i32
  }
  func.func @transform_67(%arg0: i32) -> (i32, i32, i32) {
    %c0_i32 = arith.constant 0 : i32
    %c0_i32_0 = arith.constant 0 : i32
    %c0_i32_1 = arith.constant 0 : i32
    return %arg0, %c0_i32, %c0_i32_0 : i32, i32, i32
  }
}

</mosaic_0001>

<llo_original>
// kernel: vac_encoder_forward.1
$region0: #{vac_encoder_forward.1}
  #allocation0 [shape = 'u32[]', space=smem, size = 0x4, offset = 0x4, fixed_abs, tag = 'smem constant byte address 0x4 - core index']
  #allocation1 [shape = 'u32[144,128]{1,0:T(1,128)}', space=vmem, size = 0x12000, scoped, tag = 'internal scratch']
  %s0 = inlined_call_operand.smem [shape: u32[68], index: -1, kind: input, shape index: {}]
  %s1 = sld [smem:[%s0]]
  %s2 = scalar_lea.smem %s0, 1
  %s3 = sld [smem:[%s2]]
  %s4 = scalar_lea.smem %s0, 2
  %s5 = sld [smem:[%s4]]
  %s6 = scalar_lea.smem %s0, 3
  %s7 = sld [smem:[%s6]]
  %s8 = scalar_lea.smem %s0, 4
  %s9 = sld [smem:[%s8]]
  %s10 = scalar_lea.smem %s0, 5
  %s11 = sld [smem:[%s10]]
  %s12 = scalar_lea.smem %s0, 6
  %s13 = sld [smem:[%s12]]
  %s14 = scalar_lea.smem %s0, 7
  %s15 = sld [smem:[%s14]]
  %s16 = scalar_lea.smem %s0, 8
  %s17 = sld [smem:[%s16]]
  %s18 = scalar_lea.smem %s0, 9
  %s19 = sld [smem:[%s18]]
  %s20 = scalar_lea.smem %s0, 10
  %s21 = sld [smem:[%s20]]
  %s22 = scalar_lea.smem %s0, 11
  %s23 = sld [smem:[%s22]]
  %s24 = scalar_lea.smem %s0, 12
  %s25 = sld [smem:[%s24]]
  %s26 = scalar_lea.smem %s0, 13
  %s27 = sld [smem:[%s26]]
  %s28 = scalar_lea.smem %s0, 14
  %s29 = sld [smem:[%s28]]
  %s30 = scalar_lea.smem %s0, 15
  %s31 = sld [smem:[%s30]]
  %s32 = scalar_lea.smem %s0, 16
  %s33 = sld [smem:[%s32]]
  %s34 = scalar_lea.smem %s0, 17
  %s35 = sld [smem:[%s34]]
  %s36 = scalar_lea.smem %s0, 18
  %s37 = sld [smem:[%s36]]
  %s38 = scalar_lea.smem %s0, 19
  %s39 = sld [smem:[%s38]]
  %s40 = scalar_lea.smem %s0, 20
  %s41 = sld [smem:[%s40]]
  %s42 = scalar_lea.smem %s0, 21
  %s43 = sld [smem:[%s42]]
  %s44 = scalar_lea.smem %s0, 22
  %s45 = sld [smem:[%s44]]
  %s46 = scalar_lea.smem %s0, 23
  %s47 = sld [smem:[%s46]]
  %s48 = scalar_lea.smem %s0, 24
  %s49 = sld [smem:[%s48]]
  %s50 = scalar_lea.smem %s0, 25
  %s51 = sld [smem:[%s50]]
  %s52 = scalar_lea.smem %s0, 26
  %s53 = sld [smem:[%s52]]
  %s54 = scalar_lea.smem %s0, 27
  %s55 = sld [smem:[%s54]]
  %s56 = scalar_lea.smem %s0, 28
  %s57 = sld [smem:[%s56]]
  %s58 = scalar_lea.smem %s0, 29
  %s59 = sld [smem:[%s58]]
  %s60 = scalar_lea.smem %s0, 30
  %s61 = sld [smem:[%s60]]
  %s62 = scalar_lea.smem %s0, 31
  %s63 = sld [smem:[%s62]]
  %s64 = scalar_lea.smem %s0, 32
  %s65 = sld [smem:[%s64]]
  %s66 = scalar_lea.smem %s0, 33
  %s67 = sld [smem:[%s66]]
  %s68 = scalar_lea.smem %s0, 34
  %s69 = sld [smem:[%s68]]
  %s70 = scalar_lea.smem %s0, 35
  %s71 = sld [smem:[%s70]]
  %s72 = scalar_lea.smem %s0, 36
  %s73 = sld [smem:[%s72]]
  %s74 = scalar_lea.smem %s0, 37
  %s75 = sld [smem:[%s74]]
  %s76 = scalar_lea.smem %s0, 38
  %s77 = sld [smem:[%s76]]
  %s78 = scalar_lea.smem %s0, 39
  %s79 = sld [smem:[%s78]]
  %s80 = scalar_lea.smem %s0, 40
  %s81 = sld [smem:[%s80]]
  %s82 = scalar_lea.smem %s0, 41
  %s83 = sld [smem:[%s82]]
  %s84 = scalar_lea.smem %s0, 42
  %s85 = sld [smem:[%s84]]
  %s86 = scalar_lea.smem %s0, 43
  %s87 = sld [smem:[%s86]]
  %s88 = scalar_lea.smem %s0, 44
  %s89 = sld [smem:[%s88]]
  %s90 = scalar_lea.smem %s0, 45
  %s91 = sld [smem:[%s90]]
  %s92 = scalar_lea.smem %s0, 46
  %s93 = sld [smem:[%s92]]
  %s94 = scalar_lea.smem %s0, 47
  %s95 = sld [smem:[%s94]]
  %s96 = scalar_lea.smem %s0, 48
  %s97 = sld [smem:[%s96]]
  %s98 = scalar_lea.smem %s0, 49
  %s99 = sld [smem:[%s98]]
  %s100 = scalar_lea.smem %s0, 50
  %s101 = sld [smem:[%s100]]
  %s102 = scalar_lea.smem %s0, 51
  %s103 = sld [smem:[%s102]]
  %s104 = scalar_lea.smem %s0, 52
  %s105 = sld [smem:[%s104]]
  %s106 = scalar_lea.smem %s0, 53
  %s107 = sld [smem:[%s106]]
  %s108 = scalar_lea.smem %s0, 54
  %s109 = sld [smem:[%s108]]
  %s110 = scalar_lea.smem %s0, 55
  %s111 = sld [smem:[%s110]]
  %s112 = scalar_lea.smem %s0, 56
  %s113 = sld [smem:[%s112]]
  %s114 = scalar_lea.smem %s0, 57
  %s115 = sld [smem:[%s114]]
  %s116 = scalar_lea.smem %s0, 58
  %s117 = sld [smem:[%s116]]
  %s118 = scalar_lea.smem %s0, 59
  %s119 = sld [smem:[%s118]]
  %s120 = scalar_lea.smem %s0, 60
  %s121 = sld [smem:[%s120]]
  %s122 = scalar_lea.smem %s0, 61
  %s123 = sld [smem:[%s122]]
  %s124 = scalar_lea.smem %s0, 62
  %s125 = sld [smem:[%s124]]
  %s126 = scalar_lea.smem %s0, 63
  %s127 = sld [smem:[%s126]]
  %s128 = scalar_lea.smem %s0, 64
  %s129 = sld [smem:[%s128]]
  %s130 = scalar_lea.smem %s0, 65
  %s131 = sld [smem:[%s130]]
  %s132 = scalar_lea.smem %s0, 66
  %s133 = sld [smem:[%s132]]
  %s134 = scalar_lea.smem %s0, 67
  %s135 = sld [smem:[%s134]]
  %s136 = sld [smem:[#allocation0]]
  $region401: #{vac_encoder_forward.1} parent=0
    _
  %s138 = ssub.s32 1, %s136
  %s139 = scalar_select 0, %s138, %s136
  $region1: #{vac_encoder_forward.1} parent=0
    #allocation2 [shape = 'u8[512]{0}', space=vmem, size = 0x400, scoped, tag = 'input window, operand 4, single buffered']
    #allocation3 [shape = 's32[2]{0}', space=sflag, size = 0x8, scoped, tag = 'scoped memory for vac_encoder_forward.1']
    #allocation4 [shape = 'u8[512]{0}', space=vmem, size = 0x400, scoped, tag = 'input window, operand 5, single buffered']
    #allocation5 [shape = 's32[1]{0}', space=sflag, size = 0x4, scoped, tag = 'scoped memory for vac_encoder_forward.1']
    #allocation6 [shape = 'u8[512]{0}', space=vmem, size = 0x400, scoped, tag = 'input window, operand 6, single buffered']
    #allocation7 [shape = 'u8[512]{0}', space=vmem, size = 0x400, scoped, tag = 'input window, operand 7, single buffered']
    #allocation8 [shape = 's32[1]{0}', space=sflag, size = 0x4, scoped, tag = 'scoped memory for vac_encoder_forward.1']
    #allocation9 [shape = 'u8[512]{0}', space=vmem, size = 0x400, scoped, tag = 'input window, operand 8, single buffered']
    #allocation10 [shape = 'u8[512]{0}', space=vmem, size = 0x400, scoped, tag = 'input window, operand 12, single buffered']
    #allocation11 [shape = 's32[1]{0}', space=sflag, size = 0x4, scoped, tag = 'scoped memory for vac_encoder_forward.1']
    #allocation12 [shape = 'u8[512]{0}', space=vmem, size = 0x400, scoped, tag = 'input window, operand 13, single buffered']
    #allocation13 [shape = 'u8[512]{0}', space=vmem, size = 0x400, scoped, tag = 'input window, operand 14, single buffered']
    #allocation14 [shape = 's32[1]{0}', space=sflag, size = 0x4, scoped, tag = 'scoped memory for vac_encoder_forward.1']
    #allocation15 [shape = 'u8[512]{0}', space=vmem, size = 0x400, scoped, tag = 'input window, operand 15, single buffered']
    #allocation16 [shape = 'u8[512]{0}', space=vmem, size = 0x400, scoped, tag = 'input window, operand 16, single buffered']
    #allocation17 [shape = 's32[1]{0}', space=sflag, size = 0x4, scoped, tag = 'scoped memory for vac_encoder_forward.1']
    #allocation18 [shape = 'u8[512]{0}', space=vmem, size = 0x400, scoped, tag = 'input window, operand 17, single buffered']
    #allocation19 [shape = 'u8[512]{0}', space=vmem, size = 0x400, scoped, tag = 'input window, operand 18, single buffered']
    #allocation20 [shape = 's32[1]{0}', space=sflag, size = 0x4, scoped, tag = 'scoped memory for vac_encoder_forward.1']
    #allocation21 [shape = 'u8[512]{0}', space=vmem, size = 0x400, scoped, tag = 'input window, operand 19, single buffered']
    #allocation22 [shape = 'u8[512]{0}', space=vmem, size = 0x400, scoped, tag = 'input window, operand 24, single buffered']
    #allocation23 [shape = 's32[1]{0}', space=sflag, size = 0x4, scoped, tag = 'scoped memory for vac_encoder_forward.1']
    #allocation24 [shape = 'u8[512]{0}', space=vmem, size = 0x400, scoped, tag = 'input window, operand 25, single buffered']
    #allocation25 [shape = 'u8[512]{0}', space=vmem, size = 0x400, scoped, tag = 'input window, operand 26, single buffered']
    #allocation26 [shape = 's32[1]{0}', space=sflag, size = 0x4, scoped, tag = 'scoped memory for vac_encoder_forward.1']
    #allocation27 [shape = 'u8[512]{0}', space=vmem, size = 0x400, scoped, tag = 'input window, operand 27, single buffered']
    #allocation28 [shape = 'u8[512]{0}', space=vmem, size = 0x400, scoped, tag = 'input window, operand 28, single buffered']
    #allocation29 [shape = 's32[1]{0}', space=sflag, size = 0x4, scoped, tag = 'scoped memory for vac_encoder_forward.1']
    #allocation30 [shape = 'u8[512]{0}', space=vmem, size = 0x400, scoped, tag = 'input window, operand 29, single buffered']
    #allocation31 [shape = 'u8[512]{0}', space=vmem, size = 0x400, scoped, tag = 'input window, operand 30, single buffered']
    #allocation32 [shape = 's32[1]{0}', space=sflag, size = 0x4, scoped, tag = 'scoped memory for vac_encoder_forward.1']
    #allocation33 [shape = 'u8[512]{0}', space=vmem, size = 0x400, scoped, tag = 'input window, operand 34, single buffered']
    #allocation34 [shape = 'u8[512]{0}', space=vmem, size = 0x400, scoped, tag = 'input window, operand 35, single buffered']
    #allocation35 [shape = 's32[1]{0}', space=sflag, size = 0x4, scoped, tag = 'scoped memory for vac_encoder_forward.1']
    #allocation36 [shape = 'u8[512]{0}', space=vmem, size = 0x400, scoped, tag = 'input window, operand 61, single buffered']
    #allocation37 [shape = 'u8[512]{0}', space=vmem, size = 0x400, scoped, tag = 'input window, operand 63, single buffered']
    #allocation38 [shape = 's32[1]{0}', space=sflag, size = 0x4, scoped, tag = 'scoped memory for vac_encoder_forward.1']
    #allocation39 [shape = 'u8[512]{0}', space=vmem, size = 0x400, scoped, tag = 'input window, operand 65, single buffered']
    %140 = vsyncpa [#allocation3], 0
    %141 = vsyncpa [#allocation5], 0
    %142 = vsyncpa [#allocation8], 0
    %143 = vsyncpa [#allocation11], 0
    %144 = vsyncpa [#allocation14], 0
    %145 = vsyncpa [#allocation17], 0
    %146 = vsyncpa [#allocation20], 0
    %147 = vsyncpa [#allocation23], 0
    %148 = vsyncpa [#allocation26], 0
    %149 = vsyncpa [#allocation29], 0
    %150 = vsyncpa [#allocation32], 0
    %151 = vsyncpa [#allocation35], 0
    %152 = vsyncpa [#allocation38], 0
    loop: start=0, step=1, limit=4
    $region2: #{vac_encoder_forward.1} parent=1 // loop_pre_header
      _
    $region3: #{vac_encoder_forward.1} parent=1 // loop_header
      %s154 = sphi 0, %s158
      %p155 = scmp.ge.s32.totalorder %s154, 4
      %s164 = sphi 0, %s166
      %s167 = sphi 0, %s164
      %s168 = sphi 0, %s167
      %s184 = sphi 0, %s168
      %s190 = sphi 0, %s192
      %s193 = sphi 0, %s190
      %s194 = sphi 0, %s193
      %s210 = sphi 0, %s194
      %s214 = sphi 0, %s214
      %s216 = sphi 0, %s214
      %s217 = sphi 0, %s216
      %s231 = sphi 0, %s217
      %s235 = sphi 0, %s235
      %s237 = sphi 0, %s235
      %s238 = sphi 0, %s237
      %s252 = sphi 0, %s238
      %s256 = sphi 0, %s256
      %s258 = sphi 0, %s256
      %s259 = sphi 0, %s258
      %s273 = sphi 0, %s259
      %s277 = sphi 0, %s277
      %s279 = sphi 0, %s277
      %s280 = sphi 0, %s279
      %s294 = sphi 0, %s280
      %s298 = sphi 0, %s298
      %s300 = sphi 0, %s298
      %s301 = sphi 0, %s300
      %s315 = sphi 0, %s301
      %s319 = sphi 0, %s319
      %s321 = sphi 0, %s319
      %s322 = sphi 0, %s321
      %s336 = sphi 0, %s322
      %s340 = sphi 0, %s340
      %s342 = sphi 0, %s340
      %s343 = sphi 0, %s342
      %s357 = sphi 0, %s343
      %s361 = sphi 0, %s361
      %s363 = sphi 0, %s361
      %s364 = sphi 0, %s363
      %s378 = sphi 0, %s364
      %s382 = sphi 0, %s382
      %s384 = sphi 0, %s382
      %s385 = sphi 0, %s384
      %s399 = sphi 0, %s385
      %s403 = sphi 0, %s403
      %s405 = sphi 0, %s403
      %s406 = sphi 0, %s405
      %s420 = sphi 0, %s406
      %s424 = sphi 0, %s424
      %s426 = sphi 0, %s424
      %s427 = sphi 0, %s426
      %s441 = sphi 0, %s427
      %s445 = sphi 0, %s445
      %s447 = sphi 0, %s445
      %s448 = sphi 0, %s447
      %s462 = sphi 0, %s448
      %s466 = sphi 0, %s466
      %s468 = sphi 0, %s466
      %s469 = sphi 0, %s468
      %s483 = sphi 0, %s469
      %s487 = sphi 0, %s487
      %s489 = sphi 0, %s487
      %s490 = sphi 0, %s489
      %s504 = sphi 0, %s490
      %s508 = sphi 0, %s508
      %s510 = sphi 0, %s508
      %s511 = sphi 0, %s510
      %s525 = sphi 0, %s511
      %s529 = sphi 0, %s529
      %s531 = sphi 0, %s529
      %s532 = sphi 0, %s531
      %s546 = sphi 0, %s532
      %s550 = sphi 0, %s550
      %s552 = sphi 0, %s550
      %s553 = sphi 0, %s552
      %s567 = sphi 0, %s553
      %s571 = sphi 0, %s571
      %s573 = sphi 0, %s571
      %s574 = sphi 0, %s573
      %s588 = sphi 0, %s574
      %s592 = sphi 0, %s592
      %s594 = sphi 0, %s592
      %s595 = sphi 0, %s594
      %s609 = sphi 0, %s595
      %s613 = sphi 0, %s613
      %s615 = sphi 0, %s613
      %s616 = sphi 0, %s615
      %s630 = sphi 0, %s616
      %s634 = sphi 0, %s634
      %s636 = sphi 0, %s634
      %s637 = sphi 0, %s636
      %s651 = sphi 0, %s637
      %s655 = sphi 0, %s655
      %s657 = sphi 0, %s655
      %s658 = sphi 0, %s657
      %s672 = sphi 0, %s658
      %s676 = sphi 0, %s676
      %s678 = sphi 0, %s676
      %s679 = sphi 0, %s678
      %s693 = sphi 0, %s679
      %s697 = sphi 0, %s697
      %s699 = sphi 0, %s697
      %s700 = sphi 0, %s699
      %s714 = sphi 0, %s700
      %s718 = sphi 0, %s718
      %s720 = sphi 0, %s718
      %s721 = sphi 0, %s720
      %s735 = sphi 0, %s721
      %s739 = sphi 0, %s739
      %s741 = sphi 0, %s739
      %s742 = sphi 0, %s741
      %s756 = sphi 0, %s742
      %s760 = sphi 0, %s760
      %s762 = sphi 0, %s760
      %s763 = sphi 0, %s762
      %s777 = sphi 0, %s763
      %s781 = sphi 0, %s781
      %s783 = sphi 0, %s781
      %s784 = sphi 0, %s783
      %s798 = sphi 0, %s784
      %s802 = sphi 0, %s802
      %s804 = sphi 0, %s802
      %s805 = sphi 0, %s804
      %s819 = sphi 0, %s805
      %s823 = sphi 0, %s823
      %s825 = sphi 0, %s823
      %s826 = sphi 0, %s825
      %s840 = sphi 0, %s826
      %s844 = sphi 0, %s844
      %s846 = sphi 0, %s844
      %s847 = sphi 0, %s846
      %s861 = sphi 0, %s847
      %s865 = sphi 0, %s865
      %s867 = sphi 0, %s865
      %s868 = sphi 0, %s867
      %s882 = sphi 0, %s868
      %s886 = sphi 0, %s886
      %s888 = sphi 0, %s886
      %s889 = sphi 0, %s888
      %s903 = sphi 0, %s889
      %s907 = sphi 0, %s907
      %s909 = sphi 0, %s907
      %s910 = sphi 0, %s909
      %s924 = sphi 0, %s910
      %s928 = sphi 0, %s928
      %s930 = sphi 0, %s928
      %s931 = sphi 0, %s930
      %s945 = sphi 0, %s931
      %s949 = sphi 0, %s949
      %s951 = sphi 0, %s949
      %s952 = sphi 0, %s951
      %s966 = sphi 0, %s952
      %s970 = sphi 0, %s970
      %s972 = sphi 0, %s970
      %s973 = sphi 0, %s972
      %s987 = sphi 0, %s973
      %s991 = sphi 0, %s991
      %s993 = sphi 0, %s991
      %s994 = sphi 0, %s993
      %s1008 = sphi 0, %s994
      %s1012 = sphi 0, %s1012
      %s1014 = sphi 0, %s1012
      %s1015 = sphi 0, %s1014
      %s1029 = sphi 0, %s1015
      %s1033 = sphi 0, %s1033
      %s1035 = sphi 0, %s1033
      %s1036 = sphi 0, %s1035
      %s1050 = sphi 0, %s1036
      %s1054 = sphi 0, %s1054
      %s1056 = sphi 0, %s1054
      %s1057 = sphi 0, %s1056
      %s1071 = sphi 0, %s1057
      %s1075 = sphi 0, %s1075
      %s1077 = sphi 0, %s1075
      %s1078 = sphi 0, %s1077
      %s1092 = sphi 0, %s1078
      %s1096 = sphi 0, %s1096
      %s1098 = sphi 0, %s1096
      %s1099 = sphi 0, %s1098
      %s1113 = sphi 0, %s1099
      %s1117 = sphi 0, %s1117
      %s1119 = sphi 0, %s1117
      %s1120 = sphi 0, %s1119
      %s1134 = sphi 0, %s1120
      %s1138 = sphi 0, %s1138
      %s1140 = sphi 0, %s1138
      %s1141 = sphi 0, %s1140
      %s1155 = sphi 0, %s1141
      %s1159 = sphi 0, %s1159
      %s1161 = sphi 0, %s1159
      %s1162 = sphi 0, %s1161
      %s1176 = sphi 0, %s1162
      %s1180 = sphi 0, %s1180
      %s1182 = sphi 0, %s1180
      %s1183 = sphi 0, %s1182
      %s1197 = sphi 0, %s1183
      %s1201 = sphi 0, %s1201
      %s1203 = sphi 0, %s1201
      %s1204 = sphi 0, %s1203
      %s1218 = sphi 0, %s1204
      %s1222 = sphi 0, %s1222
      %s1224 = sphi 0, %s1222
      %s1225 = sphi 0, %s1224
      %s1239 = sphi 0, %s1225
      %s1243 = sphi 0, %s1243
      %s1245 = sphi 0, %s1243
      %s1246 = sphi 0, %s1245
      %s1260 = sphi 0, %s1246
      %s1264 = sphi 0, %s1264
      %s1266 = sphi 0, %s1264
      %s1267 = sphi 0, %s1266
      %s1281 = sphi 0, %s1267
      %s1285 = sphi 0, %s1285
      %s1287 = sphi 0, %s1285
      %s1288 = sphi 0, %s1287
      %s1302 = sphi 0, %s1288
      %s1306 = sphi 0, %s1306
      %s1308 = sphi 0, %s1306
      %s1309 = sphi 0, %s1308
      %s1323 = sphi 0, %s1309
      %s1327 = sphi 0, %s1327
      %s1329 = sphi 0, %s1327
      %s1330 = sphi 0, %s1329
      %s1344 = sphi 0, %s1330
      %s1348 = sphi 0, %s1348
      %s1350 = sphi 0, %s1348
      %s1351 = sphi 0, %s1350
      %s1365 = sphi 0, %s1351
      %s1369 = sphi 0, %s1369
      %s1371 = sphi 0, %s1369
      %s1372 = sphi 0, %s1371
      %s1386 = sphi 0, %s1372
      %s1390 = sphi 0, %s1390
      %s1392 = sphi 0, %s1390
      %s1393 = sphi 0, %s1392
      %s1407 = sphi 0, %s1393
      %s1411 = sphi 0, %s1411
      %s1413 = sphi 0, %s1411
      %s1414 = sphi 0, %s1413
      %s1428 = sphi 0, %s1414
      %s1432 = sphi 0, %s1432
      %s1434 = sphi 0, %s1432
      %s1435 = sphi 0, %s1434
      %s1449 = sphi 0, %s1435
      %s1453 = sphi 0, %s1453
      %s1455 = sphi 0, %s1453
      %s1456 = sphi 0, %s1455
      %s1470 = sphi 0, %s1456
      %s1474 = sphi 0, %s1474
      %s1476 = sphi 0, %s1474
      %s1477 = sphi 0, %s1476
      %s1491 = sphi 0, %s1477
      %s1495 = sphi 0, %s1495
      %s1497 = sphi 0, %s1495
      %s1498 = sphi 0, %s1497
      %s1512 = sphi 0, %s1498
      %s1516 = sphi 0, %s1516
      %s1518 = sphi 0, %s1516
      %s1519 = sphi 0, %s1518
      %s1533 = sphi 0, %s1519
      %s1537 = sphi 0, %s1537
      %s1539 = sphi 0, %s1537
      %s1540 = sphi 0, %s1539
      %s1554 = sphi 0, %s1540
      %s1558 = sphi 0, %s1558
      %s1560 = sphi 0, %s1558
      %s1561 = sphi 0, %s1560
      %s1575 = sphi 0, %s1561
      %s1581 = sphi 0, %s1583
      %s1584 = sphi 0, %s1581
      %s1585 = sphi 0, %s1584
      %s1601 = sphi 0, %s1585
    $region4: #{vac_encoder_forward.1} parent=1 // loop_header_branch
      %157 = sbr.rel (%p155) target = $region8
    $region5: #{vac_encoder_forward.1} parent=1 // loop_body
      %s159 = ssub.s32 %s154, 1
      %s160 = ssub.s32 %s154, 2
      %s161 = sadd.s32 %s154, 1
      %s162 = ssub.s32 %s154, %s161
      %p163 = scmp.eq.s32.totalorder %s162, 0
      %s165 = sadd.s32 %s164, 1
      %s166 = scalar_select %p163, %s164, %s165
      %p169 = pneg %p163
      %p170 = scmp.eq.s32.totalorder %s154, 1
      %p171 = por %p169, %p170
      %p172 = scmp.ne.s32.totalorder %s164, %s167
      %p173 = scmp.eq.s32.totalorder %s154, 0
      %p174 = por %p172, %p173
      %p175 = scmp.ne.s32.totalorder %s164, %s167
      %p176 = scmp.eq.s32.totalorder %s159, 1
      %p177 = por %p175, %p176
      %p178 = scmp.ne.s32.totalorder %s167, %s168
      %p179 = scmp.eq.s32.totalorder %s159, 0
      %p180 = por %p178, %p179
      %p181 = scmp.ne.s32.totalorder %s167, %s168
      %p182 = scmp.eq.s32.totalorder %s160, 1
      %p183 = por %p181, %p182
      %p185 = scmp.ne.s32.totalorder %s168, %s184
      %p186 = scmp.eq.s32.totalorder %s160, 0
      %p187 = por %p185, %p186
      %s188 = ssub.s32 %s154, %s161
      %p189 = scmp.eq.s32.totalorder %s188, 0
      %s191 = sadd.s32 %s190, 1
      %s192 = scalar_select %p189, %s190, %s191
      %p195 = pneg %p189
      %p196 = scmp.eq.s32.totalorder %s154, 1
      %p197 = por %p195, %p196
      %p198 = scmp.ne.s32.totalorder %s190, %s193
      %p199 = scmp.eq.s32.totalorder %s154, 0
      %p200 = por %p198, %p199
      %p201 = scmp.ne.s32.totalorder %s190, %s193
      %p202 = scmp.eq.s32.totalorder %s159, 1
      %p203 = por %p201, %p202
      %p204 = scmp.ne.s32.totalorder %s193, %s194
      %p205 = scmp.eq.s32.totalorder %s159, 0
      %p206 = por %p204, %p205
      %p207 = scmp.ne.s32.totalorder %s193, %s194
      %p208 = scmp.eq.s32.totalorder %s160, 1
      %p209 = por %p207, %p208
      %p211 = scmp.ne.s32.totalorder %s194, %s210
      %p212 = scmp.eq.s32.totalorder %s160, 0
      %p213 = por %p211, %p212
      %s215 = sadd.s32 %s214, 1
      %p218 = scmp.eq.s32.totalorder %s154, 1
      %p219 = scmp.ne.s32.totalorder %s214, %s216
      %p220 = scmp.eq.s32.totalorder %s154, 0
      %p221 = por %p219, %p220
      %p222 = scmp.ne.s32.totalorder %s214, %s216
      %p223 = scmp.eq.s32.totalorder %s159, 1
      %p224 = por %p222, %p223
      %p225 = scmp.ne.s32.totalorder %s216, %s217
      %p226 = scmp.eq.s32.totalorder %s159, 0
      %p227 = por %p225, %p226
      %p228 = scmp.ne.s32.totalorder %s216, %s217
      %p229 = scmp.eq.s32.totalorder %s160, 1
      %p230 = por %p228, %p229
      %p232 = scmp.ne.s32.totalorder %s217, %s231
      %p233 = scmp.eq.s32.totalorder %s160, 0
      %p234 = por %p232, %p233
      %s236 = sadd.s32 %s235, 1
      %p239 = scmp.eq.s32.totalorder %s154, 1
      %p240 = scmp.ne.s32.totalorder %s235, %s237
      %p241 = scmp.eq.s32.totalorder %s154, 0
      %p242 = por %p240, %p241
      %p243 = scmp.ne.s32.totalorder %s235, %s237
      %p244 = scmp.eq.s32.totalorder %s159, 1
      %p245 = por %p243, %p244
      %p246 = scmp.ne.s32.totalorder %s237, %s238
      %p247 = scmp.eq.s32.totalorder %s159, 0
      %p248 = por %p246, %p247
      %p249 = scmp.ne.s32.totalorder %s237, %s238
      %p250 = scmp.eq.s32.totalorder %s160, 1
      %p251 = por %p249, %p250
      %p253 = scmp.ne.s32.totalorder %s238, %s252
      %p254 = scmp.eq.s32.totalorder %s160, 0
      %p255 = por %p253, %p254
      %s257 = sadd.s32 %s256, 1
      %p260 = scmp.eq.s32.totalorder %s154, 1
      %p261 = scmp.ne.s32.totalorder %s256, %s258
      %p262 = scmp.eq.s32.totalorder %s154, 0
      %p263 = por %p261, %p262
      %p264 = scmp.ne.s32.totalorder %s256, %s258
      %p265 = scmp.eq.s32.totalorder %s159, 1
      %p266 = por %p264, %p265
      %p267 = scmp.ne.s32.totalorder %s258, %s259
      %p268 = scmp.eq.s32.totalorder %s159, 0
      %p269 = por %p267, %p268
      %p270 = scmp.ne.s32.totalorder %s258, %s259
      %p271 = scmp.eq.s32.totalorder %s160, 1
      %p272 = por %p270, %p271
      %p274 = scmp.ne.s32.totalorder %s259, %s273
      %p275 = scmp.eq.s32.totalorder %s160, 0
      %p276 = por %p274, %p275
      %s278 = sadd.s32 %s277, 1
      %p281 = scmp.eq.s32.totalorder %s154, 1
      %p282 = scmp.ne.s32.totalorder %s277, %s279
      %p283 = scmp.eq.s32.totalorder %s154, 0
      %p284 = por %p282, %p283
      %p285 = scmp.ne.s32.totalorder %s277, %s279
      %p286 = scmp.eq.s32.totalorder %s159, 1
      %p287 = por %p285, %p286
      %p288 = scmp.ne.s32.totalorder %s279, %s280
      %p289 = scmp.eq.s32.totalorder %s159, 0
      %p290 = por %p288, %p289
      %p291 = scmp.ne.s32.totalorder %s279, %s280
      %p292 = scmp.eq.s32.totalorder %s160, 1
      %p293 = por %p291, %p292
      %p295 = scmp.ne.s32.totalorder %s280, %s294
      %p296 = scmp.eq.s32.totalorder %s160, 0
      %p297 = por %p295, %p296
      %s299 = sadd.s32 %s298, 1
      %p302 = scmp.eq.s32.totalorder %s154, 1
      %p303 = scmp.ne.s32.totalorder %s298, %s300
      %p304 = scmp.eq.s32.totalorder %s154, 0
      %p305 = por %p303, %p304
      %p306 = scmp.ne.s32.totalorder %s298, %s300
      %p307 = scmp.eq.s32.totalorder %s159, 1
      %p308 = por %p306, %p307
      %p309 = scmp.ne.s32.totalorder %s300, %s301
      %p310 = scmp.eq.s32.totalorder %s159, 0
      %p311 = por %p309, %p310
      %p312 = scmp.ne.s32.totalorder %s300, %s301
      %p313 = scmp.eq.s32.totalorder %s160, 1
      %p314 = por %p312, %p313
      %p316 = scmp.ne.s32.totalorder %s301, %s315
      %p317 = scmp.eq.s32.totalorder %s160, 0
      %p318 = por %p316, %p317
      %s320 = sadd.s32 %s319, 1
      %p323 = scmp.eq.s32.totalorder %s154, 1
      %p324 = scmp.ne.s32.totalorder %s319, %s321
      %p325 = scmp.eq.s32.totalorder %s154, 0
      %p326 = por %p324, %p325
      %p327 = scmp.ne.s32.totalorder %s319, %s321
      %p328 = scmp.eq.s32.totalorder %s159, 1
      %p329 = por %p327, %p328
      %p330 = scmp.ne.s32.totalorder %s321, %s322
      %p331 = scmp.eq.s32.totalorder %s159, 0
      %p332 = por %p330, %p331
      %p333 = scmp.ne.s32.totalorder %s321, %s322
      %p334 = scmp.eq.s32.totalorder %s160, 1
      %p335 = por %p333, %p334
      %p337 = scmp.ne.s32.totalorder %s322, %s336
      %p338 = scmp.eq.s32.totalorder %s160, 0
      %p339 = por %p337, %p338
      %s341 = sadd.s32 %s340, 1
      %p344 = scmp.eq.s32.totalorder %s154, 1
      %p345 = scmp.ne.s32.totalorder %s340, %s342
      %p346 = scmp.eq.s32.totalorder %s154, 0
      %p347 = por %p345, %p346
      %p348 = scmp.ne.s32.totalorder %s340, %s342
      %p349 = scmp.eq.s32.totalorder %s159, 1
      %p350 = por %p348, %p349
      %p351 = scmp.ne.s32.totalorder %s342, %s343
      %p352 = scmp.eq.s32.totalorder %s159, 0
      %p353 = por %p351, %p352
      %p354 = scmp.ne.s32.totalorder %s342, %s343
      %p355 = scmp.eq.s32.totalorder %s160, 1
      %p356 = por %p354, %p355
      %p358 = scmp.ne.s32.totalorder %s343, %s357
      %p359 = scmp.eq.s32.totalorder %s160, 0
      %p360 = por %p358, %p359
      %s362 = sadd.s32 %s361, 1
      %p365 = scmp.eq.s32.totalorder %s154, 1
      %p366 = scmp.ne.s32.totalorder %s361, %s363
      %p367 = scmp.eq.s32.totalorder %s154, 0
      %p368 = por %p366, %p367
      %p369 = scmp.ne.s32.totalorder %s361, %s363
      %p370 = scmp.eq.s32.totalorder %s159, 1
      %p371 = por %p369, %p370
      %p372 = scmp.ne.s32.totalorder %s363, %s364
      %p373 = scmp.eq.s32.totalorder %s159, 0
      %p374 = por %p372, %p373
      %p375 = scmp.ne.s32.totalorder %s363, %s364
      %p376 = scmp.eq.s32.totalorder %s160, 1
      %p377 = por %p375, %p376
      %p379 = scmp.ne.s32.totalorder %s364, %s378
      %p380 = scmp.eq.s32.totalorder %s160, 0
      %p381 = por %p379, %p380
      %s383 = sadd.s32 %s382, 1
      %p386 = scmp.eq.s32.totalorder %s154, 1
      %p387 = scmp.ne.s32.totalorder %s382, %s384
      %p388 = scmp.eq.s32.totalorder %s154, 0
      %p389 = por %p387, %p388
      %p390 = scmp.ne.s32.totalorder %s382, %s384
      %p391 = scmp.eq.s32.totalorder %s159, 1
      %p392 = por %p390, %p391
      %p393 = scmp.ne.s32.totalorder %s384, %s385
      %p394 = scmp.eq.s32.totalorder %s159, 0
      %p395 = por %p393, %p394
      %p396 = scmp.ne.s32.totalorder %s384, %s385
      %p397 = scmp.eq.s32.totalorder %s160, 1
      %p398 = por %p396, %p397
      %p400 = scmp.ne.s32.totalorder %s385, %s399
      %p401 = scmp.eq.s32.totalorder %s160, 0
      %p402 = por %p400, %p401
      %s404 = sadd.s32 %s403, 1
      %p407 = scmp.eq.s32.totalorder %s154, 1
      %p408 = scmp.ne.s32.totalorder %s403, %s405
      %p409 = scmp.eq.s32.totalorder %s154, 0
      %p410 = por %p408, %p409
      %p411 = scmp.ne.s32.totalorder %s403, %s405
      %p412 = scmp.eq.s32.totalorder %s159, 1
      %p413 = por %p411, %p412
      %p414 = scmp.ne.s32.totalorder %s405, %s406
      %p415 = scmp.eq.s32.totalorder %s159, 0
      %p416 = por %p414, %p415
      %p417 = scmp.ne.s32.totalorder %s405, %s406
      %p418 = scmp.eq.s32.totalorder %s160, 1
      %p419 = por %p417, %p418
      %p421 = scmp.ne.s32.totalorder %s406, %s420
      %p422 = scmp.eq.s32.totalorder %s160, 0
      %p423 = por %p421, %p422
      %s425 = sadd.s32 %s424, 1
      %p428 = scmp.eq.s32.totalorder %s154, 1
      %p429 = scmp.ne.s32.totalorder %s424, %s426
      %p430 = scmp.eq.s32.totalorder %s154, 0
      %p431 = por %p429, %p430
      %p432 = scmp.ne.s32.totalorder %s424, %s426
      %p433 = scmp.eq.s32.totalorder %s159, 1
      %p434 = por %p432, %p433
      %p435 = scmp.ne.s32.totalorder %s426, %s427
      %p436 = scmp.eq.s32.totalorder %s159, 0
      %p437 = por %p435, %p436
      %p438 = scmp.ne.s32.totalorder %s426, %s427
      %p439 = scmp.eq.s32.totalorder %s160, 1
      %p440 = por %p438, %p439
      %p442 = scmp.ne.s32.totalorder %s427, %s441
      %p443 = scmp.eq.s32.totalorder %s160, 0
      %p444 = por %p442, %p443
      %s446 = sadd.s32 %s445, 1
      %p449 = scmp.eq.s32.totalorder %s154, 1
      %p450 = scmp.ne.s32.totalorder %s445, %s447
      %p451 = scmp.eq.s32.totalorder %s154, 0
      %p452 = por %p450, %p451
      %p453 = scmp.ne.s32.totalorder %s445, %s447
      %p454 = scmp.eq.s32.totalorder %s159, 1
      %p455 = por %p453, %p454
      %p456 = scmp.ne.s32.totalorder %s447, %s448
      %p457 = scmp.eq.s32.totalorder %s159, 0
      %p458 = por %p456, %p457
      %p459 = scmp.ne.s32.totalorder %s447, %s448
      %p460 = scmp.eq.s32.totalorder %s160, 1
      %p461 = por %p459, %p460
      %p463 = scmp.ne.s32.totalorder %s448, %s462
      %p464 = scmp.eq.s32.totalorder %s160, 0
      %p465 = por %p463, %p464
      %s467 = sadd.s32 %s466, 1
      %p470 = scmp.eq.s32.totalorder %s154, 1
      %p471 = scmp.ne.s32.totalorder %s466, %s468
      %p472 = scmp.eq.s32.totalorder %s154, 0
      %p473 = por %p471, %p472
      %p474 = scmp.ne.s32.totalorder %s466, %s468
      %p475 = scmp.eq.s32.totalorder %s159, 1
      %p476 = por %p474, %p475
      %p477 = scmp.ne.s32.totalorder %s468, %s469
      %p478 = scmp.eq.s32.totalorder %s159, 0
      %p479 = por %p477, %p478
      %p480 = scmp.ne.s32.totalorder %s468, %s469
      %p481 = scmp.eq.s32.totalorder %s160, 1
      %p482 = por %p480, %p481
      %p484 = scmp.ne.s32.totalorder %s469, %s483
      %p485 = scmp.eq.s32.totalorder %s160, 0
      %p486 = por %p484, %p485
      %s488 = sadd.s32 %s487, 1
      %p491 = scmp.eq.s32.totalorder %s154, 1
      %p492 = scmp.ne.s32.totalorder %s487, %s489
      %p493 = scmp.eq.s32.totalorder %s154, 0
      %p494 = por %p492, %p493
      %p495 = scmp.ne.s32.totalorder %s487, %s489
      %p496 = scmp.eq.s32.totalorder %s159, 1
      %p497 = por %p495, %p496
      %p498 = scmp.ne.s32.totalorder %s489, %s490
      %p499 = scmp.eq.s32.totalorder %s159, 0
      %p500 = por %p498, %p499
      %p501 = scmp.ne.s32.totalorder %s489, %s490
      %p502 = scmp.eq.s32.totalorder %s160, 1
      %p503 = por %p501, %p502
      %p505 = scmp.ne.s32.totalorder %s490, %s504
      %p506 = scmp.eq.s32.totalorder %s160, 0
      %p507 = por %p505, %p506
      %s509 = sadd.s32 %s508, 1
      %p512 = scmp.eq.s32.totalorder %s154, 1
      %p513 = scmp.ne.s32.totalorder %s508, %s510
      %p514 = scmp.eq.s32.totalorder %s154, 0
      %p515 = por %p513, %p514
      %p516 = scmp.ne.s32.totalorder %s508, %s510
      %p517 = scmp.eq.s32.totalorder %s159, 1
      %p518 = por %p516, %p517
      %p519 = scmp.ne.s32.totalorder %s510, %s511
      %p520 = scmp.eq.s32.totalorder %s159, 0
      %p521 = por %p519, %p520
      %p522 = scmp.ne.s32.totalorder %s510, %s511
      %p523 = scmp.eq.s32.totalorder %s160, 1
      %p524 = por %p522, %p523
      %p526 = scmp.ne.s32.totalorder %s511, %s525
      %p527 = scmp.eq.s32.totalorder %s160, 0
      %p528 = por %p526, %p527
      %s530 = sadd.s32 %s529, 1
      %p533 = scmp.eq.s32.totalorder %s154, 1
      %p534 = scmp.ne.s32.totalorder %s529, %s531
      %p535 = scmp.eq.s32.totalorder %s154, 0
      %p536 = por %p534, %p535
      %p537 = scmp.ne.s32.totalorder %s529, %s531
      %p538 = scmp.eq.s32.totalorder %s159, 1
      %p539 = por %p537, %p538
      %p540 = scmp.ne.s32.totalorder %s531, %s532
      %p541 = scmp.eq.s32.totalorder %s159, 0
      %p542 = por %p540, %p541
      %p543 = scmp.ne.s32.totalorder %s531, %s532
      %p544 = scmp.eq.s32.totalorder %s160, 1
      %p545 = por %p543, %p544
      %p547 = scmp.ne.s32.totalorder %s532, %s546
      %p548 = scmp.eq.s32.totalorder %s160, 0
      %p549 = por %p547, %p548
      %s551 = sadd.s32 %s550, 1
      %p554 = scmp.eq.s32.totalorder %s154, 1
      %p555 = scmp.ne.s32.totalorder %s550, %s552
      %p556 = scmp.eq.s32.totalorder %s154, 0
      %p557 = por %p555, %p556
      %p558 = scmp.ne.s32.totalorder %s550, %s552
      %p559 = scmp.eq.s32.totalorder %s159, 1
      %p560 = por %p558, %p559
      %p561 = scmp.ne.s32.totalorder %s552, %s553
      %p562 = scmp.eq.s32.totalorder %s159, 0
      %p563 = por %p561, %p562
      %p564 = scmp.ne.s32.totalorder %s552, %s553
      %p565 = scmp.eq.s32.totalorder %s160, 1
      %p566 = por %p564, %p565
      %p568 = scmp.ne.s32.totalorder %s553, %s567
      %p569 = scmp.eq.s32.totalorder %s160, 0
      %p570 = por %p568, %p569
      %s572 = sadd.s32 %s571, 1
      %p575 = scmp.eq.s32.totalorder %s154, 1
      %p576 = scmp.ne.s32.totalorder %s571, %s573
      %p577 = scmp.eq.s32.totalorder %s154, 0
      %p578 = por %p576, %p577
      %p579 = scmp.ne.s32.totalorder %s571, %s573
      %p580 = scmp.eq.s32.totalorder %s159, 1
      %p581 = por %p579, %p580
      %p582 = scmp.ne.s32.totalorder %s573, %s574
      %p583 = scmp.eq.s32.totalorder %s159, 0
      %p584 = por %p582, %p583
      %p585 = scmp.ne.s32.totalorder %s573, %s574
      %p586 = scmp.eq.s32.totalorder %s160, 1
      %p587 = por %p585, %p586
      %p589 = scmp.ne.s32.totalorder %s574, %s588
      %p590 = scmp.eq.s32.totalorder %s160, 0
      %p591 = por %p589, %p590
      %s593 = sadd.s32 %s592, 1
      %p596 = scmp.eq.s32.totalorder %s154, 1
      %p597 = scmp.ne.s32.totalorder %s592, %s594
      %p598 = scmp.eq.s32.totalorder %s154, 0
      %p599 = por %p597, %p598
      %p600 = scmp.ne.s32.totalorder %s592, %s594
      %p601 = scmp.eq.s32.totalorder %s159, 1
      %p602 = por %p600, %p601
      %p603 = scmp.ne.s32.totalorder %s594, %s595
      %p604 = scmp.eq.s32.totalorder %s159, 0
      %p605 = por %p603, %p604
      %p606 = scmp.ne.s32.totalorder %s594, %s595
      %p607 = scmp.eq.s32.totalorder %s160, 1
      %p608 = por %p606, %p607
      %p610 = scmp.ne.s32.totalorder %s595, %s609
      %p611 = scmp.eq.s32.totalorder %s160, 0
      %p612 = por %p610, %p611
      %s614 = sadd.s32 %s613, 1
      %p617 = scmp.eq.s32.totalorder %s154, 1
      %p618 = scmp.ne.s32.totalorder %s613, %s615
      %p619 = scmp.eq.s32.totalorder %s154, 0
      %p620 = por %p618, %p619
      %p621 = scmp.ne.s32.totalorder %s613, %s615
      %p622 = scmp.eq.s32.totalorder %s159, 1
      %p623 = por %p621, %p622
      %p624 = scmp.ne.s32.totalorder %s615, %s616
      %p625 = scmp.eq.s32.totalorder %s159, 0
      %p626 = por %p624, %p625
      %p627 = scmp.ne.s32.totalorder %s615, %s616
      %p628 = scmp.eq.s32.totalorder %s160, 1
      %p629 = por %p627, %p628
      %p631 = scmp.ne.s32.totalorder %s616, %s630
      %p632 = scmp.eq.s32.totalorder %s160, 0
      %p633 = por %p631, %p632
      %s635 = sadd.s32 %s634, 1
      %p638 = scmp.eq.s32.totalorder %s154, 1
      %p639 = scmp.ne.s32.totalorder %s634, %s636
      %p640 = scmp.eq.s32.totalorder %s154, 0
      %p641 = por %p639, %p640
      %p642 = scmp.ne.s32.totalorder %s634, %s636
      %p643 = scmp.eq.s32.totalorder %s159, 1
      %p644 = por %p642, %p643
      %p645 = scmp.ne.s32.totalorder %s636, %s637
      %p646 = scmp.eq.s32.totalorder %s159, 0
      %p647 = por %p645, %p646
      %p648 = scmp.ne.s32.totalorder %s636, %s637
      %p649 = scmp.eq.s32.totalorder %s160, 1
      %p650 = por %p648, %p649
      %p652 = scmp.ne.s32.totalorder %s637, %s651
      %p653 = scmp.eq.s32.totalorder %s160, 0
      %p654 = por %p652, %p653
      %s656 = sadd.s32 %s655, 1
      %p659 = scmp.eq.s32.totalorder %s154, 1
      %p660 = scmp.ne.s32.totalorder %s655, %s657
      %p661 = scmp.eq.s32.totalorder %s154, 0
      %p662 = por %p660, %p661
      %p663 = scmp.ne.s32.totalorder %s655, %s657
      %p664 = scmp.eq.s32.totalorder %s159, 1
      %p665 = por %p663, %p664
      %p666 = scmp.ne.s32.totalorder %s657, %s658
      %p667 = scmp.eq.s32.totalorder %s159, 0
      %p668 = por %p666, %p667
      %p669 = scmp.ne.s32.totalorder %s657, %s658
      %p670 = scmp.eq.s32.totalorder %s160, 1
      %p671 = por %p669, %p670
      %p673 = scmp.ne.s32.totalorder %s658, %s672
      %p674 = scmp.eq.s32.totalorder %s160, 0
      %p675 = por %p673, %p674
      %s677 = sadd.s32 %s676, 1
      %p680 = scmp.eq.s32.totalorder %s154, 1
      %p681 = scmp.ne.s32.totalorder %s676, %s678
      %p682 = scmp.eq.s32.totalorder %s154, 0
      %p683 = por %p681, %p682
      %p684 = scmp.ne.s32.totalorder %s676, %s678
      %p685 = scmp.eq.s32.totalorder %s159, 1
      %p686 = por %p684, %p685
      %p687 = scmp.ne.s32.totalorder %s678, %s679
      %p688 = scmp.eq.s32.totalorder %s159, 0
      %p689 = por %p687, %p688
      %p690 = scmp.ne.s32.totalorder %s678, %s679
      %p691 = scmp.eq.s32.totalorder %s160, 1
      %p692 = por %p690, %p691
      %p694 = scmp.ne.s32.totalorder %s679, %s693
      %p695 = scmp.eq.s32.totalorder %s160, 0
      %p696 = por %p694, %p695
      %s698 = sadd.s32 %s697, 1
      %p701 = scmp.eq.s32.totalorder %s154, 1
      %p702 = scmp.ne.s32.totalorder %s697, %s699
      %p703 = scmp.eq.s32.totalorder %s154, 0
      %p704 = por %p702, %p703
      %p705 = scmp.ne.s32.totalorder %s697, %s699
      %p706 = scmp.eq.s32.totalorder %s159, 1
      %p707 = por %p705, %p706
      %p708 = scmp.ne.s32.totalorder %s699, %s700
      %p709 = scmp.eq.s32.totalorder %s159, 0
      %p710 = por %p708, %p709
      %p711 = scmp.ne.s32.totalorder %s699, %s700
      %p712 = scmp.eq.s32.totalorder %s160, 1
      %p713 = por %p711, %p712
      %p715 = scmp.ne.s32.totalorder %s700, %s714
      %p716 = scmp.eq.s32.totalorder %s160, 0
      %p717 = por %p715, %p716
      %s719 = sadd.s32 %s718, 1
      %p722 = scmp.eq.s32.totalorder %s154, 1
      %p723 = scmp.ne.s32.totalorder %s718, %s720
      %p724 = scmp.eq.s32.totalorder %s154, 0
      %p725 = por %p723, %p724
      %p726 = scmp.ne.s32.totalorder %s718, %s720
      %p727 = scmp.eq.s32.totalorder %s159, 1
      %p728 = por %p726, %p727
      %p729 = scmp.ne.s32.totalorder %s720, %s721
      %p730 = scmp.eq.s32.totalorder %s159, 0
      %p731 = por %p729, %p730
      %p732 = scmp.ne.s32.totalorder %s720, %s721
      %p733 = scmp.eq.s32.totalorder %s160, 1
      %p734 = por %p732, %p733
      %p736 = scmp.ne.s32.totalorder %s721, %s735
      %p737 = scmp.eq.s32.totalorder %s160, 0
      %p738 = por %p736, %p737
      %s740 = sadd.s32 %s739, 1
      %p743 = scmp.eq.s32.totalorder %s154, 1
      %p744 = scmp.ne.s32.totalorder %s739, %s741
      %p745 = scmp.eq.s32.totalorder %s154, 0
      %p746 = por %p744, %p745
      %p747 = scmp.ne.s32.totalorder %s739, %s741
      %p748 = scmp.eq.s32.totalorder %s159, 1
      %p749 = por %p747, %p748
      %p750 = scmp.ne.s32.totalorder %s741, %s742
      %p751 = scmp.eq.s32.totalorder %s159, 0
      %p752 = por %p750, %p751
      %p753 = scmp.ne.s32.totalorder %s741, %s742
      %p754 = scmp.eq.s32.totalorder %s160, 1
      %p755 = por %p753, %p754
      %p757 = scmp.ne.s32.totalorder %s742, %s756
      %p758 = scmp.eq.s32.totalorder %s160, 0
      %p759 = por %p757, %p758
      %s761 = sadd.s32 %s760, 1
      %p764 = scmp.eq.s32.totalorder %s154, 1
      %p765 = scmp.ne.s32.totalorder %s760, %s762
      %p766 = scmp.eq.s32.totalorder %s154, 0
      %p767 = por %p765, %p766
      %p768 = scmp.ne.s32.totalorder %s760, %s762
      %p769 = scmp.eq.s32.totalorder %s159, 1
      %p770 = por %p768, %p769
      %p771 = scmp.ne.s32.totalorder %s762, %s763
      %p772 = scmp.eq.s32.totalorder %s159, 0
      %p773 = por %p771, %p772
      %p774 = scmp.ne.s32.totalorder %s762, %s763
      %p775 = scmp.eq.s32.totalorder %s160, 1
      %p776 = por %p774, %p775
      %p778 = scmp.ne.s32.totalorder %s763, %s777
      %p779 = scmp.eq.s32.totalorder %s160, 0
      %p780 = por %p778, %p779
      %s782 = sadd.s32 %s781, 1
      %p785 = scmp.eq.s32.totalorder %s154, 1
      %p786 = scmp.ne.s32.totalorder %s781, %s783
      %p787 = scmp.eq.s32.totalorder %s154, 0
      %p788 = por %p786, %p787
      %p789 = scmp.ne.s32.totalorder %s781, %s783
      %p790 = scmp.eq.s32.totalorder %s159, 1
      %p791 = por %p789, %p790
      %p792 = scmp.ne.s32.totalorder %s783, %s784
      %p793 = scmp.eq.s32.totalorder %s159, 0
      %p794 = por %p792, %p793
      %p795 = scmp.ne.s32.totalorder %s783, %s784
      %p796 = scmp.eq.s32.totalorder %s160, 1
      %p797 = por %p795, %p796
      %p799 = scmp.ne.s32.totalorder %s784, %s798
      %p800 = scmp.eq.s32.totalorder %s160, 0
      %p801 = por %p799, %p800
      %s803 = sadd.s32 %s802, 1
      %p806 = scmp.eq.s32.totalorder %s154, 1
      %p807 = scmp.ne.s32.totalorder %s802, %s804
      %p808 = scmp.eq.s32.totalorder %s154, 0
      %p809 = por %p807, %p808
      %p810 = scmp.ne.s32.totalorder %s802, %s804
      %p811 = scmp.eq.s32.totalorder %s159, 1
      %p812 = por %p810, %p811
      %p813 = scmp.ne.s32.totalorder %s804, %s805
      %p814 = scmp.eq.s32.totalorder %s159, 0
      %p815 = por %p813, %p814
      %p816 = scmp.ne.s32.totalorder %s804, %s805
      %p817 = scmp.eq.s32.totalorder %s160, 1
      %p818 = por %p816, %p817
      %p820 = scmp.ne.s32.totalorder %s805, %s819
      %p821 = scmp.eq.s32.totalorder %s160, 0
      %p822 = por %p820, %p821
      %s824 = sadd.s32 %s823, 1
      %p827 = scmp.eq.s32.totalorder %s154, 1
      %p828 = scmp.ne.s32.totalorder %s823, %s825
      %p829 = scmp.eq.s32.totalorder %s154, 0
      %p830 = por %p828, %p829
      %p831 = scmp.ne.s32.totalorder %s823, %s825
      %p832 = scmp.eq.s32.totalorder %s159, 1
      %p833 = por %p831, %p832
      %p834 = scmp.ne.s32.totalorder %s825, %s826
      %p835 = scmp.eq.s32.totalorder %s159, 0
      %p836 = por %p834, %p835
      %p837 = scmp.ne.s32.totalorder %s825, %s826
      %p838 = scmp.eq.s32.totalorder %s160, 1
      %p839 = por %p837, %p838
      %p841 = scmp.ne.s32.totalorder %s826, %s840
      %p842 = scmp.eq.s32.totalorder %s160, 0
      %p843 = por %p841, %p842
      %s845 = sadd.s32 %s844, 1
      %p848 = scmp.eq.s32.totalorder %s154, 1
      %p849 = scmp.ne.s32.totalorder %s844, %s846
      %p850 = scmp.eq.s32.totalorder %s154, 0
      %p851 = por %p849, %p850
      %p852 = scmp.ne.s32.totalorder %s844, %s846
      %p853 = scmp.eq.s32.totalorder %s159, 1
      %p854 = por %p852, %p853
      %p855 = scmp.ne.s32.totalorder %s846, %s847
      %p856 = scmp.eq.s32.totalorder %s159, 0
      %p857 = por %p855, %p856
      %p858 = scmp.ne.s32.totalorder %s846, %s847
      %p859 = scmp.eq.s32.totalorder %s160, 1
      %p860 = por %p858, %p859
      %p862 = scmp.ne.s32.totalorder %s847, %s861
      %p863 = scmp.eq.s32.totalorder %s160, 0
      %p864 = por %p862, %p863
      %s866 = sadd.s32 %s865, 1
      %p869 = scmp.eq.s32.totalorder %s154, 1
      %p870 = scmp.ne.s32.totalorder %s865, %s867
      %p871 = scmp.eq.s32.totalorder %s154, 0
      %p872 = por %p870, %p871
      %p873 = scmp.ne.s32.totalorder %s865, %s867
      %p874 = scmp.eq.s32.totalorder %s159, 1
      %p875 = por %p873, %p874
      %p876 = scmp.ne.s32.totalorder %s867, %s868
      %p877 = scmp.eq.s32.totalorder %s159, 0
      %p878 = por %p876, %p877
      %p879 = scmp.ne.s32.totalorder %s867, %s868
      %p880 = scmp.eq.s32.totalorder %s160, 1
      %p881 = por %p879, %p880
      %p883 = scmp.ne.s32.totalorder %s868, %s882
      %p884 = scmp.eq.s32.totalorder %s160, 0
      %p885 = por %p883, %p884
      %s887 = sadd.s32 %s886, 1
      %p890 = scmp.eq.s32.totalorder %s154, 1
      %p891 = scmp.ne.s32.totalorder %s886, %s888
      %p892 = scmp.eq.s32.totalorder %s154, 0
      %p893 = por %p891, %p892
      %p894 = scmp.ne.s32.totalorder %s886, %s888
      %p895 = scmp.eq.s32.totalorder %s159, 1
      %p896 = por %p894, %p895
      %p897 = scmp.ne.s32.totalorder %s888, %s889
      %p898 = scmp.eq.s32.totalorder %s159, 0
      %p899 = por %p897, %p898
      %p900 = scmp.ne.s32.totalorder %s888, %s889
      %p901 = scmp.eq.s32.totalorder %s160, 1
      %p902 = por %p900, %p901
      %p904 = scmp.ne.s32.totalorder %s889, %s903
      %p905 = scmp.eq.s32.totalorder %s160, 0
      %p906 = por %p904, %p905
      %s908 = sadd.s32 %s907, 1
      %p911 = scmp.eq.s32.totalorder %s154, 1
      %p912 = scmp.ne.s32.totalorder %s907, %s909
      %p913 = scmp.eq.s32.totalorder %s154, 0
      %p914 = por %p912, %p913
      %p915 = scmp.ne.s32.totalorder %s907, %s909
      %p916 = scmp.eq.s32.totalorder %s159, 1
      %p917 = por %p915, %p916
      %p918 = scmp.ne.s32.totalorder %s909, %s910
      %p919 = scmp.eq.s32.totalorder %s159, 0
      %p920 = por %p918, %p919
      %p921 = scmp.ne.s32.totalorder %s909, %s910
      %p922 = scmp.eq.s32.totalorder %s160, 1
      %p923 = por %p921, %p922
      %p925 = scmp.ne.s32.totalorder %s910, %s924
      %p926 = scmp.eq.s32.totalorder %s160, 0
      %p927 = por %p925, %p926
      %s929 = sadd.s32 %s928, 1
      %p932 = scmp.eq.s32.totalorder %s154, 1
      %p933 = scmp.ne.s32.totalorder %s928, %s930
      %p934 = scmp.eq.s32.totalorder %s154, 0
      %p935 = por %p933, %p934
      %p936 = scmp.ne.s32.totalorder %s928, %s930
      %p937 = scmp.eq.s32.totalorder %s159, 1
      %p938 = por %p936, %p937
      %p939 = scmp.ne.s32.totalorder %s930, %s931
      %p940 = scmp.eq.s32.totalorder %s159, 0
      %p941 = por %p939, %p940
      %p942 = scmp.ne.s32.totalorder %s930, %s931
      %p943 = scmp.eq.s32.totalorder %s160, 1
      %p944 = por %p942, %p943
      %p946 = scmp.ne.s32.totalorder %s931, %s945
      %p947 = scmp.eq.s32.totalorder %s160, 0
      %p948 = por %p946, %p947
      %s950 = sadd.s32 %s949, 1
      %p953 = scmp.eq.s32.totalorder %s154, 1
      %p954 = scmp.ne.s32.totalorder %s949, %s951
      %p955 = scmp.eq.s32.totalorder %s154, 0
      %p956 = por %p954, %p955
      %p957 = scmp.ne.s32.totalorder %s949, %s951
      %p958 = scmp.eq.s32.totalorder %s159, 1
      %p959 = por %p957, %p958
      %p960 = scmp.ne.s32.totalorder %s951, %s952
      %p961 = scmp.eq.s32.totalorder %s159, 0
      %p962 = por %p960, %p961
      %p963 = scmp.ne.s32.totalorder %s951, %s952
      %p964 = scmp.eq.s32.totalorder %s160, 1
      %p965 = por %p963, %p964
      %p967 = scmp.ne.s32.totalorder %s952, %s966
      %p968 = scmp.eq.s32.totalorder %s160, 0
      %p969 = por %p967, %p968
      %s971 = sadd.s32 %s970, 1
      %p974 = scmp.eq.s32.totalorder %s154, 1
      %p975 = scmp.ne.s32.totalorder %s970, %s972
      %p976 = scmp.eq.s32.totalorder %s154, 0
      %p977 = por %p975, %p976
      %p978 = scmp.ne.s32.totalorder %s970, %s972
      %p979 = scmp.eq.s32.totalorder %s159, 1
      %p980 = por %p978, %p979
      %p981 = scmp.ne.s32.totalorder %s972, %s973
      %p982 = scmp.eq.s32.totalorder %s159, 0
      %p983 = por %p981, %p982
      %p984 = scmp.ne.s32.totalorder %s972, %s973
      %p985 = scmp.eq.s32.totalorder %s160, 1
      %p986 = por %p984, %p985
      %p988 = scmp.ne.s32.totalorder %s973, %s987
      %p989 = scmp.eq.s32.totalorder %s160, 0
      %p990 = por %p988, %p989
      %s992 = sadd.s32 %s991, 1
      %p995 = scmp.eq.s32.totalorder %s154, 1
      %p996 = scmp.ne.s32.totalorder %s991, %s993
      %p997 = scmp.eq.s32.totalorder %s154, 0
      %p998 = por %p996, %p997
      %p999 = scmp.ne.s32.totalorder %s991, %s993
      %p1000 = scmp.eq.s32.totalorder %s159, 1
      %p1001 = por %p999, %p1000
      %p1002 = scmp.ne.s32.totalorder %s993, %s994
      %p1003 = scmp.eq.s32.totalorder %s159, 0
      %p1004 = por %p1002, %p1003
      %p1005 = scmp.ne.s32.totalorder %s993, %s994
      %p1006 = scmp.eq.s32.totalorder %s160, 1
      %p1007 = por %p1005, %p1006
      %p1009 = scmp.ne.s32.totalorder %s994, %s1008
      %p1010 = scmp.eq.s32.totalorder %s160, 0
      %p1011 = por %p1009, %p1010
      %s1013 = sadd.s32 %s1012, 1
      %p1016 = scmp.eq.s32.totalorder %s154, 1
      %p1017 = scmp.ne.s32.totalorder %s1012, %s1014
      %p1018 = scmp.eq.s32.totalorder %s154, 0
      %p1019 = por %p1017, %p1018
      %p1020 = scmp.ne.s32.totalorder %s1012, %s1014
      %p1021 = scmp.eq.s32.totalorder %s159, 1
      %p1022 = por %p1020, %p1021
      %p1023 = scmp.ne.s32.totalorder %s1014, %s1015
      %p1024 = scmp.eq.s32.totalorder %s159, 0
      %p1025 = por %p1023, %p1024
      %p1026 = scmp.ne.s32.totalorder %s1014, %s1015
      %p1027 = scmp.eq.s32.totalorder %s160, 1
      %p1028 = por %p1026, %p1027
      %p1030 = scmp.ne.s32.totalorder %s1015, %s1029
      %p1031 = scmp.eq.s32.totalorder %s160, 0
      %p1032 = por %p1030, %p1031
      %s1034 = sadd.s32 %s1033, 1
      %p1037 = scmp.eq.s32.totalorder %s154, 1
      %p1038 = scmp.ne.s32.totalorder %s1033, %s1035
      %p1039 = scmp.eq.s32.totalorder %s154, 0
      %p1040 = por %p1038, %p1039
      %p1041 = scmp.ne.s32.totalorder %s1033, %s1035
      %p1042 = scmp.eq.s32.totalorder %s159, 1
      %p1043 = por %p1041, %p1042
      %p1044 = scmp.ne.s32.totalorder %s1035, %s1036
      %p1045 = scmp.eq.s32.totalorder %s159, 0
      %p1046 = por %p1044, %p1045
      %p1047 = scmp.ne.s32.totalorder %s1035, %s1036
      %p1048 = scmp.eq.s32.totalorder %s160, 1
      %p1049 = por %p1047, %p1048
      %p1051 = scmp.ne.s32.totalorder %s1036, %s1050
      %p1052 = scmp.eq.s32.totalorder %s160, 0
      %p1053 = por %p1051, %p1052
      %s1055 = sadd.s32 %s1054, 1
      %p1058 = scmp.eq.s32.totalorder %s154, 1
      %p1059 = scmp.ne.s32.totalorder %s1054, %s1056
      %p1060 = scmp.eq.s32.totalorder %s154, 0
      %p1061 = por %p1059, %p1060
      %p1062 = scmp.ne.s32.totalorder %s1054, %s1056
      %p1063 = scmp.eq.s32.totalorder %s159, 1
      %p1064 = por %p1062, %p1063
      %p1065 = scmp.ne.s32.totalorder %s1056, %s1057
      %p1066 = scmp.eq.s32.totalorder %s159, 0
      %p1067 = por %p1065, %p1066
      %p1068 = scmp.ne.s32.totalorder %s1056, %s1057
      %p1069 = scmp.eq.s32.totalorder %s160, 1
      %p1070 = por %p1068, %p1069
      %p1072 = scmp.ne.s32.totalorder %s1057, %s1071
      %p1073 = scmp.eq.s32.totalorder %s160, 0
      %p1074 = por %p1072, %p1073
      %s1076 = sadd.s32 %s1075, 1
      %p1079 = scmp.eq.s32.totalorder %s154, 1
      %p1080 = scmp.ne.s32.totalorder %s1075, %s1077
      %p1081 = scmp.eq.s32.totalorder %s154, 0
      %p1082 = por %p1080, %p1081
      %p1083 = scmp.ne.s32.totalorder %s1075, %s1077
      %p1084 = scmp.eq.s32.totalorder %s159, 1
      %p1085 = por %p1083, %p1084
      %p1086 = scmp.ne.s32.totalorder %s1077, %s1078
      %p1087 = scmp.eq.s32.totalorder %s159, 0
      %p1088 = por %p1086, %p1087
      %p1089 = scmp.ne.s32.totalorder %s1077, %s1078
      %p1090 = scmp.eq.s32.totalorder %s160, 1
      %p1091 = por %p1089, %p1090
      %p1093 = scmp.ne.s32.totalorder %s1078, %s1092
      %p1094 = scmp.eq.s32.totalorder %s160, 0
      %p1095 = por %p1093, %p1094
      %s1097 = sadd.s32 %s1096, 1
      %p1100 = scmp.eq.s32.totalorder %s154, 1
      %p1101 = scmp.ne.s32.totalorder %s1096, %s1098
      %p1102 = scmp.eq.s32.totalorder %s154, 0
      %p1103 = por %p1101, %p1102
      %p1104 = scmp.ne.s32.totalorder %s1096, %s1098
      %p1105 = scmp.eq.s32.totalorder %s159, 1
      %p1106 = por %p1104, %p1105
      %p1107 = scmp.ne.s32.totalorder %s1098, %s1099
      %p1108 = scmp.eq.s32.totalorder %s159, 0
      %p1109 = por %p1107, %p1108
      %p1110 = scmp.ne.s32.totalorder %s1098, %s1099
      %p1111 = scmp.eq.s32.totalorder %s160, 1
      %p1112 = por %p1110, %p1111
      %p1114 = scmp.ne.s32.totalorder %s1099, %s1113
      %p1115 = scmp.eq.s32.totalorder %s160, 0
      %p1116 = por %p1114, %p1115
      %s1118 = sadd.s32 %s1117, 1
      %p1121 = scmp.eq.s32.totalorder %s154, 1
      %p1122 = scmp.ne.s32.totalorder %s1117, %s1119
      %p1123 = scmp.eq.s32.totalorder %s154, 0
      %p1124 = por %p1122, %p1123
      %p1125 = scmp.ne.s32.totalorder %s1117, %s1119
      %p1126 = scmp.eq.s32.totalorder %s159, 1
      %p1127 = por %p1125, %p1126
      %p1128 = scmp.ne.s32.totalorder %s1119, %s1120
      %p1129 = scmp.eq.s32.totalorder %s159, 0
      %p1130 = por %p1128, %p1129
      %p1131 = scmp.ne.s32.totalorder %s1119, %s1120
      %p1132 = scmp.eq.s32.totalorder %s160, 1
      %p1133 = por %p1131, %p1132
      %p1135 = scmp.ne.s32.totalorder %s1120, %s1134
      %p1136 = scmp.eq.s32.totalorder %s160, 0
      %p1137 = por %p1135, %p1136
      %s1139 = sadd.s32 %s1138, 1
      %p1142 = scmp.eq.s32.totalorder %s154, 1
      %p1143 = scmp.ne.s32.totalorder %s1138, %s1140
      %p1144 = scmp.eq.s32.totalorder %s154, 0
      %p1145 = por %p1143, %p1144
      %p1146 = scmp.ne.s32.totalorder %s1138, %s1140
      %p1147 = scmp.eq.s32.totalorder %s159, 1
      %p1148 = por %p1146, %p1147
      %p1149 = scmp.ne.s32.totalorder %s1140, %s1141
      %p1150 = scmp.eq.s32.totalorder %s159, 0
      %p1151 = por %p1149, %p1150
      %p1152 = scmp.ne.s32.totalorder %s1140, %s1141
      %p1153 = scmp.eq.s32.totalorder %s160, 1
      %p1154 = por %p1152, %p1153
      %p1156 = scmp.ne.s32.totalorder %s1141, %s1155
      %p1157 = scmp.eq.s32.totalorder %s160, 0
      %p1158 = por %p1156, %p1157
      %s1160 = sadd.s32 %s1159, 1
      %p1163 = scmp.eq.s32.totalorder %s154, 1
      %p1164 = scmp.ne.s32.totalorder %s1159, %s1161
      %p1165 = scmp.eq.s32.totalorder %s154, 0
      %p1166 = por %p1164, %p1165
      %p1167 = scmp.ne.s32.totalorder %s1159, %s1161
      %p1168 = scmp.eq.s32.totalorder %s159, 1
      %p1169 = por %p1167, %p1168
      %p1170 = scmp.ne.s32.totalorder %s1161, %s1162
      %p1171 = scmp.eq.s32.totalorder %s159, 0
      %p1172 = por %p1170, %p1171
      %p1173 = scmp.ne.s32.totalorder %s1161, %s1162
      %p1174 = scmp.eq.s32.totalorder %s160, 1
      %p1175 = por %p1173, %p1174
      %p1177 = scmp.ne.s32.totalorder %s1162, %s1176
      %p1178 = scmp.eq.s32.totalorder %s160, 0
      %p1179 = por %p1177, %p1178
      %s1181 = sadd.s32 %s1180, 1
      %p1184 = scmp.eq.s32.totalorder %s154, 1
      %p1185 = scmp.ne.s32.totalorder %s1180, %s1182
      %p1186 = scmp.eq.s32.totalorder %s154, 0
      %p1187 = por %p1185, %p1186
      %p1188 = scmp.ne.s32.totalorder %s1180, %s1182
      %p1189 = scmp.eq.s32.totalorder %s159, 1
      %p1190 = por %p1188, %p1189
      %p1191 = scmp.ne.s32.totalorder %s1182, %s1183
      %p1192 = scmp.eq.s32.totalorder %s159, 0
      %p1193 = por %p1191, %p1192
      %p1194 = scmp.ne.s32.totalorder %s1182, %s1183
      %p1195 = scmp.eq.s32.totalorder %s160, 1
      %p1196 = por %p1194, %p1195
      %p1198 = scmp.ne.s32.totalorder %s1183, %s1197
      %p1199 = scmp.eq.s32.totalorder %s160, 0
      %p1200 = por %p1198, %p1199
      %s1202 = sadd.s32 %s1201, 1
      %p1205 = scmp.eq.s32.totalorder %s154, 1
      %p1206 = scmp.ne.s32.totalorder %s1201, %s1203
      %p1207 = scmp.eq.s32.totalorder %s154, 0
      %p1208 = por %p1206, %p1207
      %p1209 = scmp.ne.s32.totalorder %s1201, %s1203
      %p1210 = scmp.eq.s32.totalorder %s159, 1
      %p1211 = por %p1209, %p1210
      %p1212 = scmp.ne.s32.totalorder %s1203, %s1204
      %p1213 = scmp.eq.s32.totalorder %s159, 0
      %p1214 = por %p1212, %p1213
      %p1215 = scmp.ne.s32.totalorder %s1203, %s1204
      %p1216 = scmp.eq.s32.totalorder %s160, 1
      %p1217 = por %p1215, %p1216
      %p1219 = scmp.ne.s32.totalorder %s1204, %s1218
      %p1220 = scmp.eq.s32.totalorder %s160, 0
      %p1221 = por %p1219, %p1220
      %s1223 = sadd.s32 %s1222, 1
      %p1226 = scmp.eq.s32.totalorder %s154, 1
      %p1227 = scmp.ne.s32.totalorder %s1222, %s1224
      %p1228 = scmp.eq.s32.totalorder %s154, 0
      %p1229 = por %p1227, %p1228
      %p1230 = scmp.ne.s32.totalorder %s1222, %s1224
      %p1231 = scmp.eq.s32.totalorder %s159, 1
      %p1232 = por %p1230, %p1231
      %p1233 = scmp.ne.s32.totalorder %s1224, %s1225
      %p1234 = scmp.eq.s32.totalorder %s159, 0
      %p1235 = por %p1233, %p1234
      %p1236 = scmp.ne.s32.totalorder %s1224, %s1225
      %p1237 = scmp.eq.s32.totalorder %s160, 1
      %p1238 = por %p1236, %p1237
      %p1240 = scmp.ne.s32.totalorder %s1225, %s1239
      %p1241 = scmp.eq.s32.totalorder %s160, 0
      %p1242 = por %p1240, %p1241
      %s1244 = sadd.s32 %s1243, 1
      %p1247 = scmp.eq.s32.totalorder %s154, 1
      %p1248 = scmp.ne.s32.totalorder %s1243, %s1245
      %p1249 = scmp.eq.s32.totalorder %s154, 0
      %p1250 = por %p1248, %p1249
      %p1251 = scmp.ne.s32.totalorder %s1243, %s1245
      %p1252 = scmp.eq.s32.totalorder %s159, 1
      %p1253 = por %p1251, %p1252
      %p1254 = scmp.ne.s32.totalorder %s1245, %s1246
      %p1255 = scmp.eq.s32.totalorder %s159, 0
      %p1256 = por %p1254, %p1255
      %p1257 = scmp.ne.s32.totalorder %s1245, %s1246
      %p1258 = scmp.eq.s32.totalorder %s160, 1
      %p1259 = por %p1257, %p1258
      %p1261 = scmp.ne.s32.totalorder %s1246, %s1260
      %p1262 = scmp.eq.s32.totalorder %s160, 0
      %p1263 = por %p1261, %p1262
      %s1265 = sadd.s32 %s1264, 1
      %p1268 = scmp.eq.s32.totalorder %s154, 1
      %p1269 = scmp.ne.s32.totalorder %s1264, %s1266
      %p1270 = scmp.eq.s32.totalorder %s154, 0
      %p1271 = por %p1269, %p1270
      %p1272 = scmp.ne.s32.totalorder %s1264, %s1266
      %p1273 = scmp.eq.s32.totalorder %s159, 1
      %p1274 = por %p1272, %p1273
      %p1275 = scmp.ne.s32.totalorder %s1266, %s1267
      %p1276 = scmp.eq.s32.totalorder %s159, 0
      %p1277 = por %p1275, %p1276
      %p1278 = scmp.ne.s32.totalorder %s1266, %s1267
      %p1279 = scmp.eq.s32.totalorder %s160, 1
      %p1280 = por %p1278, %p1279
      %p1282 = scmp.ne.s32.totalorder %s1267, %s1281
      %p1283 = scmp.eq.s32.totalorder %s160, 0
      %p1284 = por %p1282, %p1283
      %s1286 = sadd.s32 %s1285, 1
      %p1289 = scmp.eq.s32.totalorder %s154, 1
      %p1290 = scmp.ne.s32.totalorder %s1285, %s1287
      %p1291 = scmp.eq.s32.totalorder %s154, 0
      %p1292 = por %p1290, %p1291
      %p1293 = scmp.ne.s32.totalorder %s1285, %s1287
      %p1294 = scmp.eq.s32.totalorder %s159, 1
      %p1295 = por %p1293, %p1294
      %p1296 = scmp.ne.s32.totalorder %s1287, %s1288
      %p1297 = scmp.eq.s32.totalorder %s159, 0
      %p1298 = por %p1296, %p1297
      %p1299 = scmp.ne.s32.totalorder %s1287, %s1288
      %p1300 = scmp.eq.s32.totalorder %s160, 1
      %p1301 = por %p1299, %p1300
      %p1303 = scmp.ne.s32.totalorder %s1288, %s1302
      %p1304 = scmp.eq.s32.totalorder %s160, 0
      %p1305 = por %p1303, %p1304
      %s1307 = sadd.s32 %s1306, 1
      %p1310 = scmp.eq.s32.totalorder %s154, 1
      %p1311 = scmp.ne.s32.totalorder %s1306, %s1308
      %p1312 = scmp.eq.s32.totalorder %s154, 0
      %p1313 = por %p1311, %p1312
      %p1314 = scmp.ne.s32.totalorder %s1306, %s1308
      %p1315 = scmp.eq.s32.totalorder %s159, 1
      %p1316 = por %p1314, %p1315
      %p1317 = scmp.ne.s32.totalorder %s1308, %s1309
      %p1318 = scmp.eq.s32.totalorder %s159, 0
      %p1319 = por %p1317, %p1318
      %p1320 = scmp.ne.s32.totalorder %s1308, %s1309
      %p1321 = scmp.eq.s32.totalorder %s160, 1
      %p1322 = por %p1320, %p1321
      %p1324 = scmp.ne.s32.totalorder %s1309, %s1323
      %p1325 = scmp.eq.s32.totalorder %s160, 0
      %p1326 = por %p1324, %p1325
      %s1328 = sadd.s32 %s1327, 1
      %p1331 = scmp.eq.s32.totalorder %s154, 1
      %p1332 = scmp.ne.s32.totalorder %s1327, %s1329
      %p1333 = scmp.eq.s32.totalorder %s154, 0
      %p1334 = por %p1332, %p1333
      %p1335 = scmp.ne.s32.totalorder %s1327, %s1329
      %p1336 = scmp.eq.s32.totalorder %s159, 1
      %p1337 = por %p1335, %p1336
      %p1338 = scmp.ne.s32.totalorder %s1329, %s1330
      %p1339 = scmp.eq.s32.totalorder %s159, 0
      %p1340 = por %p1338, %p1339
      %p1341 = scmp.ne.s32.totalorder %s1329, %s1330
      %p1342 = scmp.eq.s32.totalorder %s160, 1
      %p1343 = por %p1341, %p1342
      %p1345 = scmp.ne.s32.totalorder %s1330, %s1344
      %p1346 = scmp.eq.s32.totalorder %s160, 0
      %p1347 = por %p1345, %p1346
      %s1349 = sadd.s32 %s1348, 1
      %p1352 = scmp.eq.s32.totalorder %s154, 1
      %p1353 = scmp.ne.s32.totalorder %s1348, %s1350
      %p1354 = scmp.eq.s32.totalorder %s154, 0
      %p1355 = por %p1353, %p1354
      %p1356 = scmp.ne.s32.totalorder %s1348, %s1350
      %p1357 = scmp.eq.s32.totalorder %s159, 1
      %p1358 = por %p1356, %p1357
      %p1359 = scmp.ne.s32.totalorder %s1350, %s1351
      %p1360 = scmp.eq.s32.totalorder %s159, 0
      %p1361 = por %p1359, %p1360
      %p1362 = scmp.ne.s32.totalorder %s1350, %s1351
      %p1363 = scmp.eq.s32.totalorder %s160, 1
      %p1364 = por %p1362, %p1363
      %p1366 = scmp.ne.s32.totalorder %s1351, %s1365
      %p1367 = scmp.eq.s32.totalorder %s160, 0
      %p1368 = por %p1366, %p1367
      %s1370 = sadd.s32 %s1369, 1
      %p1373 = scmp.eq.s32.totalorder %s154, 1
      %p1374 = scmp.ne.s32.totalorder %s1369, %s1371
      %p1375 = scmp.eq.s32.totalorder %s154, 0
      %p1376 = por %p1374, %p1375
      %p1377 = scmp.ne.s32.totalorder %s1369, %s1371
      %p1378 = scmp.eq.s32.totalorder %s159, 1
      %p1379 = por %p1377, %p1378
      %p1380 = scmp.ne.s32.totalorder %s1371, %s1372
      %p1381 = scmp.eq.s32.totalorder %s159, 0
      %p1382 = por %p1380, %p1381
      %p1383 = scmp.ne.s32.totalorder %s1371, %s1372
      %p1384 = scmp.eq.s32.totalorder %s160, 1
      %p1385 = por %p1383, %p1384
      %p1387 = scmp.ne.s32.totalorder %s1372, %s1386
      %p1388 = scmp.eq.s32.totalorder %s160, 0
      %p1389 = por %p1387, %p1388
      %s1391 = sadd.s32 %s1390, 1
      %p1394 = scmp.eq.s32.totalorder %s154, 1
      %p1395 = scmp.ne.s32.totalorder %s1390, %s1392
      %p1396 = scmp.eq.s32.totalorder %s154, 0
      %p1397 = por %p1395, %p1396
      %p1398 = scmp.ne.s32.totalorder %s1390, %s1392
      %p1399 = scmp.eq.s32.totalorder %s159, 1
      %p1400 = por %p1398, %p1399
      %p1401 = scmp.ne.s32.totalorder %s1392, %s1393
      %p1402 = scmp.eq.s32.totalorder %s159, 0
      %p1403 = por %p1401, %p1402
      %p1404 = scmp.ne.s32.totalorder %s1392, %s1393
      %p1405 = scmp.eq.s32.totalorder %s160, 1
      %p1406 = por %p1404, %p1405
      %p1408 = scmp.ne.s32.totalorder %s1393, %s1407
      %p1409 = scmp.eq.s32.totalorder %s160, 0
      %p1410 = por %p1408, %p1409
      %s1412 = sadd.s32 %s1411, 1
      %p1415 = scmp.eq.s32.totalorder %s154, 1
      %p1416 = scmp.ne.s32.totalorder %s1411, %s1413
      %p1417 = scmp.eq.s32.totalorder %s154, 0
      %p1418 = por %p1416, %p1417
      %p1419 = scmp.ne.s32.totalorder %s1411, %s1413
      %p1420 = scmp.eq.s32.totalorder %s159, 1
      %p1421 = por %p1419, %p1420
      %p1422 = scmp.ne.s32.totalorder %s1413, %s1414
      %p1423 = scmp.eq.s32.totalorder %s159, 0
      %p1424 = por %p1422, %p1423
      %p1425 = scmp.ne.s32.totalorder %s1413, %s1414
      %p1426 = scmp.eq.s32.totalorder %s160, 1
      %p1427 = por %p1425, %p1426
      %p1429 = scmp.ne.s32.totalorder %s1414, %s1428
      %p1430 = scmp.eq.s32.totalorder %s160, 0
      %p1431 = por %p1429, %p1430
      %s1433 = sadd.s32 %s1432, 1
      %p1436 = scmp.eq.s32.totalorder %s154, 1
      %p1437 = scmp.ne.s32.totalorder %s1432, %s1434
      %p1438 = scmp.eq.s32.totalorder %s154, 0
      %p1439 = por %p1437, %p1438
      %p1440 = scmp.ne.s32.totalorder %s1432, %s1434
      %p1441 = scmp.eq.s32.totalorder %s159, 1
      %p1442 = por %p1440, %p1441
      %p1443 = scmp.ne.s32.totalorder %s1434, %s1435
      %p1444 = scmp.eq.s32.totalorder %s159, 0
      %p1445 = por %p1443, %p1444
      %p1446 = scmp.ne.s32.totalorder %s1434, %s1435
      %p1447 = scmp.eq.s32.totalorder %s160, 1
      %p1448 = por %p1446, %p1447
      %p1450 = scmp.ne.s32.totalorder %s1435, %s1449
      %p1451 = scmp.eq.s32.totalorder %s160, 0
      %p1452 = por %p1450, %p1451
      %s1454 = sadd.s32 %s1453, 1
      %p1457 = scmp.eq.s32.totalorder %s154, 1
      %p1458 = scmp.ne.s32.totalorder %s1453, %s1455
      %p1459 = scmp.eq.s32.totalorder %s154, 0
      %p1460 = por %p1458, %p1459
      %p1461 = scmp.ne.s32.totalorder %s1453, %s1455
      %p1462 = scmp.eq.s32.totalorder %s159, 1
      %p1463 = por %p1461, %p1462
      %p1464 = scmp.ne.s32.totalorder %s1455, %s1456
      %p1465 = scmp.eq.s32.totalorder %s159, 0
      %p1466 = por %p1464, %p1465
      %p1467 = scmp.ne.s32.totalorder %s1455, %s1456
      %p1468 = scmp.eq.s32.totalorder %s160, 1
      %p1469 = por %p1467, %p1468
      %p1471 = scmp.ne.s32.totalorder %s1456, %s1470
      %p1472 = scmp.eq.s32.totalorder %s160, 0
      %p1473 = por %p1471, %p1472
      %s1475 = sadd.s32 %s1474, 1
      %p1478 = scmp.eq.s32.totalorder %s154, 1
      %p1479 = scmp.ne.s32.totalorder %s1474, %s1476
      %p1480 = scmp.eq.s32.totalorder %s154, 0
      %p1481 = por %p1479, %p1480
      %p1482 = scmp.ne.s32.totalorder %s1474, %s1476
      %p1483 = scmp.eq.s32.totalorder %s159, 1
      %p1484 = por %p1482, %p1483
      %p1485 = scmp.ne.s32.totalorder %s1476, %s1477
      %p1486 = scmp.eq.s32.totalorder %s159, 0
      %p1487 = por %p1485, %p1486
      %p1488 = scmp.ne.s32.totalorder %s1476, %s1477
      %p1489 = scmp.eq.s32.totalorder %s160, 1
      %p1490 = por %p1488, %p1489
      %p1492 = scmp.ne.s32.totalorder %s1477, %s1491
      %p1493 = scmp.eq.s32.totalorder %s160, 0
      %p1494 = por %p1492, %p1493
      %s1496 = sadd.s32 %s1495, 1
      %p1499 = scmp.eq.s32.totalorder %s154, 1
      %p1500 = scmp.ne.s32.totalorder %s1495, %s1497
      %p1501 = scmp.eq.s32.totalorder %s154, 0
      %p1502 = por %p1500, %p1501
      %p1503 = scmp.ne.s32.totalorder %s1495, %s1497
      %p1504 = scmp.eq.s32.totalorder %s159, 1
      %p1505 = por %p1503, %p1504
      %p1506 = scmp.ne.s32.totalorder %s1497, %s1498
      %p1507 = scmp.eq.s32.totalorder %s159, 0
      %p1508 = por %p1506, %p1507
      %p1509 = scmp.ne.s32.totalorder %s1497, %s1498
      %p1510 = scmp.eq.s32.totalorder %s160, 1
      %p1511 = por %p1509, %p1510
      %p1513 = scmp.ne.s32.totalorder %s1498, %s1512
      %p1514 = scmp.eq.s32.totalorder %s160, 0
      %p1515 = por %p1513, %p1514
      %s1517 = sadd.s32 %s1516, 1
      %p1520 = scmp.eq.s32.totalorder %s154, 1
      %p1521 = scmp.ne.s32.totalorder %s1516, %s1518
      %p1522 = scmp.eq.s32.totalorder %s154, 0
      %p1523 = por %p1521, %p1522
      %p1524 = scmp.ne.s32.totalorder %s1516, %s1518
      %p1525 = scmp.eq.s32.totalorder %s159, 1
      %p1526 = por %p1524, %p1525
      %p1527 = scmp.ne.s32.totalorder %s1518, %s1519
      %p1528 = scmp.eq.s32.totalorder %s159, 0
      %p1529 = por %p1527, %p1528
      %p1530 = scmp.ne.s32.totalorder %s1518, %s1519
      %p1531 = scmp.eq.s32.totalorder %s160, 1
      %p1532 = por %p1530, %p1531
      %p1534 = scmp.ne.s32.totalorder %s1519, %s1533
      %p1535 = scmp.eq.s32.totalorder %s160, 0
      %p1536 = por %p1534, %p1535
      %s1538 = sadd.s32 %s1537, 1
      %p1541 = scmp.eq.s32.totalorder %s154, 1
      %p1542 = scmp.ne.s32.totalorder %s1537, %s1539
      %p1543 = scmp.eq.s32.totalorder %s154, 0
      %p1544 = por %p1542, %p1543
      %p1545 = scmp.ne.s32.totalorder %s1537, %s1539
      %p1546 = scmp.eq.s32.totalorder %s159, 1
      %p1547 = por %p1545, %p1546
      %p1548 = scmp.ne.s32.totalorder %s1539, %s1540
      %p1549 = scmp.eq.s32.totalorder %s159, 0
      %p1550 = por %p1548, %p1549
      %p1551 = scmp.ne.s32.totalorder %s1539, %s1540
      %p1552 = scmp.eq.s32.totalorder %s160, 1
      %p1553 = por %p1551, %p1552
      %p1555 = scmp.ne.s32.totalorder %s1540, %s1554
      %p1556 = scmp.eq.s32.totalorder %s160, 0
      %p1557 = por %p1555, %p1556
      %s1559 = sadd.s32 %s1558, 1
      %p1562 = scmp.eq.s32.totalorder %s154, 1
      %p1563 = scmp.ne.s32.totalorder %s1558, %s1560
      %p1564 = scmp.eq.s32.totalorder %s154, 0
      %p1565 = por %p1563, %p1564
      %p1566 = scmp.ne.s32.totalorder %s1558, %s1560
      %p1567 = scmp.eq.s32.totalorder %s159, 1
      %p1568 = por %p1566, %p1567
      %p1569 = scmp.ne.s32.totalorder %s1560, %s1561
      %p1570 = scmp.eq.s32.totalorder %s159, 0
      %p1571 = por %p1569, %p1570
      %p1572 = scmp.ne.s32.totalorder %s1560, %s1561
      %p1573 = scmp.eq.s32.totalorder %s160, 1
      %p1574 = por %p1572, %p1573
      %p1576 = scmp.ne.s32.totalorder %s1561, %s1575
      %p1577 = scmp.eq.s32.totalorder %s160, 0
      %p1578 = por %p1576, %p1577
      %s1579 = ssub.s32 %s154, %s161
      %p1580 = scmp.eq.s32.totalorder %s1579, 0
      %s1582 = sadd.s32 %s1581, 1
      %s1583 = scalar_select %p1580, %s1581, %s1582
      %p1586 = pneg %p1580
      %p1587 = scmp.eq.s32.totalorder %s154, 1
      %p1588 = por %p1586, %p1587
      %p1589 = scmp.ne.s32.totalorder %s1581, %s1584
      %p1590 = scmp.eq.s32.totalorder %s154, 0
      %p1591 = por %p1589, %p1590
      %p1592 = scmp.ne.s32.totalorder %s1581, %s1584
      %p1593 = scmp.eq.s32.totalorder %s159, 1
      %p1594 = por %p1592, %p1593
      %p1595 = scmp.ne.s32.totalorder %s1584, %s1585
      %p1596 = scmp.eq.s32.totalorder %s159, 0
      %p1597 = por %p1595, %p1596
      %p1598 = scmp.ne.s32.totalorder %s1584, %s1585
      %p1599 = scmp.eq.s32.totalorder %s160, 1
      %p1600 = por %p1598, %p1599
      %p1602 = scmp.ne.s32.totalorder %s1585, %s1601
      %p1603 = scmp.eq.s32.totalorder %s160, 0
      %p1604 = por %p1602, %p1603
      %p1605 = scmp.le.s32.totalorder 1, %s154
      %p1606 = scmp.lt.s32.totalorder %s154, 3
      %p1607 = pnand %p1605, %p1606
      %p1608 = pneg %p1607
      // Predicated region
      $region9: #{vac_encoder_forward.1} parent=5 // pred_check
        _
      $region10: #{vac_encoder_forward.1} parent=5 // pred_check_branch
        %1610 = sbr.rel (%p1607) target = $region12
      $region11: #{vac_encoder_forward.1} parent=5 // pred_region
        %s1611 = ssub.s32 %s154, 1
        // Predicated region
        $region13: #{vac_encoder_forward.1} parent=11 // pred_check
          %p1612 = pneg %p227
        $region14: #{vac_encoder_forward.1} parent=11 // pred_check_branch
          %1614 = sbr.rel (%p1612) target = $region16
        $region15: #{vac_encoder_forward.1} parent=11 // pred_region
          _
        $region16: #{vac_encoder_forward.1} parent=11 // pred_fallthru
          _
        // Predicated region
        $region17: #{vac_encoder_forward.1} parent=11 // pred_check
          %p1615 = pneg %p248
        $region18: #{vac_encoder_forward.1} parent=11 // pred_check_branch
          %1617 = sbr.rel (%p1615) target = $region20
        $region19: #{vac_encoder_forward.1} parent=11 // pred_region
          _
        $region20: #{vac_encoder_forward.1} parent=11 // pred_fallthru
          _
        // Predicated region
        $region21: #{vac_encoder_forward.1} parent=11 // pred_check
          %p1618 = pneg %p269
        $region22: #{vac_encoder_forward.1} parent=11 // pred_check_branch
          %1620 = sbr.rel (%p1618) target = $region24
        $region23: #{vac_encoder_forward.1} parent=11 // pred_region
          %s1622 = ssub.s32 16, 16
          %1623 = vsyncadd [#allocation3], %s1622
          %s1625 = sshll.u32 [#allocation2], 4
          %s1626 = int_to_ptr.vmem [resolvable:$true] %s1625
          %1628 = dma.hbm_to_vmem [thread:$0]  %s9, 16, %s1626, [#allocation3]
        $region24: #{vac_encoder_forward.1} parent=11 // pred_fallthru
          _
        // Predicated region
        $region25: #{vac_encoder_forward.1} parent=11 // pred_check
          %p1629 = pneg %p290
        $region26: #{vac_encoder_forward.1} parent=11 // pred_check_branch
          %1631 = sbr.rel (%p1629) target = $region28
        $region27: #{vac_encoder_forward.1} parent=11 // pred_region
          %s1633 = ssub.s32 16, 16
          %1634 = vsyncadd [#allocation5], %s1633
          %s1636 = sshll.u32 [#allocation4], 4
          %s1637 = int_to_ptr.vmem [resolvable:$true] %s1636
          %1639 = dma.hbm_to_vmem [thread:$0]  %s11, 16, %s1637, [#allocation5]
        $region28: #{vac_encoder_forward.1} parent=11 // pred_fallthru
          _
        // Predicated region
        $region29: #{vac_encoder_forward.1} parent=11 // pred_check
          %p1640 = pneg %p311
        $region30: #{vac_encoder_forward.1} parent=11 // pred_check_branch
          %1642 = sbr.rel (%p1640) target = $region32
        $region31: #{vac_encoder_forward.1} parent=11 // pred_region
          %s1644 = ssub.s32 16, 16
          %1645 = vsyncadd [#allocation5], %s1644
          %s1647 = sshll.u32 [#allocation6], 4
          %s1648 = int_to_ptr.vmem [resolvable:$true] %s1647
          %1650 = dma.hbm_to_vmem [thread:$0]  %s13, 16, %s1648, [#allocation5]
        $region32: #{vac_encoder_forward.1} parent=11 // pred_fallthru
          _
        // Predicated region
        $region33: #{vac_encoder_forward.1} parent=11 // pred_check
          %p1651 = pneg %p332
        $region34: #{vac_encoder_forward.1} parent=11 // pred_check_branch
          %1653 = sbr.rel (%p1651) target = $region36
        $region35: #{vac_encoder_forward.1} parent=11 // pred_region
          %s1655 = ssub.s32 16, 16
          %1656 = vsyncadd [#allocation8], %s1655
          %s1658 = sshll.u32 [#allocation7], 4
          %s1659 = int_to_ptr.vmem [resolvable:$true] %s1658
          %1661 = dma.hbm_to_vmem [thread:$0]  %s15, 16, %s1659, [#allocation8]
        $region36: #{vac_encoder_forward.1} parent=11 // pred_fallthru
          _
        // Predicated region
        $region37: #{vac_encoder_forward.1} parent=11 // pred_check
          %p1662 = pneg %p353
        $region38: #{vac_encoder_forward.1} parent=11 // pred_check_branch
          %1664 = sbr.rel (%p1662) target = $region40
        $region39: #{vac_encoder_forward.1} parent=11 // pred_region
          %s1666 = ssub.s32 16, 16
          %1667 = vsyncadd [#allocation8], %s1666
          %s1669 = sshll.u32 [#allocation9], 4
          %s1670 = int_to_ptr.vmem [resolvable:$true] %s1669
          %1672 = dma.hbm_to_vmem [thread:$0]  %s17, 16, %s1670, [#allocation8]
        $region40: #{vac_encoder_forward.1} parent=11 // pred_fallthru
          _
        // Predicated region
        $region41: #{vac_encoder_forward.1} parent=11 // pred_check
          %p1673 = pneg %p374
        $region42: #{vac_encoder_forward.1} parent=11 // pred_check_branch
          %1675 = sbr.rel (%p1673) target = $region44
        $region43: #{vac_encoder_forward.1} parent=11 // pred_region
          _
        $region44: #{vac_encoder_forward.1} parent=11 // pred_fallthru
          _
        // Predicated region
        $region45: #{vac_encoder_forward.1} parent=11 // pred_check
          %p1676 = pneg %p395
        $region46: #{vac_encoder_forward.1} parent=11 // pred_check_branch
          %1678 = sbr.rel (%p1676) target = $region48
        $region47: #{vac_encoder_forward.1} parent=11 // pred_region
          _
        $region48: #{vac_encoder_forward.1} parent=11 // pred_fallthru
          _
        // Predicated region
        $region49: #{vac_encoder_forward.1} parent=11 // pred_check
          %p1679 = pneg %p416
        $region50: #{vac_encoder_forward.1} parent=11 // pred_check_branch
          %1681 = sbr.rel (%p1679) target = $region52
        $region51: #{vac_encoder_forward.1} parent=11 // pred_region
          _
        $region52: #{vac_encoder_forward.1} parent=11 // pred_fallthru
          _
        // Predicated region
        $region53: #{vac_encoder_forward.1} parent=11 // pred_check
          %p1682 = pneg %p437
        $region54: #{vac_encoder_forward.1} parent=11 // pred_check_branch
          %1684 = sbr.rel (%p1682) target = $region56
        $region55: #{vac_encoder_forward.1} parent=11 // pred_region
          %s1686 = ssub.s32 16, 16
          %1687 = vsyncadd [#allocation11], %s1686
          %s1689 = sshll.u32 [#allocation10], 4
          %s1690 = int_to_ptr.vmem [resolvable:$true] %s1689
          %1692 = dma.hbm_to_vmem [thread:$0]  %s25, 16, %s1690, [#allocation11]
        $region56: #{vac_encoder_forward.1} parent=11 // pred_fallthru
          _
        // Predicated region
        $region57: #{vac_encoder_forward.1} parent=11 // pred_check
          %p1693 = pneg %p458
        $region58: #{vac_encoder_forward.1} parent=11 // pred_check_branch
          %1695 = sbr.rel (%p1693) target = $region60
        $region59: #{vac_encoder_forward.1} parent=11 // pred_region
          %s1697 = ssub.s32 16, 16
          %1698 = vsyncadd [#allocation11], %s1697
          %s1700 = sshll.u32 [#allocation12], 4
          %s1701 = int_to_ptr.vmem [resolvable:$true] %s1700
          %1703 = dma.hbm_to_vmem [thread:$0]  %s27, 16, %s1701, [#allocation11]
        $region60: #{vac_encoder_forward.1} parent=11 // pred_fallthru
          _
        // Predicated region
        $region61: #{vac_encoder_forward.1} parent=11 // pred_check
          %p1704 = pneg %p479
        $region62: #{vac_encoder_forward.1} parent=11 // pred_check_branch
          %1706 = sbr.rel (%p1704) target = $region64
        $region63: #{vac_encoder_forward.1} parent=11 // pred_region
          %s1708 = ssub.s32 16, 16
          %1709 = vsyncadd [#allocation14], %s1708
          %s1711 = sshll.u32 [#allocation13], 4
          %s1712 = int_to_ptr.vmem [resolvable:$true] %s1711
          %1714 = dma.hbm_to_vmem [thread:$0]  %s29, 16, %s1712, [#allocation14]
        $region64: #{vac_encoder_forward.1} parent=11 // pred_fallthru
          _
        // Predicated region
        $region65: #{vac_encoder_forward.1} parent=11 // pred_check
          %p1715 = pneg %p500
        $region66: #{vac_encoder_forward.1} parent=11 // pred_check_branch
          %1717 = sbr.rel (%p1715) target = $region68
        $region67: #{vac_encoder_forward.1} parent=11 // pred_region
          %s1719 = ssub.s32 16, 16
          %1720 = vsyncadd [#allocation14], %s1719
          %s1722 = sshll.u32 [#allocation15], 4
          %s1723 = int_to_ptr.vmem [resolvable:$true] %s1722
          %1725 = dma.hbm_to_vmem [thread:$0]  %s31, 16, %s1723, [#allocation14]
        $region68: #{vac_encoder_forward.1} parent=11 // pred_fallthru
          _
        // Predicated region
        $region69: #{vac_encoder_forward.1} parent=11 // pred_check
          %p1726 = pneg %p521
        $region70: #{vac_encoder_forward.1} parent=11 // pred_check_branch
          %1728 = sbr.rel (%p1726) target = $region72
        $region71: #{vac_encoder_forward.1} parent=11 // pred_region
          %s1730 = ssub.s32 16, 16
          %1731 = vsyncadd [#allocation17], %s1730
          %s1733 = sshll.u32 [#allocation16], 4
          %s1734 = int_to_ptr.vmem [resolvable:$true] %s1733
          %1736 = dma.hbm_to_vmem [thread:$0]  %s33, 16, %s1734, [#allocation17]
        $region72: #{vac_encoder_forward.1} parent=11 // pred_fallthru
          _
        // Predicated region
        $region73: #{vac_encoder_forward.1} parent=11 // pred_check
          %p1737 = pneg %p542
        $region74: #{vac_encoder_forward.1} parent=11 // pred_check_branch
          %1739 = sbr.rel (%p1737) target = $region76
        $region75: #{vac_encoder_forward.1} parent=11 // pred_region
          %s1741 = ssub.s32 16, 16
          %1742 = vsyncadd [#allocation17], %s1741
          %s1744 = sshll.u32 [#allocation18], 4
          %s1745 = int_to_ptr.vmem [resolvable:$true] %s1744
          %1747 = dma.hbm_to_vmem [thread:$0]  %s35, 16, %s1745, [#allocation17]
        $region76: #{vac_encoder_forward.1} parent=11 // pred_fallthru
          _
        // Predicated region
        $region77: #{vac_encoder_forward.1} parent=11 // pred_check
          %p1748 = pneg %p563
        $region78: #{vac_encoder_forward.1} parent=11 // pred_check_branch
          %1750 = sbr.rel (%p1748) target = $region80
        $region79: #{vac_encoder_forward.1} parent=11 // pred_region
          %s1752 = ssub.s32 16, 16
          %1753 = vsyncadd [#allocation20], %s1752
          %s1755 = sshll.u32 [#allocation19], 4
          %s1756 = int_to_ptr.vmem [resolvable:$true] %s1755
          %1758 = dma.hbm_to_vmem [thread:$0]  %s37, 16, %s1756, [#allocation20]
        $region80: #{vac_encoder_forward.1} parent=11 // pred_fallthru
          _
        // Predicated region
        $region81: #{vac_encoder_forward.1} parent=11 // pred_check
          %p1759 = pneg %p584
        $region82: #{vac_encoder_forward.1} parent=11 // pred_check_branch
          %1761 = sbr.rel (%p1759) target = $region84
        $region83: #{vac_encoder_forward.1} parent=11 // pred_region
          %s1763 = ssub.s32 16, 16
          %1764 = vsyncadd [#allocation20], %s1763
          %s1766 = sshll.u32 [#allocation21], 4
          %s1767 = int_to_ptr.vmem [resolvable:$true] %s1766
          %1769 = dma.hbm_to_vmem [thread:$0]  %s39, 16, %s1767, [#allocation20]
        $region84: #{vac_encoder_forward.1} parent=11 // pred_fallthru
          _
        // Predicated region
        $region85: #{vac_encoder_forward.1} parent=11 // pred_check
          %p1770 = pneg %p605
        $region86: #{vac_encoder_forward.1} parent=11 // pred_check_branch
          %1772 = sbr.rel (%p1770) target = $region88
        $region87: #{vac_encoder_forward.1} parent=11 // pred_region
          _
        $region88: #{vac_encoder_forward.1} parent=11 // pred_fallthru
          _
        // Predicated region
        $region89: #{vac_encoder_forward.1} parent=11 // pred_check
          %p1773 = pneg %p626
        $region90: #{vac_encoder_forward.1} parent=11 // pred_check_branch
          %1775 = sbr.rel (%p1773) target = $region92
        $region91: #{vac_encoder_forward.1} parent=11 // pred_region
          _
        $region92: #{vac_encoder_forward.1} parent=11 // pred_fallthru
          _
        // Predicated region
        $region93: #{vac_encoder_forward.1} parent=11 // pred_check
          %p1776 = pneg %p647
        $region94: #{vac_encoder_forward.1} parent=11 // pred_check_branch
          %1778 = sbr.rel (%p1776) target = $region96
        $region95: #{vac_encoder_forward.1} parent=11 // pred_region
          _
        $region96: #{vac_encoder_forward.1} parent=11 // pred_fallthru
          _
        // Predicated region
        $region97: #{vac_encoder_forward.1} parent=11 // pred_check
          %p1779 = pneg %p668
        $region98: #{vac_encoder_forward.1} parent=11 // pred_check_branch
          %1781 = sbr.rel (%p1779) target = $region100
        $region99: #{vac_encoder_forward.1} parent=11 // pred_region
          _
        $region100: #{vac_encoder_forward.1} parent=11 // pred_fallthru
          _
        // Predicated region
        $region101: #{vac_encoder_forward.1} parent=11 // pred_check
          %p1782 = pneg %p689
        $region102: #{vac_encoder_forward.1} parent=11 // pred_check_branch
          %1784 = sbr.rel (%p1782) target = $region104
        $region103: #{vac_encoder_forward.1} parent=11 // pred_region
          %s1786 = ssub.s32 16, 16
          %1787 = vsyncadd [#allocation23], %s1786
          %s1789 = sshll.u32 [#allocation22], 4
          %s1790 = int_to_ptr.vmem [resolvable:$true] %s1789
          %1792 = dma.hbm_to_vmem [thread:$0]  %s49, 16, %s1790, [#allocation23]
        $region104: #{vac_encoder_forward.1} parent=11 // pred_fallthru
          _
        // Predicated region
        $region105: #{vac_encoder_forward.1} parent=11 // pred_check
          %p1793 = pneg %p710
        $region106: #{vac_encoder_forward.1} parent=11 // pred_check_branch
          %1795 = sbr.rel (%p1793) target = $region108
        $region107: #{vac_encoder_forward.1} parent=11 // pred_region
          %s1797 = ssub.s32 16, 16
          %1798 = vsyncadd [#allocation23], %s1797
          %s1800 = sshll.u32 [#allocation24], 4
          %s1801 = int_to_ptr.vmem [resolvable:$true] %s1800
          %1803 = dma.hbm_to_vmem [thread:$0]  %s51, 16, %s1801, [#allocation23]
        $region108: #{vac_encoder_forward.1} parent=11 // pred_fallthru
          _
        // Predicated region
        $region109: #{vac_encoder_forward.1} parent=11 // pred_check
          %p1804 = pneg %p731
        $region110: #{vac_encoder_forward.1} parent=11 // pred_check_branch
          %1806 = sbr.rel (%p1804) target = $region112
        $region111: #{vac_encoder_forward.1} parent=11 // pred_region
          %s1808 = ssub.s32 16, 16
          %1809 = vsyncadd [#allocation26], %s1808
          %s1811 = sshll.u32 [#allocation25], 4
          %s1812 = int_to_ptr.vmem [resolvable:$true] %s1811
          %1814 = dma.hbm_to_vmem [thread:$0]  %s53, 16, %s1812, [#allocation26]
        $region112: #{vac_encoder_forward.1} parent=11 // pred_fallthru
          _
        // Predicated region
        $region113: #{vac_encoder_forward.1} parent=11 // pred_check
          %p1815 = pneg %p752
        $region114: #{vac_encoder_forward.1} parent=11 // pred_check_branch
          %1817 = sbr.rel (%p1815) target = $region116
        $region115: #{vac_encoder_forward.1} parent=11 // pred_region
          %s1819 = ssub.s32 16, 16
          %1820 = vsyncadd [#allocation26], %s1819
          %s1822 = sshll.u32 [#allocation27], 4
          %s1823 = int_to_ptr.vmem [resolvable:$true] %s1822
          %1825 = dma.hbm_to_vmem [thread:$0]  %s55, 16, %s1823, [#allocation26]
        $region116: #{vac_encoder_forward.1} parent=11 // pred_fallthru
          _
        // Predicated region
        $region117: #{vac_encoder_forward.1} parent=11 // pred_check
          %p1826 = pneg %p773
        $region118: #{vac_encoder_forward.1} parent=11 // pred_check_branch
          %1828 = sbr.rel (%p1826) target = $region120
        $region119: #{vac_encoder_forward.1} parent=11 // pred_region
          %s1830 = ssub.s32 16, 16
          %1831 = vsyncadd [#allocation29], %s1830
          %s1833 = sshll.u32 [#allocation28], 4
          %s1834 = int_to_ptr.vmem [resolvable:$true] %s1833
          %1836 = dma.hbm_to_vmem [thread:$0]  %s57, 16, %s1834, [#allocation29]
        $region120: #{vac_encoder_forward.1} parent=11 // pred_fallthru
          _
        // Predicated region
        $region121: #{vac_encoder_forward.1} parent=11 // pred_check
          %p1837 = pneg %p794
        $region122: #{vac_encoder_forward.1} parent=11 // pred_check_branch
          %1839 = sbr.rel (%p1837) target = $region124
        $region123: #{vac_encoder_forward.1} parent=11 // pred_region
          %s1841 = ssub.s32 16, 16
          %1842 = vsyncadd [#allocation29], %s1841
          %s1844 = sshll.u32 [#allocation30], 4
          %s1845 = int_to_ptr.vmem [resolvable:$true] %s1844
          %1847 = dma.hbm_to_vmem [thread:$0]  %s59, 16, %s1845, [#allocation29]
        $region124: #{vac_encoder_forward.1} parent=11 // pred_fallthru
          _
        // Predicated region
        $region125: #{vac_encoder_forward.1} parent=11 // pred_check
          %p1848 = pneg %p815
        $region126: #{vac_encoder_forward.1} parent=11 // pred_check_branch
          %1850 = sbr.rel (%p1848) target = $region128
        $region127: #{vac_encoder_forward.1} parent=11 // pred_region
          %s1852 = ssub.s32 16, 16
          %1853 = vsyncadd [#allocation32], %s1852
          %s1855 = sshll.u32 [#allocation31], 4
          %s1856 = int_to_ptr.vmem [resolvable:$true] %s1855
          %1858 = dma.hbm_to_vmem [thread:$0]  %s61, 16, %s1856, [#allocation32]
        $region128: #{vac_encoder_forward.1} parent=11 // pred_fallthru
          _
        // Predicated region
        $region129: #{vac_encoder_forward.1} parent=11 // pred_check
          %p1859 = pneg %p836
        $region130: #{vac_encoder_forward.1} parent=11 // pred_check_branch
          %1861 = sbr.rel (%p1859) target = $region132
        $region131: #{vac_encoder_forward.1} parent=11 // pred_region
          _
        $region132: #{vac_encoder_forward.1} parent=11 // pred_fallthru
          _
        // Predicated region
        $region133: #{vac_encoder_forward.1} parent=11 // pred_check
          %p1862 = pneg %p857
        $region134: #{vac_encoder_forward.1} parent=11 // pred_check_branch
          %1864 = sbr.rel (%p1862) target = $region136
        $region135: #{vac_encoder_forward.1} parent=11 // pred_region
          _
        $region136: #{vac_encoder_forward.1} parent=11 // pred_fallthru
          _
        // Predicated region
        $region137: #{vac_encoder_forward.1} parent=11 // pred_check
          %p1865 = pneg %p878
        $region138: #{vac_encoder_forward.1} parent=11 // pred_check_branch
          %1867 = sbr.rel (%p1865) target = $region140
        $region139: #{vac_encoder_forward.1} parent=11 // pred_region
          _
        $region140: #{vac_encoder_forward.1} parent=11 // pred_fallthru
          _
        // Predicated region
        $region141: #{vac_encoder_forward.1} parent=11 // pred_check
          %p1868 = pneg %p899
        $region142: #{vac_encoder_forward.1} parent=11 // pred_check_branch
          %1870 = sbr.rel (%p1868) target = $region144
        $region143: #{vac_encoder_forward.1} parent=11 // pred_region
          %s1872 = ssub.s32 16, 16
          %1873 = vsyncadd [#allocation32], %s1872
          %s1875 = sshll.u32 [#allocation33], 4
          %s1876 = int_to_ptr.vmem [resolvable:$true] %s1875
          %1878 = dma.hbm_to_vmem [thread:$0]  %s69, 16, %s1876, [#allocation32]
        $region144: #{vac_encoder_forward.1} parent=11 // pred_fallthru
          _
        // Predicated region
        $region145: #{vac_encoder_forward.1} parent=11 // pred_check
          %p1879 = pneg %p920
        $region146: #{vac_encoder_forward.1} parent=11 // pred_check_branch
          %1881 = sbr.rel (%p1879) target = $region148
        $region147: #{vac_encoder_forward.1} parent=11 // pred_region
          %s1883 = ssub.s32 16, 16
          %1884 = vsyncadd [#allocation35], %s1883
          %s1886 = sshll.u32 [#allocation34], 4
          %s1887 = int_to_ptr.vmem [resolvable:$true] %s1886
          %1889 = dma.hbm_to_vmem [thread:$0]  %s71, 16, %s1887, [#allocation35]
        $region148: #{vac_encoder_forward.1} parent=11 // pred_fallthru
          _
        // Predicated region
        $region149: #{vac_encoder_forward.1} parent=11 // pred_check
          %p1890 = pneg %p941
        $region150: #{vac_encoder_forward.1} parent=11 // pred_check_branch
          %1892 = sbr.rel (%p1890) target = $region152
        $region151: #{vac_encoder_forward.1} parent=11 // pred_region
          _
        $region152: #{vac_encoder_forward.1} parent=11 // pred_fallthru
          _
        // Predicated region
        $region153: #{vac_encoder_forward.1} parent=11 // pred_check
          %p1893 = pneg %p962
        $region154: #{vac_encoder_forward.1} parent=11 // pred_check_branch
          %1895 = sbr.rel (%p1893) target = $region156
        $region155: #{vac_encoder_forward.1} parent=11 // pred_region
          _
        $region156: #{vac_encoder_forward.1} parent=11 // pred_fallthru
          _
        // Predicated region
        $region157: #{vac_encoder_forward.1} parent=11 // pred_check
          %p1896 = pneg %p983
        $region158: #{vac_encoder_forward.1} parent=11 // pred_check_branch
          %1898 = sbr.rel (%p1896) target = $region160
        $region159: #{vac_encoder_forward.1} parent=11 // pred_region
          _
        $region160: #{vac_encoder_forward.1} parent=11 // pred_fallthru
          _
        // Predicated region
        $region161: #{vac_encoder_forward.1} parent=11 // pred_check
          %p1899 = pneg %p1004
        $region162: #{vac_encoder_forward.1} parent=11 // pred_check_branch
          %1901 = sbr.rel (%p1899) target = $region164
        $region163: #{vac_encoder_forward.1} parent=11 // pred_region
          _
        $region164: #{vac_encoder_forward.1} parent=11 // pred_fallthru
          _
        // Predicated region
        $region165: #{vac_encoder_forward.1} parent=11 // pred_check
          %p1902 = pneg %p1025
        $region166: #{vac_encoder_forward.1} parent=11 // pred_check_branch
          %1904 = sbr.rel (%p1902) target = $region168
        $region167: #{vac_encoder_forward.1} parent=11 // pred_region
          _
        $region168: #{vac_encoder_forward.1} parent=11 // pred_fallthru
          _
        // Predicated region
        $region169: #{vac_encoder_forward.1} parent=11 // pred_check
          %p1905 = pneg %p1046
        $region170: #{vac_encoder_forward.1} parent=11 // pred_check_branch
          %1907 = sbr.rel (%p1905) target = $region172
        $region171: #{vac_encoder_forward.1} parent=11 // pred_region
          _
        $region172: #{vac_encoder_forward.1} parent=11 // pred_fallthru
          _
        // Predicated region
        $region173: #{vac_encoder_forward.1} parent=11 // pred_check
          %p1908 = pneg %p1067
        $region174: #{vac_encoder_forward.1} parent=11 // pred_check_branch
          %1910 = sbr.rel (%p1908) target = $region176
        $region175: #{vac_encoder_forward.1} parent=11 // pred_region
          _
        $region176: #{vac_encoder_forward.1} parent=11 // pred_fallthru
          _
        // Predicated region
        $region177: #{vac_encoder_forward.1} parent=11 // pred_check
          %p1911 = pneg %p1088
        $region178: #{vac_encoder_forward.1} parent=11 // pred_check_branch
          %1913 = sbr.rel (%p1911) target = $region180
        $region179: #{vac_encoder_forward.1} parent=11 // pred_region
          _
        $region180: #{vac_encoder_forward.1} parent=11 // pred_fallthru
          _
        // Predicated region
        $region181: #{vac_encoder_forward.1} parent=11 // pred_check
          %p1914 = pneg %p1109
        $region182: #{vac_encoder_forward.1} parent=11 // pred_check_branch
          %1916 = sbr.rel (%p1914) target = $region184
        $region183: #{vac_encoder_forward.1} parent=11 // pred_region
          _
        $region184: #{vac_encoder_forward.1} parent=11 // pred_fallthru
          _
        // Predicated region
        $region185: #{vac_encoder_forward.1} parent=11 // pred_check
          %p1917 = pneg %p1130
        $region186: #{vac_encoder_forward.1} parent=11 // pred_check_branch
          %1919 = sbr.rel (%p1917) target = $region188
        $region187: #{vac_encoder_forward.1} parent=11 // pred_region
          _
        $region188: #{vac_encoder_forward.1} parent=11 // pred_fallthru
          _
        // Predicated region
        $region189: #{vac_encoder_forward.1} parent=11 // pred_check
          %p1920 = pneg %p1151
        $region190: #{vac_encoder_forward.1} parent=11 // pred_check_branch
          %1922 = sbr.rel (%p1920) target = $region192
        $region191: #{vac_encoder_forward.1} parent=11 // pred_region
          _
        $region192: #{vac_encoder_forward.1} parent=11 // pred_fallthru
          _
        // Predicated region
        $region193: #{vac_encoder_forward.1} parent=11 // pred_check
          %p1923 = pneg %p1172
        $region194: #{vac_encoder_forward.1} parent=11 // pred_check_branch
          %1925 = sbr.rel (%p1923) target = $region196
        $region195: #{vac_encoder_forward.1} parent=11 // pred_region
          _
        $region196: #{vac_encoder_forward.1} parent=11 // pred_fallthru
          _
        // Predicated region
        $region197: #{vac_encoder_forward.1} parent=11 // pred_check
          %p1926 = pneg %p1193
        $region198: #{vac_encoder_forward.1} parent=11 // pred_check_branch
          %1928 = sbr.rel (%p1926) target = $region200
        $region199: #{vac_encoder_forward.1} parent=11 // pred_region
          _
        $region200: #{vac_encoder_forward.1} parent=11 // pred_fallthru
          _
        // Predicated region
        $region201: #{vac_encoder_forward.1} parent=11 // pred_check
          %p1929 = pneg %p1214
        $region202: #{vac_encoder_forward.1} parent=11 // pred_check_branch
          %1931 = sbr.rel (%p1929) target = $region204
        $region203: #{vac_encoder_forward.1} parent=11 // pred_region
          _
        $region204: #{vac_encoder_forward.1} parent=11 // pred_fallthru
          _
        // Predicated region
        $region205: #{vac_encoder_forward.1} parent=11 // pred_check
          %p1932 = pneg %p1235
        $region206: #{vac_encoder_forward.1} parent=11 // pred_check_branch
          %1934 = sbr.rel (%p1932) target = $region208
        $region207: #{vac_encoder_forward.1} parent=11 // pred_region
          _
        $region208: #{vac_encoder_forward.1} parent=11 // pred_fallthru
          _
        // Predicated region
        $region209: #{vac_encoder_forward.1} parent=11 // pred_check
          %p1935 = pneg %p1256
        $region210: #{vac_encoder_forward.1} parent=11 // pred_check_branch
          %1937 = sbr.rel (%p1935) target = $region212
        $region211: #{vac_encoder_forward.1} parent=11 // pred_region
          _
        $region212: #{vac_encoder_forward.1} parent=11 // pred_fallthru
          _
        // Predicated region
        $region213: #{vac_encoder_forward.1} parent=11 // pred_check
          %p1938 = pneg %p1277
        $region214: #{vac_encoder_forward.1} parent=11 // pred_check_branch
          %1940 = sbr.rel (%p1938) target = $region216
        $region215: #{vac_encoder_forward.1} parent=11 // pred_region
          _
        $region216: #{vac_encoder_forward.1} parent=11 // pred_fallthru
          _
        // Predicated region
        $region217: #{vac_encoder_forward.1} parent=11 // pred_check
          %p1941 = pneg %p1298
        $region218: #{vac_encoder_forward.1} parent=11 // pred_check_branch
          %1943 = sbr.rel (%p1941) target = $region220
        $region219: #{vac_encoder_forward.1} parent=11 // pred_region
          _
        $region220: #{vac_encoder_forward.1} parent=11 // pred_fallthru
          _
        // Predicated region
        $region221: #{vac_encoder_forward.1} parent=11 // pred_check
          %p1944 = pneg %p1319
        $region222: #{vac_encoder_forward.1} parent=11 // pred_check_branch
          %1946 = sbr.rel (%p1944) target = $region224
        $region223: #{vac_encoder_forward.1} parent=11 // pred_region
          _
        $region224: #{vac_encoder_forward.1} parent=11 // pred_fallthru
          _
        // Predicated region
        $region225: #{vac_encoder_forward.1} parent=11 // pred_check
          %p1947 = pneg %p1340
        $region226: #{vac_encoder_forward.1} parent=11 // pred_check_branch
          %1949 = sbr.rel (%p1947) target = $region228
        $region227: #{vac_encoder_forward.1} parent=11 // pred_region
          _
        $region228: #{vac_encoder_forward.1} parent=11 // pred_fallthru
          _
        // Predicated region
        $region229: #{vac_encoder_forward.1} parent=11 // pred_check
          %p1950 = pneg %p1361
        $region230: #{vac_encoder_forward.1} parent=11 // pred_check_branch
          %1952 = sbr.rel (%p1950) target = $region232
        $region231: #{vac_encoder_forward.1} parent=11 // pred_region
          _
        $region232: #{vac_encoder_forward.1} parent=11 // pred_fallthru
          _
        // Predicated region
        $region233: #{vac_encoder_forward.1} parent=11 // pred_check
          %p1953 = pneg %p1382
        $region234: #{vac_encoder_forward.1} parent=11 // pred_check_branch
          %1955 = sbr.rel (%p1953) target = $region236
        $region235: #{vac_encoder_forward.1} parent=11 // pred_region
          _
        $region236: #{vac_encoder_forward.1} parent=11 // pred_fallthru
          _
        // Predicated region
        $region237: #{vac_encoder_forward.1} parent=11 // pred_check
          %p1956 = pneg %p1403
        $region238: #{vac_encoder_forward.1} parent=11 // pred_check_branch
          %1958 = sbr.rel (%p1956) target = $region240
        $region239: #{vac_encoder_forward.1} parent=11 // pred_region
          _
        $region240: #{vac_encoder_forward.1} parent=11 // pred_fallthru
          _
        // Predicated region
        $region241: #{vac_encoder_forward.1} parent=11 // pred_check
          %p1959 = pneg %p1424
        $region242: #{vac_encoder_forward.1} parent=11 // pred_check_branch
          %1961 = sbr.rel (%p1959) target = $region244
        $region243: #{vac_encoder_forward.1} parent=11 // pred_region
          _
        $region244: #{vac_encoder_forward.1} parent=11 // pred_fallthru
          _
        // Predicated region
        $region245: #{vac_encoder_forward.1} parent=11 // pred_check
          %p1962 = pneg %p1445
        $region246: #{vac_encoder_forward.1} parent=11 // pred_check_branch
          %1964 = sbr.rel (%p1962) target = $region248
        $region247: #{vac_encoder_forward.1} parent=11 // pred_region
          _
        $region248: #{vac_encoder_forward.1} parent=11 // pred_fallthru
          _
        // Predicated region
        $region249: #{vac_encoder_forward.1} parent=11 // pred_check
          %p1965 = pneg %p1466
        $region250: #{vac_encoder_forward.1} parent=11 // pred_check_branch
          %1967 = sbr.rel (%p1965) target = $region252
        $region251: #{vac_encoder_forward.1} parent=11 // pred_region
          %s1969 = ssub.s32 16, 16
          %1970 = vsyncadd [#allocation35], %s1969
          %s1972 = sshll.u32 [#allocation36], 4
          %s1973 = int_to_ptr.vmem [resolvable:$true] %s1972
          %1975 = dma.hbm_to_vmem [thread:$0]  %s123, 16, %s1973, [#allocation35]
        $region252: #{vac_encoder_forward.1} parent=11 // pred_fallthru
          _
        // Predicated region
        $region253: #{vac_encoder_forward.1} parent=11 // pred_check
          %p1976 = pneg %p1487
        $region254: #{vac_encoder_forward.1} parent=11 // pred_check_branch
          %1978 = sbr.rel (%p1976) target = $region256
        $region255: #{vac_encoder_forward.1} parent=11 // pred_region
          _
        $region256: #{vac_encoder_forward.1} parent=11 // pred_fallthru
          _
        // Predicated region
        $region257: #{vac_encoder_forward.1} parent=11 // pred_check
          %p1979 = pneg %p1508
        $region258: #{vac_encoder_forward.1} parent=11 // pred_check_branch
          %1981 = sbr.rel (%p1979) target = $region260
        $region259: #{vac_encoder_forward.1} parent=11 // pred_region
          %s1983 = ssub.s32 16, 16
          %1984 = vsyncadd [#allocation38], %s1983
          %s1986 = sshll.u32 [#allocation37], 4
          %s1987 = int_to_ptr.vmem [resolvable:$true] %s1986
          %1989 = dma.hbm_to_vmem [thread:$0]  %s127, 16, %s1987, [#allocation38]
        $region260: #{vac_encoder_forward.1} parent=11 // pred_fallthru
          _
        // Predicated region
        $region261: #{vac_encoder_forward.1} parent=11 // pred_check
          %p1990 = pneg %p1529
        $region262: #{vac_encoder_forward.1} parent=11 // pred_check_branch
          %1992 = sbr.rel (%p1990) target = $region264
        $region263: #{vac_encoder_forward.1} parent=11 // pred_region
          _
        $region264: #{vac_encoder_forward.1} parent=11 // pred_fallthru
          _
        // Predicated region
        $region265: #{vac_encoder_forward.1} parent=11 // pred_check
          %p1993 = pneg %p1550
        $region266: #{vac_encoder_forward.1} parent=11 // pred_check_branch
          %1995 = sbr.rel (%p1993) target = $region268
        $region267: #{vac_encoder_forward.1} parent=11 // pred_region
          %s1997 = ssub.s32 16, 16
          %1998 = vsyncadd [#allocation38], %s1997
          %s2000 = sshll.u32 [#allocation39], 4
          %s2001 = int_to_ptr.vmem [resolvable:$true] %s2000
          %2003 = dma.hbm_to_vmem [thread:$0]  %s131, 16, %s2001, [#allocation38]
        $region268: #{vac_encoder_forward.1} parent=11 // pred_fallthru
          _
        // Predicated region
        $region269: #{vac_encoder_forward.1} parent=11 // pred_check
          %p2004 = pneg %p1571
        $region270: #{vac_encoder_forward.1} parent=11 // pred_check_branch
          %2006 = sbr.rel (%p2004) target = $region272
        $region271: #{vac_encoder_forward.1} parent=11 // pred_region
          _
        $region272: #{vac_encoder_forward.1} parent=11 // pred_fallthru
          _
      $region12: #{vac_encoder_forward.1} parent=5 // pred_fallthru
        _
      %p2007 = scmp.lt.s32.totalorder %s154, 2
      // Predicated region
      $region273: #{vac_encoder_forward.1} parent=5 // pred_check
        %p2008 = pneg %p2007
      $region274: #{vac_encoder_forward.1} parent=5 // pred_check_branch
        %2010 = sbr.rel (%p2008) target = $region276
      $region275: #{vac_encoder_forward.1} parent=5 // pred_region
        // Predicated region
        $region277: #{vac_encoder_forward.1} parent=275 // pred_check
          %p2011 = pneg %p174
        $region278: #{vac_encoder_forward.1} parent=275 // pred_check_branch
          %2013 = sbr.rel (%p2011) target = $region280
        $region279: #{vac_encoder_forward.1} parent=275 // pred_region
          %p2014 = scmp.lt.s32.totalorder %s154, 1
          %s2015 = scalar_select %p2014, %s154, 1
          %s2016 = smul.addr %s2015, 8
          %s2017 = scalar_lea.vmem %s1, %s2016
        $region280: #{vac_encoder_forward.1} parent=275 // pred_fallthru
          _
        // Predicated region
        $region281: #{vac_encoder_forward.1} parent=275 // pred_check
          %p2018 = pneg %p200
        $region282: #{vac_encoder_forward.1} parent=275 // pred_check_branch
          %2020 = sbr.rel (%p2018) target = $region284
        $region283: #{vac_encoder_forward.1} parent=275 // pred_region
          %p2021 = scmp.lt.s32.totalorder %s154, 1
          %s2022 = scalar_select %p2021, %s154, 1
          %s2023 = smul.addr %s2022, 8
          %s2024 = scalar_lea.vmem %s3, %s2023
        $region284: #{vac_encoder_forward.1} parent=275 // pred_fallthru
          _
      $region276: #{vac_encoder_forward.1} parent=5 // pred_fallthru
        _
      %p2025 = scmp.le.s32.totalorder 1, %s154
      %p2026 = scmp.lt.s32.totalorder %s154, 3
      %p2027 = pnand %p2025, %p2026
      %p2028 = pneg %p2027
      // Predicated region
      $region285: #{vac_encoder_forward.1} parent=5 // pred_check
        _
      $region286: #{vac_encoder_forward.1} parent=5 // pred_check_branch
        %2030 = sbr.rel (%p2027) target = $region288
      $region287: #{vac_encoder_forward.1} parent=5 // pred_region
        %s2031 = ssub.s32 %s154, 1
        // Predicated region
        $region289: #{vac_encoder_forward.1} parent=287 // pred_check
          %p2032 = pneg %p269
        $region290: #{vac_encoder_forward.1} parent=287 // pred_check_branch
          %2034 = sbr.rel (%p2032) target = $region292
        $region291: #{vac_encoder_forward.1} parent=287 // pred_region
          %2035 = dma.done [#allocation3], 16
        $region292: #{vac_encoder_forward.1} parent=287 // pred_fallthru
          _
        // Predicated region
        $region293: #{vac_encoder_forward.1} parent=287 // pred_check
          %p2036 = pneg %p290
        $region294: #{vac_encoder_forward.1} parent=287 // pred_check_branch
          %2038 = sbr.rel (%p2036) target = $region296
        $region295: #{vac_encoder_forward.1} parent=287 // pred_region
          %2039 = dma.done [#allocation5], 16
        $region296: #{vac_encoder_forward.1} parent=287 // pred_fallthru
          _
        // Predicated region
        $region297: #{vac_encoder_forward.1} parent=287 // pred_check
          %p2040 = pneg %p311
        $region298: #{vac_encoder_forward.1} parent=287 // pred_check_branch
          %2042 = sbr.rel (%p2040) target = $region300
        $region299: #{vac_encoder_forward.1} parent=287 // pred_region
          %2043 = dma.done [#allocation5], 16
        $region300: #{vac_encoder_forward.1} parent=287 // pred_fallthru
          _
        // Predicated region
        $region301: #{vac_encoder_forward.1} parent=287 // pred_check
          %p2044 = pneg %p332
        $region302: #{vac_encoder_forward.1} parent=287 // pred_check_branch
          %2046 = sbr.rel (%p2044) target = $region304
        $region303: #{vac_encoder_forward.1} parent=287 // pred_region
          %2047 = dma.done [#allocation8], 16
        $region304: #{vac_encoder_forward.1} parent=287 // pred_fallthru
          _
        // Predicated region
        $region305: #{vac_encoder_forward.1} parent=287 // pred_check
          %p2048 = pneg %p353
        $region306: #{vac_encoder_forward.1} parent=287 // pred_check_branch
          %2050 = sbr.rel (%p2048) target = $region308
        $region307: #{vac_encoder_forward.1} parent=287 // pred_region
          %2051 = dma.done [#allocation8], 16
        $region308: #{vac_encoder_forward.1} parent=287 // pred_fallthru
          _
        // Predicated region
        $region309: #{vac_encoder_forward.1} parent=287 // pred_check
          %p2052 = pneg %p437
        $region310: #{vac_encoder_forward.1} parent=287 // pred_check_branch
          %2054 = sbr.rel (%p2052) target = $region312
        $region311: #{vac_encoder_forward.1} parent=287 // pred_region
          %2055 = dma.done [#allocation11], 16
        $region312: #{vac_encoder_forward.1} parent=287 // pred_fallthru
          _
        // Predicated region
        $region313: #{vac_encoder_forward.1} parent=287 // pred_check
          %p2056 = pneg %p458
        $region314: #{vac_encoder_forward.1} parent=287 // pred_check_branch
          %2058 = sbr.rel (%p2056) target = $region316
        $region315: #{vac_encoder_forward.1} parent=287 // pred_region
          %2059 = dma.done [#allocation11], 16
        $region316: #{vac_encoder_forward.1} parent=287 // pred_fallthru
          _
        // Predicated region
        $region317: #{vac_encoder_forward.1} parent=287 // pred_check
          %p2060 = pneg %p479
        $region318: #{vac_encoder_forward.1} parent=287 // pred_check_branch
          %2062 = sbr.rel (%p2060) target = $region320
        $region319: #{vac_encoder_forward.1} parent=287 // pred_region
          %2063 = dma.done [#allocation14], 16
        $region320: #{vac_encoder_forward.1} parent=287 // pred_fallthru
          _
        // Predicated region
        $region321: #{vac_encoder_forward.1} parent=287 // pred_check
          %p2064 = pneg %p500
        $region322: #{vac_encoder_forward.1} parent=287 // pred_check_branch
          %2066 = sbr.rel (%p2064) target = $region324
        $region323: #{vac_encoder_forward.1} parent=287 // pred_region
          %2067 = dma.done [#allocation14], 16
        $region324: #{vac_encoder_forward.1} parent=287 // pred_fallthru
          _
        // Predicated region
        $region325: #{vac_encoder_forward.1} parent=287 // pred_check
          %p2068 = pneg %p521
        $region326: #{vac_encoder_forward.1} parent=287 // pred_check_branch
          %2070 = sbr.rel (%p2068) target = $region328
        $region327: #{vac_encoder_forward.1} parent=287 // pred_region
          %2071 = dma.done [#allocation17], 16
        $region328: #{vac_encoder_forward.1} parent=287 // pred_fallthru
          _
        // Predicated region
        $region329: #{vac_encoder_forward.1} parent=287 // pred_check
          %p2072 = pneg %p542
        $region330: #{vac_encoder_forward.1} parent=287 // pred_check_branch
          %2074 = sbr.rel (%p2072) target = $region332
        $region331: #{vac_encoder_forward.1} parent=287 // pred_region
          %2075 = dma.done [#allocation17], 16
        $region332: #{vac_encoder_forward.1} parent=287 // pred_fallthru
          _
        // Predicated region
        $region333: #{vac_encoder_forward.1} parent=287 // pred_check
          %p2076 = pneg %p563
        $region334: #{vac_encoder_forward.1} parent=287 // pred_check_branch
          %2078 = sbr.rel (%p2076) target = $region336
        $region335: #{vac_encoder_forward.1} parent=287 // pred_region
          %2079 = dma.done [#allocation20], 16
        $region336: #{vac_encoder_forward.1} parent=287 // pred_fallthru
          _
        // Predicated region
        $region337: #{vac_encoder_forward.1} parent=287 // pred_check
          %p2080 = pneg %p584
        $region338: #{vac_encoder_forward.1} parent=287 // pred_check_branch
          %2082 = sbr.rel (%p2080) target = $region340
        $region339: #{vac_encoder_forward.1} parent=287 // pred_region
          %2083 = dma.done [#allocation20], 16
        $region340: #{vac_encoder_forward.1} parent=287 // pred_fallthru
          _
        // Predicated region
        $region341: #{vac_encoder_forward.1} parent=287 // pred_check
          %p2084 = pneg %p689
        $region342: #{vac_encoder_forward.1} parent=287 // pred_check_branch
          %2086 = sbr.rel (%p2084) target = $region344
        $region343: #{vac_encoder_forward.1} parent=287 // pred_region
          %2087 = dma.done [#allocation23], 16
        $region344: #{vac_encoder_forward.1} parent=287 // pred_fallthru
          _
        // Predicated region
        $region345: #{vac_encoder_forward.1} parent=287 // pred_check
          %p2088 = pneg %p710
        $region346: #{vac_encoder_forward.1} parent=287 // pred_check_branch
          %2090 = sbr.rel (%p2088) target = $region348
        $region347: #{vac_encoder_forward.1} parent=287 // pred_region
          %2091 = dma.done [#allocation23], 16
        $region348: #{vac_encoder_forward.1} parent=287 // pred_fallthru
          _
        // Predicated region
        $region349: #{vac_encoder_forward.1} parent=287 // pred_check
          %p2092 = pneg %p731
        $region350: #{vac_encoder_forward.1} parent=287 // pred_check_branch
          %2094 = sbr.rel (%p2092) target = $region352
        $region351: #{vac_encoder_forward.1} parent=287 // pred_region
          %2095 = dma.done [#allocation26], 16
        $region352: #{vac_encoder_forward.1} parent=287 // pred_fallthru
          _
        // Predicated region
        $region353: #{vac_encoder_forward.1} parent=287 // pred_check
          %p2096 = pneg %p752
        $region354: #{vac_encoder_forward.1} parent=287 // pred_check_branch
          %2098 = sbr.rel (%p2096) target = $region356
        $region355: #{vac_encoder_forward.1} parent=287 // pred_region
          %2099 = dma.done [#allocation26], 16
        $region356: #{vac_encoder_forward.1} parent=287 // pred_fallthru
          _
        // Predicated region
        $region357: #{vac_encoder_forward.1} parent=287 // pred_check
          %p2100 = pneg %p773
        $region358: #{vac_encoder_forward.1} parent=287 // pred_check_branch
          %2102 = sbr.rel (%p2100) target = $region360
        $region359: #{vac_encoder_forward.1} parent=287 // pred_region
          %2103 = dma.done [#allocation29], 16
        $region360: #{vac_encoder_forward.1} parent=287 // pred_fallthru
          _
        // Predicated region
        $region361: #{vac_encoder_forward.1} parent=287 // pred_check
          %p2104 = pneg %p794
        $region362: #{vac_encoder_forward.1} parent=287 // pred_check_branch
          %2106 = sbr.rel (%p2104) target = $region364
        $region363: #{vac_encoder_forward.1} parent=287 // pred_region
          %2107 = dma.done [#allocation29], 16
        $region364: #{vac_encoder_forward.1} parent=287 // pred_fallthru
          _
        // Predicated region
        $region365: #{vac_encoder_forward.1} parent=287 // pred_check
          %p2108 = pneg %p815
        $region366: #{vac_encoder_forward.1} parent=287 // pred_check_branch
          %2110 = sbr.rel (%p2108) target = $region368
        $region367: #{vac_encoder_forward.1} parent=287 // pred_region
          %2111 = dma.done [#allocation32], 16
        $region368: #{vac_encoder_forward.1} parent=287 // pred_fallthru
          _
        // Predicated region
        $region369: #{vac_encoder_forward.1} parent=287 // pred_check
          %p2112 = pneg %p899
        $region370: #{vac_encoder_forward.1} parent=287 // pred_check_branch
          %2114 = sbr.rel (%p2112) target = $region372
        $region371: #{vac_encoder_forward.1} parent=287 // pred_region
          %2115 = dma.done [#allocation32], 16
        $region372: #{vac_encoder_forward.1} parent=287 // pred_fallthru
          _
        // Predicated region
        $region373: #{vac_encoder_forward.1} parent=287 // pred_check
          %p2116 = pneg %p920
        $region374: #{vac_encoder_forward.1} parent=287 // pred_check_branch
          %2118 = sbr.rel (%p2116) target = $region376
        $region375: #{vac_encoder_forward.1} parent=287 // pred_region
          %2119 = dma.done [#allocation35], 16
        $region376: #{vac_encoder_forward.1} parent=287 // pred_fallthru
          _
        // Predicated region
        $region377: #{vac_encoder_forward.1} parent=287 // pred_check
          %p2120 = pneg %p1466
        $region378: #{vac_encoder_forward.1} parent=287 // pred_check_branch
          %2122 = sbr.rel (%p2120) target = $region380
        $region379: #{vac_encoder_forward.1} parent=287 // pred_region
          %2123 = dma.done [#allocation35], 16
        $region380: #{vac_encoder_forward.1} parent=287 // pred_fallthru
          _
        // Predicated region
        $region381: #{vac_encoder_forward.1} parent=287 // pred_check
          %p2124 = pneg %p1508
        $region382: #{vac_encoder_forward.1} parent=287 // pred_check_branch
          %2126 = sbr.rel (%p2124) target = $region384
        $region383: #{vac_encoder_forward.1} parent=287 // pred_region
          %2127 = dma.done [#allocation38], 16
        $region384: #{vac_encoder_forward.1} parent=287 // pred_fallthru
          _
        // Predicated region
        $region385: #{vac_encoder_forward.1} parent=287 // pred_check
          %p2128 = pneg %p1550
        $region386: #{vac_encoder_forward.1} parent=287 // pred_check_branch
          %2130 = sbr.rel (%p2128) target = $region388
        $region387: #{vac_encoder_forward.1} parent=287 // pred_region
          %2131 = dma.done [#allocation38], 16
        $region388: #{vac_encoder_forward.1} parent=287 // pred_fallthru
          _
        %p2132 = scmp.lt.s32.totalorder %s159, 1
        %s2133 = scalar_select %p2132, %s159, 1
        %s2134 = smul.addr %s2133, 8
        %s2135 = scalar_lea.vmem %s1, %s2134
        %p2136 = pneg %p180
        %p2137 = pneg %p177
        %p2138 = scmp.lt.s32.totalorder %s159, 1
        %s2139 = scalar_select %p2138, %s159, 1
        %s2140 = smul.addr %s2139, 8
        %s2141 = scalar_lea.vmem %s3, %s2140
        %p2142 = pneg %p206
        %p2143 = pneg %p203
        %p2144 = pneg %p227
        %p2145 = pneg %p224
        %p2146 = pneg %p248
        %p2147 = pneg %p245
        %p2148 = pneg %p269
        %p2149 = pneg %p266
        %p2150 = pneg %p290
        %p2151 = pneg %p287
        %p2152 = pneg %p311
        %p2153 = pneg %p308
        %p2154 = pneg %p332
        %p2155 = pneg %p329
        %p2156 = pneg %p353
        %p2157 = pneg %p350
        %p2158 = pneg %p374
        %p2159 = pneg %p371
        %p2160 = pneg %p395
        %p2161 = pneg %p392
        %p2162 = pneg %p416
        %p2163 = pneg %p413
        %p2164 = pneg %p437
        %p2165 = pneg %p434
        %p2166 = pneg %p458
        %p2167 = pneg %p455
        %p2168 = pneg %p479
        %p2169 = pneg %p476
        %p2170 = pneg %p500
        %p2171 = pneg %p497
        %p2172 = pneg %p521
        %p2173 = pneg %p518
        %p2174 = pneg %p542
        %p2175 = pneg %p539
        %p2176 = pneg %p563
        %p2177 = pneg %p560
        %p2178 = pneg %p584
        %p2179 = pneg %p581
        %p2180 = pneg %p605
        %p2181 = pneg %p602
        %p2182 = pneg %p626
        %p2183 = pneg %p623
        %p2184 = pneg %p647
        %p2185 = pneg %p644
        %p2186 = pneg %p668
        %p2187 = pneg %p665
        %p2188 = pneg %p689
        %p2189 = pneg %p686
        %p2190 = pneg %p710
        %p2191 = pneg %p707
        %p2192 = pneg %p731
        %p2193 = pneg %p728
        %p2194 = pneg %p752
        %p2195 = pneg %p749
        %p2196 = pneg %p773
        %p2197 = pneg %p770
        %p2198 = pneg %p794
        %p2199 = pneg %p791
        %p2200 = pneg %p815
        %p2201 = pneg %p812
        %p2202 = pneg %p836
        %p2203 = pneg %p833
        %p2204 = pneg %p857
        %p2205 = pneg %p854
        %p2206 = pneg %p878
        %p2207 = pneg %p875
        %p2208 = pneg %p899
        %p2209 = pneg %p896
        %p2210 = pneg %p920
        %p2211 = pneg %p917
        %p2212 = pneg %p941
        %p2213 = pneg %p938
        %p2214 = pneg %p962
        %p2215 = pneg %p959
        %p2216 = pneg %p983
        %p2217 = pneg %p980
        %p2218 = pneg %p1004
        %p2219 = pneg %p1001
        %p2220 = pneg %p1025
        %p2221 = pneg %p1022
        %p2222 = pneg %p1046
        %p2223 = pneg %p1043
        %p2224 = pneg %p1067
        %p2225 = pneg %p1064
        %p2226 = pneg %p1088
        %p2227 = pneg %p1085
        %p2228 = pneg %p1109
        %p2229 = pneg %p1106
        %p2230 = pneg %p1130
        %p2231 = pneg %p1127
        %p2232 = pneg %p1151
        %p2233 = pneg %p1148
        %p2234 = pneg %p1172
        %p2235 = pneg %p1169
        %p2236 = pneg %p1193
        %p2237 = pneg %p1190
        %p2238 = pneg %p1214
        %p2239 = pneg %p1211
        %p2240 = pneg %p1235
        %p2241 = pneg %p1232
        %p2242 = pneg %p1256
        %p2243 = pneg %p1253
        %p2244 = pneg %p1277
        %p2245 = pneg %p1274
        %p2246 = pneg %p1298
        %p2247 = pneg %p1295
        %p2248 = pneg %p1319
        %p2249 = pneg %p1316
        %p2250 = pneg %p1340
        %p2251 = pneg %p1337
        %p2252 = pneg %p1361
        %p2253 = pneg %p1358
        %p2254 = pneg %p1382
        %p2255 = pneg %p1379
        %p2256 = pneg %p1403
        %p2257 = pneg %p1400
        %p2258 = pneg %p1424
        %p2259 = pneg %p1421
        %p2260 = pneg %p1445
        %p2261 = pneg %p1442
        %p2262 = pneg %p1466
        %p2263 = pneg %p1463
        %p2264 = pneg %p1487
        %p2265 = pneg %p1484
        %p2266 = pneg %p1508
        %p2267 = pneg %p1505
        %p2268 = pneg %p1529
        %p2269 = pneg %p1526
        %p2270 = pneg %p1550
        %p2271 = pneg %p1547
        %p2272 = pneg %p1571
        %p2273 = pneg %p1568
        %p2274 = pneg %p1597
        %p2275 = pneg %p1594
        %p2276 = scmp.lt.s32.totalorder %s159, 1
        %s2277 = scalar_select %p2276, %s159, 1
        %s2278 = smul.addr %s2277, 2
        %s2279 = scalar_lea.vmem %s135, %s2278
        %p2280 = scmp.lt.s32.totalorder %s159, 1
        %s2281 = scalar_select %p2280, %s159, 1
        %s2282 = smul.addr %s2281, 8
        %s2283 = scalar_lea.vmem %s1, %s2282
        %p2284 = scmp.lt.s32.totalorder %s159, 1
        %s2285 = scalar_select %p2284, %s159, 1
        %s2286 = smul.addr %s2285, 8
        %s2287 = scalar_lea.vmem %s3, %s2286
        %p2288 = scmp.lt.s32.totalorder %s159, 1
        %s2289 = scalar_select %p2288, %s159, 1
        %s2290 = smul.addr %s2289, 2
        %s2291 = scalar_lea.vmem %s135, %s2290
        %v2293 = vld [vmem:[%s2283] sm:$0xff]
        %v2294 = vld [vmem:[%s5] sm:$0xff]
        %v2295 = vpack.c.bf16 %v2293, %v2293
        %v2296 = vld [vmem:[%s129] sm:$0xff]
        %v2297 = vld [vmem:[%s129 + $0x8] sm:$0xff]
        %v2298 = vld [vmem:[%s129 + $0x10] sm:$0xff]
        %v2299 = vld [vmem:[%s129 + $0x18] sm:$0xff]
        %v2300 = vld [vmem:[%s129 + $0x20] sm:$0xff]
        %v2301 = vld [vmem:[%s129 + $0x28] sm:$0xff]
        %v2302 = vld [vmem:[%s129 + $0x30] sm:$0xff]
        %v2303 = vld [vmem:[%s129 + $0x38] sm:$0xff]
        %v2304 = vpack.c.bf16 %v2297, %v2296
        %v2305 = vpack.c.bf16 %v2299, %v2298
        %v2306 = vpack.c.bf16 %v2301, %v2300
        %v2307 = vpack.c.bf16 %v2303, %v2302
        %v2308 = vld [vmem:[#allocation37] sm:$0x1]
        %v2310 = vlaneseq
        %v2311 = vshrl.u32 %v2310, 7
        %v2312 = vsub.s32 0, %v2311
        %v2313 = vrot.slane %v2308, %v2312
        %vm2315 = vcmask 523264
        %v2317 = vsel %vm2315, %v2295, 0
        %2319 = vmatprep.subr.bf16.mxu0 0
        %2320 = vmatpush1.bf16.msra.mxu0 %v2304
        %2321 = vmatprep.subr.bf16.mxu0 0
        %2322 = vmatpush1.bf16.msra.mxu0 %v2305
        %2323 = vmatprep.subr.bf16.mxu0 0
        %2324 = vmatpush1.bf16.msra.mxu0 %v2306
        %2325 = vmatprep.subr.bf16.mxu0 0
        %2326 = vmatpush1.bf16.msra.mxu0 %v2307
        %2327 = vmatprep.subr.bf16.mxu0 0
        %2328 = vmatpush1.bf16.msra.mxu0 0
        %2329 = vmatprep.subr.bf16.mxu0 0
        %2330 = vmatpush1.bf16.msra.mxu0 0
        %2331 = vmatprep.subr.bf16.mxu0 0
        %2332 = vmatpush1.bf16.msra.mxu0 0
        %2333 = vmatprep.subr.bf16.mxu0 0
        %2334 = vmatpush1.bf16.msra.mxu0 0
        %2335 = vmatprep.subr.bf16.mxu0 0
        %2336 = vmatpush1.bf16.msra.mxu0 0
        %2337 = vmatprep.subr.bf16.mxu0 0
        %2338 = vmatpush1.bf16.msra.mxu0 0
        %2339 = vmatprep.subr.bf16.mxu0 0
        %2340 = vmatpush1.bf16.msra.mxu0 0
        %2341 = vmatprep.subr.bf16.mxu0 0
        %2342 = vmatpush1.bf16.msra.mxu0 0
        %2343 = vmatprep.subr.bf16.mxu0 0
        %2344 = vmatpush1.bf16.msra.mxu0 0
        %2345 = vmatprep.subr.bf16.mxu0 0
        %2346 = vmatpush1.bf16.msra.mxu0 0
        %2347 = vmatprep.subr.bf16.mxu0 0
        %2348 = vmatpush1.bf16.msra.mxu0 0
        %2349 = vmatprep.subr.bf16.mxu0 0
        %2350 = vmatpush1.bf16.msra.mxu0 0
        %2351 = vmatprep.mubr.bf16.mxu0 0
        %2352 = vmatmul.mubr.bf16.gmra.mrb[0].mxu0 %v2317
        %v2353 = vpop.f32.mrb[0].mxu0
        %v2354 = vadd.f32 %v2313, %v2353
        %v2355 = vpop.f32.mrb[0].mxu0
        %v2356 = vpop.f32.mrb[0].mxu0
        %v2357 = vpop.f32.mrb[0].mxu0
        %2358 = vdwg.mxu0
        %v2359 = vmax.f32 %v2354, 0.0
        %v2360 = vadd.f32 %v2359, %v2294
        %v2361 = vld [vmem:[%s125] sm:$0xff]
        %v2362 = vpack.c.bf16 %v2361, %v2361
        %v2363 = vld [vmem:[%s87] sm:$0xff]
        %v2364 = vld [vmem:[%s87 + $0x8] sm:$0xff]
        %v2365 = vld [vmem:[%s87 + $0x10] sm:$0xff]
        %v2366 = vld [vmem:[%s87 + $0x18] sm:$0xff]
        %v2367 = vpack.c.bf16 %v2364, %v2363
        %v2368 = vpack.c.bf16 %v2366, %v2365
        %v2369 = vld [vmem:[%s83] sm:$0x1]
        %v2371 = vlaneseq
        %v2372 = vshrl.u32 %v2371, 7
        %v2373 = vsub.s32 0, %v2372
        %v2374 = vrot.slane %v2369, %v2373
        %vm2376 = vcmask 261120
        %v2378 = vsel %vm2376, %v2362, 0
        %2380 = vmatprep.subr.bf16.mxu0 0
        %2381 = vmatpush1.bf16.msra.mxu0 %v2367
        %2382 = vmatprep.subr.bf16.mxu0 0
        %2383 = vmatpush1.bf16.msra.mxu0 %v2368
        %2384 = vmatprep.subr.bf16.mxu0 0
        %2385 = vmatpush1.bf16.msra.mxu0 0
        %2386 = vmatprep.subr.bf16.mxu0 0
        %2387 = vmatpush1.bf16.msra.mxu0 0
        %2388 = vmatprep.subr.bf16.mxu0 0
        %2389 = vmatpush1.bf16.msra.mxu0 0
        %2390 = vmatprep.subr.bf16.mxu0 0
        %2391 = vmatpush1.bf16.msra.mxu0 0
        %2392 = vmatprep.subr.bf16.mxu0 0
        %2393 = vmatpush1.bf16.msra.mxu0 0
        %2394 = vmatprep.subr.bf16.mxu0 0
        %2395 = vmatpush1.bf16.msra.mxu0 0
        %2396 = vmatprep.subr.bf16.mxu0 0
        %2397 = vmatpush1.bf16.msra.mxu0 0
        %2398 = vmatprep.subr.bf16.mxu0 0
        %2399 = vmatpush1.bf16.msra.mxu0 0
        %2400 = vmatprep.subr.bf16.mxu0 0
        %2401 = vmatpush1.bf16.msra.mxu0 0
        %2402 = vmatprep.subr.bf16.mxu0 0
        %2403 = vmatpush1.bf16.msra.mxu0 0
        %2404 = vmatprep.subr.bf16.mxu0 0
        %2405 = vmatpush1.bf16.msra.mxu0 0
        %2406 = vmatprep.subr.bf16.mxu0 0
        %2407 = vmatpush1.bf16.msra.mxu0 0
        %2408 = vmatprep.subr.bf16.mxu0 0
        %2409 = vmatpush1.bf16.msra.mxu0 0
        %2410 = vmatprep.subr.bf16.mxu0 0
        %2411 = vmatpush1.bf16.msra.mxu0 0
        %2412 = vmatprep.mubr.bf16.mxu0 0
        %2413 = vmatmul.mubr.bf16.gmra.mrb[0].mxu0 %v2378
        %v2414 = vpop.f32.mrb[0].mxu0
        %v2415 = vadd.f32 %v2374, %v2414
        %v2416 = vpop.f32.mrb[0].mxu0
        %v2417 = vpop.f32.mrb[0].mxu0
        %v2418 = vpop.f32.mrb[0].mxu0
        %2419 = vdwg.mxu0
        %v2420 = vpack.c.bf16 %v2415, %v2415
        %2422 = vrot.lane.b32.xlu0 %v2420, 96
        %v2423 = vpop.permute.xlu0 %2422
        %vm2424 = vcmask 64512
        %v2426 = vsel %vm2424, %v2420, 0
        %v2429 = vsel %vm2424, %v2423, 0
        %2431 = vmatprep.subr.bf16.mxu0 0
        %2432 = vmatpush1.bf16.xpose.msra.mxu0 %v2429
        %2433 = vmatprep.subr.bf16.mxu0 0
        %2434 = vmatpush1.bf16.xpose.msra.mxu0 0
        %2435 = vmatprep.subr.bf16.mxu0 0
        %2436 = vmatpush1.bf16.xpose.msra.mxu0 0
        %2437 = vmatprep.subr.bf16.mxu0 0
        %2438 = vmatpush1.bf16.xpose.msra.mxu0 0
        %2439 = vmatprep.subr.bf16.mxu0 0
        %2440 = vmatpush1.bf16.xpose.msra.mxu0 0
        %2441 = vmatprep.subr.bf16.mxu0 0
        %2442 = vmatpush1.bf16.xpose.msra.mxu0 0
        %2443 = vmatprep.subr.bf16.mxu0 0
        %2444 = vmatpush1.bf16.xpose.msra.mxu0 0
        %2445 = vmatprep.subr.bf16.mxu0 0
        %2446 = vmatpush1.bf16.xpose.msra.mxu0 0
        %2447 = vmatprep.subr.bf16.mxu0 0
        %2448 = vmatpush1.bf16.xpose.msra.mxu0 0
        %2449 = vmatprep.subr.bf16.mxu0 0
        %2450 = vmatpush1.bf16.xpose.msra.mxu0 0
        %2451 = vmatprep.subr.bf16.mxu0 0
        %2452 = vmatpush1.bf16.xpose.msra.mxu0 0
        %2453 = vmatprep.subr.bf16.mxu0 0
        %2454 = vmatpush1.bf16.xpose.msra.mxu0 0
        %2455 = vmatprep.subr.bf16.mxu0 0
        %2456 = vmatpush1.bf16.xpose.msra.mxu0 0
        %2457 = vmatprep.subr.bf16.mxu0 0
        %2458 = vmatpush1.bf16.xpose.msra.mxu0 0
        %2459 = vmatprep.subr.bf16.mxu0 0
        %2460 = vmatpush1.bf16.xpose.msra.mxu0 0
        %2461 = vmatprep.subr.bf16.mxu0 0
        %2462 = vmatpush1.bf16.xpose.msra.mxu0 0
        %2463 = vmatprep.mubr.bf16.mxu0 0
        %2464 = vmatmul.mubr.bf16.gmra.mrb[0].mxu0 %v2426
        %v2465 = vpop.f32.mrb[0].mxu0
        %v2466 = vadd.f32 0.0, %v2465
        %v2467 = vpop.f32.mrb[0].mxu0
        %v2468 = vpop.f32.mrb[0].mxu0
        %v2469 = vpop.f32.mrb[0].mxu0
        %2470 = vdwg.mxu0
        %v2471 = vmul.f32 %v2466, 0.35355338
        %v2472 = vsel %vm2424, %v2471, -inf
        %2473 = vmax.xlane.f32.xlu0 %v2472
        %v2474 = vpop.xlane.xlu0 %2473
        %v2475 = vsub.f32 %v2471, %v2474
        %v2476 = vmul.f32 %v2475, 1.442695
        %v2477 = vpow.pop %v2476
        %v2478 = vsel %vm2424, %v2477, 0.0
        %2479 = vadd.xlane.f32.xlu0 %v2478
        %v2480 = vpop.xlane.xlu0 %2479
        %v2481 = vrcp.pop %v2480
        %v2482 = vmul.f32 %v2477, %v2481
        %v2483 = vpack.c.bf16 %v2482, %v2482
        %2484 = vrot.lane.b32.xlu0 %v2420, 64
        %v2485 = vpop.permute.xlu0 %2484
        %v2487 = vsel %vm2424, %v2483, 0
        %vm2489 = vcmask 1043456
        %v2491 = vsel %vm2489, %v2485, 0
        %2493 = vmatprep.subr.bf16.mxu0 0
        %2494 = vmatpush1.bf16.msra.mxu0 %v2491
        %2495 = vmatprep.subr.bf16.mxu0 0
        %2496 = vmatpush1.bf16.msra.mxu0 0
        %2497 = vmatprep.subr.bf16.mxu0 0
        %2498 = vmatpush1.bf16.msra.mxu0 0
        %2499 = vmatprep.subr.bf16.mxu0 0
        %2500 = vmatpush1.bf16.msra.mxu0 0
        %2501 = vmatprep.subr.bf16.mxu0 0
        %2502 = vmatpush1.bf16.msra.mxu0 0
        %2503 = vmatprep.subr.bf16.mxu0 0
        %2504 = vmatpush1.bf16.msra.mxu0 0
        %2505 = vmatprep.subr.bf16.mxu0 0
        %2506 = vmatpush1.bf16.msra.mxu0 0
        %2507 = vmatprep.subr.bf16.mxu0 0
        %2508 = vmatpush1.bf16.msra.mxu0 0
        %2509 = vmatprep.subr.bf16.mxu0 0
        %2510 = vmatpush1.bf16.msra.mxu0 0
        %2511 = vmatprep.subr.bf16.mxu0 0
        %2512 = vmatpush1.bf16.msra.mxu0 0
        %2513 = vmatprep.subr.bf16.mxu0 0
        %2514 = vmatpush1.bf16.msra.mxu0 0
        %2515 = vmatprep.subr.bf16.mxu0 0
        %2516 = vmatpush1.bf16.msra.mxu0 0
        %2517 = vmatprep.subr.bf16.mxu0 0
        %2518 = vmatpush1.bf16.msra.mxu0 0
        %2519 = vmatprep.subr.bf16.mxu0 0
        %2520 = vmatpush1.bf16.msra.mxu0 0
        %2521 = vmatprep.subr.bf16.mxu0 0
        %2522 = vmatpush1.bf16.msra.mxu0 0
        %2523 = vmatprep.subr.bf16.mxu0 0
        %2524 = vmatpush1.bf16.msra.mxu0 0
        %2525 = vmatprep.mubr.bf16.mxu0 0
        %2526 = vmatmul.mubr.bf16.gmra.mrb[0].mxu0 %v2487
        %v2527 = vpop.f32.mrb[0].mxu0
        %v2528 = vadd.f32 0.0, %v2527
        %v2529 = vpop.f32.mrb[0].mxu0
        %v2530 = vpop.f32.mrb[0].mxu0
        %v2531 = vpop.f32.mrb[0].mxu0
        %2532 = vdwg.mxu0
        %2533 = vrot.lane.b32.xlu0 %v2420, 120
        %v2534 = vpop.permute.xlu0 %2533
        %2535 = vrot.lane.b32.xlu0 %v2420, 88
        %v2536 = vpop.permute.xlu0 %2535
        %v2538 = vsel %vm2424, %v2534, 0
        %v2541 = vsel %vm2424, %v2536, 0
        %2543 = vmatprep.subr.bf16.mxu0 0
        %2544 = vmatpush1.bf16.xpose.msra.mxu0 %v2541
        %2545 = vmatprep.subr.bf16.mxu0 0
        %2546 = vmatpush1.bf16.xpose.msra.mxu0 0
        %2547 = vmatprep.subr.bf16.mxu0 0
        %2548 = vmatpush1.bf16.xpose.msra.mxu0 0
        %2549 = vmatprep.subr.bf16.mxu0 0
        %2550 = vmatpush1.bf16.xpose.msra.mxu0 0
        %2551 = vmatprep.subr.bf16.mxu0 0
        %2552 = vmatpush1.bf16.xpose.msra.mxu0 0
        %2553 = vmatprep.subr.bf16.mxu0 0
        %2554 = vmatpush1.bf16.xpose.msra.mxu0 0
        %2555 = vmatprep.subr.bf16.mxu0 0
        %2556 = vmatpush1.bf16.xpose.msra.mxu0 0
        %2557 = vmatprep.subr.bf16.mxu0 0
        %2558 = vmatpush1.bf16.xpose.msra.mxu0 0
        %2559 = vmatprep.subr.bf16.mxu0 0
        %2560 = vmatpush1.bf16.xpose.msra.mxu0 0
        %2561 = vmatprep.subr.bf16.mxu0 0
        %2562 = vmatpush1.bf16.xpose.msra.mxu0 0
        %2563 = vmatprep.subr.bf16.mxu0 0
        %2564 = vmatpush1.bf16.xpose.msra.mxu0 0
        %2565 = vmatprep.subr.bf16.mxu0 0
        %2566 = vmatpush1.bf16.xpose.msra.mxu0 0
        %2567 = vmatprep.subr.bf16.mxu0 0
        %2568 = vmatpush1.bf16.xpose.msra.mxu0 0
        %2569 = vmatprep.subr.bf16.mxu0 0
        %2570 = vmatpush1.bf16.xpose.msra.mxu0 0
        %2571 = vmatprep.subr.bf16.mxu0 0
        %2572 = vmatpush1.bf16.xpose.msra.mxu0 0
        %2573 = vmatprep.subr.bf16.mxu0 0
        %2574 = vmatpush1.bf16.xpose.msra.mxu0 0
        %2575 = vmatprep.mubr.bf16.mxu0 0
        %2576 = vmatmul.mubr.bf16.gmra.mrb[0].mxu0 %v2538
        %v2577 = vpop.f32.mrb[0].mxu0
        %v2578 = vadd.f32 0.0, %v2577
        %v2579 = vpop.f32.mrb[0].mxu0
        %v2580 = vpop.f32.mrb[0].mxu0
        %v2581 = vpop.f32.mrb[0].mxu0
        %2582 = vdwg.mxu0
        %v2583 = vmul.f32 %v2578, 0.35355338
        %v2584 = vsel %vm2424, %v2583, -inf
        %2585 = vmax.xlane.f32.xlu0 %v2584
        %v2586 = vpop.xlane.xlu0 %2585
        %v2587 = vsub.f32 %v2583, %v2586
        %v2588 = vmul.f32 %v2587, 1.442695
        %v2589 = vpow.pop %v2588
        %v2590 = vsel %vm2424, %v2589, 0.0
        %2591 = vadd.xlane.f32.xlu0 %v2590
        %v2592 = vpop.xlane.xlu0 %2591
        %v2593 = vrcp.pop %v2592
        %v2594 = vmul.f32 %v2589, %v2593
        %v2595 = vpack.c.bf16 %v2594, %v2594
        %2596 = vrot.lane.b32.xlu0 %v2420, 56
        %v2597 = vpop.permute.xlu0 %2596
        %v2599 = vsel %vm2424, %v2595, 0
        %v2602 = vsel %vm2489, %v2597, 0
        %2604 = vmatprep.subr.bf16.mxu0 0
        %2605 = vmatpush1.bf16.msra.mxu0 %v2602
        %2606 = vmatprep.subr.bf16.mxu0 0
        %2607 = vmatpush1.bf16.msra.mxu0 0
        %2608 = vmatprep.subr.bf16.mxu0 0
        %2609 = vmatpush1.bf16.msra.mxu0 0
        %2610 = vmatprep.subr.bf16.mxu0 0
        %2611 = vmatpush1.bf16.msra.mxu0 0
        %2612 = vmatprep.subr.bf16.mxu0 0
        %2613 = vmatpush1.bf16.msra.mxu0 0
        %2614 = vmatprep.subr.bf16.mxu0 0
        %2615 = vmatpush1.bf16.msra.mxu0 0
        %2616 = vmatprep.subr.bf16.mxu0 0
        %2617 = vmatpush1.bf16.msra.mxu0 0
        %2618 = vmatprep.subr.bf16.mxu0 0
        %2619 = vmatpush1.bf16.msra.mxu0 0
        %2620 = vmatprep.subr.bf16.mxu0 0
        %2621 = vmatpush1.bf16.msra.mxu0 0
        %2622 = vmatprep.subr.bf16.mxu0 0
        %2623 = vmatpush1.bf16.msra.mxu0 0
        %2624 = vmatprep.subr.bf16.mxu0 0
        %2625 = vmatpush1.bf16.msra.mxu0 0
        %2626 = vmatprep.subr.bf16.mxu0 0
        %2627 = vmatpush1.bf16.msra.mxu0 0
        %2628 = vmatprep.subr.bf16.mxu0 0
        %2629 = vmatpush1.bf16.msra.mxu0 0
        %2630 = vmatprep.subr.bf16.mxu0 0
        %2631 = vmatpush1.bf16.msra.mxu0 0
        %2632 = vmatprep.subr.bf16.mxu0 0
        %2633 = vmatpush1.bf16.msra.mxu0 0
        %2634 = vmatprep.subr.bf16.mxu0 0
        %2635 = vmatpush1.bf16.msra.mxu0 0
        %2636 = vmatprep.mubr.bf16.mxu0 0
        %2637 = vmatmul.mubr.bf16.gmra.mrb[0].mxu0 %v2599
        %v2638 = vpop.f32.mrb[0].mxu0
        %v2639 = vadd.f32 0.0, %v2638
        %v2640 = vpop.f32.mrb[0].mxu0
        %v2641 = vpop.f32.mrb[0].mxu0
        %v2642 = vpop.f32.mrb[0].mxu0
        %2643 = vdwg.mxu0
        %2644 = vrot.lane.b32.xlu0 %v2420, 112
        %v2645 = vpop.permute.xlu0 %2644
        %2646 = vrot.lane.b32.xlu0 %v2420, 80
        %v2647 = vpop.permute.xlu0 %2646
        %v2649 = vsel %vm2424, %v2645, 0
        %v2652 = vsel %vm2424, %v2647, 0
        %2654 = vmatprep.subr.bf16.mxu0 0
        %2655 = vmatpush1.bf16.xpose.msra.mxu0 %v2652
        %2656 = vmatprep.subr.bf16.mxu0 0
        %2657 = vmatpush1.bf16.xpose.msra.mxu0 0
        %2658 = vmatprep.subr.bf16.mxu0 0
        %2659 = vmatpush1.bf16.xpose.msra.mxu0 0
        %2660 = vmatprep.subr.bf16.mxu0 0
        %2661 = vmatpush1.bf16.xpose.msra.mxu0 0
        %2662 = vmatprep.subr.bf16.mxu0 0
        %2663 = vmatpush1.bf16.xpose.msra.mxu0 0
        %2664 = vmatprep.subr.bf16.mxu0 0
        %2665 = vmatpush1.bf16.xpose.msra.mxu0 0
        %2666 = vmatprep.subr.bf16.mxu0 0
        %2667 = vmatpush1.bf16.xpose.msra.mxu0 0
        %2668 = vmatprep.subr.bf16.mxu0 0
        %2669 = vmatpush1.bf16.xpose.msra.mxu0 0
        %2670 = vmatprep.subr.bf16.mxu0 0
        %2671 = vmatpush1.bf16.xpose.msra.mxu0 0
        %2672 = vmatprep.subr.bf16.mxu0 0
        %2673 = vmatpush1.bf16.xpose.msra.mxu0 0
        %2674 = vmatprep.subr.bf16.mxu0 0
        %2675 = vmatpush1.bf16.xpose.msra.mxu0 0
        %2676 = vmatprep.subr.bf16.mxu0 0
        %2677 = vmatpush1.bf16.xpose.msra.mxu0 0
        %2678 = vmatprep.subr.bf16.mxu0 0
        %2679 = vmatpush1.bf16.xpose.msra.mxu0 0
        %2680 = vmatprep.subr.bf16.mxu0 0
        %2681 = vmatpush1.bf16.xpose.msra.mxu0 0
        %2682 = vmatprep.subr.bf16.mxu0 0
        %2683 = vmatpush1.bf16.xpose.msra.mxu0 0
        %2684 = vmatprep.subr.bf16.mxu0 0
        %2685 = vmatpush1.bf16.xpose.msra.mxu0 0
        %2686 = vmatprep.mubr.bf16.mxu0 0
        %2687 = vmatmul.mubr.bf16.gmra.mrb[0].mxu0 %v2649
        %v2688 = vpop.f32.mrb[0].mxu0
        %v2689 = vadd.f32 0.0, %v2688
        %v2690 = vpop.f32.mrb[0].mxu0
        %v2691 = vpop.f32.mrb[0].mxu0
        %v2692 = vpop.f32.mrb[0].mxu0
        %2693 = vdwg.mxu0
        %v2694 = vmul.f32 %v2689, 0.35355338
        %v2695 = vsel %vm2424, %v2694, -inf
        %2696 = vmax.xlane.f32.xlu0 %v2695
        %v2697 = vpop.xlane.xlu0 %2696
        %v2698 = vsub.f32 %v2694, %v2697
        %v2699 = vmul.f32 %v2698, 1.442695
        %v2700 = vpow.pop %v2699
        %v2701 = vsel %vm2424, %v2700, 0.0
        %2702 = vadd.xlane.f32.xlu0 %v2701
        %v2703 = vpop.xlane.xlu0 %2702
        %v2704 = vrcp.pop %v2703
        %v2705 = vmul.f32 %v2700, %v2704
        %v2706 = vpack.c.bf16 %v2705, %v2705
        %2707 = vrot.lane.b32.xlu0 %v2420, 48
        %v2708 = vpop.permute.xlu0 %2707
        %v2710 = vsel %vm2424, %v2706, 0
        %v2713 = vsel %vm2489, %v2708, 0
        %2715 = vmatprep.subr.bf16.mxu0 0
        %2716 = vmatpush1.bf16.msra.mxu0 %v2713
        %2717 = vmatprep.subr.bf16.mxu0 0
        %2718 = vmatpush1.bf16.msra.mxu0 0
        %2719 = vmatprep.subr.bf16.mxu0 0
        %2720 = vmatpush1.bf16.msra.mxu0 0
        %2721 = vmatprep.subr.bf16.mxu0 0
        %2722 = vmatpush1.bf16.msra.mxu0 0
        %2723 = vmatprep.subr.bf16.mxu0 0
        %2724 = vmatpush1.bf16.msra.mxu0 0
        %2725 = vmatprep.subr.bf16.mxu0 0
        %2726 = vmatpush1.bf16.msra.mxu0 0
        %2727 = vmatprep.subr.bf16.mxu0 0
        %2728 = vmatpush1.bf16.msra.mxu0 0
        %2729 = vmatprep.subr.bf16.mxu0 0
        %2730 = vmatpush1.bf16.msra.mxu0 0
        %2731 = vmatprep.subr.bf16.mxu0 0
        %2732 = vmatpush1.bf16.msra.mxu0 0
        %2733 = vmatprep.subr.bf16.mxu0 0
        %2734 = vmatpush1.bf16.msra.mxu0 0
        %2735 = vmatprep.subr.bf16.mxu0 0
        %2736 = vmatpush1.bf16.msra.mxu0 0
        %2737 = vmatprep.subr.bf16.mxu0 0
        %2738 = vmatpush1.bf16.msra.mxu0 0
        %2739 = vmatprep.subr.bf16.mxu0 0
        %2740 = vmatpush1.bf16.msra.mxu0 0
        %2741 = vmatprep.subr.bf16.mxu0 0
        %2742 = vmatpush1.bf16.msra.mxu0 0
        %2743 = vmatprep.subr.bf16.mxu0 0
        %2744 = vmatpush1.bf16.msra.mxu0 0
        %2745 = vmatprep.subr.bf16.mxu0 0
        %2746 = vmatpush1.bf16.msra.mxu0 0
        %2747 = vmatprep.mubr.bf16.mxu0 0
        %2748 = vmatmul.mubr.bf16.gmra.mrb[0].mxu0 %v2710
        %v2749 = vpop.f32.mrb[0].mxu0
        %v2750 = vadd.f32 0.0, %v2749
        %v2751 = vpop.f32.mrb[0].mxu0
        %v2752 = vpop.f32.mrb[0].mxu0
        %v2753 = vpop.f32.mrb[0].mxu0
        %2754 = vdwg.mxu0
        %2755 = vrot.lane.b32.xlu0 %v2420, 104
        %v2756 = vpop.permute.xlu0 %2755
        %2757 = vrot.lane.b32.xlu0 %v2420, 72
        %v2758 = vpop.permute.xlu0 %2757
        %v2760 = vsel %vm2424, %v2756, 0
        %v2763 = vsel %vm2424, %v2758, 0
        %2765 = vmatprep.subr.bf16.mxu0 0
        %2766 = vmatpush1.bf16.xpose.msra.mxu0 %v2763
        %2767 = vmatprep.subr.bf16.mxu0 0
        %2768 = vmatpush1.bf16.xpose.msra.mxu0 0
        %2769 = vmatprep.subr.bf16.mxu0 0
        %2770 = vmatpush1.bf16.xpose.msra.mxu0 0
        %2771 = vmatprep.subr.bf16.mxu0 0
        %2772 = vmatpush1.bf16.xpose.msra.mxu0 0
        %2773 = vmatprep.subr.bf16.mxu0 0
        %2774 = vmatpush1.bf16.xpose.msra.mxu0 0
        %2775 = vmatprep.subr.bf16.mxu0 0
        %2776 = vmatpush1.bf16.xpose.msra.mxu0 0
        %2777 = vmatprep.subr.bf16.mxu0 0
        %2778 = vmatpush1.bf16.xpose.msra.mxu0 0
        %2779 = vmatprep.subr.bf16.mxu0 0
        %2780 = vmatpush1.bf16.xpose.msra.mxu0 0
        %2781 = vmatprep.subr.bf16.mxu0 0
        %2782 = vmatpush1.bf16.xpose.msra.mxu0 0
        %2783 = vmatprep.subr.bf16.mxu0 0
        %2784 = vmatpush1.bf16.xpose.msra.mxu0 0
        %2785 = vmatprep.subr.bf16.mxu0 0
        %2786 = vmatpush1.bf16.xpose.msra.mxu0 0
        %2787 = vmatprep.subr.bf16.mxu0 0
        %2788 = vmatpush1.bf16.xpose.msra.mxu0 0
        %2789 = vmatprep.subr.bf16.mxu0 0
        %2790 = vmatpush1.bf16.xpose.msra.mxu0 0
        %2791 = vmatprep.subr.bf16.mxu0 0
        %2792 = vmatpush1.bf16.xpose.msra.mxu0 0
        %2793 = vmatprep.subr.bf16.mxu0 0
        %2794 = vmatpush1.bf16.xpose.msra.mxu0 0
        %2795 = vmatprep.subr.bf16.mxu0 0
        %2796 = vmatpush1.bf16.xpose.msra.mxu0 0
        %2797 = vmatprep.mubr.bf16.mxu0 0
        %2798 = vmatmul.mubr.bf16.gmra.mrb[0].mxu0 %v2760
        %v2799 = vpop.f32.mrb[0].mxu0
        %v2800 = vadd.f32 0.0, %v2799
        %v2801 = vpop.f32.mrb[0].mxu0
        %v2802 = vpop.f32.mrb[0].mxu0
        %v2803 = vpop.f32.mrb[0].mxu0
        %2804 = vdwg.mxu0
        %v2805 = vmul.f32 %v2800, 0.35355338
        %v2806 = vsel %vm2424, %v2805, -inf
        %2807 = vmax.xlane.f32.xlu0 %v2806
        %v2808 = vpop.xlane.xlu0 %2807
        %v2809 = vsub.f32 %v2805, %v2808
        %v2810 = vmul.f32 %v2809, 1.442695
        %v2811 = vpow.pop %v2810
        %v2812 = vsel %vm2424, %v2811, 0.0
        %2813 = vadd.xlane.f32.xlu0 %v2812
        %v2814 = vpop.xlane.xlu0 %2813
        %v2815 = vrcp.pop %v2814
        %v2816 = vmul.f32 %v2811, %v2815
        %v2817 = vpack.c.bf16 %v2816, %v2816
        %2818 = vrot.lane.b32.xlu0 %v2420, 40
        %v2819 = vpop.permute.xlu0 %2818
        %v2821 = vsel %vm2424, %v2817, 0
        %v2824 = vsel %vm2489, %v2819, 0
        %2826 = vmatprep.subr.bf16.mxu0 0
        %2827 = vmatpush1.bf16.msra.mxu0 %v2824
        %2828 = vmatprep.subr.bf16.mxu0 0
        %2829 = vmatpush1.bf16.msra.mxu0 0
        %2830 = vmatprep.subr.bf16.mxu0 0
        %2831 = vmatpush1.bf16.msra.mxu0 0
        %2832 = vmatprep.subr.bf16.mxu0 0
        %2833 = vmatpush1.bf16.msra.mxu0 0
        %2834 = vmatprep.subr.bf16.mxu0 0
        %2835 = vmatpush1.bf16.msra.mxu0 0
        %2836 = vmatprep.subr.bf16.mxu0 0
        %2837 = vmatpush1.bf16.msra.mxu0 0
        %2838 = vmatprep.subr.bf16.mxu0 0
        %2839 = vmatpush1.bf16.msra.mxu0 0
        %2840 = vmatprep.subr.bf16.mxu0 0
        %2841 = vmatpush1.bf16.msra.mxu0 0
        %2842 = vmatprep.subr.bf16.mxu0 0
        %2843 = vmatpush1.bf16.msra.mxu0 0
        %2844 = vmatprep.subr.bf16.mxu0 0
        %2845 = vmatpush1.bf16.msra.mxu0 0
        %2846 = vmatprep.subr.bf16.mxu0 0
        %2847 = vmatpush1.bf16.msra.mxu0 0
        %2848 = vmatprep.subr.bf16.mxu0 0
        %2849 = vmatpush1.bf16.msra.mxu0 0
        %2850 = vmatprep.subr.bf16.mxu0 0
        %2851 = vmatpush1.bf16.msra.mxu0 0
        %2852 = vmatprep.subr.bf16.mxu0 0
        %2853 = vmatpush1.bf16.msra.mxu0 0
        %2854 = vmatprep.subr.bf16.mxu0 0
        %2855 = vmatpush1.bf16.msra.mxu0 0
        %2856 = vmatprep.subr.bf16.mxu0 0
        %2857 = vmatpush1.bf16.msra.mxu0 0
        %2858 = vmatprep.mubr.bf16.mxu0 0
        %2859 = vmatmul.mubr.bf16.gmra.mrb[0].mxu0 %v2821
        %v2860 = vpop.f32.mrb[0].mxu0
        %v2861 = vadd.f32 0.0, %v2860
        %v2862 = vpop.f32.mrb[0].mxu0
        %v2863 = vpop.f32.mrb[0].mxu0
        %v2864 = vpop.f32.mrb[0].mxu0
        %2865 = vdwg.mxu0
        %2867 = vrot.lane.b32.xlu0 %v2639, 8
        %v2868 = vpop.permute.xlu0 %2867
        %2871 = vrot.lane.b32.xlu0 %v2750, 16
        %v2872 = vpop.permute.xlu0 %2871
        %2875 = vrot.lane.b32.xlu0 %v2861, 24
        %v2876 = vpop.permute.xlu0 %2875
        %v2878 = vsel %vm2424, %v2528, %v2868
        %vm2879 = vcmask 130048
        %v2880 = vsel %vm2879, %v2878, %v2872
        %vm2881 = vcmask 195584
        %v2882 = vsel %vm2881, %v2880, %v2876
        %v2883 = vpack.c.bf16 %v2882, %v2882
        %v2884 = vld [vmem:[%s85] sm:$0xff]
        %v2885 = vld [vmem:[%s85 + $0x8] sm:$0xff]
        %v2886 = vld [vmem:[%s85 + $0x10] sm:$0xff]
        %v2887 = vld [vmem:[%s85 + $0x18] sm:$0xff]
        %v2888 = vpack.c.bf16 %v2885, %v2884
        %v2889 = vpack.c.bf16 %v2887, %v2886
        %v2890 = vld [vmem:[%s81] sm:$0x1]
        %v2892 = vlaneseq
        %v2893 = vshrl.u32 %v2892, 7
        %v2894 = vsub.s32 0, %v2893
        %v2895 = vrot.slane %v2890, %v2894
        %v2898 = vsel %vm2376, %v2883, 0
        %2900 = vmatprep.subr.bf16.mxu0 0
        %2901 = vmatpush1.bf16.msra.mxu0 %v2888
        %2902 = vmatprep.subr.bf16.mxu0 0
        %2903 = vmatpush1.bf16.msra.mxu0 %v2889
        %2904 = vmatprep.subr.bf16.mxu0 0
        %2905 = vmatpush1.bf16.msra.mxu0 0
        %2906 = vmatprep.subr.bf16.mxu0 0
        %2907 = vmatpush1.bf16.msra.mxu0 0
        %2908 = vmatprep.subr.bf16.mxu0 0
        %2909 = vmatpush1.bf16.msra.mxu0 0
        %2910 = vmatprep.subr.bf16.mxu0 0
        %2911 = vmatpush1.bf16.msra.mxu0 0
        %2912 = vmatprep.subr.bf16.mxu0 0
        %2913 = vmatpush1.bf16.msra.mxu0 0
        %2914 = vmatprep.subr.bf16.mxu0 0
        %2915 = vmatpush1.bf16.msra.mxu0 0
        %2916 = vmatprep.subr.bf16.mxu0 0
        %2917 = vmatpush1.bf16.msra.mxu0 0
        %2918 = vmatprep.subr.bf16.mxu0 0
        %2919 = vmatpush1.bf16.msra.mxu0 0
        %2920 = vmatprep.subr.bf16.mxu0 0
        %2921 = vmatpush1.bf16.msra.mxu0 0
        %2922 = vmatprep.subr.bf16.mxu0 0
        %2923 = vmatpush1.bf16.msra.mxu0 0
        %2924 = vmatprep.subr.bf16.mxu0 0
        %2925 = vmatpush1.bf16.msra.mxu0 0
        %2926 = vmatprep.subr.bf16.mxu0 0
        %2927 = vmatpush1.bf16.msra.mxu0 0
        %2928 = vmatprep.subr.bf16.mxu0 0
        %2929 = vmatpush1.bf16.msra.mxu0 0
        %2930 = vmatprep.subr.bf16.mxu0 0
        %2931 = vmatpush1.bf16.msra.mxu0 0
        %2932 = vmatprep.mubr.bf16.mxu0 0
        %2933 = vmatmul.mubr.bf16.gmra.mrb[0].mxu0 %v2898
        %v2934 = vpop.f32.mrb[0].mxu0
        %v2935 = vadd.f32 %v2895, %v2934
        %v2936 = vpop.f32.mrb[0].mxu0
        %v2937 = vpop.f32.mrb[0].mxu0
        %v2938 = vpop.f32.mrb[0].mxu0
        %2939 = vdwg.mxu0
        %v2940 = vadd.f32 %v2361, %v2935
        %v2941 = vsel %vm2376, %v2940, 0.0
        %2942 = vadd.xlane.f32.xlu0 %v2941
        %v2943 = vpop.xlane.xlu0 %2942
        %v2944 = vrcp.pop 32.0
        %v2945 = vmul.f32 %v2943, %v2944
        %v2946 = vsub.f32 %v2940, %v2945
        %v2947 = vmul.f32 %v2946, %v2946
        %v2948 = vsel %vm2376, %v2947, 0.0
        %2949 = vadd.xlane.f32.xlu0 %v2948
        %v2950 = vpop.xlane.xlu0 %2949
        %v2951 = vmul.f32 %v2950, %v2944
        %v2952 = vadd.f32 %v2951, 1e-05
        %v2953 = vrsqrt.pop %v2952
        %v2954 = vmul.f32 %v2946, %v2953
        %v2955 = vld [vmem:[#allocation34] sm:$0x1]
        %v2957 = vlaneseq
        %v2958 = vshrl.u32 %v2957, 7
        %v2959 = vsub.s32 0, %v2958
        %v2960 = vrot.slane %v2955, %v2959
        %v2962 = vmul.f32 %v2954, %v2960
        %v2963 = vld [vmem:[#allocation33] sm:$0x1]
        %v2965 = vlaneseq
        %v2966 = vshrl.u32 %v2965, 7
        %v2967 = vsub.s32 0, %v2966
        %v2968 = vrot.slane %v2963, %v2967
        %v2970 = vadd.f32 %v2962, %v2968
        %v2971 = vpack.c.bf16 %v2970, %v2970
        %v2972 = vld [vmem:[%s67] sm:$0xff]
        %v2973 = vld [vmem:[%s67 + $0x8] sm:$0xff]
        %v2974 = vld [vmem:[%s67 + $0x10] sm:$0xff]
        %v2975 = vld [vmem:[%s67 + $0x18] sm:$0xff]
        %v2976 = vpack.c.bf16 %v2973, %v2972
        %v2977 = vpack.c.bf16 %v2975, %v2974
        %v2978 = vld [vmem:[#allocation31] sm:$0x1]
        %v2980 = vlaneseq
        %v2981 = vshrl.u32 %v2980, 7
        %v2982 = vsub.s32 0, %v2981
        %v2983 = vrot.slane %v2978, %v2982
        %v2986 = vsel %vm2376, %v2971, 0
        %2988 = vmatprep.subr.bf16.mxu0 0
        %2989 = vmatpush1.bf16.msra.mxu0 %v2976
        %2990 = vmatprep.subr.bf16.mxu0 0
        %2991 = vmatpush1.bf16.msra.mxu0 %v2977
        %2992 = vmatprep.subr.bf16.mxu0 0
        %2993 = vmatpush1.bf16.msra.mxu0 0
        %2994 = vmatprep.subr.bf16.mxu0 0
        %2995 = vmatpush1.bf16.msra.mxu0 0
        %2996 = vmatprep.subr.bf16.mxu0 0
        %2997 = vmatpush1.bf16.msra.mxu0 0
        %2998 = vmatprep.subr.bf16.mxu0 0
        %2999 = vmatpush1.bf16.msra.mxu0 0
        %3000 = vmatprep.subr.bf16.mxu0 0
        %3001 = vmatpush1.bf16.msra.mxu0 0
        %3002 = vmatprep.subr.bf16.mxu0 0
        %3003 = vmatpush1.bf16.msra.mxu0 0
        %3004 = vmatprep.subr.bf16.mxu0 0
        %3005 = vmatpush1.bf16.msra.mxu0 0
        %3006 = vmatprep.subr.bf16.mxu0 0
        %3007 = vmatpush1.bf16.msra.mxu0 0
        %3008 = vmatprep.subr.bf16.mxu0 0
        %3009 = vmatpush1.bf16.msra.mxu0 0
        %3010 = vmatprep.subr.bf16.mxu0 0
        %3011 = vmatpush1.bf16.msra.mxu0 0
        %3012 = vmatprep.subr.bf16.mxu0 0
        %3013 = vmatpush1.bf16.msra.mxu0 0
        %3014 = vmatprep.subr.bf16.mxu0 0
        %3015 = vmatpush1.bf16.msra.mxu0 0
        %3016 = vmatprep.subr.bf16.mxu0 0
        %3017 = vmatpush1.bf16.msra.mxu0 0
        %3018 = vmatprep.subr.bf16.mxu0 0
        %3019 = vmatpush1.bf16.msra.mxu0 0
        %3020 = vmatprep.mubr.bf16.mxu0 0
        %3021 = vmatmul.mubr.bf16.gmra.mrb[0].mxu0 %v2986
        %v3022 = vpop.f32.mrb[0].mxu0
        %v3023 = vadd.f32 %v2983, %v3022
        %v3024 = vpop.f32.mrb[0].mxu0
        %v3025 = vpop.f32.mrb[0].mxu0
        %v3026 = vpop.f32.mrb[0].mxu0
        %3027 = vdwg.mxu0
        %v3028 = vpack.c.bf16 %v2360, %v2360
        %v3029 = vld [vmem:[%s63] sm:$0xff]
        %v3030 = vld [vmem:[%s63 + $0x8] sm:$0xff]
        %v3031 = vld [vmem:[%s63 + $0x10] sm:$0xff]
        %v3032 = vld [vmem:[%s63 + $0x18] sm:$0xff]
        %v3033 = vpack.c.bf16 %v3030, %v3029
        %v3034 = vpack.c.bf16 %v3032, %v3031
        %v3035 = vld [vmem:[#allocation28] sm:$0x1]
        %v3037 = vlaneseq
        %v3038 = vshrl.u32 %v3037, 7
        %v3039 = vsub.s32 0, %v3038
        %v3040 = vrot.slane %v3035, %v3039
        %v3043 = vsel %vm2376, %v3028, 0
        %3045 = vmatprep.subr.bf16.mxu0 0
        %3046 = vmatpush1.bf16.msra.mxu0 %v3033
        %3047 = vmatprep.subr.bf16.mxu0 0
        %3048 = vmatpush1.bf16.msra.mxu0 %v3034
        %3049 = vmatprep.subr.bf16.mxu0 0
        %3050 = vmatpush1.bf16.msra.mxu0 0
        %3051 = vmatprep.subr.bf16.mxu0 0
        %3052 = vmatpush1.bf16.msra.mxu0 0
        %3053 = vmatprep.subr.bf16.mxu0 0
        %3054 = vmatpush1.bf16.msra.mxu0 0
        %3055 = vmatprep.subr.bf16.mxu0 0
        %3056 = vmatpush1.bf16.msra.mxu0 0
        %3057 = vmatprep.subr.bf16.mxu0 0
        %3058 = vmatpush1.bf16.msra.mxu0 0
        %3059 = vmatprep.subr.bf16.mxu0 0
        %3060 = vmatpush1.bf16.msra.mxu0 0
        %3061 = vmatprep.subr.bf16.mxu0 0
        %3062 = vmatpush1.bf16.msra.mxu0 0
        %3063 = vmatprep.subr.bf16.mxu0 0
        %3064 = vmatpush1.bf16.msra.mxu0 0
        %3065 = vmatprep.subr.bf16.mxu0 0
        %3066 = vmatpush1.bf16.msra.mxu0 0
        %3067 = vmatprep.subr.bf16.mxu0 0
        %3068 = vmatpush1.bf16.msra.mxu0 0
        %3069 = vmatprep.subr.bf16.mxu0 0
        %3070 = vmatpush1.bf16.msra.mxu0 0
        %3071 = vmatprep.subr.bf16.mxu0 0
        %3072 = vmatpush1.bf16.msra.mxu0 0
        %3073 = vmatprep.subr.bf16.mxu0 0
        %3074 = vmatpush1.bf16.msra.mxu0 0
        %3075 = vmatprep.subr.bf16.mxu0 0
        %3076 = vmatpush1.bf16.msra.mxu0 0
        %3077 = vmatprep.mubr.bf16.mxu0 0
        %3078 = vmatmul.mubr.bf16.gmra.mrb[0].mxu0 %v3043
        %v3079 = vpop.f32.mrb[0].mxu0
        %v3080 = vadd.f32 %v3040, %v3079
        %v3081 = vpop.f32.mrb[0].mxu0
        %v3082 = vpop.f32.mrb[0].mxu0
        %v3083 = vpop.f32.mrb[0].mxu0
        %3084 = vdwg.mxu0
        %v3085 = vpack.c.bf16 %v3023, %v3023
        %v3086 = vpack.c.bf16 %v3080, %v3080
        %v3088 = vsel %vm2424, %v3085, 0
        %v3091 = vsel %vm2424, %v3086, 0
        %3093 = vmatprep.subr.bf16.mxu0 0
        %3094 = vmatpush1.bf16.xpose.msra.mxu0 %v3091
        %3095 = vmatprep.subr.bf16.mxu0 0
        %3096 = vmatpush1.bf16.xpose.msra.mxu0 0
        %3097 = vmatprep.subr.bf16.mxu0 0
        %3098 = vmatpush1.bf16.xpose.msra.mxu0 0
        %3099 = vmatprep.subr.bf16.mxu0 0
        %3100 = vmatpush1.bf16.xpose.msra.mxu0 0
        %3101 = vmatprep.subr.bf16.mxu0 0
        %3102 = vmatpush1.bf16.xpose.msra.mxu0 0
        %3103 = vmatprep.subr.bf16.mxu0 0
        %3104 = vmatpush1.bf16.xpose.msra.mxu0 0
        %3105 = vmatprep.subr.bf16.mxu0 0
        %3106 = vmatpush1.bf16.xpose.msra.mxu0 0
        %3107 = vmatprep.subr.bf16.mxu0 0
        %3108 = vmatpush1.bf16.xpose.msra.mxu0 0
        %3109 = vmatprep.subr.bf16.mxu0 0
        %3110 = vmatpush1.bf16.xpose.msra.mxu0 0
        %3111 = vmatprep.subr.bf16.mxu0 0
        %3112 = vmatpush1.bf16.xpose.msra.mxu0 0
        %3113 = vmatprep.subr.bf16.mxu0 0
        %3114 = vmatpush1.bf16.xpose.msra.mxu0 0
        %3115 = vmatprep.subr.bf16.mxu0 0
        %3116 = vmatpush1.bf16.xpose.msra.mxu0 0
        %3117 = vmatprep.subr.bf16.mxu0 0
        %3118 = vmatpush1.bf16.xpose.msra.mxu0 0
        %3119 = vmatprep.subr.bf16.mxu0 0
        %3120 = vmatpush1.bf16.xpose.msra.mxu0 0
        %3121 = vmatprep.subr.bf16.mxu0 0
        %3122 = vmatpush1.bf16.xpose.msra.mxu0 0
        %3123 = vmatprep.subr.bf16.mxu0 0
        %3124 = vmatpush1.bf16.xpose.msra.mxu0 0
        %3125 = vmatprep.mubr.bf16.mxu0 0
        %3126 = vmatmul.mubr.bf16.gmra.mrb[0].mxu0 %v3088
        %v3127 = vpop.f32.mrb[0].mxu0
        %v3128 = vadd.f32 0.0, %v3127
        %v3129 = vpop.f32.mrb[0].mxu0
        %v3130 = vpop.f32.mrb[0].mxu0
        %v3131 = vpop.f32.mrb[0].mxu0
        %3132 = vdwg.mxu0
        %v3133 = vmul.f32 %v3128, 0.35355338
        %v3134 = vsel %vm2424, %v3133, -inf
        %3135 = vmax.xlane.f32.xlu0 %v3134
        %v3136 = vpop.xlane.xlu0 %3135
        %v3137 = vsub.f32 %v3133, %v3136
        %v3138 = vmul.f32 %v3137, 1.442695
        %v3139 = vpow.pop %v3138
        %v3140 = vsel %vm2424, %v3139, 0.0
        %3141 = vadd.xlane.f32.xlu0 %v3140
        %v3142 = vpop.xlane.xlu0 %3141
        %v3143 = vrcp.pop %v3142
        %v3144 = vmul.f32 %v3139, %v3143
        %v3145 = vpack.c.bf16 %v3144, %v3144
        %3147 = vrot.lane.b32.xlu0 %v3086, 96
        %v3148 = vpop.permute.xlu0 %3147
        %v3150 = vsel %vm2424, %v3145, 0
        %v3153 = vsel %vm2489, %v3148, 0
        %3155 = vmatprep.subr.bf16.mxu0 0
        %3156 = vmatpush1.bf16.msra.mxu0 %v3153
        %3157 = vmatprep.subr.bf16.mxu0 0
        %3158 = vmatpush1.bf16.msra.mxu0 0
        %3159 = vmatprep.subr.bf16.mxu0 0
        %3160 = vmatpush1.bf16.msra.mxu0 0
        %3161 = vmatprep.subr.bf16.mxu0 0
        %3162 = vmatpush1.bf16.msra.mxu0 0
        %3163 = vmatprep.subr.bf16.mxu0 0
        %3164 = vmatpush1.bf16.msra.mxu0 0
        %3165 = vmatprep.subr.bf16.mxu0 0
        %3166 = vmatpush1.bf16.msra.mxu0 0
        %3167 = vmatprep.subr.bf16.mxu0 0
        %3168 = vmatpush1.bf16.msra.mxu0 0
        %3169 = vmatprep.subr.bf16.mxu0 0
        %3170 = vmatpush1.bf16.msra.mxu0 0
        %3171 = vmatprep.subr.bf16.mxu0 0
        %3172 = vmatpush1.bf16.msra.mxu0 0
        %3173 = vmatprep.subr.bf16.mxu0 0
        %3174 = vmatpush1.bf16.msra.mxu0 0
        %3175 = vmatprep.subr.bf16.mxu0 0
        %3176 = vmatpush1.bf16.msra.mxu0 0
        %3177 = vmatprep.subr.bf16.mxu0 0
        %3178 = vmatpush1.bf16.msra.mxu0 0
        %3179 = vmatprep.subr.bf16.mxu0 0
        %3180 = vmatpush1.bf16.msra.mxu0 0
        %3181 = vmatprep.subr.bf16.mxu0 0
        %3182 = vmatpush1.bf16.msra.mxu0 0
        %3183 = vmatprep.subr.bf16.mxu0 0
        %3184 = vmatpush1.bf16.msra.mxu0 0
        %3185 = vmatprep.subr.bf16.mxu0 0
        %3186 = vmatpush1.bf16.msra.mxu0 0
        %3187 = vmatprep.mubr.bf16.mxu0 0
        %3188 = vmatmul.mubr.bf16.gmra.mrb[0].mxu0 %v3150
        %v3189 = vpop.f32.mrb[0].mxu0
        %v3190 = vadd.f32 0.0, %v3189
        %v3191 = vpop.f32.mrb[0].mxu0
        %v3192 = vpop.f32.mrb[0].mxu0
        %v3193 = vpop.f32.mrb[0].mxu0
        %3194 = vdwg.mxu0
        %3196 = vrot.lane.b32.xlu0 %v3085, 120
        %v3197 = vpop.permute.xlu0 %3196
        %3198 = vrot.lane.b32.xlu0 %v3086, 120
        %v3199 = vpop.permute.xlu0 %3198
        %v3201 = vsel %vm2424, %v3197, 0
        %v3204 = vsel %vm2424, %v3199, 0
        %3206 = vmatprep.subr.bf16.mxu0 0
        %3207 = vmatpush1.bf16.xpose.msra.mxu0 %v3204
        %3208 = vmatprep.subr.bf16.mxu0 0
        %3209 = vmatpush1.bf16.xpose.msra.mxu0 0
        %3210 = vmatprep.subr.bf16.mxu0 0
        %3211 = vmatpush1.bf16.xpose.msra.mxu0 0
        %3212 = vmatprep.subr.bf16.mxu0 0
        %3213 = vmatpush1.bf16.xpose.msra.mxu0 0
        %3214 = vmatprep.subr.bf16.mxu0 0
        %3215 = vmatpush1.bf16.xpose.msra.mxu0 0
        %3216 = vmatprep.subr.bf16.mxu0 0
        %3217 = vmatpush1.bf16.xpose.msra.mxu0 0
        %3218 = vmatprep.subr.bf16.mxu0 0
        %3219 = vmatpush1.bf16.xpose.msra.mxu0 0
        %3220 = vmatprep.subr.bf16.mxu0 0
        %3221 = vmatpush1.bf16.xpose.msra.mxu0 0
        %3222 = vmatprep.subr.bf16.mxu0 0
        %3223 = vmatpush1.bf16.xpose.msra.mxu0 0
        %3224 = vmatprep.subr.bf16.mxu0 0
        %3225 = vmatpush1.bf16.xpose.msra.mxu0 0
        %3226 = vmatprep.subr.bf16.mxu0 0
        %3227 = vmatpush1.bf16.xpose.msra.mxu0 0
        %3228 = vmatprep.subr.bf16.mxu0 0
        %3229 = vmatpush1.bf16.xpose.msra.mxu0 0
        %3230 = vmatprep.subr.bf16.mxu0 0
        %3231 = vmatpush1.bf16.xpose.msra.mxu0 0
        %3232 = vmatprep.subr.bf16.mxu0 0
        %3233 = vmatpush1.bf16.xpose.msra.mxu0 0
        %3234 = vmatprep.subr.bf16.mxu0 0
        %3235 = vmatpush1.bf16.xpose.msra.mxu0 0
        %3236 = vmatprep.subr.bf16.mxu0 0
        %3237 = vmatpush1.bf16.xpose.msra.mxu0 0
        %3238 = vmatprep.mubr.bf16.mxu0 0
        %3239 = vmatmul.mubr.bf16.gmra.mrb[0].mxu0 %v3201
        %v3240 = vpop.f32.mrb[0].mxu0
        %v3241 = vadd.f32 0.0, %v3240
        %v3242 = vpop.f32.mrb[0].mxu0
        %v3243 = vpop.f32.mrb[0].mxu0
        %v3244 = vpop.f32.mrb[0].mxu0
        %3245 = vdwg.mxu0
        %v3246 = vmul.f32 %v3241, 0.35355338
        %v3247 = vsel %vm2424, %v3246, -inf
        %3248 = vmax.xlane.f32.xlu0 %v3247
        %v3249 = vpop.xlane.xlu0 %3248
        %v3250 = vsub.f32 %v3246, %v3249
        %v3251 = vmul.f32 %v3250, 1.442695
        %v3252 = vpow.pop %v3251
        %v3253 = vsel %vm2424, %v3252, 0.0
        %3254 = vadd.xlane.f32.xlu0 %v3253
        %v3255 = vpop.xlane.xlu0 %3254
        %v3256 = vrcp.pop %v3255
        %v3257 = vmul.f32 %v3252, %v3256
        %v3258 = vpack.c.bf16 %v3257, %v3257
        %3259 = vrot.lane.b32.xlu0 %v3086, 88
        %v3260 = vpop.permute.xlu0 %3259
        %v3262 = vsel %vm2424, %v3258, 0
        %v3265 = vsel %vm2489, %v3260, 0
        %3267 = vmatprep.subr.bf16.mxu0 0
        %3268 = vmatpush1.bf16.msra.mxu0 %v3265
        %3269 = vmatprep.subr.bf16.mxu0 0
        %3270 = vmatpush1.bf16.msra.mxu0 0
        %3271 = vmatprep.subr.bf16.mxu0 0
        %3272 = vmatpush1.bf16.msra.mxu0 0
        %3273 = vmatprep.subr.bf16.mxu0 0
        %3274 = vmatpush1.bf16.msra.mxu0 0
        %3275 = vmatprep.subr.bf16.mxu0 0
        %3276 = vmatpush1.bf16.msra.mxu0 0
        %3277 = vmatprep.subr.bf16.mxu0 0
        %3278 = vmatpush1.bf16.msra.mxu0 0
        %3279 = vmatprep.subr.bf16.mxu0 0
        %3280 = vmatpush1.bf16.msra.mxu0 0
        %3281 = vmatprep.subr.bf16.mxu0 0
        %3282 = vmatpush1.bf16.msra.mxu0 0
        %3283 = vmatprep.subr.bf16.mxu0 0
        %3284 = vmatpush1.bf16.msra.mxu0 0
        %3285 = vmatprep.subr.bf16.mxu0 0
        %3286 = vmatpush1.bf16.msra.mxu0 0
        %3287 = vmatprep.subr.bf16.mxu0 0
        %3288 = vmatpush1.bf16.msra.mxu0 0
        %3289 = vmatprep.subr.bf16.mxu0 0
        %3290 = vmatpush1.bf16.msra.mxu0 0
        %3291 = vmatprep.subr.bf16.mxu0 0
        %3292 = vmatpush1.bf16.msra.mxu0 0
        %3293 = vmatprep.subr.bf16.mxu0 0
        %3294 = vmatpush1.bf16.msra.mxu0 0
        %3295 = vmatprep.subr.bf16.mxu0 0
        %3296 = vmatpush1.bf16.msra.mxu0 0
        %3297 = vmatprep.subr.bf16.mxu0 0
        %3298 = vmatpush1.bf16.msra.mxu0 0
        %3299 = vmatprep.mubr.bf16.mxu0 0
        %3300 = vmatmul.mubr.bf16.gmra.mrb[0].mxu0 %v3262
        %v3301 = vpop.f32.mrb[0].mxu0
        %v3302 = vadd.f32 0.0, %v3301
        %v3303 = vpop.f32.mrb[0].mxu0
        %v3304 = vpop.f32.mrb[0].mxu0
        %v3305 = vpop.f32.mrb[0].mxu0
        %3306 = vdwg.mxu0
        %3307 = vrot.lane.b32.xlu0 %v3085, 112
        %v3308 = vpop.permute.xlu0 %3307
        %3309 = vrot.lane.b32.xlu0 %v3086, 112
        %v3310 = vpop.permute.xlu0 %3309
        %v3312 = vsel %vm2424, %v3308, 0
        %v3315 = vsel %vm2424, %v3310, 0
        %3317 = vmatprep.subr.bf16.mxu0 0
        %3318 = vmatpush1.bf16.xpose.msra.mxu0 %v3315
        %3319 = vmatprep.subr.bf16.mxu0 0
        %3320 = vmatpush1.bf16.xpose.msra.mxu0 0
        %3321 = vmatprep.subr.bf16.mxu0 0
        %3322 = vmatpush1.bf16.xpose.msra.mxu0 0
        %3323 = vmatprep.subr.bf16.mxu0 0
        %3324 = vmatpush1.bf16.xpose.msra.mxu0 0
        %3325 = vmatprep.subr.bf16.mxu0 0
        %3326 = vmatpush1.bf16.xpose.msra.mxu0 0
        %3327 = vmatprep.subr.bf16.mxu0 0
        %3328 = vmatpush1.bf16.xpose.msra.mxu0 0
        %3329 = vmatprep.subr.bf16.mxu0 0
        %3330 = vmatpush1.bf16.xpose.msra.mxu0 0
        %3331 = vmatprep.subr.bf16.mxu0 0
        %3332 = vmatpush1.bf16.xpose.msra.mxu0 0
        %3333 = vmatprep.subr.bf16.mxu0 0
        %3334 = vmatpush1.bf16.xpose.msra.mxu0 0
        %3335 = vmatprep.subr.bf16.mxu0 0
        %3336 = vmatpush1.bf16.xpose.msra.mxu0 0
        %3337 = vmatprep.subr.bf16.mxu0 0
        %3338 = vmatpush1.bf16.xpose.msra.mxu0 0
        %3339 = vmatprep.subr.bf16.mxu0 0
        %3340 = vmatpush1.bf16.xpose.msra.mxu0 0
        %3341 = vmatprep.subr.bf16.mxu0 0
        %3342 = vmatpush1.bf16.xpose.msra.mxu0 0
        %3343 = vmatprep.subr.bf16.mxu0 0
        %3344 = vmatpush1.bf16.xpose.msra.mxu0 0
        %3345 = vmatprep.subr.bf16.mxu0 0
        %3346 = vmatpush1.bf16.xpose.msra.mxu0 0
        %3347 = vmatprep.subr.bf16.mxu0 0
        %3348 = vmatpush1.bf16.xpose.msra.mxu0 0
        %3349 = vmatprep.mubr.bf16.mxu0 0
        %3350 = vmatmul.mubr.bf16.gmra.mrb[0].mxu0 %v3312
        %v3351 = vpop.f32.mrb[0].mxu0
        %v3352 = vadd.f32 0.0, %v3351
        %v3353 = vpop.f32.mrb[0].mxu0
        %v3354 = vpop.f32.mrb[0].mxu0
        %v3355 = vpop.f32.mrb[0].mxu0
        %3356 = vdwg.mxu0
        %v3357 = vmul.f32 %v3352, 0.35355338
        %v3358 = vsel %vm2424, %v3357, -inf
        %3359 = vmax.xlane.f32.xlu0 %v3358
        %v3360 = vpop.xlane.xlu0 %3359
        %v3361 = vsub.f32 %v3357, %v3360
        %v3362 = vmul.f32 %v3361, 1.442695
        %v3363 = vpow.pop %v3362
        %v3364 = vsel %vm2424, %v3363, 0.0
        %3365 = vadd.xlane.f32.xlu0 %v3364
        %v3366 = vpop.xlane.xlu0 %3365
        %v3367 = vrcp.pop %v3366
        %v3368 = vmul.f32 %v3363, %v3367
        %v3369 = vpack.c.bf16 %v3368, %v3368
        %3370 = vrot.lane.b32.xlu0 %v3086, 80
        %v3371 = vpop.permute.xlu0 %3370
        %v3373 = vsel %vm2424, %v3369, 0
        %v3376 = vsel %vm2489, %v3371, 0
        %3378 = vmatprep.subr.bf16.mxu0 0
        %3379 = vmatpush1.bf16.msra.mxu0 %v3376
        %3380 = vmatprep.subr.bf16.mxu0 0
        %3381 = vmatpush1.bf16.msra.mxu0 0
        %3382 = vmatprep.subr.bf16.mxu0 0
        %3383 = vmatpush1.bf16.msra.mxu0 0
        %3384 = vmatprep.subr.bf16.mxu0 0
        %3385 = vmatpush1.bf16.msra.mxu0 0
        %3386 = vmatprep.subr.bf16.mxu0 0
        %3387 = vmatpush1.bf16.msra.mxu0 0
        %3388 = vmatprep.subr.bf16.mxu0 0
        %3389 = vmatpush1.bf16.msra.mxu0 0
        %3390 = vmatprep.subr.bf16.mxu0 0
        %3391 = vmatpush1.bf16.msra.mxu0 0
        %3392 = vmatprep.subr.bf16.mxu0 0
        %3393 = vmatpush1.bf16.msra.mxu0 0
        %3394 = vmatprep.subr.bf16.mxu0 0
        %3395 = vmatpush1.bf16.msra.mxu0 0
        %3396 = vmatprep.subr.bf16.mxu0 0
        %3397 = vmatpush1.bf16.msra.mxu0 0
        %3398 = vmatprep.subr.bf16.mxu0 0
        %3399 = vmatpush1.bf16.msra.mxu0 0
        %3400 = vmatprep.subr.bf16.mxu0 0
        %3401 = vmatpush1.bf16.msra.mxu0 0
        %3402 = vmatprep.subr.bf16.mxu0 0
        %3403 = vmatpush1.bf16.msra.mxu0 0
        %3404 = vmatprep.subr.bf16.mxu0 0
        %3405 = vmatpush1.bf16.msra.mxu0 0
        %3406 = vmatprep.subr.bf16.mxu0 0
        %3407 = vmatpush1.bf16.msra.mxu0 0
        %3408 = vmatprep.subr.bf16.mxu0 0
        %3409 = vmatpush1.bf16.msra.mxu0 0
        %3410 = vmatprep.mubr.bf16.mxu0 0
        %3411 = vmatmul.mubr.bf16.gmra.mrb[0].mxu0 %v3373
        %v3412 = vpop.f32.mrb[0].mxu0
        %v3413 = vadd.f32 0.0, %v3412
        %v3414 = vpop.f32.mrb[0].mxu0
        %v3415 = vpop.f32.mrb[0].mxu0
        %v3416 = vpop.f32.mrb[0].mxu0
        %3417 = vdwg.mxu0
        %3418 = vrot.lane.b32.xlu0 %v3085, 104
        %v3419 = vpop.permute.xlu0 %3418
        %3420 = vrot.lane.b32.xlu0 %v3086, 104
        %v3421 = vpop.permute.xlu0 %3420
        %v3423 = vsel %vm2424, %v3419, 0
        %v3426 = vsel %vm2424, %v3421, 0
        %3428 = vmatprep.subr.bf16.mxu0 0
        %3429 = vmatpush1.bf16.xpose.msra.mxu0 %v3426
        %3430 = vmatprep.subr.bf16.mxu0 0
        %3431 = vmatpush1.bf16.xpose.msra.mxu0 0
        %3432 = vmatprep.subr.bf16.mxu0 0
        %3433 = vmatpush1.bf16.xpose.msra.mxu0 0
        %3434 = vmatprep.subr.bf16.mxu0 0
        %3435 = vmatpush1.bf16.xpose.msra.mxu0 0
        %3436 = vmatprep.subr.bf16.mxu0 0
        %3437 = vmatpush1.bf16.xpose.msra.mxu0 0
        %3438 = vmatprep.subr.bf16.mxu0 0
        %3439 = vmatpush1.bf16.xpose.msra.mxu0 0
        %3440 = vmatprep.subr.bf16.mxu0 0
        %3441 = vmatpush1.bf16.xpose.msra.mxu0 0
        %3442 = vmatprep.subr.bf16.mxu0 0
        %3443 = vmatpush1.bf16.xpose.msra.mxu0 0
        %3444 = vmatprep.subr.bf16.mxu0 0
        %3445 = vmatpush1.bf16.xpose.msra.mxu0 0
        %3446 = vmatprep.subr.bf16.mxu0 0
        %3447 = vmatpush1.bf16.xpose.msra.mxu0 0
        %3448 = vmatprep.subr.bf16.mxu0 0
        %3449 = vmatpush1.bf16.xpose.msra.mxu0 0
        %3450 = vmatprep.subr.bf16.mxu0 0
        %3451 = vmatpush1.bf16.xpose.msra.mxu0 0
        %3452 = vmatprep.subr.bf16.mxu0 0
        %3453 = vmatpush1.bf16.xpose.msra.mxu0 0
        %3454 = vmatprep.subr.bf16.mxu0 0
        %3455 = vmatpush1.bf16.xpose.msra.mxu0 0
        %3456 = vmatprep.subr.bf16.mxu0 0
        %3457 = vmatpush1.bf16.xpose.msra.mxu0 0
        %3458 = vmatprep.subr.bf16.mxu0 0
        %3459 = vmatpush1.bf16.xpose.msra.mxu0 0
        %3460 = vmatprep.mubr.bf16.mxu0 0
        %3461 = vmatmul.mubr.bf16.gmra.mrb[0].mxu0 %v3423
        %v3462 = vpop.f32.mrb[0].mxu0
        %v3463 = vadd.f32 0.0, %v3462
        %v3464 = vpop.f32.mrb[0].mxu0
        %v3465 = vpop.f32.mrb[0].mxu0
        %v3466 = vpop.f32.mrb[0].mxu0
        %3467 = vdwg.mxu0
        %v3468 = vmul.f32 %v3463, 0.35355338
        %v3469 = vsel %vm2424, %v3468, -inf
        %3470 = vmax.xlane.f32.xlu0 %v3469
        %v3471 = vpop.xlane.xlu0 %3470
        %v3472 = vsub.f32 %v3468, %v3471
        %v3473 = vmul.f32 %v3472, 1.442695
        %v3474 = vpow.pop %v3473
        %v3475 = vsel %vm2424, %v3474, 0.0
        %3476 = vadd.xlane.f32.xlu0 %v3475
        %v3477 = vpop.xlane.xlu0 %3476
        %v3478 = vrcp.pop %v3477
        %v3479 = vmul.f32 %v3474, %v3478
        %v3480 = vpack.c.bf16 %v3479, %v3479
        %3481 = vrot.lane.b32.xlu0 %v3086, 72
        %v3482 = vpop.permute.xlu0 %3481
        %v3484 = vsel %vm2424, %v3480, 0
        %v3487 = vsel %vm2489, %v3482, 0
        %3489 = vmatprep.subr.bf16.mxu0 0
        %3490 = vmatpush1.bf16.msra.mxu0 %v3487
        %3491 = vmatprep.subr.bf16.mxu0 0
        %3492 = vmatpush1.bf16.msra.mxu0 0
        %3493 = vmatprep.subr.bf16.mxu0 0
        %3494 = vmatpush1.bf16.msra.mxu0 0
        %3495 = vmatprep.subr.bf16.mxu0 0
        %3496 = vmatpush1.bf16.msra.mxu0 0
        %3497 = vmatprep.subr.bf16.mxu0 0
        %3498 = vmatpush1.bf16.msra.mxu0 0
        %3499 = vmatprep.subr.bf16.mxu0 0
        %3500 = vmatpush1.bf16.msra.mxu0 0
        %3501 = vmatprep.subr.bf16.mxu0 0
        %3502 = vmatpush1.bf16.msra.mxu0 0
        %3503 = vmatprep.subr.bf16.mxu0 0
        %3504 = vmatpush1.bf16.msra.mxu0 0
        %3505 = vmatprep.subr.bf16.mxu0 0
        %3506 = vmatpush1.bf16.msra.mxu0 0
        %3507 = vmatprep.subr.bf16.mxu0 0
        %3508 = vmatpush1.bf16.msra.mxu0 0
        %3509 = vmatprep.subr.bf16.mxu0 0
        %3510 = vmatpush1.bf16.msra.mxu0 0
        %3511 = vmatprep.subr.bf16.mxu0 0
        %3512 = vmatpush1.bf16.msra.mxu0 0
        %3513 = vmatprep.subr.bf16.mxu0 0
        %3514 = vmatpush1.bf16.msra.mxu0 0
        %3515 = vmatprep.subr.bf16.mxu0 0
        %3516 = vmatpush1.bf16.msra.mxu0 0
        %3517 = vmatprep.subr.bf16.mxu0 0
        %3518 = vmatpush1.bf16.msra.mxu0 0
        %3519 = vmatprep.subr.bf16.mxu0 0
        %3520 = vmatpush1.bf16.msra.mxu0 0
        %3521 = vmatprep.mubr.bf16.mxu0 0
        %3522 = vmatmul.mubr.bf16.gmra.mrb[0].mxu0 %v3484
        %v3523 = vpop.f32.mrb[0].mxu0
        %v3524 = vadd.f32 0.0, %v3523
        %v3525 = vpop.f32.mrb[0].mxu0
        %v3526 = vpop.f32.mrb[0].mxu0
        %v3527 = vpop.f32.mrb[0].mxu0
        %3528 = vdwg.mxu0
        %3530 = vrot.lane.b32.xlu0 %v3302, 8
        %v3531 = vpop.permute.xlu0 %3530
        %3534 = vrot.lane.b32.xlu0 %v3413, 16
        %v3535 = vpop.permute.xlu0 %3534
        %3538 = vrot.lane.b32.xlu0 %v3524, 24
        %v3539 = vpop.permute.xlu0 %3538
        %v3541 = vsel %vm2424, %v3190, %v3531
        %v3542 = vsel %vm2879, %v3541, %v3535
        %v3543 = vsel %vm2881, %v3542, %v3539
        %v3544 = vpack.c.bf16 %v3543, %v3543
        %v3545 = vld [vmem:[%s65] sm:$0xff]
        %v3546 = vld [vmem:[%s65 + $0x8] sm:$0xff]
        %v3547 = vld [vmem:[%s65 + $0x10] sm:$0xff]
        %v3548 = vld [vmem:[%s65 + $0x18] sm:$0xff]
        %v3549 = vpack.c.bf16 %v3546, %v3545
        %v3550 = vpack.c.bf16 %v3548, %v3547
        %v3551 = vld [vmem:[#allocation30] sm:$0x1]
        %v3553 = vlaneseq
        %v3554 = vshrl.u32 %v3553, 7
        %v3555 = vsub.s32 0, %v3554
        %v3556 = vrot.slane %v3551, %v3555
        %v3559 = vsel %vm2376, %v3544, 0
        %3561 = vmatprep.subr.bf16.mxu0 0
        %3562 = vmatpush1.bf16.msra.mxu0 %v3549
        %3563 = vmatprep.subr.bf16.mxu0 0
        %3564 = vmatpush1.bf16.msra.mxu0 %v3550
        %3565 = vmatprep.subr.bf16.mxu0 0
        %3566 = vmatpush1.bf16.msra.mxu0 0
        %3567 = vmatprep.subr.bf16.mxu0 0
        %3568 = vmatpush1.bf16.msra.mxu0 0
        %3569 = vmatprep.subr.bf16.mxu0 0
        %3570 = vmatpush1.bf16.msra.mxu0 0
        %3571 = vmatprep.subr.bf16.mxu0 0
        %3572 = vmatpush1.bf16.msra.mxu0 0
        %3573 = vmatprep.subr.bf16.mxu0 0
        %3574 = vmatpush1.bf16.msra.mxu0 0
        %3575 = vmatprep.subr.bf16.mxu0 0
        %3576 = vmatpush1.bf16.msra.mxu0 0
        %3577 = vmatprep.subr.bf16.mxu0 0
        %3578 = vmatpush1.bf16.msra.mxu0 0
        %3579 = vmatprep.subr.bf16.mxu0 0
        %3580 = vmatpush1.bf16.msra.mxu0 0
        %3581 = vmatprep.subr.bf16.mxu0 0
        %3582 = vmatpush1.bf16.msra.mxu0 0
        %3583 = vmatprep.subr.bf16.mxu0 0
        %3584 = vmatpush1.bf16.msra.mxu0 0
        %3585 = vmatprep.subr.bf16.mxu0 0
        %3586 = vmatpush1.bf16.msra.mxu0 0
        %3587 = vmatprep.subr.bf16.mxu0 0
        %3588 = vmatpush1.bf16.msra.mxu0 0
        %3589 = vmatprep.subr.bf16.mxu0 0
        %3590 = vmatpush1.bf16.msra.mxu0 0
        %3591 = vmatprep.subr.bf16.mxu0 0
        %3592 = vmatpush1.bf16.msra.mxu0 0
        %3593 = vmatprep.mubr.bf16.mxu0 0
        %3594 = vmatmul.mubr.bf16.gmra.mrb[0].mxu0 %v3559
        %v3595 = vpop.f32.mrb[0].mxu0
        %v3596 = vadd.f32 %v3556, %v3595
        %v3597 = vpop.f32.mrb[0].mxu0
        %v3598 = vpop.f32.mrb[0].mxu0
        %v3599 = vpop.f32.mrb[0].mxu0
        %3600 = vdwg.mxu0
        %v3601 = vadd.f32 %v2970, %v3596
        %v3602 = vsel %vm2376, %v3601, 0.0
        %3603 = vadd.xlane.f32.xlu0 %v3602
        %v3604 = vpop.xlane.xlu0 %3603
        %v3605 = vmul.f32 %v3604, %v2944
        %v3606 = vsub.f32 %v3601, %v3605
        %v3607 = vmul.f32 %v3606, %v3606
        %v3608 = vsel %vm2376, %v3607, 0.0
        %3609 = vadd.xlane.f32.xlu0 %v3608
        %v3610 = vpop.xlane.xlu0 %3609
        %v3611 = vmul.f32 %v3610, %v2944
        %v3612 = vadd.f32 %v3611, 1e-05
        %v3613 = vrsqrt.pop %v3612
        %v3614 = vmul.f32 %v3606, %v3613
        %v3615 = vld [vmem:[%s75] sm:$0x1]
        %v3617 = vlaneseq
        %v3618 = vshrl.u32 %v3617, 7
        %v3619 = vsub.s32 0, %v3618
        %v3620 = vrot.slane %v3615, %v3619
        %v3622 = vmul.f32 %v3614, %v3620
        %v3623 = vld [vmem:[%s73] sm:$0x1]
        %v3625 = vlaneseq
        %v3626 = vshrl.u32 %v3625, 7
        %v3627 = vsub.s32 0, %v3626
        %v3628 = vrot.slane %v3623, %v3627
        %v3630 = vadd.f32 %v3622, %v3628
        %v3631 = vpack.c.bf16 %v3630, %v3630
        %v3632 = vld [vmem:[%s89] sm:$0xff]
        %v3633 = vld [vmem:[%s89 + $0x8] sm:$0xff]
        %v3634 = vld [vmem:[%s89 + $0x10] sm:$0xff]
        %v3635 = vld [vmem:[%s89 + $0x18] sm:$0xff]
        %v3636 = vpack.c.bf16 %v3633, %v3632
        %v3637 = vpack.c.bf16 %v3635, %v3634
        %v3638 = vld [vmem:[#allocation25] sm:$0x1]
        %v3640 = vlaneseq
        %v3641 = vshrl.u32 %v3640, 7
        %v3642 = vsub.s32 0, %v3641
        %v3643 = vrot.slane %v3638, %v3642
        %v3646 = vsel %vm2376, %v3631, 0
        %3648 = vmatprep.subr.bf16.mxu0 0
        %3649 = vmatpush1.bf16.msra.mxu0 %v3636
        %3650 = vmatprep.subr.bf16.mxu0 0
        %3651 = vmatpush1.bf16.msra.mxu0 %v3637
        %3652 = vmatprep.subr.bf16.mxu0 0
        %3653 = vmatpush1.bf16.msra.mxu0 0
        %3654 = vmatprep.subr.bf16.mxu0 0
        %3655 = vmatpush1.bf16.msra.mxu0 0
        %3656 = vmatprep.subr.bf16.mxu0 0
        %3657 = vmatpush1.bf16.msra.mxu0 0
        %3658 = vmatprep.subr.bf16.mxu0 0
        %3659 = vmatpush1.bf16.msra.mxu0 0
        %3660 = vmatprep.subr.bf16.mxu0 0
        %3661 = vmatpush1.bf16.msra.mxu0 0
        %3662 = vmatprep.subr.bf16.mxu0 0
        %3663 = vmatpush1.bf16.msra.mxu0 0
        %3664 = vmatprep.subr.bf16.mxu0 0
        %3665 = vmatpush1.bf16.msra.mxu0 0
        %3666 = vmatprep.subr.bf16.mxu0 0
        %3667 = vmatpush1.bf16.msra.mxu0 0
        %3668 = vmatprep.subr.bf16.mxu0 0
        %3669 = vmatpush1.bf16.msra.mxu0 0
        %3670 = vmatprep.subr.bf16.mxu0 0
        %3671 = vmatpush1.bf16.msra.mxu0 0
        %3672 = vmatprep.subr.bf16.mxu0 0
        %3673 = vmatpush1.bf16.msra.mxu0 0
        %3674 = vmatprep.subr.bf16.mxu0 0
        %3675 = vmatpush1.bf16.msra.mxu0 0
        %3676 = vmatprep.subr.bf16.mxu0 0
        %3677 = vmatpush1.bf16.msra.mxu0 0
        %3678 = vmatprep.subr.bf16.mxu0 0
        %3679 = vmatpush1.bf16.msra.mxu0 0
        %3680 = vmatprep.mubr.bf16.mxu0 0
        %3681 = vmatmul.mubr.bf16.gmra.mrb[0].mxu0 %v3646
        %v3682 = vpop.f32.mrb[0].mxu0
        %v3683 = vadd.f32 %v3643, %v3682
        %v3684 = vpop.f32.mrb[0].mxu0
        %v3685 = vpop.f32.mrb[0].mxu0
        %v3686 = vpop.f32.mrb[0].mxu0
        %3687 = vdwg.mxu0
        %v3688 = vmax.f32 %v3683, 0.0
        %v3689 = vpack.c.bf16 %v3688, %v3688
        %v3690 = vld [vmem:[%s91] sm:$0xff]
        %v3691 = vld [vmem:[%s91 + $0x8] sm:$0xff]
        %v3692 = vld [vmem:[%s91 + $0x10] sm:$0xff]
        %v3693 = vld [vmem:[%s91 + $0x18] sm:$0xff]
        %v3694 = vld [vmem:[%s91 + $0x20] sm:$0xff]
        %v3695 = vld [vmem:[%s91 + $0x28] sm:$0xff]
        %v3696 = vld [vmem:[%s91 + $0x30] sm:$0xff]
        %v3697 = vld [vmem:[%s91 + $0x38] sm:$0xff]
        %v3698 = vpack.c.bf16 %v3691, %v3690
        %v3699 = vpack.c.bf16 %v3693, %v3692
        %v3700 = vpack.c.bf16 %v3695, %v3694
        %v3701 = vpack.c.bf16 %v3697, %v3696
        %v3702 = vld [vmem:[#allocation27] sm:$0x1]
        %v3704 = vlaneseq
        %v3705 = vshrl.u32 %v3704, 7
        %v3706 = vsub.s32 0, %v3705
        %v3707 = vrot.slane %v3702, %v3706
        %v3710 = vsel %vm2315, %v3689, 0
        %3712 = vmatprep.subr.bf16.mxu0 0
        %3713 = vmatpush1.bf16.msra.mxu0 %v3698
        %3714 = vmatprep.subr.bf16.mxu0 0
        %3715 = vmatpush1.bf16.msra.mxu0 %v3699
        %3716 = vmatprep.subr.bf16.mxu0 0
        %3717 = vmatpush1.bf16.msra.mxu0 %v3700
        %3718 = vmatprep.subr.bf16.mxu0 0
        %3719 = vmatpush1.bf16.msra.mxu0 %v3701
        %3720 = vmatprep.subr.bf16.mxu0 0
        %3721 = vmatpush1.bf16.msra.mxu0 0
        %3722 = vmatprep.subr.bf16.mxu0 0
        %3723 = vmatpush1.bf16.msra.mxu0 0
        %3724 = vmatprep.subr.bf16.mxu0 0
        %3725 = vmatpush1.bf16.msra.mxu0 0
        %3726 = vmatprep.subr.bf16.mxu0 0
        %3727 = vmatpush1.bf16.msra.mxu0 0
        %3728 = vmatprep.subr.bf16.mxu0 0
        %3729 = vmatpush1.bf16.msra.mxu0 0
        %3730 = vmatprep.subr.bf16.mxu0 0
        %3731 = vmatpush1.bf16.msra.mxu0 0
        %3732 = vmatprep.subr.bf16.mxu0 0
        %3733 = vmatpush1.bf16.msra.mxu0 0
        %3734 = vmatprep.subr.bf16.mxu0 0
        %3735 = vmatpush1.bf16.msra.mxu0 0
        %3736 = vmatprep.subr.bf16.mxu0 0
        %3737 = vmatpush1.bf16.msra.mxu0 0
        %3738 = vmatprep.subr.bf16.mxu0 0
        %3739 = vmatpush1.bf16.msra.mxu0 0
        %3740 = vmatprep.subr.bf16.mxu0 0
        %3741 = vmatpush1.bf16.msra.mxu0 0
        %3742 = vmatprep.subr.bf16.mxu0 0
        %3743 = vmatpush1.bf16.msra.mxu0 0
        %3744 = vmatprep.mubr.bf16.mxu0 0
        %3745 = vmatmul.mubr.bf16.gmra.mrb[0].mxu0 %v3710
        %v3746 = vpop.f32.mrb[0].mxu0
        %v3747 = vadd.f32 %v3707, %v3746
        %v3748 = vpop.f32.mrb[0].mxu0
        %v3749 = vpop.f32.mrb[0].mxu0
        %v3750 = vpop.f32.mrb[0].mxu0
        %3751 = vdwg.mxu0
        %v3752 = vadd.f32 %v3630, %v3747
        %v3753 = vsel %vm2376, %v3752, 0.0
        %3754 = vadd.xlane.f32.xlu0 %v3753
        %v3755 = vpop.xlane.xlu0 %3754
        %v3756 = vmul.f32 %v3755, %v2944
        %v3757 = vsub.f32 %v3752, %v3756
        %v3758 = vmul.f32 %v3757, %v3757
        %v3759 = vsel %vm2376, %v3758, 0.0
        %3760 = vadd.xlane.f32.xlu0 %v3759
        %v3761 = vpop.xlane.xlu0 %3760
        %v3762 = vmul.f32 %v3761, %v2944
        %v3763 = vadd.f32 %v3762, 1e-05
        %v3764 = vrsqrt.pop %v3763
        %v3765 = vmul.f32 %v3757, %v3764
        %v3766 = vld [vmem:[%s79] sm:$0x1]
        %v3768 = vlaneseq
        %v3769 = vshrl.u32 %v3768, 7
        %v3770 = vsub.s32 0, %v3769
        %v3771 = vrot.slane %v3766, %v3770
        %v3773 = vmul.f32 %v3765, %v3771
        %v3774 = vld [vmem:[%s77] sm:$0x1]
        %v3776 = vlaneseq
        %v3777 = vshrl.u32 %v3776, 7
        %v3778 = vsub.s32 0, %v3777
        %v3779 = vrot.slane %v3774, %v3778
        %v3781 = vadd.f32 %v3773, %v3779
        %v3782 = vsel %vm2376, %v3781, 0.0
        %3783 = vadd.xlane.f32.xlu0 %v3782
        %v3784 = vpop.xlane.xlu0 %3783
        %v3785 = vmul.f32 %v3784, %v2944
        %v3786 = vsub.f32 %v3781, %v3785
        %v3787 = vmul.f32 %v3786, %v3786
        %v3788 = vsel %vm2376, %v3787, 0.0
        %3789 = vadd.xlane.f32.xlu0 %v3788
        %v3790 = vpop.xlane.xlu0 %3789
        %v3791 = vmul.f32 %v3790, %v2944
        %v3792 = vadd.f32 %v3791, 1e-05
        %v3793 = vrsqrt.pop %v3792
        %v3794 = vmul.f32 %v3786, %v3793
        %v3795 = vld [vmem:[%s95] sm:$0x1]
        %v3797 = vlaneseq
        %v3798 = vshrl.u32 %v3797, 7
        %v3799 = vsub.s32 0, %v3798
        %v3800 = vrot.slane %v3795, %v3799
        %v3802 = vmul.f32 %v3794, %v3800
        %v3803 = vld [vmem:[%s93] sm:$0x1]
        %v3805 = vlaneseq
        %v3806 = vshrl.u32 %v3805, 7
        %v3807 = vsub.s32 0, %v3806
        %v3808 = vrot.slane %v3803, %v3807
        %v3810 = vadd.f32 %v3802, %v3808
        %v3811 = vpack.c.bf16 %v3810, %v3810
        %v3812 = vld [vmem:[%s115] sm:$0xff]
        %v3813 = vld [vmem:[%s115 + $0x8] sm:$0xff]
        %v3814 = vld [vmem:[%s115 + $0x10] sm:$0xff]
        %v3815 = vld [vmem:[%s115 + $0x18] sm:$0xff]
        %v3816 = vpack.c.bf16 %v3813, %v3812
        %v3817 = vpack.c.bf16 %v3815, %v3814
        %v3818 = vld [vmem:[%s111] sm:$0x1]
        %v3820 = vlaneseq
        %v3821 = vshrl.u32 %v3820, 7
        %v3822 = vsub.s32 0, %v3821
        %v3823 = vrot.slane %v3818, %v3822
        %v3826 = vsel %vm2376, %v3811, 0
        %3828 = vmatprep.subr.bf16.mxu0 0
        %3829 = vmatpush1.bf16.msra.mxu0 %v3816
        %3830 = vmatprep.subr.bf16.mxu0 0
        %3831 = vmatpush1.bf16.msra.mxu0 %v3817
        %3832 = vmatprep.subr.bf16.mxu0 0
        %3833 = vmatpush1.bf16.msra.mxu0 0
        %3834 = vmatprep.subr.bf16.mxu0 0
        %3835 = vmatpush1.bf16.msra.mxu0 0
        %3836 = vmatprep.subr.bf16.mxu0 0
        %3837 = vmatpush1.bf16.msra.mxu0 0
        %3838 = vmatprep.subr.bf16.mxu0 0
        %3839 = vmatpush1.bf16.msra.mxu0 0
        %3840 = vmatprep.subr.bf16.mxu0 0
        %3841 = vmatpush1.bf16.msra.mxu0 0
        %3842 = vmatprep.subr.bf16.mxu0 0
        %3843 = vmatpush1.bf16.msra.mxu0 0
        %3844 = vmatprep.subr.bf16.mxu0 0
        %3845 = vmatpush1.bf16.msra.mxu0 0
        %3846 = vmatprep.subr.bf16.mxu0 0
        %3847 = vmatpush1.bf16.msra.mxu0 0
        %3848 = vmatprep.subr.bf16.mxu0 0
        %3849 = vmatpush1.bf16.msra.mxu0 0
        %3850 = vmatprep.subr.bf16.mxu0 0
        %3851 = vmatpush1.bf16.msra.mxu0 0
        %3852 = vmatprep.subr.bf16.mxu0 0
        %3853 = vmatpush1.bf16.msra.mxu0 0
        %3854 = vmatprep.subr.bf16.mxu0 0
        %3855 = vmatpush1.bf16.msra.mxu0 0
        %3856 = vmatprep.subr.bf16.mxu0 0
        %3857 = vmatpush1.bf16.msra.mxu0 0
        %3858 = vmatprep.subr.bf16.mxu0 0
        %3859 = vmatpush1.bf16.msra.mxu0 0
        %3860 = vmatprep.mubr.bf16.mxu0 0
        %3861 = vmatmul.mubr.bf16.gmra.mrb[0].mxu0 %v3826
        %v3862 = vpop.f32.mrb[0].mxu0
        %v3863 = vadd.f32 %v3823, %v3862
        %v3864 = vpop.f32.mrb[0].mxu0
        %v3865 = vpop.f32.mrb[0].mxu0
        %v3866 = vpop.f32.mrb[0].mxu0
        %3867 = vdwg.mxu0
        %v3868 = vpack.c.bf16 %v3863, %v3863
        %3870 = vrot.lane.b32.xlu0 %v3868, 96
        %v3871 = vpop.permute.xlu0 %3870
        %v3873 = vsel %vm2424, %v3868, 0
        %v3876 = vsel %vm2424, %v3871, 0
        %3878 = vmatprep.subr.bf16.mxu0 0
        %3879 = vmatpush1.bf16.xpose.msra.mxu0 %v3876
        %3880 = vmatprep.subr.bf16.mxu0 0
        %3881 = vmatpush1.bf16.xpose.msra.mxu0 0
        %3882 = vmatprep.subr.bf16.mxu0 0
        %3883 = vmatpush1.bf16.xpose.msra.mxu0 0
        %3884 = vmatprep.subr.bf16.mxu0 0
        %3885 = vmatpush1.bf16.xpose.msra.mxu0 0
        %3886 = vmatprep.subr.bf16.mxu0 0
        %3887 = vmatpush1.bf16.xpose.msra.mxu0 0
        %3888 = vmatprep.subr.bf16.mxu0 0
        %3889 = vmatpush1.bf16.xpose.msra.mxu0 0
        %3890 = vmatprep.subr.bf16.mxu0 0
        %3891 = vmatpush1.bf16.xpose.msra.mxu0 0
        %3892 = vmatprep.subr.bf16.mxu0 0
        %3893 = vmatpush1.bf16.xpose.msra.mxu0 0
        %3894 = vmatprep.subr.bf16.mxu0 0
        %3895 = vmatpush1.bf16.xpose.msra.mxu0 0
        %3896 = vmatprep.subr.bf16.mxu0 0
        %3897 = vmatpush1.bf16.xpose.msra.mxu0 0
        %3898 = vmatprep.subr.bf16.mxu0 0
        %3899 = vmatpush1.bf16.xpose.msra.mxu0 0
        %3900 = vmatprep.subr.bf16.mxu0 0
        %3901 = vmatpush1.bf16.xpose.msra.mxu0 0
        %3902 = vmatprep.subr.bf16.mxu0 0
        %3903 = vmatpush1.bf16.xpose.msra.mxu0 0
        %3904 = vmatprep.subr.bf16.mxu0 0
        %3905 = vmatpush1.bf16.xpose.msra.mxu0 0
        %3906 = vmatprep.subr.bf16.mxu0 0
        %3907 = vmatpush1.bf16.xpose.msra.mxu0 0
        %3908 = vmatprep.subr.bf16.mxu0 0
        %3909 = vmatpush1.bf16.xpose.msra.mxu0 0
        %3910 = vmatprep.mubr.bf16.mxu0 0
        %3911 = vmatmul.mubr.bf16.gmra.mrb[0].mxu0 %v3873
        %v3912 = vpop.f32.mrb[0].mxu0
        %v3913 = vadd.f32 0.0, %v3912
        %v3914 = vpop.f32.mrb[0].mxu0
        %v3915 = vpop.f32.mrb[0].mxu0
        %v3916 = vpop.f32.mrb[0].mxu0
        %3917 = vdwg.mxu0
        %v3918 = vmul.f32 %v3913, 0.35355338
        %v3919 = vsel %vm2424, %v3918, -inf
        %3920 = vmax.xlane.f32.xlu0 %v3919
        %v3921 = vpop.xlane.xlu0 %3920
        %v3922 = vsub.f32 %v3918, %v3921
        %v3923 = vmul.f32 %v3922, 1.442695
        %v3924 = vpow.pop %v3923
        %v3925 = vsel %vm2424, %v3924, 0.0
        %3926 = vadd.xlane.f32.xlu0 %v3925
        %v3927 = vpop.xlane.xlu0 %3926
        %v3928 = vrcp.pop %v3927
        %v3929 = vmul.f32 %v3924, %v3928
        %v3930 = vpack.c.bf16 %v3929, %v3929
        %3931 = vrot.lane.b32.xlu0 %v3868, 64
        %v3932 = vpop.permute.xlu0 %3931
        %v3934 = vsel %vm2424, %v3930, 0
        %v3937 = vsel %vm2489, %v3932, 0
        %3939 = vmatprep.subr.bf16.mxu0 0
        %3940 = vmatpush1.bf16.msra.mxu0 %v3937
        %3941 = vmatprep.subr.bf16.mxu0 0
        %3942 = vmatpush1.bf16.msra.mxu0 0
        %3943 = vmatprep.subr.bf16.mxu0 0
        %3944 = vmatpush1.bf16.msra.mxu0 0
        %3945 = vmatprep.subr.bf16.mxu0 0
        %3946 = vmatpush1.bf16.msra.mxu0 0
        %3947 = vmatprep.subr.bf16.mxu0 0
        %3948 = vmatpush1.bf16.msra.mxu0 0
        %3949 = vmatprep.subr.bf16.mxu0 0
        %3950 = vmatpush1.bf16.msra.mxu0 0
        %3951 = vmatprep.subr.bf16.mxu0 0
        %3952 = vmatpush1.bf16.msra.mxu0 0
        %3953 = vmatprep.subr.bf16.mxu0 0
        %3954 = vmatpush1.bf16.msra.mxu0 0
        %3955 = vmatprep.subr.bf16.mxu0 0
        %3956 = vmatpush1.bf16.msra.mxu0 0
        %3957 = vmatprep.subr.bf16.mxu0 0
        %3958 = vmatpush1.bf16.msra.mxu0 0
        %3959 = vmatprep.subr.bf16.mxu0 0
        %3960 = vmatpush1.bf16.msra.mxu0 0
        %3961 = vmatprep.subr.bf16.mxu0 0
        %3962 = vmatpush1.bf16.msra.mxu0 0
        %3963 = vmatprep.subr.bf16.mxu0 0
        %3964 = vmatpush1.bf16.msra.mxu0 0
        %3965 = vmatprep.subr.bf16.mxu0 0
        %3966 = vmatpush1.bf16.msra.mxu0 0
        %3967 = vmatprep.subr.bf16.mxu0 0
        %3968 = vmatpush1.bf16.msra.mxu0 0
        %3969 = vmatprep.subr.bf16.mxu0 0
        %3970 = vmatpush1.bf16.msra.mxu0 0
        %3971 = vmatprep.mubr.bf16.mxu0 0
        %3972 = vmatmul.mubr.bf16.gmra.mrb[0].mxu0 %v3934
        %v3973 = vpop.f32.mrb[0].mxu0
        %v3974 = vadd.f32 0.0, %v3973
        %v3975 = vpop.f32.mrb[0].mxu0
        %v3976 = vpop.f32.mrb[0].mxu0
        %v3977 = vpop.f32.mrb[0].mxu0
        %3978 = vdwg.mxu0
        %3979 = vrot.lane.b32.xlu0 %v3868, 120
        %v3980 = vpop.permute.xlu0 %3979
        %3981 = vrot.lane.b32.xlu0 %v3868, 88
        %v3982 = vpop.permute.xlu0 %3981
        %v3984 = vsel %vm2424, %v3980, 0
        %v3987 = vsel %vm2424, %v3982, 0
        %3989 = vmatprep.subr.bf16.mxu0 0
        %3990 = vmatpush1.bf16.xpose.msra.mxu0 %v3987
        %3991 = vmatprep.subr.bf16.mxu0 0
        %3992 = vmatpush1.bf16.xpose.msra.mxu0 0
        %3993 = vmatprep.subr.bf16.mxu0 0
        %3994 = vmatpush1.bf16.xpose.msra.mxu0 0
        %3995 = vmatprep.subr.bf16.mxu0 0
        %3996 = vmatpush1.bf16.xpose.msra.mxu0 0
        %3997 = vmatprep.subr.bf16.mxu0 0
        %3998 = vmatpush1.bf16.xpose.msra.mxu0 0
        %3999 = vmatprep.subr.bf16.mxu0 0
        %4000 = vmatpush1.bf16.xpose.msra.mxu0 0
        %4001 = vmatprep.subr.bf16.mxu0 0
        %4002 = vmatpush1.bf16.xpose.msra.mxu0 0
        %4003 = vmatprep.subr.bf16.mxu0 0
        %4004 = vmatpush1.bf16.xpose.msra.mxu0 0
        %4005 = vmatprep.subr.bf16.mxu0 0
        %4006 = vmatpush1.bf16.xpose.msra.mxu0 0
        %4007 = vmatprep.subr.bf16.mxu0 0
        %4008 = vmatpush1.bf16.xpose.msra.mxu0 0
        %4009 = vmatprep.subr.bf16.mxu0 0
        %4010 = vmatpush1.bf16.xpose.msra.mxu0 0
        %4011 = vmatprep.subr.bf16.mxu0 0
        %4012 = vmatpush1.bf16.xpose.msra.mxu0 0
        %4013 = vmatprep.subr.bf16.mxu0 0
        %4014 = vmatpush1.bf16.xpose.msra.mxu0 0
        %4015 = vmatprep.subr.bf16.mxu0 0
        %4016 = vmatpush1.bf16.xpose.msra.mxu0 0
        %4017 = vmatprep.subr.bf16.mxu0 0
        %4018 = vmatpush1.bf16.xpose.msra.mxu0 0
        %4019 = vmatprep.subr.bf16.mxu0 0
        %4020 = vmatpush1.bf16.xpose.msra.mxu0 0
        %4021 = vmatprep.mubr.bf16.mxu0 0
        %4022 = vmatmul.mubr.bf16.gmra.mrb[0].mxu0 %v3984
        %v4023 = vpop.f32.mrb[0].mxu0
        %v4024 = vadd.f32 0.0, %v4023
        %v4025 = vpop.f32.mrb[0].mxu0
        %v4026 = vpop.f32.mrb[0].mxu0
        %v4027 = vpop.f32.mrb[0].mxu0
        %4028 = vdwg.mxu0
        %v4029 = vmul.f32 %v4024, 0.35355338
        %v4030 = vsel %vm2424, %v4029, -inf
        %4031 = vmax.xlane.f32.xlu0 %v4030
        %v4032 = vpop.xlane.xlu0 %4031
        %v4033 = vsub.f32 %v4029, %v4032
        %v4034 = vmul.f32 %v4033, 1.442695
        %v4035 = vpow.pop %v4034
        %v4036 = vsel %vm2424, %v4035, 0.0
        %4037 = vadd.xlane.f32.xlu0 %v4036
        %v4038 = vpop.xlane.xlu0 %4037
        %v4039 = vrcp.pop %v4038
        %v4040 = vmul.f32 %v4035, %v4039
        %v4041 = vpack.c.bf16 %v4040, %v4040
        %4042 = vrot.lane.b32.xlu0 %v3868, 56
        %v4043 = vpop.permute.xlu0 %4042
        %v4045 = vsel %vm2424, %v4041, 0
        %v4048 = vsel %vm2489, %v4043, 0
        %4050 = vmatprep.subr.bf16.mxu0 0
        %4051 = vmatpush1.bf16.msra.mxu0 %v4048
        %4052 = vmatprep.subr.bf16.mxu0 0
        %4053 = vmatpush1.bf16.msra.mxu0 0
        %4054 = vmatprep.subr.bf16.mxu0 0
        %4055 = vmatpush1.bf16.msra.mxu0 0
        %4056 = vmatprep.subr.bf16.mxu0 0
        %4057 = vmatpush1.bf16.msra.mxu0 0
        %4058 = vmatprep.subr.bf16.mxu0 0
        %4059 = vmatpush1.bf16.msra.mxu0 0
        %4060 = vmatprep.subr.bf16.mxu0 0
        %4061 = vmatpush1.bf16.msra.mxu0 0
        %4062 = vmatprep.subr.bf16.mxu0 0
        %4063 = vmatpush1.bf16.msra.mxu0 0
        %4064 = vmatprep.subr.bf16.mxu0 0
        %4065 = vmatpush1.bf16.msra.mxu0 0
        %4066 = vmatprep.subr.bf16.mxu0 0
        %4067 = vmatpush1.bf16.msra.mxu0 0
        %4068 = vmatprep.subr.bf16.mxu0 0
        %4069 = vmatpush1.bf16.msra.mxu0 0
        %4070 = vmatprep.subr.bf16.mxu0 0
        %4071 = vmatpush1.bf16.msra.mxu0 0
        %4072 = vmatprep.subr.bf16.mxu0 0
        %4073 = vmatpush1.bf16.msra.mxu0 0
        %4074 = vmatprep.subr.bf16.mxu0 0
        %4075 = vmatpush1.bf16.msra.mxu0 0
        %4076 = vmatprep.subr.bf16.mxu0 0
        %4077 = vmatpush1.bf16.msra.mxu0 0
        %4078 = vmatprep.subr.bf16.mxu0 0
        %4079 = vmatpush1.bf16.msra.mxu0 0
        %4080 = vmatprep.subr.bf16.mxu0 0
        %4081 = vmatpush1.bf16.msra.mxu0 0
        %4082 = vmatprep.mubr.bf16.mxu0 0
        %4083 = vmatmul.mubr.bf16.gmra.mrb[0].mxu0 %v4045
        %v4084 = vpop.f32.mrb[0].mxu0
        %v4085 = vadd.f32 0.0, %v4084
        %v4086 = vpop.f32.mrb[0].mxu0
        %v4087 = vpop.f32.mrb[0].mxu0
        %v4088 = vpop.f32.mrb[0].mxu0
        %4089 = vdwg.mxu0
        %4090 = vrot.lane.b32.xlu0 %v3868, 112
        %v4091 = vpop.permute.xlu0 %4090
        %4092 = vrot.lane.b32.xlu0 %v3868, 80
        %v4093 = vpop.permute.xlu0 %4092
        %v4095 = vsel %vm2424, %v4091, 0
        %v4098 = vsel %vm2424, %v4093, 0
        %4100 = vmatprep.subr.bf16.mxu0 0
        %4101 = vmatpush1.bf16.xpose.msra.mxu0 %v4098
        %4102 = vmatprep.subr.bf16.mxu0 0
        %4103 = vmatpush1.bf16.xpose.msra.mxu0 0
        %4104 = vmatprep.subr.bf16.mxu0 0
        %4105 = vmatpush1.bf16.xpose.msra.mxu0 0
        %4106 = vmatprep.subr.bf16.mxu0 0
        %4107 = vmatpush1.bf16.xpose.msra.mxu0 0
        %4108 = vmatprep.subr.bf16.mxu0 0
        %4109 = vmatpush1.bf16.xpose.msra.mxu0 0
        %4110 = vmatprep.subr.bf16.mxu0 0
        %4111 = vmatpush1.bf16.xpose.msra.mxu0 0
        %4112 = vmatprep.subr.bf16.mxu0 0
        %4113 = vmatpush1.bf16.xpose.msra.mxu0 0
        %4114 = vmatprep.subr.bf16.mxu0 0
        %4115 = vmatpush1.bf16.xpose.msra.mxu0 0
        %4116 = vmatprep.subr.bf16.mxu0 0
        %4117 = vmatpush1.bf16.xpose.msra.mxu0 0
        %4118 = vmatprep.subr.bf16.mxu0 0
        %4119 = vmatpush1.bf16.xpose.msra.mxu0 0
        %4120 = vmatprep.subr.bf16.mxu0 0
        %4121 = vmatpush1.bf16.xpose.msra.mxu0 0
        %4122 = vmatprep.subr.bf16.mxu0 0
        %4123 = vmatpush1.bf16.xpose.msra.mxu0 0
        %4124 = vmatprep.subr.bf16.mxu0 0
        %4125 = vmatpush1.bf16.xpose.msra.mxu0 0
        %4126 = vmatprep.subr.bf16.mxu0 0
        %4127 = vmatpush1.bf16.xpose.msra.mxu0 0
        %4128 = vmatprep.subr.bf16.mxu0 0
        %4129 = vmatpush1.bf16.xpose.msra.mxu0 0
        %4130 = vmatprep.subr.bf16.mxu0 0
        %4131 = vmatpush1.bf16.xpose.msra.mxu0 0
        %4132 = vmatprep.mubr.bf16.mxu0 0
        %4133 = vmatmul.mubr.bf16.gmra.mrb[0].mxu0 %v4095
        %v4134 = vpop.f32.mrb[0].mxu0
        %v4135 = vadd.f32 0.0, %v4134
        %v4136 = vpop.f32.mrb[0].mxu0
        %v4137 = vpop.f32.mrb[0].mxu0
        %v4138 = vpop.f32.mrb[0].mxu0
        %4139 = vdwg.mxu0
        %v4140 = vmul.f32 %v4135, 0.35355338
        %v4141 = vsel %vm2424, %v4140, -inf
        %4142 = vmax.xlane.f32.xlu0 %v4141
        %v4143 = vpop.xlane.xlu0 %4142
        %v4144 = vsub.f32 %v4140, %v4143
        %v4145 = vmul.f32 %v4144, 1.442695
        %v4146 = vpow.pop %v4145
        %v4147 = vsel %vm2424, %v4146, 0.0
        %4148 = vadd.xlane.f32.xlu0 %v4147
        %v4149 = vpop.xlane.xlu0 %4148
        %v4150 = vrcp.pop %v4149
        %v4151 = vmul.f32 %v4146, %v4150
        %v4152 = vpack.c.bf16 %v4151, %v4151
        %4153 = vrot.lane.b32.xlu0 %v3868, 48
        %v4154 = vpop.permute.xlu0 %4153
        %v4156 = vsel %vm2424, %v4152, 0
        %v4159 = vsel %vm2489, %v4154, 0
        %4161 = vmatprep.subr.bf16.mxu0 0
        %4162 = vmatpush1.bf16.msra.mxu0 %v4159
        %4163 = vmatprep.subr.bf16.mxu0 0
        %4164 = vmatpush1.bf16.msra.mxu0 0
        %4165 = vmatprep.subr.bf16.mxu0 0
        %4166 = vmatpush1.bf16.msra.mxu0 0
        %4167 = vmatprep.subr.bf16.mxu0 0
        %4168 = vmatpush1.bf16.msra.mxu0 0
        %4169 = vmatprep.subr.bf16.mxu0 0
        %4170 = vmatpush1.bf16.msra.mxu0 0
        %4171 = vmatprep.subr.bf16.mxu0 0
        %4172 = vmatpush1.bf16.msra.mxu0 0
        %4173 = vmatprep.subr.bf16.mxu0 0
        %4174 = vmatpush1.bf16.msra.mxu0 0
        %4175 = vmatprep.subr.bf16.mxu0 0
        %4176 = vmatpush1.bf16.msra.mxu0 0
        %4177 = vmatprep.subr.bf16.mxu0 0
        %4178 = vmatpush1.bf16.msra.mxu0 0
        %4179 = vmatprep.subr.bf16.mxu0 0
        %4180 = vmatpush1.bf16.msra.mxu0 0
        %4181 = vmatprep.subr.bf16.mxu0 0
        %4182 = vmatpush1.bf16.msra.mxu0 0
        %4183 = vmatprep.subr.bf16.mxu0 0
        %4184 = vmatpush1.bf16.msra.mxu0 0
        %4185 = vmatprep.subr.bf16.mxu0 0
        %4186 = vmatpush1.bf16.msra.mxu0 0
        %4187 = vmatprep.subr.bf16.mxu0 0
        %4188 = vmatpush1.bf16.msra.mxu0 0
        %4189 = vmatprep.subr.bf16.mxu0 0
        %4190 = vmatpush1.bf16.msra.mxu0 0
        %4191 = vmatprep.subr.bf16.mxu0 0
        %4192 = vmatpush1.bf16.msra.mxu0 0
        %4193 = vmatprep.mubr.bf16.mxu0 0
        %4194 = vmatmul.mubr.bf16.gmra.mrb[0].mxu0 %v4156
        %v4195 = vpop.f32.mrb[0].mxu0
        %v4196 = vadd.f32 0.0, %v4195
        %v4197 = vpop.f32.mrb[0].mxu0
        %v4198 = vpop.f32.mrb[0].mxu0
        %v4199 = vpop.f32.mrb[0].mxu0
        %4200 = vdwg.mxu0
        %4201 = vrot.lane.b32.xlu0 %v3868, 104
        %v4202 = vpop.permute.xlu0 %4201
        %4203 = vrot.lane.b32.xlu0 %v3868, 72
        %v4204 = vpop.permute.xlu0 %4203
        %v4206 = vsel %vm2424, %v4202, 0
        %v4209 = vsel %vm2424, %v4204, 0
        %4211 = vmatprep.subr.bf16.mxu0 0
        %4212 = vmatpush1.bf16.xpose.msra.mxu0 %v4209
        %4213 = vmatprep.subr.bf16.mxu0 0
        %4214 = vmatpush1.bf16.xpose.msra.mxu0 0
        %4215 = vmatprep.subr.bf16.mxu0 0
        %4216 = vmatpush1.bf16.xpose.msra.mxu0 0
        %4217 = vmatprep.subr.bf16.mxu0 0
        %4218 = vmatpush1.bf16.xpose.msra.mxu0 0
        %4219 = vmatprep.subr.bf16.mxu0 0
        %4220 = vmatpush1.bf16.xpose.msra.mxu0 0
        %4221 = vmatprep.subr.bf16.mxu0 0
        %4222 = vmatpush1.bf16.xpose.msra.mxu0 0
        %4223 = vmatprep.subr.bf16.mxu0 0
        %4224 = vmatpush1.bf16.xpose.msra.mxu0 0
        %4225 = vmatprep.subr.bf16.mxu0 0
        %4226 = vmatpush1.bf16.xpose.msra.mxu0 0
        %4227 = vmatprep.subr.bf16.mxu0 0
        %4228 = vmatpush1.bf16.xpose.msra.mxu0 0
        %4229 = vmatprep.subr.bf16.mxu0 0
        %4230 = vmatpush1.bf16.xpose.msra.mxu0 0
        %4231 = vmatprep.subr.bf16.mxu0 0
        %4232 = vmatpush1.bf16.xpose.msra.mxu0 0
        %4233 = vmatprep.subr.bf16.mxu0 0
        %4234 = vmatpush1.bf16.xpose.msra.mxu0 0
        %4235 = vmatprep.subr.bf16.mxu0 0
        %4236 = vmatpush1.bf16.xpose.msra.mxu0 0
        %4237 = vmatprep.subr.bf16.mxu0 0
        %4238 = vmatpush1.bf16.xpose.msra.mxu0 0
        %4239 = vmatprep.subr.bf16.mxu0 0
        %4240 = vmatpush1.bf16.xpose.msra.mxu0 0
        %4241 = vmatprep.subr.bf16.mxu0 0
        %4242 = vmatpush1.bf16.xpose.msra.mxu0 0
        %4243 = vmatprep.mubr.bf16.mxu0 0
        %4244 = vmatmul.mubr.bf16.gmra.mrb[0].mxu0 %v4206
        %v4245 = vpop.f32.mrb[0].mxu0
        %v4246 = vadd.f32 0.0, %v4245
        %v4247 = vpop.f32.mrb[0].mxu0
        %v4248 = vpop.f32.mrb[0].mxu0
        %v4249 = vpop.f32.mrb[0].mxu0
        %4250 = vdwg.mxu0
        %v4251 = vmul.f32 %v4246, 0.35355338
        %v4252 = vsel %vm2424, %v4251, -inf
        %4253 = vmax.xlane.f32.xlu0 %v4252
        %v4254 = vpop.xlane.xlu0 %4253
        %v4255 = vsub.f32 %v4251, %v4254
        %v4256 = vmul.f32 %v4255, 1.442695
        %v4257 = vpow.pop %v4256
        %v4258 = vsel %vm2424, %v4257, 0.0
        %4259 = vadd.xlane.f32.xlu0 %v4258
        %v4260 = vpop.xlane.xlu0 %4259
        %v4261 = vrcp.pop %v4260
        %v4262 = vmul.f32 %v4257, %v4261
        %v4263 = vpack.c.bf16 %v4262, %v4262
        %4264 = vrot.lane.b32.xlu0 %v3868, 40
        %v4265 = vpop.permute.xlu0 %4264
        %v4267 = vsel %vm2424, %v4263, 0
        %v4270 = vsel %vm2489, %v4265, 0
        %4272 = vmatprep.subr.bf16.mxu0 0
        %4273 = vmatpush1.bf16.msra.mxu0 %v4270
        %4274 = vmatprep.subr.bf16.mxu0 0
        %4275 = vmatpush1.bf16.msra.mxu0 0
        %4276 = vmatprep.subr.bf16.mxu0 0
        %4277 = vmatpush1.bf16.msra.mxu0 0
        %4278 = vmatprep.subr.bf16.mxu0 0
        %4279 = vmatpush1.bf16.msra.mxu0 0
        %4280 = vmatprep.subr.bf16.mxu0 0
        %4281 = vmatpush1.bf16.msra.mxu0 0
        %4282 = vmatprep.subr.bf16.mxu0 0
        %4283 = vmatpush1.bf16.msra.mxu0 0
        %4284 = vmatprep.subr.bf16.mxu0 0
        %4285 = vmatpush1.bf16.msra.mxu0 0
        %4286 = vmatprep.subr.bf16.mxu0 0
        %4287 = vmatpush1.bf16.msra.mxu0 0
        %4288 = vmatprep.subr.bf16.mxu0 0
        %4289 = vmatpush1.bf16.msra.mxu0 0
        %4290 = vmatprep.subr.bf16.mxu0 0
        %4291 = vmatpush1.bf16.msra.mxu0 0
        %4292 = vmatprep.subr.bf16.mxu0 0
        %4293 = vmatpush1.bf16.msra.mxu0 0
        %4294 = vmatprep.subr.bf16.mxu0 0
        %4295 = vmatpush1.bf16.msra.mxu0 0
        %4296 = vmatprep.subr.bf16.mxu0 0
        %4297 = vmatpush1.bf16.msra.mxu0 0
        %4298 = vmatprep.subr.bf16.mxu0 0
        %4299 = vmatpush1.bf16.msra.mxu0 0
        %4300 = vmatprep.subr.bf16.mxu0 0
        %4301 = vmatpush1.bf16.msra.mxu0 0
        %4302 = vmatprep.subr.bf16.mxu0 0
        %4303 = vmatpush1.bf16.msra.mxu0 0
        %4304 = vmatprep.mubr.bf16.mxu0 0
        %4305 = vmatmul.mubr.bf16.gmra.mrb[0].mxu0 %v4267
        %v4306 = vpop.f32.mrb[0].mxu0
        %v4307 = vadd.f32 0.0, %v4306
        %v4308 = vpop.f32.mrb[0].mxu0
        %v4309 = vpop.f32.mrb[0].mxu0
        %v4310 = vpop.f32.mrb[0].mxu0
        %4311 = vdwg.mxu0
        %4313 = vrot.lane.b32.xlu0 %v4085, 8
        %v4314 = vpop.permute.xlu0 %4313
        %4317 = vrot.lane.b32.xlu0 %v4196, 16
        %v4318 = vpop.permute.xlu0 %4317
        %4321 = vrot.lane.b32.xlu0 %v4307, 24
        %v4322 = vpop.permute.xlu0 %4321
        %v4324 = vsel %vm2424, %v3974, %v4314
        %v4325 = vsel %vm2879, %v4324, %v4318
        %v4326 = vsel %vm2881, %v4325, %v4322
        %v4327 = vpack.c.bf16 %v4326, %v4326
        %v4328 = vld [vmem:[%s113] sm:$0xff]
        %v4329 = vld [vmem:[%s113 + $0x8] sm:$0xff]
        %v4330 = vld [vmem:[%s113 + $0x10] sm:$0xff]
        %v4331 = vld [vmem:[%s113 + $0x18] sm:$0xff]
        %v4332 = vpack.c.bf16 %v4329, %v4328
        %v4333 = vpack.c.bf16 %v4331, %v4330
        %v4334 = vld [vmem:[%s109] sm:$0x1]
        %v4336 = vlaneseq
        %v4337 = vshrl.u32 %v4336, 7
        %v4338 = vsub.s32 0, %v4337
        %v4339 = vrot.slane %v4334, %v4338
        %v4342 = vsel %vm2376, %v4327, 0
        %4344 = vmatprep.subr.bf16.mxu0 0
        %4345 = vmatpush1.bf16.msra.mxu0 %v4332
        %4346 = vmatprep.subr.bf16.mxu0 0
        %4347 = vmatpush1.bf16.msra.mxu0 %v4333
        %4348 = vmatprep.subr.bf16.mxu0 0
        %4349 = vmatpush1.bf16.msra.mxu0 0
        %4350 = vmatprep.subr.bf16.mxu0 0
        %4351 = vmatpush1.bf16.msra.mxu0 0
        %4352 = vmatprep.subr.bf16.mxu0 0
        %4353 = vmatpush1.bf16.msra.mxu0 0
        %4354 = vmatprep.subr.bf16.mxu0 0
        %4355 = vmatpush1.bf16.msra.mxu0 0
        %4356 = vmatprep.subr.bf16.mxu0 0
        %4357 = vmatpush1.bf16.msra.mxu0 0
        %4358 = vmatprep.subr.bf16.mxu0 0
        %4359 = vmatpush1.bf16.msra.mxu0 0
        %4360 = vmatprep.subr.bf16.mxu0 0
        %4361 = vmatpush1.bf16.msra.mxu0 0
        %4362 = vmatprep.subr.bf16.mxu0 0
        %4363 = vmatpush1.bf16.msra.mxu0 0
        %4364 = vmatprep.subr.bf16.mxu0 0
        %4365 = vmatpush1.bf16.msra.mxu0 0
        %4366 = vmatprep.subr.bf16.mxu0 0
        %4367 = vmatpush1.bf16.msra.mxu0 0
        %4368 = vmatprep.subr.bf16.mxu0 0
        %4369 = vmatpush1.bf16.msra.mxu0 0
        %4370 = vmatprep.subr.bf16.mxu0 0
        %4371 = vmatpush1.bf16.msra.mxu0 0
        %4372 = vmatprep.subr.bf16.mxu0 0
        %4373 = vmatpush1.bf16.msra.mxu0 0
        %4374 = vmatprep.subr.bf16.mxu0 0
        %4375 = vmatpush1.bf16.msra.mxu0 0
        %4376 = vmatprep.mubr.bf16.mxu0 0
        %4377 = vmatmul.mubr.bf16.gmra.mrb[0].mxu0 %v4342
        %v4378 = vpop.f32.mrb[0].mxu0
        %v4379 = vadd.f32 %v4339, %v4378
        %v4380 = vpop.f32.mrb[0].mxu0
        %v4381 = vpop.f32.mrb[0].mxu0
        %v4382 = vpop.f32.mrb[0].mxu0
        %4383 = vdwg.mxu0
        %v4384 = vadd.f32 %v3810, %v4379
        %v4385 = vsel %vm2376, %v4384, 0.0
        %4386 = vadd.xlane.f32.xlu0 %v4385
        %v4387 = vpop.xlane.xlu0 %4386
        %v4388 = vmul.f32 %v4387, %v2944
        %v4389 = vsub.f32 %v4384, %v4388
        %v4390 = vmul.f32 %v4389, %v4389
        %v4391 = vsel %vm2376, %v4390, 0.0
        %4392 = vadd.xlane.f32.xlu0 %v4391
        %v4393 = vpop.xlane.xlu0 %4392
        %v4394 = vmul.f32 %v4393, %v2944
        %v4395 = vadd.f32 %v4394, 1e-05
        %v4396 = vrsqrt.pop %v4395
        %v4397 = vmul.f32 %v4389, %v4396
        %v4398 = vld [vmem:[%s103] sm:$0x1]
        %v4400 = vlaneseq
        %v4401 = vshrl.u32 %v4400, 7
        %v4402 = vsub.s32 0, %v4401
        %v4403 = vrot.slane %v4398, %v4402
        %v4405 = vmul.f32 %v4397, %v4403
        %v4406 = vld [vmem:[%s101] sm:$0x1]
        %v4408 = vlaneseq
        %v4409 = vshrl.u32 %v4408, 7
        %v4410 = vsub.s32 0, %v4409
        %v4411 = vrot.slane %v4406, %v4410
        %v4413 = vadd.f32 %v4405, %v4411
        %v4414 = vpack.c.bf16 %v4413, %v4413
        %v4415 = vld [vmem:[%s117] sm:$0xff]
        %v4416 = vld [vmem:[%s117 + $0x8] sm:$0xff]
        %v4417 = vld [vmem:[%s117 + $0x10] sm:$0xff]
        %v4418 = vld [vmem:[%s117 + $0x18] sm:$0xff]
        %v4419 = vpack.c.bf16 %v4416, %v4415
        %v4420 = vpack.c.bf16 %v4418, %v4417
        %v4421 = vld [vmem:[%s97] sm:$0x1]
        %v4423 = vlaneseq
        %v4424 = vshrl.u32 %v4423, 7
        %v4425 = vsub.s32 0, %v4424
        %v4426 = vrot.slane %v4421, %v4425
        %v4429 = vsel %vm2376, %v4414, 0
        %4431 = vmatprep.subr.bf16.mxu0 0
        %4432 = vmatpush1.bf16.msra.mxu0 %v4419
        %4433 = vmatprep.subr.bf16.mxu0 0
        %4434 = vmatpush1.bf16.msra.mxu0 %v4420
        %4435 = vmatprep.subr.bf16.mxu0 0
        %4436 = vmatpush1.bf16.msra.mxu0 0
        %4437 = vmatprep.subr.bf16.mxu0 0
        %4438 = vmatpush1.bf16.msra.mxu0 0
        %4439 = vmatprep.subr.bf16.mxu0 0
        %4440 = vmatpush1.bf16.msra.mxu0 0
        %4441 = vmatprep.subr.bf16.mxu0 0
        %4442 = vmatpush1.bf16.msra.mxu0 0
        %4443 = vmatprep.subr.bf16.mxu0 0
        %4444 = vmatpush1.bf16.msra.mxu0 0
        %4445 = vmatprep.subr.bf16.mxu0 0
        %4446 = vmatpush1.bf16.msra.mxu0 0
        %4447 = vmatprep.subr.bf16.mxu0 0
        %4448 = vmatpush1.bf16.msra.mxu0 0
        %4449 = vmatprep.subr.bf16.mxu0 0
        %4450 = vmatpush1.bf16.msra.mxu0 0
        %4451 = vmatprep.subr.bf16.mxu0 0
        %4452 = vmatpush1.bf16.msra.mxu0 0
        %4453 = vmatprep.subr.bf16.mxu0 0
        %4454 = vmatpush1.bf16.msra.mxu0 0
        %4455 = vmatprep.subr.bf16.mxu0 0
        %4456 = vmatpush1.bf16.msra.mxu0 0
        %4457 = vmatprep.subr.bf16.mxu0 0
        %4458 = vmatpush1.bf16.msra.mxu0 0
        %4459 = vmatprep.subr.bf16.mxu0 0
        %4460 = vmatpush1.bf16.msra.mxu0 0
        %4461 = vmatprep.subr.bf16.mxu0 0
        %4462 = vmatpush1.bf16.msra.mxu0 0
        %4463 = vmatprep.mubr.bf16.mxu0 0
        %4464 = vmatmul.mubr.bf16.gmra.mrb[0].mxu0 %v4429
        %v4465 = vpop.f32.mrb[0].mxu0
        %v4466 = vadd.f32 %v4426, %v4465
        %v4467 = vpop.f32.mrb[0].mxu0
        %v4468 = vpop.f32.mrb[0].mxu0
        %v4469 = vpop.f32.mrb[0].mxu0
        %4470 = vdwg.mxu0
        %v4471 = vmax.f32 %v4466, 0.0
        %v4472 = vpack.c.bf16 %v4471, %v4471
        %v4473 = vld [vmem:[%s119] sm:$0xff]
        %v4474 = vld [vmem:[%s119 + $0x8] sm:$0xff]
        %v4475 = vld [vmem:[%s119 + $0x10] sm:$0xff]
        %v4476 = vld [vmem:[%s119 + $0x18] sm:$0xff]
        %v4477 = vld [vmem:[%s119 + $0x20] sm:$0xff]
        %v4478 = vld [vmem:[%s119 + $0x28] sm:$0xff]
        %v4479 = vld [vmem:[%s119 + $0x30] sm:$0xff]
        %v4480 = vld [vmem:[%s119 + $0x38] sm:$0xff]
        %v4481 = vpack.c.bf16 %v4474, %v4473
        %v4482 = vpack.c.bf16 %v4476, %v4475
        %v4483 = vpack.c.bf16 %v4478, %v4477
        %v4484 = vpack.c.bf16 %v4480, %v4479
        %v4485 = vld [vmem:[%s99] sm:$0x1]
        %v4487 = vlaneseq
        %v4488 = vshrl.u32 %v4487, 7
        %v4489 = vsub.s32 0, %v4488
        %v4490 = vrot.slane %v4485, %v4489
        %v4493 = vsel %vm2315, %v4472, 0
        %4495 = vmatprep.subr.bf16.mxu0 0
        %4496 = vmatpush1.bf16.msra.mxu0 %v4481
        %4497 = vmatprep.subr.bf16.mxu0 0
        %4498 = vmatpush1.bf16.msra.mxu0 %v4482
        %4499 = vmatprep.subr.bf16.mxu0 0
        %4500 = vmatpush1.bf16.msra.mxu0 %v4483
        %4501 = vmatprep.subr.bf16.mxu0 0
        %4502 = vmatpush1.bf16.msra.mxu0 %v4484
        %4503 = vmatprep.subr.bf16.mxu0 0
        %4504 = vmatpush1.bf16.msra.mxu0 0
        %4505 = vmatprep.subr.bf16.mxu0 0
        %4506 = vmatpush1.bf16.msra.mxu0 0
        %4507 = vmatprep.subr.bf16.mxu0 0
        %4508 = vmatpush1.bf16.msra.mxu0 0
        %4509 = vmatprep.subr.bf16.mxu0 0
        %4510 = vmatpush1.bf16.msra.mxu0 0
        %4511 = vmatprep.subr.bf16.mxu0 0
        %4512 = vmatpush1.bf16.msra.mxu0 0
        %4513 = vmatprep.subr.bf16.mxu0 0
        %4514 = vmatpush1.bf16.msra.mxu0 0
        %4515 = vmatprep.subr.bf16.mxu0 0
        %4516 = vmatpush1.bf16.msra.mxu0 0
        %4517 = vmatprep.subr.bf16.mxu0 0
        %4518 = vmatpush1.bf16.msra.mxu0 0
        %4519 = vmatprep.subr.bf16.mxu0 0
        %4520 = vmatpush1.bf16.msra.mxu0 0
        %4521 = vmatprep.subr.bf16.mxu0 0
        %4522 = vmatpush1.bf16.msra.mxu0 0
        %4523 = vmatprep.subr.bf16.mxu0 0
        %4524 = vmatpush1.bf16.msra.mxu0 0
        %4525 = vmatprep.subr.bf16.mxu0 0
        %4526 = vmatpush1.bf16.msra.mxu0 0
        %4527 = vmatprep.mubr.bf16.mxu0 0
        %4528 = vmatmul.mubr.bf16.gmra.mrb[0].mxu0 %v4493
        %v4529 = vpop.f32.mrb[0].mxu0
        %v4530 = vadd.f32 %v4490, %v4529
        %v4531 = vpop.f32.mrb[0].mxu0
        %v4532 = vpop.f32.mrb[0].mxu0
        %v4533 = vpop.f32.mrb[0].mxu0
        %4534 = vdwg.mxu0
        %v4535 = vadd.f32 %v4413, %v4530
        %v4536 = vsel %vm2376, %v4535, 0.0
        %4537 = vadd.xlane.f32.xlu0 %v4536
        %v4538 = vpop.xlane.xlu0 %4537
        %v4539 = vmul.f32 %v4538, %v2944
        %v4540 = vsub.f32 %v4535, %v4539
        %v4541 = vmul.f32 %v4540, %v4540
        %v4542 = vsel %vm2376, %v4541, 0.0
        %4543 = vadd.xlane.f32.xlu0 %v4542
        %v4544 = vpop.xlane.xlu0 %4543
        %v4545 = vmul.f32 %v4544, %v2944
        %v4546 = vadd.f32 %v4545, 1e-05
        %v4547 = vrsqrt.pop %v4546
        %v4548 = vmul.f32 %v4540, %v4547
        %v4549 = vld [vmem:[%s107] sm:$0x1]
        %v4551 = vlaneseq
        %v4552 = vshrl.u32 %v4551, 7
        %v4553 = vsub.s32 0, %v4552
        %v4554 = vrot.slane %v4549, %v4553
        %v4556 = vmul.f32 %v4548, %v4554
        %v4557 = vld [vmem:[%s105] sm:$0x1]
        %v4559 = vlaneseq
        %v4560 = vshrl.u32 %v4559, 7
        %v4561 = vsub.s32 0, %v4560
        %v4562 = vrot.slane %v4557, %v4561
        %v4564 = vadd.f32 %v4556, %v4562
        %v4565 = vsel %vm2376, %v4564, 0.0
        %4566 = vadd.xlane.f32.xlu0 %v4565
        %v4567 = vpop.xlane.xlu0 %4566
        %v4568 = vmul.f32 %v4567, %v2944
        %v4569 = vsub.f32 %v4564, %v4568
        %v4570 = vmul.f32 %v4569, %v4569
        %v4571 = vsel %vm2376, %v4570, 0.0
        %4572 = vadd.xlane.f32.xlu0 %v4571
        %v4573 = vpop.xlane.xlu0 %4572
        %v4574 = vmul.f32 %v4573, %v2944
        %v4575 = vadd.f32 %v4574, 1e-05
        %v4576 = vrsqrt.pop %v4575
        %v4577 = vmul.f32 %v4569, %v4576
        %v4578 = vld [vmem:[#allocation36] sm:$0x1]
        %v4580 = vlaneseq
        %v4581 = vshrl.u32 %v4580, 7
        %v4582 = vsub.s32 0, %v4581
        %v4583 = vrot.slane %v4578, %v4582
        %v4585 = vmul.f32 %v4577, %v4583
        %v4586 = vld [vmem:[%s121] sm:$0x1]
        %v4588 = vlaneseq
        %v4589 = vshrl.u32 %v4588, 7
        %v4590 = vsub.s32 0, %v4589
        %v4591 = vrot.slane %v4586, %v4590
        %v4593 = vadd.f32 %v4585, %v4591
        %v4594 = vld [vmem:[%s2287] sm:$0xff]
        %v4595 = vld [vmem:[%s7] sm:$0xff]
        %v4596 = vpack.c.bf16 %v4594, %v4594
        %v4597 = vld [vmem:[%s133] sm:$0xff]
        %v4598 = vld [vmem:[%s133 + $0x8] sm:$0xff]
        %v4599 = vld [vmem:[%s133 + $0x10] sm:$0xff]
        %v4600 = vld [vmem:[%s133 + $0x18] sm:$0xff]
        %v4601 = vld [vmem:[%s133 + $0x20] sm:$0xff]
        %v4602 = vld [vmem:[%s133 + $0x28] sm:$0xff]
        %v4603 = vld [vmem:[%s133 + $0x30] sm:$0xff]
        %v4604 = vld [vmem:[%s133 + $0x38] sm:$0xff]
        %v4605 = vpack.c.bf16 %v4598, %v4597
        %v4606 = vpack.c.bf16 %v4600, %v4599
        %v4607 = vpack.c.bf16 %v4602, %v4601
        %v4608 = vpack.c.bf16 %v4604, %v4603
        %v4609 = vld [vmem:[#allocation39] sm:$0x1]
        %v4611 = vlaneseq
        %v4612 = vshrl.u32 %v4611, 7
        %v4613 = vsub.s32 0, %v4612
        %v4614 = vrot.slane %v4609, %v4613
        %v4617 = vsel %vm2315, %v4596, 0
        %4619 = vmatprep.subr.bf16.mxu0 0
        %4620 = vmatpush1.bf16.msra.mxu0 %v4605
        %4621 = vmatprep.subr.bf16.mxu0 0
        %4622 = vmatpush1.bf16.msra.mxu0 %v4606
        %4623 = vmatprep.subr.bf16.mxu0 0
        %4624 = vmatpush1.bf16.msra.mxu0 %v4607
        %4625 = vmatprep.subr.bf16.mxu0 0
        %4626 = vmatpush1.bf16.msra.mxu0 %v4608
        %4627 = vmatprep.subr.bf16.mxu0 0
        %4628 = vmatpush1.bf16.msra.mxu0 0
        %4629 = vmatprep.subr.bf16.mxu0 0
        %4630 = vmatpush1.bf16.msra.mxu0 0
        %4631 = vmatprep.subr.bf16.mxu0 0
        %4632 = vmatpush1.bf16.msra.mxu0 0
        %4633 = vmatprep.subr.bf16.mxu0 0
        %4634 = vmatpush1.bf16.msra.mxu0 0
        %4635 = vmatprep.subr.bf16.mxu0 0
        %4636 = vmatpush1.bf16.msra.mxu0 0
        %4637 = vmatprep.subr.bf16.mxu0 0
        %4638 = vmatpush1.bf16.msra.mxu0 0
        %4639 = vmatprep.subr.bf16.mxu0 0
        %4640 = vmatpush1.bf16.msra.mxu0 0
        %4641 = vmatprep.subr.bf16.mxu0 0
        %4642 = vmatpush1.bf16.msra.mxu0 0
        %4643 = vmatprep.subr.bf16.mxu0 0
        %4644 = vmatpush1.bf16.msra.mxu0 0
        %4645 = vmatprep.subr.bf16.mxu0 0
        %4646 = vmatpush1.bf16.msra.mxu0 0
        %4647 = vmatprep.subr.bf16.mxu0 0
        %4648 = vmatpush1.bf16.msra.mxu0 0
        %4649 = vmatprep.subr.bf16.mxu0 0
        %4650 = vmatpush1.bf16.msra.mxu0 0
        %4651 = vmatprep.mubr.bf16.mxu0 0
        %4652 = vmatmul.mubr.bf16.gmra.mrb[0].mxu0 %v4617
        %v4653 = vpop.f32.mrb[0].mxu0
        %v4654 = vadd.f32 %v4614, %v4653
        %v4655 = vpop.f32.mrb[0].mxu0
        %v4656 = vpop.f32.mrb[0].mxu0
        %v4657 = vpop.f32.mrb[0].mxu0
        %4658 = vdwg.mxu0
        %v4659 = vmax.f32 %v4654, 0.0
        %v4660 = vadd.f32 %v4659, %v4595
        %v4661 = vpack.c.bf16 %v4660, %v4660
        %v4662 = vld [vmem:[%s43] sm:$0xff]
        %v4663 = vld [vmem:[%s43 + $0x8] sm:$0xff]
        %v4664 = vld [vmem:[%s43 + $0x10] sm:$0xff]
        %v4665 = vld [vmem:[%s43 + $0x18] sm:$0xff]
        %v4666 = vpack.c.bf16 %v4663, %v4662
        %v4667 = vpack.c.bf16 %v4665, %v4664
        %v4668 = vld [vmem:[#allocation21] sm:$0x1]
        %v4670 = vlaneseq
        %v4671 = vshrl.u32 %v4670, 7
        %v4672 = vsub.s32 0, %v4671
        %v4673 = vrot.slane %v4668, %v4672
        %v4676 = vsel %vm2376, %v4661, 0
        %4678 = vmatprep.subr.bf16.mxu0 0
        %4679 = vmatpush1.bf16.msra.mxu0 %v4666
        %4680 = vmatprep.subr.bf16.mxu0 0
        %4681 = vmatpush1.bf16.msra.mxu0 %v4667
        %4682 = vmatprep.subr.bf16.mxu0 0
        %4683 = vmatpush1.bf16.msra.mxu0 0
        %4684 = vmatprep.subr.bf16.mxu0 0
        %4685 = vmatpush1.bf16.msra.mxu0 0
        %4686 = vmatprep.subr.bf16.mxu0 0
        %4687 = vmatpush1.bf16.msra.mxu0 0
        %4688 = vmatprep.subr.bf16.mxu0 0
        %4689 = vmatpush1.bf16.msra.mxu0 0
        %4690 = vmatprep.subr.bf16.mxu0 0
        %4691 = vmatpush1.bf16.msra.mxu0 0
        %4692 = vmatprep.subr.bf16.mxu0 0
        %4693 = vmatpush1.bf16.msra.mxu0 0
        %4694 = vmatprep.subr.bf16.mxu0 0
        %4695 = vmatpush1.bf16.msra.mxu0 0
        %4696 = vmatprep.subr.bf16.mxu0 0
        %4697 = vmatpush1.bf16.msra.mxu0 0
        %4698 = vmatprep.subr.bf16.mxu0 0
        %4699 = vmatpush1.bf16.msra.mxu0 0
        %4700 = vmatprep.subr.bf16.mxu0 0
        %4701 = vmatpush1.bf16.msra.mxu0 0
        %4702 = vmatprep.subr.bf16.mxu0 0
        %4703 = vmatpush1.bf16.msra.mxu0 0
        %4704 = vmatprep.subr.bf16.mxu0 0
        %4705 = vmatpush1.bf16.msra.mxu0 0
        %4706 = vmatprep.subr.bf16.mxu0 0
        %4707 = vmatpush1.bf16.msra.mxu0 0
        %4708 = vmatprep.subr.bf16.mxu0 0
        %4709 = vmatpush1.bf16.msra.mxu0 0
        %4710 = vmatprep.mubr.bf16.mxu0 0
        %4711 = vmatmul.mubr.bf16.gmra.mrb[0].mxu0 %v4676
        %v4712 = vpop.f32.mrb[0].mxu0
        %v4713 = vadd.f32 %v4673, %v4712
        %v4714 = vpop.f32.mrb[0].mxu0
        %v4715 = vpop.f32.mrb[0].mxu0
        %v4716 = vpop.f32.mrb[0].mxu0
        %4717 = vdwg.mxu0
        %v4718 = vlaneseq
        %v4719 = vshrl.u32 %v4718, 7
        %v4720 = vlaneseq
        %v4721 = vand.u32 %v4720, 127
        %vm4722 = vcmp.ge.s32.totalorder %v4719, %v4721
        %v4723 = vsel %vm4722, 0.0, -1e+30
        %v4724 = vpack.c.bf16 %v4713, %v4713
        %4726 = vrot.lane.b32.xlu0 %v4724, 96
        %v4727 = vpop.permute.xlu0 %4726
        %v4729 = vsel %vm2424, %v4724, 0
        %v4732 = vsel %vm2424, %v4727, 0
        %4734 = vmatprep.subr.bf16.mxu0 0
        %4735 = vmatpush1.bf16.xpose.msra.mxu0 %v4732
        %4736 = vmatprep.subr.bf16.mxu0 0
        %4737 = vmatpush1.bf16.xpose.msra.mxu0 0
        %4738 = vmatprep.subr.bf16.mxu0 0
        %4739 = vmatpush1.bf16.xpose.msra.mxu0 0
        %4740 = vmatprep.subr.bf16.mxu0 0
        %4741 = vmatpush1.bf16.xpose.msra.mxu0 0
        %4742 = vmatprep.subr.bf16.mxu0 0
        %4743 = vmatpush1.bf16.xpose.msra.mxu0 0
        %4744 = vmatprep.subr.bf16.mxu0 0
        %4745 = vmatpush1.bf16.xpose.msra.mxu0 0
        %4746 = vmatprep.subr.bf16.mxu0 0
        %4747 = vmatpush1.bf16.xpose.msra.mxu0 0
        %4748 = vmatprep.subr.bf16.mxu0 0
        %4749 = vmatpush1.bf16.xpose.msra.mxu0 0
        %4750 = vmatprep.subr.bf16.mxu0 0
        %4751 = vmatpush1.bf16.xpose.msra.mxu0 0
        %4752 = vmatprep.subr.bf16.mxu0 0
        %4753 = vmatpush1.bf16.xpose.msra.mxu0 0
        %4754 = vmatprep.subr.bf16.mxu0 0
        %4755 = vmatpush1.bf16.xpose.msra.mxu0 0
        %4756 = vmatprep.subr.bf16.mxu0 0
        %4757 = vmatpush1.bf16.xpose.msra.mxu0 0
        %4758 = vmatprep.subr.bf16.mxu0 0
        %4759 = vmatpush1.bf16.xpose.msra.mxu0 0
        %4760 = vmatprep.subr.bf16.mxu0 0
        %4761 = vmatpush1.bf16.xpose.msra.mxu0 0
        %4762 = vmatprep.subr.bf16.mxu0 0
        %4763 = vmatpush1.bf16.xpose.msra.mxu0 0
        %4764 = vmatprep.subr.bf16.mxu0 0
        %4765 = vmatpush1.bf16.xpose.msra.mxu0 0
        %4766 = vmatprep.mubr.bf16.mxu0 0
        %4767 = vmatmul.mubr.bf16.gmra.mrb[0].mxu0 %v4729
        %v4768 = vpop.f32.mrb[0].mxu0
        %v4769 = vadd.f32 0.0, %v4768
        %v4770 = vpop.f32.mrb[0].mxu0
        %v4771 = vpop.f32.mrb[0].mxu0
        %v4772 = vpop.f32.mrb[0].mxu0
        %4773 = vdwg.mxu0
        %v4774 = vmul.f32 %v4769, 0.35355338
        %v4775 = vadd.f32 %v4774, %v4723
        %v4776 = vsel %vm2424, %v4775, -inf
        %4777 = vmax.xlane.f32.xlu0 %v4776
        %v4778 = vpop.xlane.xlu0 %4777
        %v4779 = vsub.f32 %v4775, %v4778
        %v4780 = vmul.f32 %v4779, 1.442695
        %v4781 = vpow.pop %v4780
        %v4782 = vsel %vm2424, %v4781, 0.0
        %4783 = vadd.xlane.f32.xlu0 %v4782
        %v4784 = vpop.xlane.xlu0 %4783
        %v4785 = vrcp.pop %v4784
        %v4786 = vmul.f32 %v4781, %v4785
        %v4787 = vpack.c.bf16 %v4786, %v4786
        %4788 = vrot.lane.b32.xlu0 %v4724, 64
        %v4789 = vpop.permute.xlu0 %4788
        %v4791 = vsel %vm2424, %v4787, 0
        %v4794 = vsel %vm2489, %v4789, 0
        %4796 = vmatprep.subr.bf16.mxu0 0
        %4797 = vmatpush1.bf16.msra.mxu0 %v4794
        %4798 = vmatprep.subr.bf16.mxu0 0
        %4799 = vmatpush1.bf16.msra.mxu0 0
        %4800 = vmatprep.subr.bf16.mxu0 0
        %4801 = vmatpush1.bf16.msra.mxu0 0
        %4802 = vmatprep.subr.bf16.mxu0 0
        %4803 = vmatpush1.bf16.msra.mxu0 0
        %4804 = vmatprep.subr.bf16.mxu0 0
        %4805 = vmatpush1.bf16.msra.mxu0 0
        %4806 = vmatprep.subr.bf16.mxu0 0
        %4807 = vmatpush1.bf16.msra.mxu0 0
        %4808 = vmatprep.subr.bf16.mxu0 0
        %4809 = vmatpush1.bf16.msra.mxu0 0
        %4810 = vmatprep.subr.bf16.mxu0 0
        %4811 = vmatpush1.bf16.msra.mxu0 0
        %4812 = vmatprep.subr.bf16.mxu0 0
        %4813 = vmatpush1.bf16.msra.mxu0 0
        %4814 = vmatprep.subr.bf16.mxu0 0
        %4815 = vmatpush1.bf16.msra.mxu0 0
        %4816 = vmatprep.subr.bf16.mxu0 0
        %4817 = vmatpush1.bf16.msra.mxu0 0
        %4818 = vmatprep.subr.bf16.mxu0 0
        %4819 = vmatpush1.bf16.msra.mxu0 0
        %4820 = vmatprep.subr.bf16.mxu0 0
        %4821 = vmatpush1.bf16.msra.mxu0 0
        %4822 = vmatprep.subr.bf16.mxu0 0
        %4823 = vmatpush1.bf16.msra.mxu0 0
        %4824 = vmatprep.subr.bf16.mxu0 0
        %4825 = vmatpush1.bf16.msra.mxu0 0
        %4826 = vmatprep.subr.bf16.mxu0 0
        %4827 = vmatpush1.bf16.msra.mxu0 0
        %4828 = vmatprep.mubr.bf16.mxu0 0
        %4829 = vmatmul.mubr.bf16.gmra.mrb[0].mxu0 %v4791
        %v4830 = vpop.f32.mrb[0].mxu0
        %v4831 = vadd.f32 0.0, %v4830
        %v4832 = vpop.f32.mrb[0].mxu0
        %v4833 = vpop.f32.mrb[0].mxu0
        %v4834 = vpop.f32.mrb[0].mxu0
        %4835 = vdwg.mxu0
        %4836 = vrot.lane.b32.xlu0 %v4724, 120
        %v4837 = vpop.permute.xlu0 %4836
        %4838 = vrot.lane.b32.xlu0 %v4724, 88
        %v4839 = vpop.permute.xlu0 %4838
        %v4841 = vsel %vm2424, %v4837, 0
        %v4844 = vsel %vm2424, %v4839, 0
        %4846 = vmatprep.subr.bf16.mxu0 0
        %4847 = vmatpush1.bf16.xpose.msra.mxu0 %v4844
        %4848 = vmatprep.subr.bf16.mxu0 0
        %4849 = vmatpush1.bf16.xpose.msra.mxu0 0
        %4850 = vmatprep.subr.bf16.mxu0 0
        %4851 = vmatpush1.bf16.xpose.msra.mxu0 0
        %4852 = vmatprep.subr.bf16.mxu0 0
        %4853 = vmatpush1.bf16.xpose.msra.mxu0 0
        %4854 = vmatprep.subr.bf16.mxu0 0
        %4855 = vmatpush1.bf16.xpose.msra.mxu0 0
        %4856 = vmatprep.subr.bf16.mxu0 0
        %4857 = vmatpush1.bf16.xpose.msra.mxu0 0
        %4858 = vmatprep.subr.bf16.mxu0 0
        %4859 = vmatpush1.bf16.xpose.msra.mxu0 0
        %4860 = vmatprep.subr.bf16.mxu0 0
        %4861 = vmatpush1.bf16.xpose.msra.mxu0 0
        %4862 = vmatprep.subr.bf16.mxu0 0
        %4863 = vmatpush1.bf16.xpose.msra.mxu0 0
        %4864 = vmatprep.subr.bf16.mxu0 0
        %4865 = vmatpush1.bf16.xpose.msra.mxu0 0
        %4866 = vmatprep.subr.bf16.mxu0 0
        %4867 = vmatpush1.bf16.xpose.msra.mxu0 0
        %4868 = vmatprep.subr.bf16.mxu0 0
        %4869 = vmatpush1.bf16.xpose.msra.mxu0 0
        %4870 = vmatprep.subr.bf16.mxu0 0
        %4871 = vmatpush1.bf16.xpose.msra.mxu0 0
        %4872 = vmatprep.subr.bf16.mxu0 0
        %4873 = vmatpush1.bf16.xpose.msra.mxu0 0
        %4874 = vmatprep.subr.bf16.mxu0 0
        %4875 = vmatpush1.bf16.xpose.msra.mxu0 0
        %4876 = vmatprep.subr.bf16.mxu0 0
        %4877 = vmatpush1.bf16.xpose.msra.mxu0 0
        %4878 = vmatprep.mubr.bf16.mxu0 0
        %4879 = vmatmul.mubr.bf16.gmra.mrb[0].mxu0 %v4841
        %v4880 = vpop.f32.mrb[0].mxu0
        %v4881 = vadd.f32 0.0, %v4880
        %v4882 = vpop.f32.mrb[0].mxu0
        %v4883 = vpop.f32.mrb[0].mxu0
        %v4884 = vpop.f32.mrb[0].mxu0
        %4885 = vdwg.mxu0
        %v4886 = vmul.f32 %v4881, 0.35355338
        %v4887 = vadd.f32 %v4886, %v4723
        %v4888 = vsel %vm2424, %v4887, -inf
        %4889 = vmax.xlane.f32.xlu0 %v4888
        %v4890 = vpop.xlane.xlu0 %4889
        %v4891 = vsub.f32 %v4887, %v4890
        %v4892 = vmul.f32 %v4891, 1.442695
        %v4893 = vpow.pop %v4892
        %v4894 = vsel %vm2424, %v4893, 0.0
        %4895 = vadd.xlane.f32.xlu0 %v4894
        %v4896 = vpop.xlane.xlu0 %4895
        %v4897 = vrcp.pop %v4896
        %v4898 = vmul.f32 %v4893, %v4897
        %v4899 = vpack.c.bf16 %v4898, %v4898
        %4900 = vrot.lane.b32.xlu0 %v4724, 56
        %v4901 = vpop.permute.xlu0 %4900
        %v4903 = vsel %vm2424, %v4899, 0
        %v4906 = vsel %vm2489, %v4901, 0
        %4908 = vmatprep.subr.bf16.mxu0 0
        %4909 = vmatpush1.bf16.msra.mxu0 %v4906
        %4910 = vmatprep.subr.bf16.mxu0 0
        %4911 = vmatpush1.bf16.msra.mxu0 0
        %4912 = vmatprep.subr.bf16.mxu0 0
        %4913 = vmatpush1.bf16.msra.mxu0 0
        %4914 = vmatprep.subr.bf16.mxu0 0
        %4915 = vmatpush1.bf16.msra.mxu0 0
        %4916 = vmatprep.subr.bf16.mxu0 0
        %4917 = vmatpush1.bf16.msra.mxu0 0
        %4918 = vmatprep.subr.bf16.mxu0 0
        %4919 = vmatpush1.bf16.msra.mxu0 0
        %4920 = vmatprep.subr.bf16.mxu0 0
        %4921 = vmatpush1.bf16.msra.mxu0 0
        %4922 = vmatprep.subr.bf16.mxu0 0
        %4923 = vmatpush1.bf16.msra.mxu0 0
        %4924 = vmatprep.subr.bf16.mxu0 0
        %4925 = vmatpush1.bf16.msra.mxu0 0
        %4926 = vmatprep.subr.bf16.mxu0 0
        %4927 = vmatpush1.bf16.msra.mxu0 0
        %4928 = vmatprep.subr.bf16.mxu0 0
        %4929 = vmatpush1.bf16.msra.mxu0 0
        %4930 = vmatprep.subr.bf16.mxu0 0
        %4931 = vmatpush1.bf16.msra.mxu0 0
        %4932 = vmatprep.subr.bf16.mxu0 0
        %4933 = vmatpush1.bf16.msra.mxu0 0
        %4934 = vmatprep.subr.bf16.mxu0 0
        %4935 = vmatpush1.bf16.msra.mxu0 0
        %4936 = vmatprep.subr.bf16.mxu0 0
        %4937 = vmatpush1.bf16.msra.mxu0 0
        %4938 = vmatprep.subr.bf16.mxu0 0
        %4939 = vmatpush1.bf16.msra.mxu0 0
        %4940 = vmatprep.mubr.bf16.mxu0 0
        %4941 = vmatmul.mubr.bf16.gmra.mrb[0].mxu0 %v4903
        %v4942 = vpop.f32.mrb[0].mxu0
        %v4943 = vadd.f32 0.0, %v4942
        %v4944 = vpop.f32.mrb[0].mxu0
        %v4945 = vpop.f32.mrb[0].mxu0
        %v4946 = vpop.f32.mrb[0].mxu0
        %4947 = vdwg.mxu0
        %4948 = vrot.lane.b32.xlu0 %v4724, 112
        %v4949 = vpop.permute.xlu0 %4948
        %4950 = vrot.lane.b32.xlu0 %v4724, 80
        %v4951 = vpop.permute.xlu0 %4950
        %v4953 = vsel %vm2424, %v4949, 0
        %v4956 = vsel %vm2424, %v4951, 0
        %4958 = vmatprep.subr.bf16.mxu0 0
        %4959 = vmatpush1.bf16.xpose.msra.mxu0 %v4956
        %4960 = vmatprep.subr.bf16.mxu0 0
        %4961 = vmatpush1.bf16.xpose.msra.mxu0 0
        %4962 = vmatprep.subr.bf16.mxu0 0
        %4963 = vmatpush1.bf16.xpose.msra.mxu0 0
        %4964 = vmatprep.subr.bf16.mxu0 0
        %4965 = vmatpush1.bf16.xpose.msra.mxu0 0
        %4966 = vmatprep.subr.bf16.mxu0 0
        %4967 = vmatpush1.bf16.xpose.msra.mxu0 0
        %4968 = vmatprep.subr.bf16.mxu0 0
        %4969 = vmatpush1.bf16.xpose.msra.mxu0 0
        %4970 = vmatprep.subr.bf16.mxu0 0
        %4971 = vmatpush1.bf16.xpose.msra.mxu0 0
        %4972 = vmatprep.subr.bf16.mxu0 0
        %4973 = vmatpush1.bf16.xpose.msra.mxu0 0
        %4974 = vmatprep.subr.bf16.mxu0 0
        %4975 = vmatpush1.bf16.xpose.msra.mxu0 0
        %4976 = vmatprep.subr.bf16.mxu0 0
        %4977 = vmatpush1.bf16.xpose.msra.mxu0 0
        %4978 = vmatprep.subr.bf16.mxu0 0
        %4979 = vmatpush1.bf16.xpose.msra.mxu0 0
        %4980 = vmatprep.subr.bf16.mxu0 0
        %4981 = vmatpush1.bf16.xpose.msra.mxu0 0
        %4982 = vmatprep.subr.bf16.mxu0 0
        %4983 = vmatpush1.bf16.xpose.msra.mxu0 0
        %4984 = vmatprep.subr.bf16.mxu0 0
        %4985 = vmatpush1.bf16.xpose.msra.mxu0 0
        %4986 = vmatprep.subr.bf16.mxu0 0
        %4987 = vmatpush1.bf16.xpose.msra.mxu0 0
        %4988 = vmatprep.subr.bf16.mxu0 0
        %4989 = vmatpush1.bf16.xpose.msra.mxu0 0
        %4990 = vmatprep.mubr.bf16.mxu0 0
        %4991 = vmatmul.mubr.bf16.gmra.mrb[0].mxu0 %v4953
        %v4992 = vpop.f32.mrb[0].mxu0
        %v4993 = vadd.f32 0.0, %v4992
        %v4994 = vpop.f32.mrb[0].mxu0
        %v4995 = vpop.f32.mrb[0].mxu0
        %v4996 = vpop.f32.mrb[0].mxu0
        %4997 = vdwg.mxu0
        %v4998 = vmul.f32 %v4993, 0.35355338
        %v4999 = vadd.f32 %v4998, %v4723
        %v5000 = vsel %vm2424, %v4999, -inf
        %5001 = vmax.xlane.f32.xlu0 %v5000
        %v5002 = vpop.xlane.xlu0 %5001
        %v5003 = vsub.f32 %v4999, %v5002
        %v5004 = vmul.f32 %v5003, 1.442695
        %v5005 = vpow.pop %v5004
        %v5006 = vsel %vm2424, %v5005, 0.0
        %5007 = vadd.xlane.f32.xlu0 %v5006
        %v5008 = vpop.xlane.xlu0 %5007
        %v5009 = vrcp.pop %v5008
        %v5010 = vmul.f32 %v5005, %v5009
        %v5011 = vpack.c.bf16 %v5010, %v5010
        %5012 = vrot.lane.b32.xlu0 %v4724, 48
        %v5013 = vpop.permute.xlu0 %5012
        %v5015 = vsel %vm2424, %v5011, 0
        %v5018 = vsel %vm2489, %v5013, 0
        %5020 = vmatprep.subr.bf16.mxu0 0
        %5021 = vmatpush1.bf16.msra.mxu0 %v5018
        %5022 = vmatprep.subr.bf16.mxu0 0
        %5023 = vmatpush1.bf16.msra.mxu0 0
        %5024 = vmatprep.subr.bf16.mxu0 0
        %5025 = vmatpush1.bf16.msra.mxu0 0
        %5026 = vmatprep.subr.bf16.mxu0 0
        %5027 = vmatpush1.bf16.msra.mxu0 0
        %5028 = vmatprep.subr.bf16.mxu0 0
        %5029 = vmatpush1.bf16.msra.mxu0 0
        %5030 = vmatprep.subr.bf16.mxu0 0
        %5031 = vmatpush1.bf16.msra.mxu0 0
        %5032 = vmatprep.subr.bf16.mxu0 0
        %5033 = vmatpush1.bf16.msra.mxu0 0
        %5034 = vmatprep.subr.bf16.mxu0 0
        %5035 = vmatpush1.bf16.msra.mxu0 0
        %5036 = vmatprep.subr.bf16.mxu0 0
        %5037 = vmatpush1.bf16.msra.mxu0 0
        %5038 = vmatprep.subr.bf16.mxu0 0
        %5039 = vmatpush1.bf16.msra.mxu0 0
        %5040 = vmatprep.subr.bf16.mxu0 0
        %5041 = vmatpush1.bf16.msra.mxu0 0
        %5042 = vmatprep.subr.bf16.mxu0 0
        %5043 = vmatpush1.bf16.msra.mxu0 0
        %5044 = vmatprep.subr.bf16.mxu0 0
        %5045 = vmatpush1.bf16.msra.mxu0 0
        %5046 = vmatprep.subr.bf16.mxu0 0
        %5047 = vmatpush1.bf16.msra.mxu0 0
        %5048 = vmatprep.subr.bf16.mxu0 0
        %5049 = vmatpush1.bf16.msra.mxu0 0
        %5050 = vmatprep.subr.bf16.mxu0 0
        %5051 = vmatpush1.bf16.msra.mxu0 0
        %5052 = vmatprep.mubr.bf16.mxu0 0
        %5053 = vmatmul.mubr.bf16.gmra.mrb[0].mxu0 %v5015
        %v5054 = vpop.f32.mrb[0].mxu0
        %v5055 = vadd.f32 0.0, %v5054
        %v5056 = vpop.f32.mrb[0].mxu0
        %v5057 = vpop.f32.mrb[0].mxu0
        %v5058 = vpop.f32.mrb[0].mxu0
        %5059 = vdwg.mxu0
        %5060 = vrot.lane.b32.xlu0 %v4724, 104
        %v5061 = vpop.permute.xlu0 %5060
        %5062 = vrot.lane.b32.xlu0 %v4724, 72
        %v5063 = vpop.permute.xlu0 %5062
        %v5065 = vsel %vm2424, %v5061, 0
        %v5068 = vsel %vm2424, %v5063, 0
        %5070 = vmatprep.subr.bf16.mxu0 0
        %5071 = vmatpush1.bf16.xpose.msra.mxu0 %v5068
        %5072 = vmatprep.subr.bf16.mxu0 0
        %5073 = vmatpush1.bf16.xpose.msra.mxu0 0
        %5074 = vmatprep.subr.bf16.mxu0 0
        %5075 = vmatpush1.bf16.xpose.msra.mxu0 0
        %5076 = vmatprep.subr.bf16.mxu0 0
        %5077 = vmatpush1.bf16.xpose.msra.mxu0 0
        %5078 = vmatprep.subr.bf16.mxu0 0
        %5079 = vmatpush1.bf16.xpose.msra.mxu0 0
        %5080 = vmatprep.subr.bf16.mxu0 0
        %5081 = vmatpush1.bf16.xpose.msra.mxu0 0
        %5082 = vmatprep.subr.bf16.mxu0 0
        %5083 = vmatpush1.bf16.xpose.msra.mxu0 0
        %5084 = vmatprep.subr.bf16.mxu0 0
        %5085 = vmatpush1.bf16.xpose.msra.mxu0 0
        %5086 = vmatprep.subr.bf16.mxu0 0
        %5087 = vmatpush1.bf16.xpose.msra.mxu0 0
        %5088 = vmatprep.subr.bf16.mxu0 0
        %5089 = vmatpush1.bf16.xpose.msra.mxu0 0
        %5090 = vmatprep.subr.bf16.mxu0 0
        %5091 = vmatpush1.bf16.xpose.msra.mxu0 0
        %5092 = vmatprep.subr.bf16.mxu0 0
        %5093 = vmatpush1.bf16.xpose.msra.mxu0 0
        %5094 = vmatprep.subr.bf16.mxu0 0
        %5095 = vmatpush1.bf16.xpose.msra.mxu0 0
        %5096 = vmatprep.subr.bf16.mxu0 0
        %5097 = vmatpush1.bf16.xpose.msra.mxu0 0
        %5098 = vmatprep.subr.bf16.mxu0 0
        %5099 = vmatpush1.bf16.xpose.msra.mxu0 0
        %5100 = vmatprep.subr.bf16.mxu0 0
        %5101 = vmatpush1.bf16.xpose.msra.mxu0 0
        %5102 = vmatprep.mubr.bf16.mxu0 0
        %5103 = vmatmul.mubr.bf16.gmra.mrb[0].mxu0 %v5065
        %v5104 = vpop.f32.mrb[0].mxu0
        %v5105 = vadd.f32 0.0, %v5104
        %v5106 = vpop.f32.mrb[0].mxu0
        %v5107 = vpop.f32.mrb[0].mxu0
        %v5108 = vpop.f32.mrb[0].mxu0
        %5109 = vdwg.mxu0
        %v5110 = vmul.f32 %v5105, 0.35355338
        %v5111 = vadd.f32 %v5110, %v4723
        %v5112 = vsel %vm2424, %v5111, -inf
        %5113 = vmax.xlane.f32.xlu0 %v5112
        %v5114 = vpop.xlane.xlu0 %5113
        %v5115 = vsub.f32 %v5111, %v5114
        %v5116 = vmul.f32 %v5115, 1.442695
        %v5117 = vpow.pop %v5116
        %v5118 = vsel %vm2424, %v5117, 0.0
        %5119 = vadd.xlane.f32.xlu0 %v5118
        %v5120 = vpop.xlane.xlu0 %5119
        %v5121 = vrcp.pop %v5120
        %v5122 = vmul.f32 %v5117, %v5121
        %v5123 = vpack.c.bf16 %v5122, %v5122
        %5124 = vrot.lane.b32.xlu0 %v4724, 40
        %v5125 = vpop.permute.xlu0 %5124
        %v5127 = vsel %vm2424, %v5123, 0
        %v5130 = vsel %vm2489, %v5125, 0
        %5132 = vmatprep.subr.bf16.mxu0 0
        %5133 = vmatpush1.bf16.msra.mxu0 %v5130
        %5134 = vmatprep.subr.bf16.mxu0 0
        %5135 = vmatpush1.bf16.msra.mxu0 0
        %5136 = vmatprep.subr.bf16.mxu0 0
        %5137 = vmatpush1.bf16.msra.mxu0 0
        %5138 = vmatprep.subr.bf16.mxu0 0
        %5139 = vmatpush1.bf16.msra.mxu0 0
        %5140 = vmatprep.subr.bf16.mxu0 0
        %5141 = vmatpush1.bf16.msra.mxu0 0
        %5142 = vmatprep.subr.bf16.mxu0 0
        %5143 = vmatpush1.bf16.msra.mxu0 0
        %5144 = vmatprep.subr.bf16.mxu0 0
        %5145 = vmatpush1.bf16.msra.mxu0 0
        %5146 = vmatprep.subr.bf16.mxu0 0
        %5147 = vmatpush1.bf16.msra.mxu0 0
        %5148 = vmatprep.subr.bf16.mxu0 0
        %5149 = vmatpush1.bf16.msra.mxu0 0
        %5150 = vmatprep.subr.bf16.mxu0 0
        %5151 = vmatpush1.bf16.msra.mxu0 0
        %5152 = vmatprep.subr.bf16.mxu0 0
        %5153 = vmatpush1.bf16.msra.mxu0 0
        %5154 = vmatprep.subr.bf16.mxu0 0
        %5155 = vmatpush1.bf16.msra.mxu0 0
        %5156 = vmatprep.subr.bf16.mxu0 0
        %5157 = vmatpush1.bf16.msra.mxu0 0
        %5158 = vmatprep.subr.bf16.mxu0 0
        %5159 = vmatpush1.bf16.msra.mxu0 0
        %5160 = vmatprep.subr.bf16.mxu0 0
        %5161 = vmatpush1.bf16.msra.mxu0 0
        %5162 = vmatprep.subr.bf16.mxu0 0
        %5163 = vmatpush1.bf16.msra.mxu0 0
        %5164 = vmatprep.mubr.bf16.mxu0 0
        %5165 = vmatmul.mubr.bf16.gmra.mrb[0].mxu0 %v5127
        %v5166 = vpop.f32.mrb[0].mxu0
        %v5167 = vadd.f32 0.0, %v5166
        %v5168 = vpop.f32.mrb[0].mxu0
        %v5169 = vpop.f32.mrb[0].mxu0
        %v5170 = vpop.f32.mrb[0].mxu0
        %5171 = vdwg.mxu0
        %5173 = vrot.lane.b32.xlu0 %v4943, 8
        %v5174 = vpop.permute.xlu0 %5173
        %5177 = vrot.lane.b32.xlu0 %v5055, 16
        %v5178 = vpop.permute.xlu0 %5177
        %5181 = vrot.lane.b32.xlu0 %v5167, 24
        %v5182 = vpop.permute.xlu0 %5181
        %v5184 = vsel %vm2424, %v4831, %v5174
        %v5185 = vsel %vm2879, %v5184, %v5178
        %v5186 = vsel %vm2881, %v5185, %v5182
        %v5187 = vpack.c.bf16 %v5186, %v5186
        %v5188 = vld [vmem:[%s41] sm:$0xff]
        %v5189 = vld [vmem:[%s41 + $0x8] sm:$0xff]
        %v5190 = vld [vmem:[%s41 + $0x10] sm:$0xff]
        %v5191 = vld [vmem:[%s41 + $0x18] sm:$0xff]
        %v5192 = vpack.c.bf16 %v5189, %v5188
        %v5193 = vpack.c.bf16 %v5191, %v5190
        %v5194 = vld [vmem:[#allocation19] sm:$0x1]
        %v5196 = vlaneseq
        %v5197 = vshrl.u32 %v5196, 7
        %v5198 = vsub.s32 0, %v5197
        %v5199 = vrot.slane %v5194, %v5198
        %v5202 = vsel %vm2376, %v5187, 0
        %5204 = vmatprep.subr.bf16.mxu0 0
        %5205 = vmatpush1.bf16.msra.mxu0 %v5192
        %5206 = vmatprep.subr.bf16.mxu0 0
        %5207 = vmatpush1.bf16.msra.mxu0 %v5193
        %5208 = vmatprep.subr.bf16.mxu0 0
        %5209 = vmatpush1.bf16.msra.mxu0 0
        %5210 = vmatprep.subr.bf16.mxu0 0
        %5211 = vmatpush1.bf16.msra.mxu0 0
        %5212 = vmatprep.subr.bf16.mxu0 0
        %5213 = vmatpush1.bf16.msra.mxu0 0
        %5214 = vmatprep.subr.bf16.mxu0 0
        %5215 = vmatpush1.bf16.msra.mxu0 0
        %5216 = vmatprep.subr.bf16.mxu0 0
        %5217 = vmatpush1.bf16.msra.mxu0 0
        %5218 = vmatprep.subr.bf16.mxu0 0
        %5219 = vmatpush1.bf16.msra.mxu0 0
        %5220 = vmatprep.subr.bf16.mxu0 0
        %5221 = vmatpush1.bf16.msra.mxu0 0
        %5222 = vmatprep.subr.bf16.mxu0 0
        %5223 = vmatpush1.bf16.msra.mxu0 0
        %5224 = vmatprep.subr.bf16.mxu0 0
        %5225 = vmatpush1.bf16.msra.mxu0 0
        %5226 = vmatprep.subr.bf16.mxu0 0
        %5227 = vmatpush1.bf16.msra.mxu0 0
        %5228 = vmatprep.subr.bf16.mxu0 0
        %5229 = vmatpush1.bf16.msra.mxu0 0
        %5230 = vmatprep.subr.bf16.mxu0 0
        %5231 = vmatpush1.bf16.msra.mxu0 0
        %5232 = vmatprep.subr.bf16.mxu0 0
        %5233 = vmatpush1.bf16.msra.mxu0 0
        %5234 = vmatprep.subr.bf16.mxu0 0
        %5235 = vmatpush1.bf16.msra.mxu0 0
        %5236 = vmatprep.mubr.bf16.mxu0 0
        %5237 = vmatmul.mubr.bf16.gmra.mrb[0].mxu0 %v5202
        %v5238 = vpop.f32.mrb[0].mxu0
        %v5239 = vadd.f32 %v5199, %v5238
        %v5240 = vpop.f32.mrb[0].mxu0
        %v5241 = vpop.f32.mrb[0].mxu0
        %v5242 = vpop.f32.mrb[0].mxu0
        %5243 = vdwg.mxu0
        %v5244 = vadd.f32 %v4660, %v5239
        %v5245 = vsel %vm2376, %v5244, 0.0
        %5246 = vadd.xlane.f32.xlu0 %v5245
        %v5247 = vpop.xlane.xlu0 %5246
        %v5248 = vmul.f32 %v5247, %v2944
        %v5249 = vsub.f32 %v5244, %v5248
        %v5250 = vmul.f32 %v5249, %v5249
        %v5251 = vsel %vm2376, %v5250, 0.0
        %5252 = vadd.xlane.f32.xlu0 %v5251
        %v5253 = vpop.xlane.xlu0 %5252
        %v5254 = vmul.f32 %v5253, %v2944
        %v5255 = vadd.f32 %v5254, 1e-05
        %v5256 = vrsqrt.pop %v5255
        %v5257 = vmul.f32 %v5249, %v5256
        %v5258 = vld [vmem:[#allocation12] sm:$0x1]
        %v5260 = vlaneseq
        %v5261 = vshrl.u32 %v5260, 7
        %v5262 = vsub.s32 0, %v5261
        %v5263 = vrot.slane %v5258, %v5262
        %v5265 = vmul.f32 %v5257, %v5263
        %v5266 = vld [vmem:[#allocation10] sm:$0x1]
        %v5268 = vlaneseq
        %v5269 = vshrl.u32 %v5268, 7
        %v5270 = vsub.s32 0, %v5269
        %v5271 = vrot.slane %v5266, %v5270
        %v5273 = vadd.f32 %v5265, %v5271
        %v5274 = vpack.c.bf16 %v5273, %v5273
        %v5275 = vld [vmem:[%s23] sm:$0xff]
        %v5276 = vld [vmem:[%s23 + $0x8] sm:$0xff]
        %v5277 = vld [vmem:[%s23 + $0x10] sm:$0xff]
        %v5278 = vld [vmem:[%s23 + $0x18] sm:$0xff]
        %v5279 = vpack.c.bf16 %v5276, %v5275
        %v5280 = vpack.c.bf16 %v5278, %v5277
        %v5281 = vld [vmem:[#allocation9] sm:$0x1]
        %v5283 = vlaneseq
        %v5284 = vshrl.u32 %v5283, 7
        %v5285 = vsub.s32 0, %v5284
        %v5286 = vrot.slane %v5281, %v5285
        %v5289 = vsel %vm2376, %v5274, 0
        %5291 = vmatprep.subr.bf16.mxu0 0
        %5292 = vmatpush1.bf16.msra.mxu0 %v5279
        %5293 = vmatprep.subr.bf16.mxu0 0
        %5294 = vmatpush1.bf16.msra.mxu0 %v5280
        %5295 = vmatprep.subr.bf16.mxu0 0
        %5296 = vmatpush1.bf16.msra.mxu0 0
        %5297 = vmatprep.subr.bf16.mxu0 0
        %5298 = vmatpush1.bf16.msra.mxu0 0
        %5299 = vmatprep.subr.bf16.mxu0 0
        %5300 = vmatpush1.bf16.msra.mxu0 0
        %5301 = vmatprep.subr.bf16.mxu0 0
        %5302 = vmatpush1.bf16.msra.mxu0 0
        %5303 = vmatprep.subr.bf16.mxu0 0
        %5304 = vmatpush1.bf16.msra.mxu0 0
        %5305 = vmatprep.subr.bf16.mxu0 0
        %5306 = vmatpush1.bf16.msra.mxu0 0
        %5307 = vmatprep.subr.bf16.mxu0 0
        %5308 = vmatpush1.bf16.msra.mxu0 0
        %5309 = vmatprep.subr.bf16.mxu0 0
        %5310 = vmatpush1.bf16.msra.mxu0 0
        %5311 = vmatprep.subr.bf16.mxu0 0
        %5312 = vmatpush1.bf16.msra.mxu0 0
        %5313 = vmatprep.subr.bf16.mxu0 0
        %5314 = vmatpush1.bf16.msra.mxu0 0
        %5315 = vmatprep.subr.bf16.mxu0 0
        %5316 = vmatpush1.bf16.msra.mxu0 0
        %5317 = vmatprep.subr.bf16.mxu0 0
        %5318 = vmatpush1.bf16.msra.mxu0 0
        %5319 = vmatprep.subr.bf16.mxu0 0
        %5320 = vmatpush1.bf16.msra.mxu0 0
        %5321 = vmatprep.subr.bf16.mxu0 0
        %5322 = vmatpush1.bf16.msra.mxu0 0
        %5323 = vmatprep.mubr.bf16.mxu0 0
        %5324 = vmatmul.mubr.bf16.gmra.mrb[0].mxu0 %v5289
        %v5325 = vpop.f32.mrb[0].mxu0
        %v5326 = vadd.f32 %v5286, %v5325
        %v5327 = vpop.f32.mrb[0].mxu0
        %v5328 = vpop.f32.mrb[0].mxu0
        %v5329 = vpop.f32.mrb[0].mxu0
        %5330 = vdwg.mxu0
        %v5331 = vpack.c.bf16 %v4593, %v4593
        %v5332 = vld [vmem:[%s19] sm:$0xff]
        %v5333 = vld [vmem:[%s19 + $0x8] sm:$0xff]
        %v5334 = vld [vmem:[%s19 + $0x10] sm:$0xff]
        %v5335 = vld [vmem:[%s19 + $0x18] sm:$0xff]
        %v5336 = vpack.c.bf16 %v5333, %v5332
        %v5337 = vpack.c.bf16 %v5335, %v5334
        %v5338 = vld [vmem:[#allocation6] sm:$0x1]
        %v5340 = vlaneseq
        %v5341 = vshrl.u32 %v5340, 7
        %v5342 = vsub.s32 0, %v5341
        %v5343 = vrot.slane %v5338, %v5342
        %v5346 = vsel %vm2376, %v5331, 0
        %5348 = vmatprep.subr.bf16.mxu0 0
        %5349 = vmatpush1.bf16.msra.mxu0 %v5336
        %5350 = vmatprep.subr.bf16.mxu0 0
        %5351 = vmatpush1.bf16.msra.mxu0 %v5337
        %5352 = vmatprep.subr.bf16.mxu0 0
        %5353 = vmatpush1.bf16.msra.mxu0 0
        %5354 = vmatprep.subr.bf16.mxu0 0
        %5355 = vmatpush1.bf16.msra.mxu0 0
        %5356 = vmatprep.subr.bf16.mxu0 0
        %5357 = vmatpush1.bf16.msra.mxu0 0
        %5358 = vmatprep.subr.bf16.mxu0 0
        %5359 = vmatpush1.bf16.msra.mxu0 0
        %5360 = vmatprep.subr.bf16.mxu0 0
        %5361 = vmatpush1.bf16.msra.mxu0 0
        %5362 = vmatprep.subr.bf16.mxu0 0
        %5363 = vmatpush1.bf16.msra.mxu0 0
        %5364 = vmatprep.subr.bf16.mxu0 0
        %5365 = vmatpush1.bf16.msra.mxu0 0
        %5366 = vmatprep.subr.bf16.mxu0 0
        %5367 = vmatpush1.bf16.msra.mxu0 0
        %5368 = vmatprep.subr.bf16.mxu0 0
        %5369 = vmatpush1.bf16.msra.mxu0 0
        %5370 = vmatprep.subr.bf16.mxu0 0
        %5371 = vmatpush1.bf16.msra.mxu0 0
        %5372 = vmatprep.subr.bf16.mxu0 0
        %5373 = vmatpush1.bf16.msra.mxu0 0
        %5374 = vmatprep.subr.bf16.mxu0 0
        %5375 = vmatpush1.bf16.msra.mxu0 0
        %5376 = vmatprep.subr.bf16.mxu0 0
        %5377 = vmatpush1.bf16.msra.mxu0 0
        %5378 = vmatprep.subr.bf16.mxu0 0
        %5379 = vmatpush1.bf16.msra.mxu0 0
        %5380 = vmatprep.mubr.bf16.mxu0 0
        %5381 = vmatmul.mubr.bf16.gmra.mrb[0].mxu0 %v5346
        %v5382 = vpop.f32.mrb[0].mxu0
        %v5383 = vadd.f32 %v5343, %v5382
        %v5384 = vpop.f32.mrb[0].mxu0
        %v5385 = vpop.f32.mrb[0].mxu0
        %v5386 = vpop.f32.mrb[0].mxu0
        %5387 = vdwg.mxu0
        %v5388 = vpack.c.bf16 %v5326, %v5326
        %v5389 = vpack.c.bf16 %v5383, %v5383
        %v5391 = vsel %vm2424, %v5388, 0
        %v5394 = vsel %vm2424, %v5389, 0
        %5396 = vmatprep.subr.bf16.mxu0 0
        %5397 = vmatpush1.bf16.xpose.msra.mxu0 %v5394
        %5398 = vmatprep.subr.bf16.mxu0 0
        %5399 = vmatpush1.bf16.xpose.msra.mxu0 0
        %5400 = vmatprep.subr.bf16.mxu0 0
        %5401 = vmatpush1.bf16.xpose.msra.mxu0 0
        %5402 = vmatprep.subr.bf16.mxu0 0
        %5403 = vmatpush1.bf16.xpose.msra.mxu0 0
        %5404 = vmatprep.subr.bf16.mxu0 0
        %5405 = vmatpush1.bf16.xpose.msra.mxu0 0
        %5406 = vmatprep.subr.bf16.mxu0 0
        %5407 = vmatpush1.bf16.xpose.msra.mxu0 0
        %5408 = vmatprep.subr.bf16.mxu0 0
        %5409 = vmatpush1.bf16.xpose.msra.mxu0 0
        %5410 = vmatprep.subr.bf16.mxu0 0
        %5411 = vmatpush1.bf16.xpose.msra.mxu0 0
        %5412 = vmatprep.subr.bf16.mxu0 0
        %5413 = vmatpush1.bf16.xpose.msra.mxu0 0
        %5414 = vmatprep.subr.bf16.mxu0 0
        %5415 = vmatpush1.bf16.xpose.msra.mxu0 0
        %5416 = vmatprep.subr.bf16.mxu0 0
        %5417 = vmatpush1.bf16.xpose.msra.mxu0 0
        %5418 = vmatprep.subr.bf16.mxu0 0
        %5419 = vmatpush1.bf16.xpose.msra.mxu0 0
        %5420 = vmatprep.subr.bf16.mxu0 0
        %5421 = vmatpush1.bf16.xpose.msra.mxu0 0
        %5422 = vmatprep.subr.bf16.mxu0 0
        %5423 = vmatpush1.bf16.xpose.msra.mxu0 0
        %5424 = vmatprep.subr.bf16.mxu0 0
        %5425 = vmatpush1.bf16.xpose.msra.mxu0 0
        %5426 = vmatprep.subr.bf16.mxu0 0
        %5427 = vmatpush1.bf16.xpose.msra.mxu0 0
        %5428 = vmatprep.mubr.bf16.mxu0 0
        %5429 = vmatmul.mubr.bf16.gmra.mrb[0].mxu0 %v5391
        %v5430 = vpop.f32.mrb[0].mxu0
        %v5431 = vadd.f32 0.0, %v5430
        %v5432 = vpop.f32.mrb[0].mxu0
        %v5433 = vpop.f32.mrb[0].mxu0
        %v5434 = vpop.f32.mrb[0].mxu0
        %5435 = vdwg.mxu0
        %v5436 = vmul.f32 %v5431, 0.35355338
        %v5437 = vsel %vm2424, %v5436, -inf
        %5438 = vmax.xlane.f32.xlu0 %v5437
        %v5439 = vpop.xlane.xlu0 %5438
        %v5440 = vsub.f32 %v5436, %v5439
        %v5441 = vmul.f32 %v5440, 1.442695
        %v5442 = vpow.pop %v5441
        %v5443 = vsel %vm2424, %v5442, 0.0
        %5444 = vadd.xlane.f32.xlu0 %v5443
        %v5445 = vpop.xlane.xlu0 %5444
        %v5446 = vrcp.pop %v5445
        %v5447 = vmul.f32 %v5442, %v5446
        %v5448 = vpack.c.bf16 %v5447, %v5447
        %5450 = vrot.lane.b32.xlu0 %v5389, 96
        %v5451 = vpop.permute.xlu0 %5450
        %v5453 = vsel %vm2424, %v5448, 0
        %v5456 = vsel %vm2489, %v5451, 0
        %5458 = vmatprep.subr.bf16.mxu0 0
        %5459 = vmatpush1.bf16.msra.mxu0 %v5456
        %5460 = vmatprep.subr.bf16.mxu0 0
        %5461 = vmatpush1.bf16.msra.mxu0 0
        %5462 = vmatprep.subr.bf16.mxu0 0
        %5463 = vmatpush1.bf16.msra.mxu0 0
        %5464 = vmatprep.subr.bf16.mxu0 0
        %5465 = vmatpush1.bf16.msra.mxu0 0
        %5466 = vmatprep.subr.bf16.mxu0 0
        %5467 = vmatpush1.bf16.msra.mxu0 0
        %5468 = vmatprep.subr.bf16.mxu0 0
        %5469 = vmatpush1.bf16.msra.mxu0 0
        %5470 = vmatprep.subr.bf16.mxu0 0
        %5471 = vmatpush1.bf16.msra.mxu0 0
        %5472 = vmatprep.subr.bf16.mxu0 0
        %5473 = vmatpush1.bf16.msra.mxu0 0
        %5474 = vmatprep.subr.bf16.mxu0 0
        %5475 = vmatpush1.bf16.msra.mxu0 0
        %5476 = vmatprep.subr.bf16.mxu0 0
        %5477 = vmatpush1.bf16.msra.mxu0 0
        %5478 = vmatprep.subr.bf16.mxu0 0
        %5479 = vmatpush1.bf16.msra.mxu0 0
        %5480 = vmatprep.subr.bf16.mxu0 0
        %5481 = vmatpush1.bf16.msra.mxu0 0
        %5482 = vmatprep.subr.bf16.mxu0 0
        %5483 = vmatpush1.bf16.msra.mxu0 0
        %5484 = vmatprep.subr.bf16.mxu0 0
        %5485 = vmatpush1.bf16.msra.mxu0 0
        %5486 = vmatprep.subr.bf16.mxu0 0
        %5487 = vmatpush1.bf16.msra.mxu0 0
        %5488 = vmatprep.subr.bf16.mxu0 0
        %5489 = vmatpush1.bf16.msra.mxu0 0
        %5490 = vmatprep.mubr.bf16.mxu0 0
        %5491 = vmatmul.mubr.bf16.gmra.mrb[0].mxu0 %v5453
        %v5492 = vpop.f32.mrb[0].mxu0
        %v5493 = vadd.f32 0.0, %v5492
        %v5494 = vpop.f32.mrb[0].mxu0
        %v5495 = vpop.f32.mrb[0].mxu0
        %v5496 = vpop.f32.mrb[0].mxu0
        %5497 = vdwg.mxu0
        %5499 = vrot.lane.b32.xlu0 %v5388, 120
        %v5500 = vpop.permute.xlu0 %5499
        %5501 = vrot.lane.b32.xlu0 %v5389, 120
        %v5502 = vpop.permute.xlu0 %5501
        %v5504 = vsel %vm2424, %v5500, 0
        %v5507 = vsel %vm2424, %v5502, 0
        %5509 = vmatprep.subr.bf16.mxu0 0
        %5510 = vmatpush1.bf16.xpose.msra.mxu0 %v5507
        %5511 = vmatprep.subr.bf16.mxu0 0
        %5512 = vmatpush1.bf16.xpose.msra.mxu0 0
        %5513 = vmatprep.subr.bf16.mxu0 0
        %5514 = vmatpush1.bf16.xpose.msra.mxu0 0
        %5515 = vmatprep.subr.bf16.mxu0 0
        %5516 = vmatpush1.bf16.xpose.msra.mxu0 0
        %5517 = vmatprep.subr.bf16.mxu0 0
        %5518 = vmatpush1.bf16.xpose.msra.mxu0 0
        %5519 = vmatprep.subr.bf16.mxu0 0
        %5520 = vmatpush1.bf16.xpose.msra.mxu0 0
        %5521 = vmatprep.subr.bf16.mxu0 0
        %5522 = vmatpush1.bf16.xpose.msra.mxu0 0
        %5523 = vmatprep.subr.bf16.mxu0 0
        %5524 = vmatpush1.bf16.xpose.msra.mxu0 0
        %5525 = vmatprep.subr.bf16.mxu0 0
        %5526 = vmatpush1.bf16.xpose.msra.mxu0 0
        %5527 = vmatprep.subr.bf16.mxu0 0
        %5528 = vmatpush1.bf16.xpose.msra.mxu0 0
        %5529 = vmatprep.subr.bf16.mxu0 0
        %5530 = vmatpush1.bf16.xpose.msra.mxu0 0
        %5531 = vmatprep.subr.bf16.mxu0 0
        %5532 = vmatpush1.bf16.xpose.msra.mxu0 0
        %5533 = vmatprep.subr.bf16.mxu0 0
        %5534 = vmatpush1.bf16.xpose.msra.mxu0 0
        %5535 = vmatprep.subr.bf16.mxu0 0
        %5536 = vmatpush1.bf16.xpose.msra.mxu0 0
        %5537 = vmatprep.subr.bf16.mxu0 0
        %5538 = vmatpush1.bf16.xpose.msra.mxu0 0
        %5539 = vmatprep.subr.bf16.mxu0 0
        %5540 = vmatpush1.bf16.xpose.msra.mxu0 0
        %5541 = vmatprep.mubr.bf16.mxu0 0
        %5542 = vmatmul.mubr.bf16.gmra.mrb[0].mxu0 %v5504
        %v5543 = vpop.f32.mrb[0].mxu0
        %v5544 = vadd.f32 0.0, %v5543
        %v5545 = vpop.f32.mrb[0].mxu0
        %v5546 = vpop.f32.mrb[0].mxu0
        %v5547 = vpop.f32.mrb[0].mxu0
        %5548 = vdwg.mxu0
        %v5549 = vmul.f32 %v5544, 0.35355338
        %v5550 = vsel %vm2424, %v5549, -inf
        %5551 = vmax.xlane.f32.xlu0 %v5550
        %v5552 = vpop.xlane.xlu0 %5551
        %v5553 = vsub.f32 %v5549, %v5552
        %v5554 = vmul.f32 %v5553, 1.442695
        %v5555 = vpow.pop %v5554
        %v5556 = vsel %vm2424, %v5555, 0.0
        %5557 = vadd.xlane.f32.xlu0 %v5556
        %v5558 = vpop.xlane.xlu0 %5557
        %v5559 = vrcp.pop %v5558
        %v5560 = vmul.f32 %v5555, %v5559
        %v5561 = vpack.c.bf16 %v5560, %v5560
        %5562 = vrot.lane.b32.xlu0 %v5389, 88
        %v5563 = vpop.permute.xlu0 %5562
        %v5565 = vsel %vm2424, %v5561, 0
        %v5568 = vsel %vm2489, %v5563, 0
        %5570 = vmatprep.subr.bf16.mxu0 0
        %5571 = vmatpush1.bf16.msra.mxu0 %v5568
        %5572 = vmatprep.subr.bf16.mxu0 0
        %5573 = vmatpush1.bf16.msra.mxu0 0
        %5574 = vmatprep.subr.bf16.mxu0 0
        %5575 = vmatpush1.bf16.msra.mxu0 0
        %5576 = vmatprep.subr.bf16.mxu0 0
        %5577 = vmatpush1.bf16.msra.mxu0 0
        %5578 = vmatprep.subr.bf16.mxu0 0
        %5579 = vmatpush1.bf16.msra.mxu0 0
        %5580 = vmatprep.subr.bf16.mxu0 0
        %5581 = vmatpush1.bf16.msra.mxu0 0
        %5582 = vmatprep.subr.bf16.mxu0 0
        %5583 = vmatpush1.bf16.msra.mxu0 0
        %5584 = vmatprep.subr.bf16.mxu0 0
        %5585 = vmatpush1.bf16.msra.mxu0 0
        %5586 = vmatprep.subr.bf16.mxu0 0
        %5587 = vmatpush1.bf16.msra.mxu0 0
        %5588 = vmatprep.subr.bf16.mxu0 0
        %5589 = vmatpush1.bf16.msra.mxu0 0
        %5590 = vmatprep.subr.bf16.mxu0 0
        %5591 = vmatpush1.bf16.msra.mxu0 0
        %5592 = vmatprep.subr.bf16.mxu0 0
        %5593 = vmatpush1.bf16.msra.mxu0 0
        %5594 = vmatprep.subr.bf16.mxu0 0
        %5595 = vmatpush1.bf16.msra.mxu0 0
        %5596 = vmatprep.subr.bf16.mxu0 0
        %5597 = vmatpush1.bf16.msra.mxu0 0
        %5598 = vmatprep.subr.bf16.mxu0 0
        %5599 = vmatpush1.bf16.msra.mxu0 0
        %5600 = vmatprep.subr.bf16.mxu0 0
        %5601 = vmatpush1.bf16.msra.mxu0 0
        %5602 = vmatprep.mubr.bf16.mxu0 0
        %5603 = vmatmul.mubr.bf16.gmra.mrb[0].mxu0 %v5565
        %v5604 = vpop.f32.mrb[0].mxu0
        %v5605 = vadd.f32 0.0, %v5604
        %v5606 = vpop.f32.mrb[0].mxu0
        %v5607 = vpop.f32.mrb[0].mxu0
        %v5608 = vpop.f32.mrb[0].mxu0
        %5609 = vdwg.mxu0
        %5610 = vrot.lane.b32.xlu0 %v5388, 112
        %v5611 = vpop.permute.xlu0 %5610
        %5612 = vrot.lane.b32.xlu0 %v5389, 112
        %v5613 = vpop.permute.xlu0 %5612
        %v5615 = vsel %vm2424, %v5611, 0
        %v5618 = vsel %vm2424, %v5613, 0
        %5620 = vmatprep.subr.bf16.mxu0 0
        %5621 = vmatpush1.bf16.xpose.msra.mxu0 %v5618
        %5622 = vmatprep.subr.bf16.mxu0 0
        %5623 = vmatpush1.bf16.xpose.msra.mxu0 0
        %5624 = vmatprep.subr.bf16.mxu0 0
        %5625 = vmatpush1.bf16.xpose.msra.mxu0 0
        %5626 = vmatprep.subr.bf16.mxu0 0
        %5627 = vmatpush1.bf16.xpose.msra.mxu0 0
        %5628 = vmatprep.subr.bf16.mxu0 0
        %5629 = vmatpush1.bf16.xpose.msra.mxu0 0
        %5630 = vmatprep.subr.bf16.mxu0 0
        %5631 = vmatpush1.bf16.xpose.msra.mxu0 0
        %5632 = vmatprep.subr.bf16.mxu0 0
        %5633 = vmatpush1.bf16.xpose.msra.mxu0 0
        %5634 = vmatprep.subr.bf16.mxu0 0
        %5635 = vmatpush1.bf16.xpose.msra.mxu0 0
        %5636 = vmatprep.subr.bf16.mxu0 0
        %5637 = vmatpush1.bf16.xpose.msra.mxu0 0
        %5638 = vmatprep.subr.bf16.mxu0 0
        %5639 = vmatpush1.bf16.xpose.msra.mxu0 0
        %5640 = vmatprep.subr.bf16.mxu0 0
        %5641 = vmatpush1.bf16.xpose.msra.mxu0 0
        %5642 = vmatprep.subr.bf16.mxu0 0
        %5643 = vmatpush1.bf16.xpose.msra.mxu0 0
        %5644 = vmatprep.subr.bf16.mxu0 0
        %5645 = vmatpush1.bf16.xpose.msra.mxu0 0
        %5646 = vmatprep.subr.bf16.mxu0 0
        %5647 = vmatpush1.bf16.xpose.msra.mxu0 0
        %5648 = vmatprep.subr.bf16.mxu0 0
        %5649 = vmatpush1.bf16.xpose.msra.mxu0 0
        %5650 = vmatprep.subr.bf16.mxu0 0
        %5651 = vmatpush1.bf16.xpose.msra.mxu0 0
        %5652 = vmatprep.mubr.bf16.mxu0 0
        %5653 = vmatmul.mubr.bf16.gmra.mrb[0].mxu0 %v5615
        %v5654 = vpop.f32.mrb[0].mxu0
        %v5655 = vadd.f32 0.0, %v5654
        %v5656 = vpop.f32.mrb[0].mxu0
        %v5657 = vpop.f32.mrb[0].mxu0
        %v5658 = vpop.f32.mrb[0].mxu0
        %5659 = vdwg.mxu0
        %v5660 = vmul.f32 %v5655, 0.35355338
        %v5661 = vsel %vm2424, %v5660, -inf
        %5662 = vmax.xlane.f32.xlu0 %v5661
        %v5663 = vpop.xlane.xlu0 %5662
        %v5664 = vsub.f32 %v5660, %v5663
        %v5665 = vmul.f32 %v5664, 1.442695
        %v5666 = vpow.pop %v5665
        %v5667 = vsel %vm2424, %v5666, 0.0
        %5668 = vadd.xlane.f32.xlu0 %v5667
        %v5669 = vpop.xlane.xlu0 %5668
        %v5670 = vrcp.pop %v5669
        %v5671 = vmul.f32 %v5666, %v5670
        %v5672 = vpack.c.bf16 %v5671, %v5671
        %5673 = vrot.lane.b32.xlu0 %v5389, 80
        %v5674 = vpop.permute.xlu0 %5673
        %v5676 = vsel %vm2424, %v5672, 0
        %v5679 = vsel %vm2489, %v5674, 0
        %5681 = vmatprep.subr.bf16.mxu0 0
        %5682 = vmatpush1.bf16.msra.mxu0 %v5679
        %5683 = vmatprep.subr.bf16.mxu0 0
        %5684 = vmatpush1.bf16.msra.mxu0 0
        %5685 = vmatprep.subr.bf16.mxu0 0
        %5686 = vmatpush1.bf16.msra.mxu0 0
        %5687 = vmatprep.subr.bf16.mxu0 0
        %5688 = vmatpush1.bf16.msra.mxu0 0
        %5689 = vmatprep.subr.bf16.mxu0 0
        %5690 = vmatpush1.bf16.msra.mxu0 0
        %5691 = vmatprep.subr.bf16.mxu0 0
        %5692 = vmatpush1.bf16.msra.mxu0 0
        %5693 = vmatprep.subr.bf16.mxu0 0
        %5694 = vmatpush1.bf16.msra.mxu0 0
        %5695 = vmatprep.subr.bf16.mxu0 0
        %5696 = vmatpush1.bf16.msra.mxu0 0
        %5697 = vmatprep.subr.bf16.mxu0 0
        %5698 = vmatpush1.bf16.msra.mxu0 0
        %5699 = vmatprep.subr.bf16.mxu0 0
        %5700 = vmatpush1.bf16.msra.mxu0 0
        %5701 = vmatprep.subr.bf16.mxu0 0
        %5702 = vmatpush1.bf16.msra.mxu0 0
        %5703 = vmatprep.subr.bf16.mxu0 0
        %5704 = vmatpush1.bf16.msra.mxu0 0
        %5705 = vmatprep.subr.bf16.mxu0 0
        %5706 = vmatpush1.bf16.msra.mxu0 0
        %5707 = vmatprep.subr.bf16.mxu0 0
        %5708 = vmatpush1.bf16.msra.mxu0 0
        %5709 = vmatprep.subr.bf16.mxu0 0
        %5710 = vmatpush1.bf16.msra.mxu0 0
        %5711 = vmatprep.subr.bf16.mxu0 0
        %5712 = vmatpush1.bf16.msra.mxu0 0
        %5713 = vmatprep.mubr.bf16.mxu0 0
        %5714 = vmatmul.mubr.bf16.gmra.mrb[0].mxu0 %v5676
        %v5715 = vpop.f32.mrb[0].mxu0
        %v5716 = vadd.f32 0.0, %v5715
        %v5717 = vpop.f32.mrb[0].mxu0
        %v5718 = vpop.f32.mrb[0].mxu0
        %v5719 = vpop.f32.mrb[0].mxu0
        %5720 = vdwg.mxu0
        %5721 = vrot.lane.b32.xlu0 %v5388, 104
        %v5722 = vpop.permute.xlu0 %5721
        %5723 = vrot.lane.b32.xlu0 %v5389, 104
        %v5724 = vpop.permute.xlu0 %5723
        %v5726 = vsel %vm2424, %v5722, 0
        %v5729 = vsel %vm2424, %v5724, 0
        %5731 = vmatprep.subr.bf16.mxu0 0
        %5732 = vmatpush1.bf16.xpose.msra.mxu0 %v5729
        %5733 = vmatprep.subr.bf16.mxu0 0
        %5734 = vmatpush1.bf16.xpose.msra.mxu0 0
        %5735 = vmatprep.subr.bf16.mxu0 0
        %5736 = vmatpush1.bf16.xpose.msra.mxu0 0
        %5737 = vmatprep.subr.bf16.mxu0 0
        %5738 = vmatpush1.bf16.xpose.msra.mxu0 0
        %5739 = vmatprep.subr.bf16.mxu0 0
        %5740 = vmatpush1.bf16.xpose.msra.mxu0 0
        %5741 = vmatprep.subr.bf16.mxu0 0
        %5742 = vmatpush1.bf16.xpose.msra.mxu0 0
        %5743 = vmatprep.subr.bf16.mxu0 0
        %5744 = vmatpush1.bf16.xpose.msra.mxu0 0
        %5745 = vmatprep.subr.bf16.mxu0 0
        %5746 = vmatpush1.bf16.xpose.msra.mxu0 0
        %5747 = vmatprep.subr.bf16.mxu0 0
        %5748 = vmatpush1.bf16.xpose.msra.mxu0 0
        %5749 = vmatprep.subr.bf16.mxu0 0
        %5750 = vmatpush1.bf16.xpose.msra.mxu0 0
        %5751 = vmatprep.subr.bf16.mxu0 0
        %5752 = vmatpush1.bf16.xpose.msra.mxu0 0
        %5753 = vmatprep.subr.bf16.mxu0 0
        %5754 = vmatpush1.bf16.xpose.msra.mxu0 0
        %5755 = vmatprep.subr.bf16.mxu0 0
        %5756 = vmatpush1.bf16.xpose.msra.mxu0 0
        %5757 = vmatprep.subr.bf16.mxu0 0
        %5758 = vmatpush1.bf16.xpose.msra.mxu0 0
        %5759 = vmatprep.subr.bf16.mxu0 0
        %5760 = vmatpush1.bf16.xpose.msra.mxu0 0
        %5761 = vmatprep.subr.bf16.mxu0 0
        %5762 = vmatpush1.bf16.xpose.msra.mxu0 0
        %5763 = vmatprep.mubr.bf16.mxu0 0
        %5764 = vmatmul.mubr.bf16.gmra.mrb[0].mxu0 %v5726
        %v5765 = vpop.f32.mrb[0].mxu0
        %v5766 = vadd.f32 0.0, %v5765
        %v5767 = vpop.f32.mrb[0].mxu0
        %v5768 = vpop.f32.mrb[0].mxu0
        %v5769 = vpop.f32.mrb[0].mxu0
        %5770 = vdwg.mxu0
        %v5771 = vmul.f32 %v5766, 0.35355338
        %v5772 = vsel %vm2424, %v5771, -inf
        %5773 = vmax.xlane.f32.xlu0 %v5772
        %v5774 = vpop.xlane.xlu0 %5773
        %v5775 = vsub.f32 %v5771, %v5774
        %v5776 = vmul.f32 %v5775, 1.442695
        %v5777 = vpow.pop %v5776
        %v5778 = vsel %vm2424, %v5777, 0.0
        %5779 = vadd.xlane.f32.xlu0 %v5778
        %v5780 = vpop.xlane.xlu0 %5779
        %v5781 = vrcp.pop %v5780
        %v5782 = vmul.f32 %v5777, %v5781
        %v5783 = vpack.c.bf16 %v5782, %v5782
        %5784 = vrot.lane.b32.xlu0 %v5389, 72
        %v5785 = vpop.permute.xlu0 %5784
        %v5787 = vsel %vm2424, %v5783, 0
        %v5790 = vsel %vm2489, %v5785, 0
        %5792 = vmatprep.subr.bf16.mxu0 0
        %5793 = vmatpush1.bf16.msra.mxu0 %v5790
        %5794 = vmatprep.subr.bf16.mxu0 0
        %5795 = vmatpush1.bf16.msra.mxu0 0
        %5796 = vmatprep.subr.bf16.mxu0 0
        %5797 = vmatpush1.bf16.msra.mxu0 0
        %5798 = vmatprep.subr.bf16.mxu0 0
        %5799 = vmatpush1.bf16.msra.mxu0 0
        %5800 = vmatprep.subr.bf16.mxu0 0
        %5801 = vmatpush1.bf16.msra.mxu0 0
        %5802 = vmatprep.subr.bf16.mxu0 0
        %5803 = vmatpush1.bf16.msra.mxu0 0
        %5804 = vmatprep.subr.bf16.mxu0 0
        %5805 = vmatpush1.bf16.msra.mxu0 0
        %5806 = vmatprep.subr.bf16.mxu0 0
        %5807 = vmatpush1.bf16.msra.mxu0 0
        %5808 = vmatprep.subr.bf16.mxu0 0
        %5809 = vmatpush1.bf16.msra.mxu0 0
        %5810 = vmatprep.subr.bf16.mxu0 0
        %5811 = vmatpush1.bf16.msra.mxu0 0
        %5812 = vmatprep.subr.bf16.mxu0 0
        %5813 = vmatpush1.bf16.msra.mxu0 0
        %5814 = vmatprep.subr.bf16.mxu0 0
        %5815 = vmatpush1.bf16.msra.mxu0 0
        %5816 = vmatprep.subr.bf16.mxu0 0
        %5817 = vmatpush1.bf16.msra.mxu0 0
        %5818 = vmatprep.subr.bf16.mxu0 0
        %5819 = vmatpush1.bf16.msra.mxu0 0
        %5820 = vmatprep.subr.bf16.mxu0 0
        %5821 = vmatpush1.bf16.msra.mxu0 0
        %5822 = vmatprep.subr.bf16.mxu0 0
        %5823 = vmatpush1.bf16.msra.mxu0 0
        %5824 = vmatprep.mubr.bf16.mxu0 0
        %5825 = vmatmul.mubr.bf16.gmra.mrb[0].mxu0 %v5787
        %v5826 = vpop.f32.mrb[0].mxu0
        %v5827 = vadd.f32 0.0, %v5826
        %v5828 = vpop.f32.mrb[0].mxu0
        %v5829 = vpop.f32.mrb[0].mxu0
        %v5830 = vpop.f32.mrb[0].mxu0
        %5831 = vdwg.mxu0
        %5833 = vrot.lane.b32.xlu0 %v5605, 8
        %v5834 = vpop.permute.xlu0 %5833
        %5837 = vrot.lane.b32.xlu0 %v5716, 16
        %v5838 = vpop.permute.xlu0 %5837
        %5841 = vrot.lane.b32.xlu0 %v5827, 24
        %v5842 = vpop.permute.xlu0 %5841
        %v5844 = vsel %vm2424, %v5493, %v5834
        %v5845 = vsel %vm2879, %v5844, %v5838
        %v5846 = vsel %vm2881, %v5845, %v5842
        %v5847 = vpack.c.bf16 %v5846, %v5846
        %v5848 = vld [vmem:[%s21] sm:$0xff]
        %v5849 = vld [vmem:[%s21 + $0x8] sm:$0xff]
        %v5850 = vld [vmem:[%s21 + $0x10] sm:$0xff]
        %v5851 = vld [vmem:[%s21 + $0x18] sm:$0xff]
        %v5852 = vpack.c.bf16 %v5849, %v5848
        %v5853 = vpack.c.bf16 %v5851, %v5850
        %v5854 = vld [vmem:[#allocation7] sm:$0x1]
        %v5856 = vlaneseq
        %v5857 = vshrl.u32 %v5856, 7
        %v5858 = vsub.s32 0, %v5857
        %v5859 = vrot.slane %v5854, %v5858
        %v5862 = vsel %vm2376, %v5847, 0
        %5864 = vmatprep.subr.bf16.mxu0 0
        %5865 = vmatpush1.bf16.msra.mxu0 %v5852
        %5866 = vmatprep.subr.bf16.mxu0 0
        %5867 = vmatpush1.bf16.msra.mxu0 %v5853
        %5868 = vmatprep.subr.bf16.mxu0 0
        %5869 = vmatpush1.bf16.msra.mxu0 0
        %5870 = vmatprep.subr.bf16.mxu0 0
        %5871 = vmatpush1.bf16.msra.mxu0 0
        %5872 = vmatprep.subr.bf16.mxu0 0
        %5873 = vmatpush1.bf16.msra.mxu0 0
        %5874 = vmatprep.subr.bf16.mxu0 0
        %5875 = vmatpush1.bf16.msra.mxu0 0
        %5876 = vmatprep.subr.bf16.mxu0 0
        %5877 = vmatpush1.bf16.msra.mxu0 0
        %5878 = vmatprep.subr.bf16.mxu0 0
        %5879 = vmatpush1.bf16.msra.mxu0 0
        %5880 = vmatprep.subr.bf16.mxu0 0
        %5881 = vmatpush1.bf16.msra.mxu0 0
        %5882 = vmatprep.subr.bf16.mxu0 0
        %5883 = vmatpush1.bf16.msra.mxu0 0
        %5884 = vmatprep.subr.bf16.mxu0 0
        %5885 = vmatpush1.bf16.msra.mxu0 0
        %5886 = vmatprep.subr.bf16.mxu0 0
        %5887 = vmatpush1.bf16.msra.mxu0 0
        %5888 = vmatprep.subr.bf16.mxu0 0
        %5889 = vmatpush1.bf16.msra.mxu0 0
        %5890 = vmatprep.subr.bf16.mxu0 0
        %5891 = vmatpush1.bf16.msra.mxu0 0
        %5892 = vmatprep.subr.bf16.mxu0 0
        %5893 = vmatpush1.bf16.msra.mxu0 0
        %5894 = vmatprep.subr.bf16.mxu0 0
        %5895 = vmatpush1.bf16.msra.mxu0 0
        %5896 = vmatprep.mubr.bf16.mxu0 0
        %5897 = vmatmul.mubr.bf16.gmra.mrb[0].mxu0 %v5862
        %v5898 = vpop.f32.mrb[0].mxu0
        %v5899 = vadd.f32 %v5859, %v5898
        %v5900 = vpop.f32.mrb[0].mxu0
        %v5901 = vpop.f32.mrb[0].mxu0
        %v5902 = vpop.f32.mrb[0].mxu0
        %5903 = vdwg.mxu0
        %v5904 = vadd.f32 %v5273, %v5899
        %v5905 = vsel %vm2376, %v5904, 0.0
        %5906 = vadd.xlane.f32.xlu0 %v5905
        %v5907 = vpop.xlane.xlu0 %5906
        %v5908 = vmul.f32 %v5907, %v2944
        %v5909 = vsub.f32 %v5904, %v5908
        %v5910 = vmul.f32 %v5909, %v5909
        %v5911 = vsel %vm2376, %v5910, 0.0
        %5912 = vadd.xlane.f32.xlu0 %v5911
        %v5913 = vpop.xlane.xlu0 %5912
        %v5914 = vmul.f32 %v5913, %v2944
        %v5915 = vadd.f32 %v5914, 1e-05
        %v5916 = vrsqrt.pop %v5915
        %v5917 = vmul.f32 %v5909, %v5916
        %v5918 = vld [vmem:[#allocation15] sm:$0x1]
        %v5920 = vlaneseq
        %v5921 = vshrl.u32 %v5920, 7
        %v5922 = vsub.s32 0, %v5921
        %v5923 = vrot.slane %v5918, %v5922
        %v5925 = vmul.f32 %v5917, %v5923
        %v5926 = vld [vmem:[#allocation13] sm:$0x1]
        %v5928 = vlaneseq
        %v5929 = vshrl.u32 %v5928, 7
        %v5930 = vsub.s32 0, %v5929
        %v5931 = vrot.slane %v5926, %v5930
        %v5933 = vadd.f32 %v5925, %v5931
        %v5934 = vpack.c.bf16 %v5933, %v5933
        %v5935 = vld [vmem:[%s45] sm:$0xff]
        %v5936 = vld [vmem:[%s45 + $0x8] sm:$0xff]
        %v5937 = vld [vmem:[%s45 + $0x10] sm:$0xff]
        %v5938 = vld [vmem:[%s45 + $0x18] sm:$0xff]
        %v5939 = vpack.c.bf16 %v5936, %v5935
        %v5940 = vpack.c.bf16 %v5938, %v5937
        %v5941 = vld [vmem:[#allocation2] sm:$0x1]
        %v5943 = vlaneseq
        %v5944 = vshrl.u32 %v5943, 7
        %v5945 = vsub.s32 0, %v5944
        %v5946 = vrot.slane %v5941, %v5945
        %v5949 = vsel %vm2376, %v5934, 0
        %5951 = vmatprep.subr.bf16.mxu0 0
        %5952 = vmatpush1.bf16.msra.mxu0 %v5939
        %5953 = vmatprep.subr.bf16.mxu0 0
        %5954 = vmatpush1.bf16.msra.mxu0 %v5940
        %5955 = vmatprep.subr.bf16.mxu0 0
        %5956 = vmatpush1.bf16.msra.mxu0 0
        %5957 = vmatprep.subr.bf16.mxu0 0
        %5958 = vmatpush1.bf16.msra.mxu0 0
        %5959 = vmatprep.subr.bf16.mxu0 0
        %5960 = vmatpush1.bf16.msra.mxu0 0
        %5961 = vmatprep.subr.bf16.mxu0 0
        %5962 = vmatpush1.bf16.msra.mxu0 0
        %5963 = vmatprep.subr.bf16.mxu0 0
        %5964 = vmatpush1.bf16.msra.mxu0 0
        %5965 = vmatprep.subr.bf16.mxu0 0
        %5966 = vmatpush1.bf16.msra.mxu0 0
        %5967 = vmatprep.subr.bf16.mxu0 0
        %5968 = vmatpush1.bf16.msra.mxu0 0
        %5969 = vmatprep.subr.bf16.mxu0 0
        %5970 = vmatpush1.bf16.msra.mxu0 0
        %5971 = vmatprep.subr.bf16.mxu0 0
        %5972 = vmatpush1.bf16.msra.mxu0 0
        %5973 = vmatprep.subr.bf16.mxu0 0
        %5974 = vmatpush1.bf16.msra.mxu0 0
        %5975 = vmatprep.subr.bf16.mxu0 0
        %5976 = vmatpush1.bf16.msra.mxu0 0
        %5977 = vmatprep.subr.bf16.mxu0 0
        %5978 = vmatpush1.bf16.msra.mxu0 0
        %5979 = vmatprep.subr.bf16.mxu0 0
        %5980 = vmatpush1.bf16.msra.mxu0 0
        %5981 = vmatprep.subr.bf16.mxu0 0
        %5982 = vmatpush1.bf16.msra.mxu0 0
        %5983 = vmatprep.mubr.bf16.mxu0 0
        %5984 = vmatmul.mubr.bf16.gmra.mrb[0].mxu0 %v5949
        %v5985 = vpop.f32.mrb[0].mxu0
        %v5986 = vadd.f32 %v5946, %v5985
        %v5987 = vpop.f32.mrb[0].mxu0
        %v5988 = vpop.f32.mrb[0].mxu0
        %v5989 = vpop.f32.mrb[0].mxu0
        %5990 = vdwg.mxu0
        %v5991 = vmax.f32 %v5986, 0.0
        %v5992 = vpack.c.bf16 %v5991, %v5991
        %v5993 = vld [vmem:[%s47] sm:$0xff]
        %v5994 = vld [vmem:[%s47 + $0x8] sm:$0xff]
        %v5995 = vld [vmem:[%s47 + $0x10] sm:$0xff]
        %v5996 = vld [vmem:[%s47 + $0x18] sm:$0xff]
        %v5997 = vld [vmem:[%s47 + $0x20] sm:$0xff]
        %v5998 = vld [vmem:[%s47 + $0x28] sm:$0xff]
        %v5999 = vld [vmem:[%s47 + $0x30] sm:$0xff]
        %v6000 = vld [vmem:[%s47 + $0x38] sm:$0xff]
        %v6001 = vpack.c.bf16 %v5994, %v5993
        %v6002 = vpack.c.bf16 %v5996, %v5995
        %v6003 = vpack.c.bf16 %v5998, %v5997
        %v6004 = vpack.c.bf16 %v6000, %v5999
        %v6005 = vld [vmem:[#allocation4] sm:$0x1]
        %v6007 = vlaneseq
        %v6008 = vshrl.u32 %v6007, 7
        %v6009 = vsub.s32 0, %v6008
        %v6010 = vrot.slane %v6005, %v6009
        %v6013 = vsel %vm2315, %v5992, 0
        %6015 = vmatprep.subr.bf16.mxu0 0
        %6016 = vmatpush1.bf16.msra.mxu0 %v6001
        %6017 = vmatprep.subr.bf16.mxu0 0
        %6018 = vmatpush1.bf16.msra.mxu0 %v6002
        %6019 = vmatprep.subr.bf16.mxu0 0
        %6020 = vmatpush1.bf16.msra.mxu0 %v6003
        %6021 = vmatprep.subr.bf16.mxu0 0
        %6022 = vmatpush1.bf16.msra.mxu0 %v6004
        %6023 = vmatprep.subr.bf16.mxu0 0
        %6024 = vmatpush1.bf16.msra.mxu0 0
        %6025 = vmatprep.subr.bf16.mxu0 0
        %6026 = vmatpush1.bf16.msra.mxu0 0
        %6027 = vmatprep.subr.bf16.mxu0 0
        %6028 = vmatpush1.bf16.msra.mxu0 0
        %6029 = vmatprep.subr.bf16.mxu0 0
        %6030 = vmatpush1.bf16.msra.mxu0 0
        %6031 = vmatprep.subr.bf16.mxu0 0
        %6032 = vmatpush1.bf16.msra.mxu0 0
        %6033 = vmatprep.subr.bf16.mxu0 0
        %6034 = vmatpush1.bf16.msra.mxu0 0
        %6035 = vmatprep.subr.bf16.mxu0 0
        %6036 = vmatpush1.bf16.msra.mxu0 0
        %6037 = vmatprep.subr.bf16.mxu0 0
        %6038 = vmatpush1.bf16.msra.mxu0 0
        %6039 = vmatprep.subr.bf16.mxu0 0
        %6040 = vmatpush1.bf16.msra.mxu0 0
        %6041 = vmatprep.subr.bf16.mxu0 0
        %6042 = vmatpush1.bf16.msra.mxu0 0
        %6043 = vmatprep.subr.bf16.mxu0 0
        %6044 = vmatpush1.bf16.msra.mxu0 0
        %6045 = vmatprep.subr.bf16.mxu0 0
        %6046 = vmatpush1.bf16.msra.mxu0 0
        %6047 = vmatprep.mubr.bf16.mxu0 0
        %6048 = vmatmul.mubr.bf16.gmra.mrb[0].mxu0 %v6013
        %v6049 = vpop.f32.mrb[0].mxu0
        %v6050 = vadd.f32 %v6010, %v6049
        %v6051 = vpop.f32.mrb[0].mxu0
        %v6052 = vpop.f32.mrb[0].mxu0
        %v6053 = vpop.f32.mrb[0].mxu0
        %6054 = vdwg.mxu0
        %v6055 = vadd.f32 %v5933, %v6050
        %v6056 = vsel %vm2376, %v6055, 0.0
        %6057 = vadd.xlane.f32.xlu0 %v6056
        %v6058 = vpop.xlane.xlu0 %6057
        %v6059 = vmul.f32 %v6058, %v2944
        %v6060 = vsub.f32 %v6055, %v6059
        %v6061 = vmul.f32 %v6060, %v6060
        %v6062 = vsel %vm2376, %v6061, 0.0
        %6063 = vadd.xlane.f32.xlu0 %v6062
        %v6064 = vpop.xlane.xlu0 %6063
        %v6065 = vmul.f32 %v6064, %v2944
        %v6066 = vadd.f32 %v6065, 1e-05
        %v6067 = vrsqrt.pop %v6066
        %v6068 = vmul.f32 %v6060, %v6067
        %v6069 = vld [vmem:[#allocation18] sm:$0x1]
        %v6071 = vlaneseq
        %v6072 = vshrl.u32 %v6071, 7
        %v6073 = vsub.s32 0, %v6072
        %v6074 = vrot.slane %v6069, %v6073
        %v6076 = vmul.f32 %v6068, %v6074
        %v6077 = vld [vmem:[#allocation16] sm:$0x1]
        %v6079 = vlaneseq
        %v6080 = vshrl.u32 %v6079, 7
        %v6081 = vsub.s32 0, %v6080
        %v6082 = vrot.slane %v6077, %v6081
        %v6084 = vadd.f32 %v6076, %v6082
        %v6085 = vsel %vm2376, %v6084, 0.0
        %6086 = vadd.xlane.f32.xlu0 %v6085
        %v6087 = vpop.xlane.xlu0 %6086
        %v6088 = vmul.f32 %v6087, %v2944
        %v6089 = vsub.f32 %v6084, %v6088
        %v6090 = vmul.f32 %v6089, %v6089
        %v6091 = vsel %vm2376, %v6090, 0.0
        %6092 = vadd.xlane.f32.xlu0 %v6091
        %v6093 = vpop.xlane.xlu0 %6092
        %v6094 = vmul.f32 %v6093, %v2944
        %v6095 = vadd.f32 %v6094, 1e-05
        %v6096 = vrsqrt.pop %v6095
        %v6097 = vmul.f32 %v6089, %v6096
        %v6098 = vld [vmem:[#allocation24] sm:$0x1]
        %v6100 = vlaneseq
        %v6101 = vshrl.u32 %v6100, 7
        %v6102 = vsub.s32 0, %v6101
        %v6103 = vrot.slane %v6098, %v6102
        %v6105 = vmul.f32 %v6097, %v6103
        %v6106 = vld [vmem:[#allocation22] sm:$0x1]
        %v6108 = vlaneseq
        %v6109 = vshrl.u32 %v6108, 7
        %v6110 = vsub.s32 0, %v6109
        %v6111 = vrot.slane %v6106, %v6110
        %v6113 = vadd.f32 %v6105, %v6111
        %v6114 = vcombine.high %v6113, 0.0
        %v6116 = vunpack.c.l.s4 1983009808
        %v6117 = vunpack.c.0.s8 %v6116
        %v6118 = vlaneseq
        %v6119 = vshrl.u32 %v6118, 7
        %v6120 = vsub.s32 %v6117, %v6119
        %v6121 = vrot.slane %v6113, %v6120
        %v6123 = vunpack.c.l.s4 1983009808
        %v6124 = vunpack.c.0.s8 %v6123
        %v6125 = vlaneseq
        %v6126 = vshrl.u32 %v6125, 7
        %v6127 = vsub.s32 %v6124, %v6126
        %v6128 = vrot.slane %v6114, %v6127
        %v6129 = vcombine.high %v6121, 0.0
        %v6131 = vunpack.c.l.s4 1934713408
        %v6132 = vunpack.c.0.s8 %v6131
        %v6133 = vlaneseq
        %v6134 = vshrl.u32 %v6133, 7
        %v6135 = vsub.s32 %v6132, %v6134
        %v6136 = vrot.slane %v6121, %v6135
        %v6138 = vunpack.c.l.s4 1934713408
        %v6139 = vunpack.c.0.s8 %v6138
        %v6140 = vlaneseq
        %v6141 = vshrl.u32 %v6140, 7
        %v6142 = vsub.s32 %v6139, %v6141
        %v6143 = vrot.slane %v6129, %v6142
        %v6144 = vcombine.high %v6128, 0.0
        %v6146 = vunpack.c.l.s4 1934713408
        %v6147 = vunpack.c.0.s8 %v6146
        %v6148 = vlaneseq
        %v6149 = vshrl.u32 %v6148, 7
        %v6150 = vsub.s32 %v6147, %v6149
        %v6151 = vrot.slane %v6128, %v6150
        %v6153 = vunpack.c.l.s4 1934713408
        %v6154 = vunpack.c.0.s8 %v6153
        %v6155 = vlaneseq
        %v6156 = vshrl.u32 %v6155, 7
        %v6157 = vsub.s32 %v6154, %v6156
        %v6158 = vrot.slane %v6144, %v6157
        %v6159 = vcombine.high %v6136, 0.0
        %v6160 = vcombine.high %v6143, 0.0
        %v6161 = vcombine.high %v6151, 0.0
        %v6162 = vcombine.high %v6158, 0.0
        %6164 = vrot.lane.b32.xlu0 %v6159, 32
        %v6165 = vpop.permute.xlu0 %6164
        %6168 = vrot.lane.b32.xlu0 %v6143, 64
        %v6169 = vpop.permute.xlu0 %6168
        %6172 = vrot.lane.b32.xlu0 %v6160, 96
        %v6173 = vpop.permute.xlu0 %6172
        %6176 = vrot.lane.b32.xlu0 %v6161, 32
        %v6177 = vpop.permute.xlu0 %6176
        %6180 = vrot.lane.b32.xlu0 %v6158, 64
        %v6181 = vpop.permute.xlu0 %6180
        %6184 = vrot.lane.b32.xlu0 %v6162, 96
        %v6185 = vpop.permute.xlu0 %6184
        %v6187 = vsel %vm2376, %v6136, %v6165
        %v6188 = vsel %vm2315, %v6187, %v6169
        %vm6189 = vcmask 785408
        %v6190 = vsel %vm6189, %v6188, %v6173
        %v6191 = vsel %vm2376, %v6151, %v6177
        %v6192 = vsel %vm2315, %v6191, %v6181
        %v6193 = vsel %vm6189, %v6192, %v6185
        %v6196 = vcombine.low %v6190, %v6193
        %v6198 = vunpack.c.l.s4 1966171168
        %v6199 = vunpack.c.0.s8 %v6198
        %v6200 = vlaneseq
        %v6201 = vshrl.u32 %v6200, 7
        %v6202 = vsub.s32 %v6199, %v6201
        %v6203 = vrot.slane %v6196, %v6202
        %v6205 = vunpack.c.l.s4 1966171168
        %v6206 = vunpack.c.0.s8 %v6205
        %v6207 = vlaneseq
        %v6208 = vshrl.u32 %v6207, 7
        %v6209 = vsub.s32 %v6206, %v6208
        %v6210 = vrot.slane %v6203, %v6209
        %v6212 = vlaneseq
        %vm6213 = vcmp.ge.s32.totalorder %v6212, 0
        %vm6214 = vcmp.lt.s32.totalorder %v6212, 256
        %vm6215 = vmand %vm6213, %vm6214
        %6216 = vst.msk [vmem:[%s2291] sm:$0x3] %vm6215, %v6210
        %p6217 = scmp.lt.s32.totalorder %s159, 1
        %s6218 = scalar_select %p6217, %s159, 1
        %s6219 = smul.addr %s6218, 2
        %s6220 = scalar_lea.vmem %s135, %s6219
        // Predicated region
        $region389: #{vac_encoder_forward.1} parent=287 // pred_check
          %p6221 = pneg %p1594
        $region390: #{vac_encoder_forward.1} parent=287 // pred_check_branch
          %6223 = sbr.rel (%p6221) target = $region392
        $region391: #{vac_encoder_forward.1} parent=287 // pred_region
          _
        $region392: #{vac_encoder_forward.1} parent=287 // pred_fallthru
          _
      $region288: #{vac_encoder_forward.1} parent=5 // pred_fallthru
        _
      %p6224 = scmp.le.s32.totalorder 2, %s154
      // Predicated region
      $region393: #{vac_encoder_forward.1} parent=5 // pred_check
        %p6225 = pneg %p6224
      $region394: #{vac_encoder_forward.1} parent=5 // pred_check_branch
        %6227 = sbr.rel (%p6225) target = $region396
      $region395: #{vac_encoder_forward.1} parent=5 // pred_region
        %s6228 = ssub.s32 %s154, 2
        // Predicated region
        $region397: #{vac_encoder_forward.1} parent=395 // pred_check
          %p6229 = pneg %p1600
        $region398: #{vac_encoder_forward.1} parent=395 // pred_check_branch
          %6231 = sbr.rel (%p6229) target = $region400
        $region399: #{vac_encoder_forward.1} parent=395 // pred_region
          %p6232 = scmp.lt.s32.totalorder %s160, 1
          %s6233 = scalar_select %p6232, %s160, 1
          %s6234 = smul.addr %s6233, 2
          %s6235 = scalar_lea.vmem %s135, %s6234
        $region400: #{vac_encoder_forward.1} parent=395 // pred_fallthru
          _
      $region396: #{vac_encoder_forward.1} parent=5 // pred_fallthru
        _
    $region6: #{vac_encoder_forward.1} parent=1 // loop_footer
      %s158 = sadd.s32 1, %s154
    $region7: #{vac_encoder_forward.1} parent=1 // loop_footer_branch
      %153 = sbr.rel target = $region3
    $region8: #{vac_encoder_forward.1} parent=1 // loop_exit
      _
    %6236 = vsyncpa [#allocation3], 1
    %s6237 = scalar_lea.sflag [#allocation3], 1
    %6238 = vsyncpa %s6237, 1
    %6239 = vsyncpa [#allocation5], 1
    %6240 = vsyncpa [#allocation8], 1
    %6241 = vsyncpa [#allocation11], 1
    %6242 = vsyncpa [#allocation14], 1
    %6243 = vsyncpa [#allocation17], 1
    %6244 = vsyncpa [#allocation20], 1
    %6245 = vsyncpa [#allocation23], 1
    %6246 = vsyncpa [#allocation26], 1
    %6247 = vsyncpa [#allocation29], 1
    %6248 = vsyncpa [#allocation32], 1
    %6249 = vsyncpa [#allocation35], 1
    %6250 = vsyncpa [#allocation38], 1

</llo_original>
